<compile_context>
chip_gen: v5e
topology: v5e:2x2
jax: 0.10.0
libtpu: 0.0.40
codegen_flags: <defaults>
</compile_context>

<pallas_src>
import functools

import jax
import jax.numpy as jnp
from jax.experimental import pallas as pl
from jax.experimental.pallas import tpu as pltpu


_COMPILER_PARAMS = pltpu.CompilerParams(
    dimension_semantics=("parallel",),          # grid = (batch,)
    vmem_limit_bytes=32 * 1024 * 1024,
)


# ---------------------------------------------------------------------------
# Pallas kernels
# ---------------------------------------------------------------------------
def _conv_relu_kernel(x_ref, w_ref, b_ref, o_ref):
    """Stem conv for one batch element; kh and kw are both folded into K.

    x_ref: (1, Ho, KH*Wp*Cin) bf16    phase-stacked padded input
    w_ref: (KH*Wp*Cin, Wo*Cout) bf16  banded weight (BN scale folded), resident
    b_ref: (1, Wo*Cout) f32           folded BN bias
    o_ref: (1, Ho, Wo*Cout) bf16
    """
    y = jnp.dot(x_ref[0], w_ref[...], preferred_element_type=jnp.float32)
    o_ref[0] = jnp.maximum(y + b_ref[...], 0.0).astype(o_ref.dtype)


def _block_kernel(has_ds, ho, woc, x_ref, w1_ref, b1_ref, w2_ref, b2_ref, *rest):
    """Fused ResNet BasicBlock for one batch element.

    x_ref:   (1, Ho, 3*Wp*Cin) bf16   phase-stacked padded input (conv1 + ds)
    w1_ref:  (3*Wp*Cin, Wo*Cout) bf16 banded conv1 weight (resident)
    b1_ref:  (1, Wo*Cout) f32
    w2_ref:  (3*Wo*Cout, Wo*Cout) bf16 banded conv2 weight (implicit W pad)
    b2_ref:  (1, Wo*Cout) f32
    rest:    [wd_ref, bd_ref] (downsample band over the kh=1 phase) or
             [res_ref] (identity residual), then out_ref, y1p scratch.
    y1p_ref: (Ho+2, Wo*Cout) f32 VMEM scratch, physically zero-padded in H.
    """
    if has_ds:
        wd_ref, bd_ref, out_ref, y1p_ref = rest
    else:
        res_ref, out_ref, y1p_ref = rest

    x = x_ref[0]                                                  # (Ho, K1)

    # conv1 + BN + ReLU : a single MXU matmul (kh and kw both inside K1).
    y1 = jnp.dot(x, w1_ref[...], preferred_element_type=jnp.float32)
    y1 = jnp.maximum(y1 + b1_ref[...], 0.0)                       # (Ho, WoC) f32

    # Residual path: 1x1/s downsample reuses the same phase-stacked input
    # (its band is non-zero only on the kh=1 phase rows), or the raw input.
    if has_ds:
        res = jnp.dot(x, wd_ref[...], preferred_element_type=jnp.float32)
        res = res + bd_ref[...]
    else:
        res = res_ref[0].astype(jnp.float32)

    # conv2: keep the intermediate in a zero H-padded VMEM scratch so its
    # three H taps are plain row slices; W taps / W-padding are in the band.
    y1p_ref[...] = jnp.zeros_like(y1p_ref)
    y1p_ref[1:ho + 1, :] = y1

    acc = res + b2_ref[...]
    for kh in range(3):
        acc += jnp.dot(y1p_ref[kh:kh + ho, :].astype(jnp.bfloat16),
                       w2_ref[kh * woc:(kh + 1) * woc, :],
                       preferred_element_type=jnp.float32)
    out_ref[0] = jnp.maximum(acc, 0.0).astype(out_ref.dtype)


def _maxpool_kernel(ho, wo, c, ev_ref, od_ref, out_ref):
    """3x3/s2/p1 max pool: all 9 taps in ONE grid step (no reduction axis)."""
    woc = wo * c
    ev = ev_ref[0]                        # (3*Ho, Wev*C)  kh phases on rows
    od = od_ref[0]                        # (3*Ho, Wod*C)
    res = None
    for kh in range(3):
        e = ev[kh * ho:(kh + 1) * ho]
        o = od[kh * ho:(kh + 1) * ho]
        m = jnp.maximum(jnp.maximum(e[:, :woc], o[:, :woc]), e[:, c:woc + c])
        res = m if res is None else jnp.maximum(res, m)
    out_ref[0] = res


# ---------------------------------------------------------------------------
# Host-side helpers (band construction, phase stacking)
# ---------------------------------------------------------------------------
def _banded_weight(w_eff, stride, w_in, w_out, pad_w):
    """(KH,KW,Cin,Cout) -> (KH*w_in*Cin, w_out*Cout) block-banded matrix.

    band[(kh*w_in + w)*Cin + ci, o*Cout + co] =
        w_eff[kh, w - stride*o + pad_w, ci, co]   when that kw is in [0, KW),
    else 0 -- the KW taps, the W stride and (via pad_w) the implicit W
    zero-padding are absorbed into the matmul so the kernel never gathers in W.
    """
    kh_n, kw_n, cin, cout = w_eff.shape
    w_idx = jnp.arange(w_in)[:, None]
    o_idx = jnp.arange(w_out)[None, :]
    kw_idx = w_idx - stride * o_idx + pad_w
    valid = (kw_idx >= 0) & (kw_idx < kw_n)
    kw_safe = jnp.clip(kw_idx, 0, kw_n - 1)
    bands = []
    for kh in range(kh_n):
        band = jnp.where(valid[..., None, None], w_eff[kh][kw_safe], 0.0)
        band = jnp.transpose(band, (0, 2, 1, 3)).reshape(w_in * cin, w_out * cout)
        bands.append(band)
    return jnp.concatenate(bands, axis=0)


def _phase_stack(x, kh_n, stride, pad, out_h):
    """(N,H,W,C) -> (N, out_h, kh_n*Wp*C): H taps of the padded input stacked
    along lanes, so the conv's kh axis becomes part of the matmul K dim."""
    n, h, w, c = x.shape
    wp = w + 2 * pad
    xp = jnp.pad(x, ((0, 0), (pad, pad), (pad, pad), (0, 0)))
    phases = []
    for kh in range(kh_n):
        ph = jax.lax.slice(xp, (0, kh, 0, 0),
                           (n, kh + stride * (out_h - 1) + 1, wp, c),
                           (1, stride, 1, 1))                    # (N, out_h, Wp, C)
        phases.append(ph.reshape(n, out_h, wp * c))
    return jnp.concatenate(phases, axis=-1)


def _fold_bn_into_weight(conv):
    w_eff = (conv["w"] * conv["scale"][None, None, None, :]).astype(jnp.float32)
    return w_eff, conv["bias"].astype(jnp.float32)


# ---------------------------------------------------------------------------
# Layer wrappers
# ---------------------------------------------------------------------------
def stem_conv(x, conv):
    """7x7/s2/p3 conv + folded BN + ReLU.  x: (N,H,W,Cin) bf16 NHWC."""
    n, h, w, cin = x.shape
    cout = conv["w"].shape[-1]
    ho, wo = (h - 1) // 2 + 1, (w - 1) // 2 + 1
    wp = w + 6
    k = 7 * wp * cin
    woc = wo * cout
    w_eff, bias = _fold_bn_into_weight(conv)
    wb = _banded_weight(w_eff, 2, wp, wo, 0).astype(jnp.bfloat16)
    b = jnp.tile(bias, wo).reshape(1, woc)
    xph = _phase_stack(x, 7, 2, 3, ho).astype(jnp.bfloat16)
    out = pl.pallas_call(
        _conv_relu_kernel,
        out_shape=jax.ShapeDtypeStruct((n, ho, woc), jnp.bfloat16),
        grid=(n,),
        in_specs=[pl.BlockSpec((1, ho, k), lambda i: (i, 0, 0)),
                  pl.BlockSpec((k, woc), lambda i: (0, 0)),
                  pl.BlockSpec((1, woc), lambda i: (0, 0))],
        out_specs=pl.BlockSpec((1, ho, woc), lambda i: (i, 0, 0)),
        compiler_params=_COMPILER_PARAMS,
    )(xph, wb, b)
    return out.reshape(n, ho, wo, cout)


def maxpool2d(x):
    """3x3/s2/p1 max pool (PyTorch semantics).  x: (N,H,W,C) bf16."""
    n, h, w, c = x.shape
    ho, wo = h // 2, w // 2
    wp = w + 2
    wev, wod = (wp + 1) // 2, wp // 2
    xp = jnp.pad(x, ((0, 0), (1, 1), (1, 1), (0, 0)), constant_values=-jnp.inf)
    evs, ods = [], []
    for kh in range(3):
        ph = jax.lax.slice(xp, (0, kh, 0, 0),
                           (n, kh + 2 * (ho - 1) + 1, wp, c),
                           (1, 2, 1, 1))                         # (N, Ho, Wp, C)
        evs.append(ph[:, :, 0::2, :].reshape(n, ho, wev * c))
        ods.append(ph[:, :, 1::2, :].reshape(n, ho, wod * c))
    ev = jnp.concatenate(evs, axis=1)                            # (N, 3*Ho, Wev*C)
    od = jnp.concatenate(ods, axis=1)                            # (N, 3*Ho, Wod*C)
    out = pl.pallas_call(
        functools.partial(_maxpool_kernel, ho, wo, c),
        out_shape=jax.ShapeDtypeStruct((n, ho, wo * c), x.dtype),
        grid=(n,),
        in_specs=[pl.BlockSpec((1, 3 * ho, wev * c), lambda i: (i, 0, 0)),
                  pl.BlockSpec((1, 3 * ho, wod * c), lambda i: (i, 0, 0))],
        out_specs=pl.BlockSpec((1, ho, wo * c), lambda i: (i, 0, 0)),
        compiler_params=_COMPILER_PARAMS,
    )(ev, od)
    return out.reshape(n, ho, wo, c)


def basic_block(x, p, stride):
    """Fused BasicBlock: (1x1 downsample?) + 3x3 conv1 + 3x3 conv2 + residual
    add + ReLU in ONE pallas_call; the intermediate activation stays in VMEM."""
    n, h, w, cin = x.shape
    cout = p["conv1"]["w"].shape[-1]
    ho, wo = h // stride, w // stride
    wp = w + 2
    k1 = 3 * wp * cin
    woc = wo * cout

    w1_eff, b1v = _fold_bn_into_weight(p["conv1"])
    w1b = _banded_weight(w1_eff, stride, wp, wo, 0).astype(jnp.bfloat16)
    b1 = jnp.tile(b1v, wo).reshape(1, woc)

    w2_eff, b2v = _fold_bn_into_weight(p["conv2"])
    w2b = _banded_weight(w2_eff, 1, wo, wo, 1).astype(jnp.bfloat16)   # (3*WoC, WoC)
    b2 = jnp.tile(b2v, wo).reshape(1, woc)

    xph = _phase_stack(x, 3, stride, 1, ho).astype(jnp.bfloat16)      # (N, Ho, K1)

    has_ds = "downsample" in p
    args = [xph, w1b, b1, w2b, b2]
    in_specs = [
        pl.BlockSpec((1, ho, k1), lambda i: (i, 0, 0)),
        pl.BlockSpec((k1, woc), lambda i: (0, 0)),
        pl.BlockSpec((1, woc), lambda i: (0, 0)),
        pl.BlockSpec((3 * woc, woc), lambda i: (0, 0)),
        pl.BlockSpec((1, woc), lambda i: (0, 0)),
    ]
    if has_ds:
        wd_eff, bdv = _fold_bn_into_weight(p["downsample"])
        # 1x1/s conv expressed on the kh=1 phase of the conv1 input (pad_w=-1
        # undoes the W padding shift); embed it in the full K1 band.
        band_d = _banded_weight(wd_eff, stride, wp, wo, -1)           # (Wp*Cin, WoC)
        z = jnp.zeros_like(band_d)
        wdb = jnp.concatenate([z, band_d, z], axis=0).astype(jnp.bfloat16)
        bd = jnp.tile(bdv, wo).reshape(1, woc)
        args += [wdb, bd]
        in_specs += [pl.BlockSpec((k1, woc), lambda i: (0, 0)),
                     pl.BlockSpec((1, woc), lambda i: (0, 0))]
    else:
        args.append(x.reshape(n, h, w * cin))                          # identity
        in_specs.append(pl.BlockSpec((1, ho, woc), lambda i: (i, 0, 0)))

    out = pl.pallas_call(
        functools.partial(_block_kernel, has_ds, ho, woc),
        out_shape=jax.ShapeDtypeStruct((n, ho, woc), jnp.bfloat16),
        grid=(n,),
        in_specs=in_specs,
        out_specs=pl.BlockSpec((1, ho, woc), lambda i: (i, 0, 0)),
        scratch_shapes=[pltpu.VMEM((ho + 2, woc), jnp.float32)],
        compiler_params=_COMPILER_PARAMS,
    )(*args)
    return out.reshape(n, ho, wo, cout)


# ---------------------------------------------------------------------------
# Deterministic synthetic parameters (ResNet-18 topology, reduced width).
# Params hold ONLY arrays; strides / downsample topology is static Python.
# ---------------------------------------------------------------------------
def _folded_bn(key, c, eps=1e-5):
    k1, k2, k3, k4 = jax.random.split(key, 4)
    gamma = 1.0 + 0.1 * jax.random.normal(k1, (c,), jnp.float32)
    beta = 0.1 * jax.random.normal(k2, (c,), jnp.float32)
    mean = 0.1 * jax.random.normal(k3, (c,), jnp.float32)
    var = 1.0 + 0.1 * jnp.abs(jax.random.normal(k4, (c,), jnp.float32))
    scale = gamma / jnp.sqrt(var + eps)
    bias = beta - mean * scale
    return scale, bias


def make_conv_bn(key, kh, kw, cin, cout):
    wk, bnk = jax.random.split(key)
    fan_in = kh * kw * cin
    w = jax.random.normal(wk, (kh, kw, cin, cout), jnp.float32) / jnp.sqrt(fan_in)
    scale, bias = _folded_bn(bnk, cout)
    return {"w": w, "scale": scale, "bias": bias}


def make_basic_block(key, cin, cout, downsample):
    k1, k2, k3 = jax.random.split(key, 3)
    p = {"conv1": make_conv_bn(k1, 3, 3, cin, cout),
         "conv2": make_conv_bn(k2, 3, 3, cout, cout)}
    if downsample:
        p["downsample"] = make_conv_bn(k3, 1, 1, cin, cout)
    return p


def make_params(key, base=8, in_ch=3):
    ks = jax.random.split(key, 8)
    return {
        "conv1": make_conv_bn(ks[0], 7, 7, in_ch, base),
        "layer1": [make_basic_block(ks[1], base, base, False),
                   make_basic_block(ks[2], base, base, False)],
        "layer2": [make_basic_block(ks[3], base, 2 * base, True),
                   make_basic_block(ks[4], 2 * base, 2 * base, False)],
        "layer3": [make_basic_block(ks[5], 2 * base, 4 * base, True),
                   make_basic_block(ks[6], 4 * base, 4 * base, False)],
        "layer4_0": make_basic_block(ks[7], 4 * base, 8 * base, True),
    }


def conv5_extractor(x_nchw, params):
    """Forward pass matching Conv5Extractor: NCHW f32 in, NCHW f32 out."""
    x = jnp.transpose(x_nchw, (0, 2, 3, 1)).astype(jnp.bfloat16)   # NCHW -> NHWC
    x = stem_conv(x, params["conv1"])
    x = maxpool2d(x)
    for blk in params["layer1"]:
        x = basic_block(x, blk, stride=1)
    for blk, s in zip(params["layer2"], (2, 1)):
        x = basic_block(x, blk, s)
    for blk, s in zip(params["layer3"], (2, 1)):
        x = basic_block(x, blk, s)
    x = basic_block(x, params["layer4_0"], stride=2)
    return jnp.transpose(x, (0, 3, 1, 2)).astype(jnp.float32)      # NHWC -> NCHW


# ---------------------------------------------------------------------------
if __name__ == "__main__":
    key = jax.random.PRNGKey(0)
    pkey, xkey = jax.random.split(key)

    base = 8                                   # reduced ResNet-18 width (64 -> 8)
    params = make_params(pkey, base=base, in_ch=3)
    x = jax.random.normal(xkey, (2, 3, 64, 64), jnp.float32)       # NCHW input

    out = jax.jit(conv5_extractor)(x, params)
    out = jax.block_until_ready(out)

    assert out.shape == (2, 8 * base, 2, 2), out.shape
    assert bool(jnp.all(jnp.isfinite(out)))
    print("KERNEL_OK")
</pallas_src>

<mosaic_0001>
module attributes {stable_mosaic.version = 11 : i64} {
  func.func @_conv_relu_kernel(%arg0: i32, %arg1: memref<1x32x1470xbf16, #tpu.memory_space<vmem>>, %arg2: memref<1470x256xbf16, #tpu.memory_space<vmem>>, %arg3: memref<1x256xf32, #tpu.memory_space<vmem>>, %arg4: memref<1x32x256xbf16, #tpu.memory_space<vmem>>) attributes {dimension_semantics = [#tpu.dimension_semantics<parallel>], iteration_bounds = array<i64: 2>, scalar_prefetch = 0 : i64, scratch_operands = 0 : i64, tpu.core_type = #tpu.core_type<tc>, window_params = [{transform_indices = @transform_0, window_bounds = array<i64: 1, 32, 1470>}, {pipeline_mode = #tpu.pipeline_mode<synchronous>, transform_indices = @transform_1, window_bounds = array<i64: 1470, 256>}, {pipeline_mode = #tpu.pipeline_mode<synchronous>, transform_indices = @transform_2, window_bounds = array<i64: 1, 256>}, {transform_indices = @transform_3, window_bounds = array<i64: 1, 32, 256>}]} {
    %c0 = arith.constant 0 : index
    %c0_0 = arith.constant 0 : index
    %c0_1 = arith.constant 0 : index
    %0 = vector.load %arg1[%c0, %c0_0, %c0_1] : memref<1x32x1470xbf16, #tpu.memory_space<vmem>>, vector<1x32x1470xbf16>
    %1 = vector.shape_cast %0 : vector<1x32x1470xbf16> to vector<32x1470xbf16>
    %c0_2 = arith.constant 0 : index
    %c0_3 = arith.constant 0 : index
    %2 = vector.load %arg2[%c0_2, %c0_3] : memref<1470x256xbf16, #tpu.memory_space<vmem>>, vector<1470x256xbf16>
    %cst = arith.constant dense<0.000000e+00> : vector<32x256xf32>
    %3 = tpu.matmul %1, %2, %cst {dimension_numbers = #tpu.dot_dimension_numbers<[1], [0], [0], [1], [0, 0, 1, 1], [], []>} : vector<32x1470xbf16>, vector<1470x256xbf16>, vector<32x256xf32> -> vector<32x256xf32>
    %c0_4 = arith.constant 0 : index
    %c0_5 = arith.constant 0 : index
    %4 = vector.load %arg3[%c0_4, %c0_5] : memref<1x256xf32, #tpu.memory_space<vmem>>, vector<1x256xf32>
    %5 = vector.broadcast %4 : vector<1x256xf32> to vector<32x256xf32>
    %6 = arith.addf %3, %5 : vector<32x256xf32>
    %cst_6 = arith.constant 0.000000e+00 : f32
    %7 = vector.broadcast %cst_6 : f32 to vector<32x256xf32>
    %8 = arith.maximumf %6, %7 : vector<32x256xf32>
    %9 = arith.truncf %8 : vector<32x256xf32> to vector<32x256xbf16>
    %c0_7 = arith.constant 0 : index
    %c0_8 = arith.constant 0 : index
    %c0_9 = arith.constant 0 : index
    %10 = vector.load %arg4[%c0_7, %c0_8, %c0_9] : memref<1x32x256xbf16, #tpu.memory_space<vmem>>, vector<1x32x256xbf16>
    %11 = vector.shape_cast %10 : vector<1x32x256xbf16> to vector<32x256xbf16>
    %12 = vector.shape_cast %9 : vector<32x256xbf16> to vector<1x32x256xbf16>
    tpu.vector_store %arg4[%c0_7, %c0_8, %c0_9], %12 {strides = array<i32>} : memref<1x32x256xbf16, #tpu.memory_space<vmem>>, vector<1x32x256xbf16>,
    return
  }
  func.func @transform_0(%arg0: i32) -> (i32, i32, i32) {
    %c0_i32 = arith.constant 0 : i32
    %c0_i32_0 = arith.constant 0 : i32
    %c0_i32_1 = arith.constant 0 : i32
    return %arg0, %c0_i32, %c0_i32_0 : i32, i32, i32
  }
  func.func @transform_1(%arg0: i32) -> (i32, i32) {
    %c0_i32 = arith.constant 0 : i32
    %c0_i32_0 = arith.constant 0 : i32
    %c0_i32_1 = arith.constant 0 : i32
    return %c0_i32, %c0_i32_0 : i32, i32
  }
  func.func @transform_2(%arg0: i32) -> (i32, i32) {
    %c0_i32 = arith.constant 0 : i32
    %c0_i32_0 = arith.constant 0 : i32
    %c0_i32_1 = arith.constant 0 : i32
    return %c0_i32, %c0_i32_0 : i32, i32
  }
  func.func @transform_3(%arg0: i32) -> (i32, i32, i32) {
    %c0_i32 = arith.constant 0 : i32
    %c0_i32_0 = arith.constant 0 : i32
    %c0_i32_1 = arith.constant 0 : i32
    return %arg0, %c0_i32, %c0_i32_0 : i32, i32, i32
  }
}

module attributes {stable_mosaic.version = 11 : i64} {
  func.func @_maxpool_kernel(%arg0: i32, %arg1: memref<1x48x136xbf16, #tpu.memory_space<vmem>>, %arg2: memref<1x48x136xbf16, #tpu.memory_space<vmem>>, %arg3: memref<1x16x128xbf16, #tpu.memory_space<vmem>>) attributes {dimension_semantics = [#tpu.dimension_semantics<parallel>], iteration_bounds = array<i64: 2>, scalar_prefetch = 0 : i64, scratch_operands = 0 : i64, tpu.core_type = #tpu.core_type<tc>, window_params = [{transform_indices = @transform_0, window_bounds = array<i64: 1, 48, 136>}, {transform_indices = @transform_1, window_bounds = array<i64: 1, 48, 136>}, {transform_indices = @transform_2, window_bounds = array<i64: 1, 16, 128>}]} {
    %c0 = arith.constant 0 : index
    %c0_0 = arith.constant 0 : index
    %c0_1 = arith.constant 0 : index
    %0 = vector.load %arg1[%c0, %c0_0, %c0_1] : memref<1x48x136xbf16, #tpu.memory_space<vmem>>, vector<1x48x136xbf16>
    %1 = vector.shape_cast %0 : vector<1x48x136xbf16> to vector<48x136xbf16>
    %c0_2 = arith.constant 0 : index
    %c0_3 = arith.constant 0 : index
    %c0_4 = arith.constant 0 : index
    %2 = vector.load %arg2[%c0_2, %c0_3, %c0_4] : memref<1x48x136xbf16, #tpu.memory_space<vmem>>, vector<1x48x136xbf16>
    %3 = vector.shape_cast %2 : vector<1x48x136xbf16> to vector<48x136xbf16>
    %4 = vector.extract_strided_slice %1 {offsets = [0, 0], sizes = [16, 136], strides = [1, 1]} : vector<48x136xbf16> to vector<16x136xbf16>
    %5 = vector.extract_strided_slice %3 {offsets = [0, 0], sizes = [16, 136], strides = [1, 1]} : vector<48x136xbf16> to vector<16x136xbf16>
    %6 = vector.extract_strided_slice %4 {offsets = [0, 0], sizes = [16, 128], strides = [1, 1]} : vector<16x136xbf16> to vector<16x128xbf16>
    %7 = vector.extract_strided_slice %5 {offsets = [0, 0], sizes = [16, 128], strides = [1, 1]} : vector<16x136xbf16> to vector<16x128xbf16>
    %8 = arith.maximumf %6, %7 : vector<16x128xbf16>
    %9 = vector.extract_strided_slice %4 {offsets = [0, 8], sizes = [16, 128], strides = [1, 1]} : vector<16x136xbf16> to vector<16x128xbf16>
    %10 = arith.maximumf %8, %9 : vector<16x128xbf16>
    %11 = vector.extract_strided_slice %1 {offsets = [16, 0], sizes = [16, 136], strides = [1, 1]} : vector<48x136xbf16> to vector<16x136xbf16>
    %12 = vector.extract_strided_slice %3 {offsets = [16, 0], sizes = [16, 136], strides = [1, 1]} : vector<48x136xbf16> to vector<16x136xbf16>
    %13 = vector.extract_strided_slice %11 {offsets = [0, 0], sizes = [16, 128], strides = [1, 1]} : vector<16x136xbf16> to vector<16x128xbf16>
    %14 = vector.extract_strided_slice %12 {offsets = [0, 0], sizes = [16, 128], strides = [1, 1]} : vector<16x136xbf16> to vector<16x128xbf16>
    %15 = arith.maximumf %13, %14 : vector<16x128xbf16>
    %16 = vector.extract_strided_slice %11 {offsets = [0, 8], sizes = [16, 128], strides = [1, 1]} : vector<16x136xbf16> to vector<16x128xbf16>
    %17 = arith.maximumf %15, %16 : vector<16x128xbf16>
    %18 = arith.maximumf %10, %17 : vector<16x128xbf16>
    %19 = vector.extract_strided_slice %1 {offsets = [32, 0], sizes = [16, 136], strides = [1, 1]} : vector<48x136xbf16> to vector<16x136xbf16>
    %20 = vector.extract_strided_slice %3 {offsets = [32, 0], sizes = [16, 136], strides = [1, 1]} : vector<48x136xbf16> to vector<16x136xbf16>
    %21 = vector.extract_strided_slice %19 {offsets = [0, 0], sizes = [16, 128], strides = [1, 1]} : vector<16x136xbf16> to vector<16x128xbf16>
    %22 = vector.extract_strided_slice %20 {offsets = [0, 0], sizes = [16, 128], strides = [1, 1]} : vector<16x136xbf16> to vector<16x128xbf16>
    %23 = arith.maximumf %21, %22 : vector<16x128xbf16>
    %24 = vector.extract_strided_slice %19 {offsets = [0, 8], sizes = [16, 128], strides = [1, 1]} : vector<16x136xbf16> to vector<16x128xbf16>
    %25 = arith.maximumf %23, %24 : vector<16x128xbf16>
    %26 = arith.maximumf %18, %25 : vector<16x128xbf16>
    %c0_5 = arith.constant 0 : index
    %c0_6 = arith.constant 0 : index
    %c0_7 = arith.constant 0 : index
    %27 = vector.load %arg3[%c0_5, %c0_6, %c0_7] : memref<1x16x128xbf16, #tpu.memory_space<vmem>>, vector<1x16x128xbf16>
    %28 = vector.shape_cast %27 : vector<1x16x128xbf16> to vector<16x128xbf16>
    %29 = vector.shape_cast %26 : vector<16x128xbf16> to vector<1x16x128xbf16>
    tpu.vector_store %arg3[%c0_5, %c0_6, %c0_7], %29 {strides = array<i32>} : memref<1x16x128xbf16, #tpu.memory_space<vmem>>, vector<1x16x128xbf16>,
    return
  }
  func.func @transform_0(%arg0: i32) -> (i32, i32, i32) {
    %c0_i32 = arith.constant 0 : i32
    %c0_i32_0 = arith.constant 0 : i32
    %c0_i32_1 = arith.constant 0 : i32
    return %arg0, %c0_i32, %c0_i32_0 : i32, i32, i32
  }
  func.func @transform_1(%arg0: i32) -> (i32, i32, i32) {
    %c0_i32 = arith.constant 0 : i32
    %c0_i32_0 = arith.constant 0 : i32
    %c0_i32_1 = arith.constant 0 : i32
    return %arg0, %c0_i32, %c0_i32_0 : i32, i32, i32
  }
  func.func @transform_2(%arg0: i32) -> (i32, i32, i32) {
    %c0_i32 = arith.constant 0 : i32
    %c0_i32_0 = arith.constant 0 : i32
    %c0_i32_1 = arith.constant 0 : i32
    return %arg0, %c0_i32, %c0_i32_0 : i32, i32, i32
  }
}

module attributes {stable_mosaic.version = 11 : i64} {
  func.func @_block_kernel(%arg0: i32, %arg1: memref<1x16x432xbf16, #tpu.memory_space<vmem>>, %arg2: memref<432x128xbf16, #tpu.memory_space<vmem>>, %arg3: memref<1x128xf32, #tpu.memory_space<vmem>>, %arg4: memref<384x128xbf16, #tpu.memory_space<vmem>>, %arg5: memref<1x128xf32, #tpu.memory_space<vmem>>, %arg6: memref<1x16x128xbf16, #tpu.memory_space<vmem>>, %arg7: memref<1x16x128xbf16, #tpu.memory_space<vmem>>, %arg8: memref<18x128xf32, #tpu.memory_space<vmem>>) attributes {dimension_semantics = [#tpu.dimension_semantics<parallel>], iteration_bounds = array<i64: 2>, scalar_prefetch = 0 : i64, scratch_operands = 1 : i64, tpu.core_type = #tpu.core_type<tc>, window_params = [{transform_indices = @transform_0, window_bounds = array<i64: 1, 16, 432>}, {pipeline_mode = #tpu.pipeline_mode<synchronous>, transform_indices = @transform_1, window_bounds = array<i64: 432, 128>}, {pipeline_mode = #tpu.pipeline_mode<synchronous>, transform_indices = @transform_2, window_bounds = array<i64: 1, 128>}, {pipeline_mode = #tpu.pipeline_mode<synchronous>, transform_indices = @transform_3, window_bounds = array<i64: 384, 128>}, {pipeline_mode = #tpu.pipeline_mode<synchronous>, transform_indices = @transform_4, window_bounds = array<i64: 1, 128>}, {transform_indices = @transform_5, window_bounds = array<i64: 1, 16, 128>}, {transform_indices = @transform_6, window_bounds = array<i64: 1, 16, 128>}]} {
    %c0 = arith.constant 0 : index
    %c0_0 = arith.constant 0 : index
    %c0_1 = arith.constant 0 : index
    %0 = vector.load %arg1[%c0, %c0_0, %c0_1] : memref<1x16x432xbf16, #tpu.memory_space<vmem>>, vector<1x16x432xbf16>
    %1 = vector.shape_cast %0 : vector<1x16x432xbf16> to vector<16x432xbf16>
    %c0_2 = arith.constant 0 : index
    %c0_3 = arith.constant 0 : index
    %2 = vector.load %arg2[%c0_2, %c0_3] : memref<432x128xbf16, #tpu.memory_space<vmem>>, vector<432x128xbf16>
    %cst = arith.constant dense<0.000000e+00> : vector<16x128xf32>
    %3 = tpu.matmul %1, %2, %cst {dimension_numbers = #tpu.dot_dimension_numbers<[1], [0], [0], [1], [0, 0, 1, 1], [], []>} : vector<16x432xbf16>, vector<432x128xbf16>, vector<16x128xf32> -> vector<16x128xf32>
    %c0_4 = arith.constant 0 : index
    %c0_5 = arith.constant 0 : index
    %4 = vector.load %arg3[%c0_4, %c0_5] : memref<1x128xf32, #tpu.memory_space<vmem>>, vector<1x128xf32>
    %5 = vector.broadcast %4 : vector<1x128xf32> to vector<16x128xf32>
    %6 = arith.addf %3, %5 : vector<16x128xf32>
    %cst_6 = arith.constant 0.000000e+00 : f32
    %7 = vector.broadcast %cst_6 : f32 to vector<16x128xf32>
    %8 = arith.maximumf %6, %7 : vector<16x128xf32>
    %c0_7 = arith.constant 0 : index
    %c0_8 = arith.constant 0 : index
    %c0_9 = arith.constant 0 : index
    %9 = vector.load %arg6[%c0_7, %c0_8, %c0_9] : memref<1x16x128xbf16, #tpu.memory_space<vmem>>, vector<1x16x128xbf16>
    %10 = vector.shape_cast %9 : vector<1x16x128xbf16> to vector<16x128xbf16>
    %11 = arith.extf %10 : vector<16x128xbf16> to vector<16x128xf32>
    %cst_10 = arith.constant 0.000000e+00 : f32
    %12 = vector.broadcast %cst_10 : f32 to vector<18x128xf32>
    %c0_11 = arith.constant 0 : index
    %c0_12 = arith.constant 0 : index
    %13 = vector.load %arg8[%c0_11, %c0_12] : memref<18x128xf32, #tpu.memory_space<vmem>>, vector<18x128xf32>
    tpu.vector_store %arg8[%c0_11, %c0_12], %12 {strides = array<i32>} : memref<18x128xf32, #tpu.memory_space<vmem>>, vector<18x128xf32>,
    %c1 = arith.constant 1 : index
    %c0_13 = arith.constant 0 : index
    %14 = vector.load %arg8[%c1, %c0_13] : memref<18x128xf32, #tpu.memory_space<vmem>>, vector<16x128xf32>
    tpu.vector_store %arg8[%c1, %c0_13], %8 {strides = array<i32>} : memref<18x128xf32, #tpu.memory_space<vmem>>, vector<16x128xf32>,
    %c0_14 = arith.constant 0 : index
    %c0_15 = arith.constant 0 : index
    %15 = vector.load %arg5[%c0_14, %c0_15] : memref<1x128xf32, #tpu.memory_space<vmem>>, vector<1x128xf32>
    %16 = vector.broadcast %15 : vector<1x128xf32> to vector<16x128xf32>
    %17 = arith.addf %11, %16 : vector<16x128xf32>
    %c0_16 = arith.constant 0 : index
    %c0_17 = arith.constant 0 : index
    %18 = vector.load %arg8[%c0_16, %c0_17] : memref<18x128xf32, #tpu.memory_space<vmem>>, vector<16x128xf32>
    %19 = arith.truncf %18 : vector<16x128xf32> to vector<16x128xbf16>
    %c0_18 = arith.constant 0 : index
    %c0_19 = arith.constant 0 : index
    %20 = vector.load %arg4[%c0_18, %c0_19] : memref<384x128xbf16, #tpu.memory_space<vmem>>, vector<128x128xbf16>
    %cst_20 = arith.constant dense<0.000000e+00> : vector<16x128xf32>
    %21 = tpu.matmul %19, %20, %cst_20 {dimension_numbers = #tpu.dot_dimension_numbers<[1], [0], [0], [1], [0, 0, 1, 1], [], []>} : vector<16x128xbf16>, vector<128x128xbf16>, vector<16x128xf32> -> vector<16x128xf32>
    %22 = arith.addf %17, %21 : vector<16x128xf32>
    %c1_21 = arith.constant 1 : index
    %c0_22 = arith.constant 0 : index
    %23 = vector.load %arg8[%c1_21, %c0_22] : memref<18x128xf32, #tpu.memory_space<vmem>>, vector<16x128xf32>
    %24 = arith.truncf %23 : vector<16x128xf32> to vector<16x128xbf16>
    %c128 = arith.constant 128 : index
    %c0_23 = arith.constant 0 : index
    %25 = vector.load %arg4[%c128, %c0_23] : memref<384x128xbf16, #tpu.memory_space<vmem>>, vector<128x128xbf16>
    %cst_24 = arith.constant dense<0.000000e+00> : vector<16x128xf32>
    %26 = tpu.matmul %24, %25, %cst_24 {dimension_numbers = #tpu.dot_dimension_numbers<[1], [0], [0], [1], [0, 0, 1, 1], [], []>} : vector<16x128xbf16>, vector<128x128xbf16>, vector<16x128xf32> -> vector<16x128xf32>
    %27 = arith.addf %22, %26 : vector<16x128xf32>
    %c2 = arith.constant 2 : index
    %c0_25 = arith.constant 0 : index
    %28 = vector.load %arg8[%c2, %c0_25] : memref<18x128xf32, #tpu.memory_space<vmem>>, vector<16x128xf32>
    %29 = arith.truncf %28 : vector<16x128xf32> to vector<16x128xbf16>
    %c256 = arith.constant 256 : index
    %c0_26 = arith.constant 0 : index
    %30 = vector.load %arg4[%c256, %c0_26] : memref<384x128xbf16, #tpu.memory_space<vmem>>, vector<128x128xbf16>
    %cst_27 = arith.constant dense<0.000000e+00> : vector<16x128xf32>
    %31 = tpu.matmul %29, %30, %cst_27 {dimension_numbers = #tpu.dot_dimension_numbers<[1], [0], [0], [1], [0, 0, 1, 1], [], []>} : vector<16x128xbf16>, vector<128x128xbf16>, vector<16x128xf32> -> vector<16x128xf32>
    %32 = arith.addf %27, %31 : vector<16x128xf32>
    %cst_28 = arith.constant 0.000000e+00 : f32
    %33 = vector.broadcast %cst_28 : f32 to vector<16x128xf32>
    %34 = arith.maximumf %32, %33 : vector<16x128xf32>
    %35 = arith.truncf %34 : vector<16x128xf32> to vector<16x128xbf16>
    %c0_29 = arith.constant 0 : index
    %c0_30 = arith.constant 0 : index
    %c0_31 = arith.constant 0 : index
    %36 = vector.load %arg7[%c0_29, %c0_30, %c0_31] : memref<1x16x128xbf16, #tpu.memory_space<vmem>>, vector<1x16x128xbf16>
    %37 = vector.shape_cast %36 : vector<1x16x128xbf16> to vector<16x128xbf16>
    %38 = vector.shape_cast %35 : vector<16x128xbf16> to vector<1x16x128xbf16>
    tpu.vector_store %arg7[%c0_29, %c0_30, %c0_31], %38 {strides = array<i32>} : memref<1x16x128xbf16, #tpu.memory_space<vmem>>, vector<1x16x128xbf16>,
    return
  }
  func.func @transform_0(%arg0: i32) -> (i32, i32, i32) {
    %c0_i32 = arith.constant 0 : i32
    %c0_i32_0 = arith.constant 0 : i32
    %c0_i32_1 = arith.constant 0 : i32
    return %arg0, %c0_i32, %c0_i32_0 : i32, i32, i32
  }
  func.func @transform_1(%arg0: i32) -> (i32, i32) {
    %c0_i32 = arith.constant 0 : i32
    %c0_i32_0 = arith.constant 0 : i32
    %c0_i32_1 = arith.constant 0 : i32
    return %c0_i32, %c0_i32_0 : i32, i32
  }
  func.func @transform_2(%arg0: i32) -> (i32, i32) {
    %c0_i32 = arith.constant 0 : i32
    %c0_i32_0 = arith.constant 0 : i32
    %c0_i32_1 = arith.constant 0 : i32
    return %c0_i32, %c0_i32_0 : i32, i32
  }
  func.func @transform_3(%arg0: i32) -> (i32, i32) {
    %c0_i32 = arith.constant 0 : i32
    %c0_i32_0 = arith.constant 0 : i32
    %c0_i32_1 = arith.constant 0 : i32
    return %c0_i32, %c0_i32_0 : i32, i32
  }
  func.func @transform_4(%arg0: i32) -> (i32, i32) {
    %c0_i32 = arith.constant 0 : i32
    %c0_i32_0 = arith.constant 0 : i32
    %c0_i32_1 = arith.constant 0 : i32
    return %c0_i32, %c0_i32_0 : i32, i32
  }
  func.func @transform_5(%arg0: i32) -> (i32, i32, i32) {
    %c0_i32 = arith.constant 0 : i32
    %c0_i32_0 = arith.constant 0 : i32
    %c0_i32_1 = arith.constant 0 : i32
    return %arg0, %c0_i32, %c0_i32_0 : i32, i32, i32
  }
  func.func @transform_6(%arg0: i32) -> (i32, i32, i32) {
    %c0_i32 = arith.constant 0 : i32
    %c0_i32_0 = arith.constant 0 : i32
    %c0_i32_1 = arith.constant 0 : i32
    return %arg0, %c0_i32, %c0_i32_0 : i32, i32, i32
  }
}

module attributes {stable_mosaic.version = 11 : i64} {
  func.func @_block_kernel(%arg0: i32, %arg1: memref<1x8x432xbf16, #tpu.memory_space<vmem>>, %arg2: memref<432x128xbf16, #tpu.memory_space<vmem>>, %arg3: memref<1x128xf32, #tpu.memory_space<vmem>>, %arg4: memref<384x128xbf16, #tpu.memory_space<vmem>>, %arg5: memref<1x128xf32, #tpu.memory_space<vmem>>, %arg6: memref<432x128xbf16, #tpu.memory_space<vmem>>, %arg7: memref<1x128xf32, #tpu.memory_space<vmem>>, %arg8: memref<1x8x128xbf16, #tpu.memory_space<vmem>>, %arg9: memref<10x128xf32, #tpu.memory_space<vmem>>) attributes {dimension_semantics = [#tpu.dimension_semantics<parallel>], iteration_bounds = array<i64: 2>, scalar_prefetch = 0 : i64, scratch_operands = 1 : i64, tpu.core_type = #tpu.core_type<tc>, window_params = [{transform_indices = @transform_0, window_bounds = array<i64: 1, 8, 432>}, {pipeline_mode = #tpu.pipeline_mode<synchronous>, transform_indices = @transform_1, window_bounds = array<i64: 432, 128>}, {pipeline_mode = #tpu.pipeline_mode<synchronous>, transform_indices = @transform_2, window_bounds = array<i64: 1, 128>}, {pipeline_mode = #tpu.pipeline_mode<synchronous>, transform_indices = @transform_3, window_bounds = array<i64: 384, 128>}, {pipeline_mode = #tpu.pipeline_mode<synchronous>, transform_indices = @transform_4, window_bounds = array<i64: 1, 128>}, {pipeline_mode = #tpu.pipeline_mode<synchronous>, transform_indices = @transform_5, window_bounds = array<i64: 432, 128>}, {pipeline_mode = #tpu.pipeline_mode<synchronous>, transform_indices = @transform_6, window_bounds = array<i64: 1, 128>}, {transform_indices = @transform_7, window_bounds = array<i64: 1, 8, 128>}]} {
    %c0 = arith.constant 0 : index
    %c0_0 = arith.constant 0 : index
    %c0_1 = arith.constant 0 : index
    %0 = vector.load %arg1[%c0, %c0_0, %c0_1] : memref<1x8x432xbf16, #tpu.memory_space<vmem>>, vector<1x8x432xbf16>
    %1 = vector.shape_cast %0 : vector<1x8x432xbf16> to vector<8x432xbf16>
    %c0_2 = arith.constant 0 : index
    %c0_3 = arith.constant 0 : index
    %2 = vector.load %arg2[%c0_2, %c0_3] : memref<432x128xbf16, #tpu.memory_space<vmem>>, vector<432x128xbf16>
    %cst = arith.constant dense<0.000000e+00> : vector<8x128xf32>
    %3 = tpu.matmul %1, %2, %cst {dimension_numbers = #tpu.dot_dimension_numbers<[1], [0], [0], [1], [0, 0, 1, 1], [], []>} : vector<8x432xbf16>, vector<432x128xbf16>, vector<8x128xf32> -> vector<8x128xf32>
    %c0_4 = arith.constant 0 : index
    %c0_5 = arith.constant 0 : index
    %4 = vector.load %arg3[%c0_4, %c0_5] : memref<1x128xf32, #tpu.memory_space<vmem>>, vector<1x128xf32>
    %5 = vector.broadcast %4 : vector<1x128xf32> to vector<8x128xf32>
    %6 = arith.addf %3, %5 : vector<8x128xf32>
    %cst_6 = arith.constant 0.000000e+00 : f32
    %7 = vector.broadcast %cst_6 : f32 to vector<8x128xf32>
    %8 = arith.maximumf %6, %7 : vector<8x128xf32>
    %c0_7 = arith.constant 0 : index
    %c0_8 = arith.constant 0 : index
    %9 = vector.load %arg6[%c0_7, %c0_8] : memref<432x128xbf16, #tpu.memory_space<vmem>>, vector<432x128xbf16>
    %cst_9 = arith.constant dense<0.000000e+00> : vector<8x128xf32>
    %10 = tpu.matmul %1, %9, %cst_9 {dimension_numbers = #tpu.dot_dimension_numbers<[1], [0], [0], [1], [0, 0, 1, 1], [], []>} : vector<8x432xbf16>, vector<432x128xbf16>, vector<8x128xf32> -> vector<8x128xf32>
    %c0_10 = arith.constant 0 : index
    %c0_11 = arith.constant 0 : index
    %11 = vector.load %arg7[%c0_10, %c0_11] : memref<1x128xf32, #tpu.memory_space<vmem>>, vector<1x128xf32>
    %12 = vector.broadcast %11 : vector<1x128xf32> to vector<8x128xf32>
    %13 = arith.addf %10, %12 : vector<8x128xf32>
    %cst_12 = arith.constant 0.000000e+00 : f32
    %14 = vector.broadcast %cst_12 : f32 to vector<10x128xf32>
    %c0_13 = arith.constant 0 : index
    %c0_14 = arith.constant 0 : index
    %15 = vector.load %arg9[%c0_13, %c0_14] : memref<10x128xf32, #tpu.memory_space<vmem>>, vector<10x128xf32>
    tpu.vector_store %arg9[%c0_13, %c0_14], %14 {strides = array<i32>} : memref<10x128xf32, #tpu.memory_space<vmem>>, vector<10x128xf32>,
    %c1 = arith.constant 1 : index
    %c0_15 = arith.constant 0 : index
    %16 = vector.load %arg9[%c1, %c0_15] : memref<10x128xf32, #tpu.memory_space<vmem>>, vector<8x128xf32>
    tpu.vector_store %arg9[%c1, %c0_15], %8 {strides = array<i32>} : memref<10x128xf32, #tpu.memory_space<vmem>>, vector<8x128xf32>,
    %c0_16 = arith.constant 0 : index
    %c0_17 = arith.constant 0 : index
    %17 = vector.load %arg5[%c0_16, %c0_17] : memref<1x128xf32, #tpu.memory_space<vmem>>, vector<1x128xf32>
    %18 = vector.broadcast %17 : vector<1x128xf32> to vector<8x128xf32>
    %19 = arith.addf %13, %18 : vector<8x128xf32>
    %c0_18 = arith.constant 0 : index
    %c0_19 = arith.constant 0 : index
    %20 = vector.load %arg9[%c0_18, %c0_19] : memref<10x128xf32, #tpu.memory_space<vmem>>, vector<8x128xf32>
    %21 = arith.truncf %20 : vector<8x128xf32> to vector<8x128xbf16>
    %c0_20 = arith.constant 0 : index
    %c0_21 = arith.constant 0 : index
    %22 = vector.load %arg4[%c0_20, %c0_21] : memref<384x128xbf16, #tpu.memory_space<vmem>>, vector<128x128xbf16>
    %cst_22 = arith.constant dense<0.000000e+00> : vector<8x128xf32>
    %23 = tpu.matmul %21, %22, %cst_22 {dimension_numbers = #tpu.dot_dimension_numbers<[1], [0], [0], [1], [0, 0, 1, 1], [], []>} : vector<8x128xbf16>, vector<128x128xbf16>, vector<8x128xf32> -> vector<8x128xf32>
    %24 = arith.addf %19, %23 : vector<8x128xf32>
    %c1_23 = arith.constant 1 : index
    %c0_24 = arith.constant 0 : index
    %25 = vector.load %arg9[%c1_23, %c0_24] : memref<10x128xf32, #tpu.memory_space<vmem>>, vector<8x128xf32>
    %26 = arith.truncf %25 : vector<8x128xf32> to vector<8x128xbf16>
    %c128 = arith.constant 128 : index
    %c0_25 = arith.constant 0 : index
    %27 = vector.load %arg4[%c128, %c0_25] : memref<384x128xbf16, #tpu.memory_space<vmem>>, vector<128x128xbf16>
    %cst_26 = arith.constant dense<0.000000e+00> : vector<8x128xf32>
    %28 = tpu.matmul %26, %27, %cst_26 {dimension_numbers = #tpu.dot_dimension_numbers<[1], [0], [0], [1], [0, 0, 1, 1], [], []>} : vector<8x128xbf16>, vector<128x128xbf16>, vector<8x128xf32> -> vector<8x128xf32>
    %29 = arith.addf %24, %28 : vector<8x128xf32>
    %c2 = arith.constant 2 : index
    %c0_27 = arith.constant 0 : index
    %30 = vector.load %arg9[%c2, %c0_27] : memref<10x128xf32, #tpu.memory_space<vmem>>, vector<8x128xf32>
    %31 = arith.truncf %30 : vector<8x128xf32> to vector<8x128xbf16>
    %c256 = arith.constant 256 : index
    %c0_28 = arith.constant 0 : index
    %32 = vector.load %arg4[%c256, %c0_28] : memref<384x128xbf16, #tpu.memory_space<vmem>>, vector<128x128xbf16>
    %cst_29 = arith.constant dense<0.000000e+00> : vector<8x128xf32>
    %33 = tpu.matmul %31, %32, %cst_29 {dimension_numbers = #tpu.dot_dimension_numbers<[1], [0], [0], [1], [0, 0, 1, 1], [], []>} : vector<8x128xbf16>, vector<128x128xbf16>, vector<8x128xf32> -> vector<8x128xf32>
    %34 = arith.addf %29, %33 : vector<8x128xf32>
    %cst_30 = arith.constant 0.000000e+00 : f32
    %35 = vector.broadcast %cst_30 : f32 to vector<8x128xf32>
    %36 = arith.maximumf %34, %35 : vector<8x128xf32>
    %37 = arith.truncf %36 : vector<8x128xf32> to vector<8x128xbf16>
    %c0_31 = arith.constant 0 : index
    %c0_32 = arith.constant 0 : index
    %c0_33 = arith.constant 0 : index
    %38 = vector.load %arg8[%c0_31, %c0_32, %c0_33] : memref<1x8x128xbf16, #tpu.memory_space<vmem>>, vector<1x8x128xbf16>
    %39 = vector.shape_cast %38 : vector<1x8x128xbf16> to vector<8x128xbf16>
    %40 = vector.shape_cast %37 : vector<8x128xbf16> to vector<1x8x128xbf16>
    tpu.vector_store %arg8[%c0_31, %c0_32, %c0_33], %40 {strides = array<i32>} : memref<1x8x128xbf16, #tpu.memory_space<vmem>>, vector<1x8x128xbf16>,
    return
  }
  func.func @transform_0(%arg0: i32) -> (i32, i32, i32) {
    %c0_i32 = arith.constant 0 : i32
    %c0_i32_0 = arith.constant 0 : i32
    %c0_i32_1 = arith.constant 0 : i32
    return %arg0, %c0_i32, %c0_i32_0 : i32, i32, i32
  }
  func.func @transform_1(%arg0: i32) -> (i32, i32) {
    %c0_i32 = arith.constant 0 : i32
    %c0_i32_0 = arith.constant 0 : i32
    %c0_i32_1 = arith.constant 0 : i32
    return %c0_i32, %c0_i32_0 : i32, i32
  }
  func.func @transform_2(%arg0: i32) -> (i32, i32) {
    %c0_i32 = arith.constant 0 : i32
    %c0_i32_0 = arith.constant 0 : i32
    %c0_i32_1 = arith.constant 0 : i32
    return %c0_i32, %c0_i32_0 : i32, i32
  }
  func.func @transform_3(%arg0: i32) -> (i32, i32) {
    %c0_i32 = arith.constant 0 : i32
    %c0_i32_0 = arith.constant 0 : i32
    %c0_i32_1 = arith.constant 0 : i32
    return %c0_i32, %c0_i32_0 : i32, i32
  }
  func.func @transform_4(%arg0: i32) -> (i32, i32) {
    %c0_i32 = arith.constant 0 : i32
    %c0_i32_0 = arith.constant 0 : i32
    %c0_i32_1 = arith.constant 0 : i32
    return %c0_i32, %c0_i32_0 : i32, i32
  }
  func.func @transform_5(%arg0: i32) -> (i32, i32) {
    %c0_i32 = arith.constant 0 : i32
    %c0_i32_0 = arith.constant 0 : i32
    %c0_i32_1 = arith.constant 0 : i32
    return %c0_i32, %c0_i32_0 : i32, i32
  }
  func.func @transform_6(%arg0: i32) -> (i32, i32) {
    %c0_i32 = arith.constant 0 : i32
    %c0_i32_0 = arith.constant 0 : i32
    %c0_i32_1 = arith.constant 0 : i32
    return %c0_i32, %c0_i32_0 : i32, i32
  }
  func.func @transform_7(%arg0: i32) -> (i32, i32, i32) {
    %c0_i32 = arith.constant 0 : i32
    %c0_i32_0 = arith.constant 0 : i32
    %c0_i32_1 = arith.constant 0 : i32
    return %arg0, %c0_i32, %c0_i32_0 : i32, i32, i32
  }
}

module attributes {stable_mosaic.version = 11 : i64} {
  func.func @_block_kernel(%arg0: i32, %arg1: memref<1x8x480xbf16, #tpu.memory_space<vmem>>, %arg2: memref<480x128xbf16, #tpu.memory_space<vmem>>, %arg3: memref<1x128xf32, #tpu.memory_space<vmem>>, %arg4: memref<384x128xbf16, #tpu.memory_space<vmem>>, %arg5: memref<1x128xf32, #tpu.memory_space<vmem>>, %arg6: memref<1x8x128xbf16, #tpu.memory_space<vmem>>, %arg7: memref<1x8x128xbf16, #tpu.memory_space<vmem>>, %arg8: memref<10x128xf32, #tpu.memory_space<vmem>>) attributes {dimension_semantics = [#tpu.dimension_semantics<parallel>], iteration_bounds = array<i64: 2>, scalar_prefetch = 0 : i64, scratch_operands = 1 : i64, tpu.core_type = #tpu.core_type<tc>, window_params = [{transform_indices = @transform_0, window_bounds = array<i64: 1, 8, 480>}, {pipeline_mode = #tpu.pipeline_mode<synchronous>, transform_indices = @transform_1, window_bounds = array<i64: 480, 128>}, {pipeline_mode = #tpu.pipeline_mode<synchronous>, transform_indices = @transform_2, window_bounds = array<i64: 1, 128>}, {pipeline_mode = #tpu.pipeline_mode<synchronous>, transform_indices = @transform_3, window_bounds = array<i64: 384, 128>}, {pipeline_mode = #tpu.pipeline_mode<synchronous>, transform_indices = @transform_4, window_bounds = array<i64: 1, 128>}, {transform_indices = @transform_5, window_bounds = array<i64: 1, 8, 128>}, {transform_indices = @transform_6, window_bounds = array<i64: 1, 8, 128>}]} {
    %c0 = arith.constant 0 : index
    %c0_0 = arith.constant 0 : index
    %c0_1 = arith.constant 0 : index
    %0 = vector.load %arg1[%c0, %c0_0, %c0_1] : memref<1x8x480xbf16, #tpu.memory_space<vmem>>, vector<1x8x480xbf16>
    %1 = vector.shape_cast %0 : vector<1x8x480xbf16> to vector<8x480xbf16>
    %c0_2 = arith.constant 0 : index
    %c0_3 = arith.constant 0 : index
    %2 = vector.load %arg2[%c0_2, %c0_3] : memref<480x128xbf16, #tpu.memory_space<vmem>>, vector<480x128xbf16>
    %cst = arith.constant dense<0.000000e+00> : vector<8x128xf32>
    %3 = tpu.matmul %1, %2, %cst {dimension_numbers = #tpu.dot_dimension_numbers<[1], [0], [0], [1], [0, 0, 1, 1], [], []>} : vector<8x480xbf16>, vector<480x128xbf16>, vector<8x128xf32> -> vector<8x128xf32>
    %c0_4 = arith.constant 0 : index
    %c0_5 = arith.constant 0 : index
    %4 = vector.load %arg3[%c0_4, %c0_5] : memref<1x128xf32, #tpu.memory_space<vmem>>, vector<1x128xf32>
    %5 = vector.broadcast %4 : vector<1x128xf32> to vector<8x128xf32>
    %6 = arith.addf %3, %5 : vector<8x128xf32>
    %cst_6 = arith.constant 0.000000e+00 : f32
    %7 = vector.broadcast %cst_6 : f32 to vector<8x128xf32>
    %8 = arith.maximumf %6, %7 : vector<8x128xf32>
    %c0_7 = arith.constant 0 : index
    %c0_8 = arith.constant 0 : index
    %c0_9 = arith.constant 0 : index
    %9 = vector.load %arg6[%c0_7, %c0_8, %c0_9] : memref<1x8x128xbf16, #tpu.memory_space<vmem>>, vector<1x8x128xbf16>
    %10 = vector.shape_cast %9 : vector<1x8x128xbf16> to vector<8x128xbf16>
    %11 = arith.extf %10 : vector<8x128xbf16> to vector<8x128xf32>
    %cst_10 = arith.constant 0.000000e+00 : f32
    %12 = vector.broadcast %cst_10 : f32 to vector<10x128xf32>
    %c0_11 = arith.constant 0 : index
    %c0_12 = arith.constant 0 : index
    %13 = vector.load %arg8[%c0_11, %c0_12] : memref<10x128xf32, #tpu.memory_space<vmem>>, vector<10x128xf32>
    tpu.vector_store %arg8[%c0_11, %c0_12], %12 {strides = array<i32>} : memref<10x128xf32, #tpu.memory_space<vmem>>, vector<10x128xf32>,
    %c1 = arith.constant 1 : index
    %c0_13 = arith.constant 0 : index
    %14 = vector.load %arg8[%c1, %c0_13] : memref<10x128xf32, #tpu.memory_space<vmem>>, vector<8x128xf32>
    tpu.vector_store %arg8[%c1, %c0_13], %8 {strides = array<i32>} : memref<10x128xf32, #tpu.memory_space<vmem>>, vector<8x128xf32>,
    %c0_14 = arith.constant 0 : index
    %c0_15 = arith.constant 0 : index
    %15 = vector.load %arg5[%c0_14, %c0_15] : memref<1x128xf32, #tpu.memory_space<vmem>>, vector<1x128xf32>
    %16 = vector.broadcast %15 : vector<1x128xf32> to vector<8x128xf32>
    %17 = arith.addf %11, %16 : vector<8x128xf32>
    %c0_16 = arith.constant 0 : index
    %c0_17 = arith.constant 0 : index
    %18 = vector.load %arg8[%c0_16, %c0_17] : memref<10x128xf32, #tpu.memory_space<vmem>>, vector<8x128xf32>
    %19 = arith.truncf %18 : vector<8x128xf32> to vector<8x128xbf16>
    %c0_18 = arith.constant 0 : index
    %c0_19 = arith.constant 0 : index
    %20 = vector.load %arg4[%c0_18, %c0_19] : memref<384x128xbf16, #tpu.memory_space<vmem>>, vector<128x128xbf16>
    %cst_20 = arith.constant dense<0.000000e+00> : vector<8x128xf32>
    %21 = tpu.matmul %19, %20, %cst_20 {dimension_numbers = #tpu.dot_dimension_numbers<[1], [0], [0], [1], [0, 0, 1, 1], [], []>} : vector<8x128xbf16>, vector<128x128xbf16>, vector<8x128xf32> -> vector<8x128xf32>
    %22 = arith.addf %17, %21 : vector<8x128xf32>
    %c1_21 = arith.constant 1 : index
    %c0_22 = arith.constant 0 : index
    %23 = vector.load %arg8[%c1_21, %c0_22] : memref<10x128xf32, #tpu.memory_space<vmem>>, vector<8x128xf32>
    %24 = arith.truncf %23 : vector<8x128xf32> to vector<8x128xbf16>
    %c128 = arith.constant 128 : index
    %c0_23 = arith.constant 0 : index
    %25 = vector.load %arg4[%c128, %c0_23] : memref<384x128xbf16, #tpu.memory_space<vmem>>, vector<128x128xbf16>
    %cst_24 = arith.constant dense<0.000000e+00> : vector<8x128xf32>
    %26 = tpu.matmul %24, %25, %cst_24 {dimension_numbers = #tpu.dot_dimension_numbers<[1], [0], [0], [1], [0, 0, 1, 1], [], []>} : vector<8x128xbf16>, vector<128x128xbf16>, vector<8x128xf32> -> vector<8x128xf32>
    %27 = arith.addf %22, %26 : vector<8x128xf32>
    %c2 = arith.constant 2 : index
    %c0_25 = arith.constant 0 : index
    %28 = vector.load %arg8[%c2, %c0_25] : memref<10x128xf32, #tpu.memory_space<vmem>>, vector<8x128xf32>
    %29 = arith.truncf %28 : vector<8x128xf32> to vector<8x128xbf16>
    %c256 = arith.constant 256 : index
    %c0_26 = arith.constant 0 : index
    %30 = vector.load %arg4[%c256, %c0_26] : memref<384x128xbf16, #tpu.memory_space<vmem>>, vector<128x128xbf16>
    %cst_27 = arith.constant dense<0.000000e+00> : vector<8x128xf32>
    %31 = tpu.matmul %29, %30, %cst_27 {dimension_numbers = #tpu.dot_dimension_numbers<[1], [0], [0], [1], [0, 0, 1, 1], [], []>} : vector<8x128xbf16>, vector<128x128xbf16>, vector<8x128xf32> -> vector<8x128xf32>
    %32 = arith.addf %27, %31 : vector<8x128xf32>
    %cst_28 = arith.constant 0.000000e+00 : f32
    %33 = vector.broadcast %cst_28 : f32 to vector<8x128xf32>
    %34 = arith.maximumf %32, %33 : vector<8x128xf32>
    %35 = arith.truncf %34 : vector<8x128xf32> to vector<8x128xbf16>
    %c0_29 = arith.constant 0 : index
    %c0_30 = arith.constant 0 : index
    %c0_31 = arith.constant 0 : index
    %36 = vector.load %arg7[%c0_29, %c0_30, %c0_31] : memref<1x8x128xbf16, #tpu.memory_space<vmem>>, vector<1x8x128xbf16>
    %37 = vector.shape_cast %36 : vector<1x8x128xbf16> to vector<8x128xbf16>
    %38 = vector.shape_cast %35 : vector<8x128xbf16> to vector<1x8x128xbf16>
    tpu.vector_store %arg7[%c0_29, %c0_30, %c0_31], %38 {strides = array<i32>} : memref<1x8x128xbf16, #tpu.memory_space<vmem>>, vector<1x8x128xbf16>,
    return
  }
  func.func @transform_0(%arg0: i32) -> (i32, i32, i32) {
    %c0_i32 = arith.constant 0 : i32
    %c0_i32_0 = arith.constant 0 : i32
    %c0_i32_1 = arith.constant 0 : i32
    return %arg0, %c0_i32, %c0_i32_0 : i32, i32, i32
  }
  func.func @transform_1(%arg0: i32) -> (i32, i32) {
    %c0_i32 = arith.constant 0 : i32
    %c0_i32_0 = arith.constant 0 : i32
    %c0_i32_1 = arith.constant 0 : i32
    return %c0_i32, %c0_i32_0 : i32, i32
  }
  func.func @transform_2(%arg0: i32) -> (i32, i32) {
    %c0_i32 = arith.constant 0 : i32
    %c0_i32_0 = arith.constant 0 : i32
    %c0_i32_1 = arith.constant 0 : i32
    return %c0_i32, %c0_i32_0 : i32, i32
  }
  func.func @transform_3(%arg0: i32) -> (i32, i32) {
    %c0_i32 = arith.constant 0 : i32
    %c0_i32_0 = arith.constant 0 : i32
    %c0_i32_1 = arith.constant 0 : i32
    return %c0_i32, %c0_i32_0 : i32, i32
  }
  func.func @transform_4(%arg0: i32) -> (i32, i32) {
    %c0_i32 = arith.constant 0 : i32
    %c0_i32_0 = arith.constant 0 : i32
    %c0_i32_1 = arith.constant 0 : i32
    return %c0_i32, %c0_i32_0 : i32, i32
  }
  func.func @transform_5(%arg0: i32) -> (i32, i32, i32) {
    %c0_i32 = arith.constant 0 : i32
    %c0_i32_0 = arith.constant 0 : i32
    %c0_i32_1 = arith.constant 0 : i32
    return %arg0, %c0_i32, %c0_i32_0 : i32, i32, i32
  }
  func.func @transform_6(%arg0: i32) -> (i32, i32, i32) {
    %c0_i32 = arith.constant 0 : i32
    %c0_i32_0 = arith.constant 0 : i32
    %c0_i32_1 = arith.constant 0 : i32
    return %arg0, %c0_i32, %c0_i32_0 : i32, i32, i32
  }
}

module attributes {stable_mosaic.version = 11 : i64} {
  func.func @_block_kernel(%arg0: i32, %arg1: memref<1x4x480xbf16, #tpu.memory_space<vmem>>, %arg2: memref<480x128xbf16, #tpu.memory_space<vmem>>, %arg3: memref<1x128xf32, #tpu.memory_space<vmem>>, %arg4: memref<384x128xbf16, #tpu.memory_space<vmem>>, %arg5: memref<1x128xf32, #tpu.memory_space<vmem>>, %arg6: memref<480x128xbf16, #tpu.memory_space<vmem>>, %arg7: memref<1x128xf32, #tpu.memory_space<vmem>>, %arg8: memref<1x4x128xbf16, #tpu.memory_space<vmem>>, %arg9: memref<6x128xf32, #tpu.memory_space<vmem>>) attributes {dimension_semantics = [#tpu.dimension_semantics<parallel>], iteration_bounds = array<i64: 2>, scalar_prefetch = 0 : i64, scratch_operands = 1 : i64, tpu.core_type = #tpu.core_type<tc>, window_params = [{transform_indices = @transform_0, window_bounds = array<i64: 1, 4, 480>}, {pipeline_mode = #tpu.pipeline_mode<synchronous>, transform_indices = @transform_1, window_bounds = array<i64: 480, 128>}, {pipeline_mode = #tpu.pipeline_mode<synchronous>, transform_indices = @transform_2, window_bounds = array<i64: 1, 128>}, {pipeline_mode = #tpu.pipeline_mode<synchronous>, transform_indices = @transform_3, window_bounds = array<i64: 384, 128>}, {pipeline_mode = #tpu.pipeline_mode<synchronous>, transform_indices = @transform_4, window_bounds = array<i64: 1, 128>}, {pipeline_mode = #tpu.pipeline_mode<synchronous>, transform_indices = @transform_5, window_bounds = array<i64: 480, 128>}, {pipeline_mode = #tpu.pipeline_mode<synchronous>, transform_indices = @transform_6, window_bounds = array<i64: 1, 128>}, {transform_indices = @transform_7, window_bounds = array<i64: 1, 4, 128>}]} {
    %c0 = arith.constant 0 : index
    %c0_0 = arith.constant 0 : index
    %c0_1 = arith.constant 0 : index
    %0 = vector.load %arg1[%c0, %c0_0, %c0_1] : memref<1x4x480xbf16, #tpu.memory_space<vmem>>, vector<1x4x480xbf16>
    %1 = vector.shape_cast %0 : vector<1x4x480xbf16> to vector<4x480xbf16>
    %c0_2 = arith.constant 0 : index
    %c0_3 = arith.constant 0 : index
    %2 = vector.load %arg2[%c0_2, %c0_3] : memref<480x128xbf16, #tpu.memory_space<vmem>>, vector<480x128xbf16>
    %cst = arith.constant dense<0.000000e+00> : vector<4x128xf32>
    %3 = tpu.matmul %1, %2, %cst {dimension_numbers = #tpu.dot_dimension_numbers<[1], [0], [0], [1], [0, 0, 1, 1], [], []>} : vector<4x480xbf16>, vector<480x128xbf16>, vector<4x128xf32> -> vector<4x128xf32>
    %c0_4 = arith.constant 0 : index
    %c0_5 = arith.constant 0 : index
    %4 = vector.load %arg3[%c0_4, %c0_5] : memref<1x128xf32, #tpu.memory_space<vmem>>, vector<1x128xf32>
    %5 = vector.broadcast %4 : vector<1x128xf32> to vector<4x128xf32>
    %6 = arith.addf %3, %5 : vector<4x128xf32>
    %cst_6 = arith.constant 0.000000e+00 : f32
    %7 = vector.broadcast %cst_6 : f32 to vector<4x128xf32>
    %8 = arith.maximumf %6, %7 : vector<4x128xf32>
    %c0_7 = arith.constant 0 : index
    %c0_8 = arith.constant 0 : index
    %9 = vector.load %arg6[%c0_7, %c0_8] : memref<480x128xbf16, #tpu.memory_space<vmem>>, vector<480x128xbf16>
    %cst_9 = arith.constant dense<0.000000e+00> : vector<4x128xf32>
    %10 = tpu.matmul %1, %9, %cst_9 {dimension_numbers = #tpu.dot_dimension_numbers<[1], [0], [0], [1], [0, 0, 1, 1], [], []>} : vector<4x480xbf16>, vector<480x128xbf16>, vector<4x128xf32> -> vector<4x128xf32>
    %c0_10 = arith.constant 0 : index
    %c0_11 = arith.constant 0 : index
    %11 = vector.load %arg7[%c0_10, %c0_11] : memref<1x128xf32, #tpu.memory_space<vmem>>, vector<1x128xf32>
    %12 = vector.broadcast %11 : vector<1x128xf32> to vector<4x128xf32>
    %13 = arith.addf %10, %12 : vector<4x128xf32>
    %cst_12 = arith.constant 0.000000e+00 : f32
    %14 = vector.broadcast %cst_12 : f32 to vector<6x128xf32>
    %c0_13 = arith.constant 0 : index
    %c0_14 = arith.constant 0 : index
    %15 = vector.load %arg9[%c0_13, %c0_14] : memref<6x128xf32, #tpu.memory_space<vmem>>, vector<6x128xf32>
    tpu.vector_store %arg9[%c0_13, %c0_14], %14 {strides = array<i32>} : memref<6x128xf32, #tpu.memory_space<vmem>>, vector<6x128xf32>,
    %c1 = arith.constant 1 : index
    %c0_15 = arith.constant 0 : index
    %16 = vector.load %arg9[%c1, %c0_15] : memref<6x128xf32, #tpu.memory_space<vmem>>, vector<4x128xf32>
    tpu.vector_store %arg9[%c1, %c0_15], %8 {strides = array<i32>} : memref<6x128xf32, #tpu.memory_space<vmem>>, vector<4x128xf32>,
    %c0_16 = arith.constant 0 : index
    %c0_17 = arith.constant 0 : index
    %17 = vector.load %arg5[%c0_16, %c0_17] : memref<1x128xf32, #tpu.memory_space<vmem>>, vector<1x128xf32>
    %18 = vector.broadcast %17 : vector<1x128xf32> to vector<4x128xf32>
    %19 = arith.addf %13, %18 : vector<4x128xf32>
    %c0_18 = arith.constant 0 : index
    %c0_19 = arith.constant 0 : index
    %20 = vector.load %arg9[%c0_18, %c0_19] : memref<6x128xf32, #tpu.memory_space<vmem>>, vector<4x128xf32>
    %21 = arith.truncf %20 : vector<4x128xf32> to vector<4x128xbf16>
    %c0_20 = arith.constant 0 : index
    %c0_21 = arith.constant 0 : index
    %22 = vector.load %arg4[%c0_20, %c0_21] : memref<384x128xbf16, #tpu.memory_space<vmem>>, vector<128x128xbf16>
    %cst_22 = arith.constant dense<0.000000e+00> : vector<4x128xf32>
    %23 = tpu.matmul %21, %22, %cst_22 {dimension_numbers = #tpu.dot_dimension_numbers<[1], [0], [0], [1], [0, 0, 1, 1], [], []>} : vector<4x128xbf16>, vector<128x128xbf16>, vector<4x128xf32> -> vector<4x128xf32>
    %24 = arith.addf %19, %23 : vector<4x128xf32>
    %c1_23 = arith.constant 1 : index
    %c0_24 = arith.constant 0 : index
    %25 = vector.load %arg9[%c1_23, %c0_24] : memref<6x128xf32, #tpu.memory_space<vmem>>, vector<4x128xf32>
    %26 = arith.truncf %25 : vector<4x128xf32> to vector<4x128xbf16>
    %c128 = arith.constant 128 : index
    %c0_25 = arith.constant 0 : index
    %27 = vector.load %arg4[%c128, %c0_25] : memref<384x128xbf16, #tpu.memory_space<vmem>>, vector<128x128xbf16>
    %cst_26 = arith.constant dense<0.000000e+00> : vector<4x128xf32>
    %28 = tpu.matmul %26, %27, %cst_26 {dimension_numbers = #tpu.dot_dimension_numbers<[1], [0], [0], [1], [0, 0, 1, 1], [], []>} : vector<4x128xbf16>, vector<128x128xbf16>, vector<4x128xf32> -> vector<4x128xf32>
    %29 = arith.addf %24, %28 : vector<4x128xf32>
    %c2 = arith.constant 2 : index
    %c0_27 = arith.constant 0 : index
    %30 = vector.load %arg9[%c2, %c0_27] : memref<6x128xf32, #tpu.memory_space<vmem>>, vector<4x128xf32>
    %31 = arith.truncf %30 : vector<4x128xf32> to vector<4x128xbf16>
    %c256 = arith.constant 256 : index
    %c0_28 = arith.constant 0 : index
    %32 = vector.load %arg4[%c256, %c0_28] : memref<384x128xbf16, #tpu.memory_space<vmem>>, vector<128x128xbf16>
    %cst_29 = arith.constant dense<0.000000e+00> : vector<4x128xf32>
    %33 = tpu.matmul %31, %32, %cst_29 {dimension_numbers = #tpu.dot_dimension_numbers<[1], [0], [0], [1], [0, 0, 1, 1], [], []>} : vector<4x128xbf16>, vector<128x128xbf16>, vector<4x128xf32> -> vector<4x128xf32>
    %34 = arith.addf %29, %33 : vector<4x128xf32>
    %cst_30 = arith.constant 0.000000e+00 : f32
    %35 = vector.broadcast %cst_30 : f32 to vector<4x128xf32>
    %36 = arith.maximumf %34, %35 : vector<4x128xf32>
    %37 = arith.truncf %36 : vector<4x128xf32> to vector<4x128xbf16>
    %c0_31 = arith.constant 0 : index
    %c0_32 = arith.constant 0 : index
    %c0_33 = arith.constant 0 : index
    %38 = vector.load %arg8[%c0_31, %c0_32, %c0_33] : memref<1x4x128xbf16, #tpu.memory_space<vmem>>, vector<1x4x128xbf16>
    %39 = vector.shape_cast %38 : vector<1x4x128xbf16> to vector<4x128xbf16>
    %40 = vector.shape_cast %37 : vector<4x128xbf16> to vector<1x4x128xbf16>
    tpu.vector_store %arg8[%c0_31, %c0_32, %c0_33], %40 {strides = array<i32>} : memref<1x4x128xbf16, #tpu.memory_space<vmem>>, vector<1x4x128xbf16>,
    return
  }
  func.func @transform_0(%arg0: i32) -> (i32, i32, i32) {
    %c0_i32 = arith.constant 0 : i32
    %c0_i32_0 = arith.constant 0 : i32
    %c0_i32_1 = arith.constant 0 : i32
    return %arg0, %c0_i32, %c0_i32_0 : i32, i32, i32
  }
  func.func @transform_1(%arg0: i32) -> (i32, i32) {
    %c0_i32 = arith.constant 0 : i32
    %c0_i32_0 = arith.constant 0 : i32
    %c0_i32_1 = arith.constant 0 : i32
    return %c0_i32, %c0_i32_0 : i32, i32
  }
  func.func @transform_2(%arg0: i32) -> (i32, i32) {
    %c0_i32 = arith.constant 0 : i32
    %c0_i32_0 = arith.constant 0 : i32
    %c0_i32_1 = arith.constant 0 : i32
    return %c0_i32, %c0_i32_0 : i32, i32
  }
  func.func @transform_3(%arg0: i32) -> (i32, i32) {
    %c0_i32 = arith.constant 0 : i32
    %c0_i32_0 = arith.constant 0 : i32
    %c0_i32_1 = arith.constant 0 : i32
    return %c0_i32, %c0_i32_0 : i32, i32
  }
  func.func @transform_4(%arg0: i32) -> (i32, i32) {
    %c0_i32 = arith.constant 0 : i32
    %c0_i32_0 = arith.constant 0 : i32
    %c0_i32_1 = arith.constant 0 : i32
    return %c0_i32, %c0_i32_0 : i32, i32
  }
  func.func @transform_5(%arg0: i32) -> (i32, i32) {
    %c0_i32 = arith.constant 0 : i32
    %c0_i32_0 = arith.constant 0 : i32
    %c0_i32_1 = arith.constant 0 : i32
    return %c0_i32, %c0_i32_0 : i32, i32
  }
  func.func @transform_6(%arg0: i32) -> (i32, i32) {
    %c0_i32 = arith.constant 0 : i32
    %c0_i32_0 = arith.constant 0 : i32
    %c0_i32_1 = arith.constant 0 : i32
    return %c0_i32, %c0_i32_0 : i32, i32
  }
  func.func @transform_7(%arg0: i32) -> (i32, i32, i32) {
    %c0_i32 = arith.constant 0 : i32
    %c0_i32_0 = arith.constant 0 : i32
    %c0_i32_1 = arith.constant 0 : i32
    return %arg0, %c0_i32, %c0_i32_0 : i32, i32, i32
  }
}

module attributes {stable_mosaic.version = 11 : i64} {
  func.func @_block_kernel(%arg0: i32, %arg1: memref<1x4x576xbf16, #tpu.memory_space<vmem>>, %arg2: memref<576x128xbf16, #tpu.memory_space<vmem>>, %arg3: memref<1x128xf32, #tpu.memory_space<vmem>>, %arg4: memref<384x128xbf16, #tpu.memory_space<vmem>>, %arg5: memref<1x128xf32, #tpu.memory_space<vmem>>, %arg6: memref<1x4x128xbf16, #tpu.memory_space<vmem>>, %arg7: memref<1x4x128xbf16, #tpu.memory_space<vmem>>, %arg8: memref<6x128xf32, #tpu.memory_space<vmem>>) attributes {dimension_semantics = [#tpu.dimension_semantics<parallel>], iteration_bounds = array<i64: 2>, scalar_prefetch = 0 : i64, scratch_operands = 1 : i64, tpu.core_type = #tpu.core_type<tc>, window_params = [{transform_indices = @transform_0, window_bounds = array<i64: 1, 4, 576>}, {pipeline_mode = #tpu.pipeline_mode<synchronous>, transform_indices = @transform_1, window_bounds = array<i64: 576, 128>}, {pipeline_mode = #tpu.pipeline_mode<synchronous>, transform_indices = @transform_2, window_bounds = array<i64: 1, 128>}, {pipeline_mode = #tpu.pipeline_mode<synchronous>, transform_indices = @transform_3, window_bounds = array<i64: 384, 128>}, {pipeline_mode = #tpu.pipeline_mode<synchronous>, transform_indices = @transform_4, window_bounds = array<i64: 1, 128>}, {transform_indices = @transform_5, window_bounds = array<i64: 1, 4, 128>}, {transform_indices = @transform_6, window_bounds = array<i64: 1, 4, 128>}]} {
    %c0 = arith.constant 0 : index
    %c0_0 = arith.constant 0 : index
    %c0_1 = arith.constant 0 : index
    %0 = vector.load %arg1[%c0, %c0_0, %c0_1] : memref<1x4x576xbf16, #tpu.memory_space<vmem>>, vector<1x4x576xbf16>
    %1 = vector.shape_cast %0 : vector<1x4x576xbf16> to vector<4x576xbf16>
    %c0_2 = arith.constant 0 : index
    %c0_3 = arith.constant 0 : index
    %2 = vector.load %arg2[%c0_2, %c0_3] : memref<576x128xbf16, #tpu.memory_space<vmem>>, vector<576x128xbf16>
    %cst = arith.constant dense<0.000000e+00> : vector<4x128xf32>
    %3 = tpu.matmul %1, %2, %cst {dimension_numbers = #tpu.dot_dimension_numbers<[1], [0], [0], [1], [0, 0, 1, 1], [], []>} : vector<4x576xbf16>, vector<576x128xbf16>, vector<4x128xf32> -> vector<4x128xf32>
    %c0_4 = arith.constant 0 : index
    %c0_5 = arith.constant 0 : index
    %4 = vector.load %arg3[%c0_4, %c0_5] : memref<1x128xf32, #tpu.memory_space<vmem>>, vector<1x128xf32>
    %5 = vector.broadcast %4 : vector<1x128xf32> to vector<4x128xf32>
    %6 = arith.addf %3, %5 : vector<4x128xf32>
    %cst_6 = arith.constant 0.000000e+00 : f32
    %7 = vector.broadcast %cst_6 : f32 to vector<4x128xf32>
    %8 = arith.maximumf %6, %7 : vector<4x128xf32>
    %c0_7 = arith.constant 0 : index
    %c0_8 = arith.constant 0 : index
    %c0_9 = arith.constant 0 : index
    %9 = vector.load %arg6[%c0_7, %c0_8, %c0_9] : memref<1x4x128xbf16, #tpu.memory_space<vmem>>, vector<1x4x128xbf16>
    %10 = vector.shape_cast %9 : vector<1x4x128xbf16> to vector<4x128xbf16>
    %11 = arith.extf %10 : vector<4x128xbf16> to vector<4x128xf32>
    %cst_10 = arith.constant 0.000000e+00 : f32
    %12 = vector.broadcast %cst_10 : f32 to vector<6x128xf32>
    %c0_11 = arith.constant 0 : index
    %c0_12 = arith.constant 0 : index
    %13 = vector.load %arg8[%c0_11, %c0_12] : memref<6x128xf32, #tpu.memory_space<vmem>>, vector<6x128xf32>
    tpu.vector_store %arg8[%c0_11, %c0_12], %12 {strides = array<i32>} : memref<6x128xf32, #tpu.memory_space<vmem>>, vector<6x128xf32>,
    %c1 = arith.constant 1 : index
    %c0_13 = arith.constant 0 : index
    %14 = vector.load %arg8[%c1, %c0_13] : memref<6x128xf32, #tpu.memory_space<vmem>>, vector<4x128xf32>
    tpu.vector_store %arg8[%c1, %c0_13], %8 {strides = array<i32>} : memref<6x128xf32, #tpu.memory_space<vmem>>, vector<4x128xf32>,
    %c0_14 = arith.constant 0 : index
    %c0_15 = arith.constant 0 : index
    %15 = vector.load %arg5[%c0_14, %c0_15] : memref<1x128xf32, #tpu.memory_space<vmem>>, vector<1x128xf32>
    %16 = vector.broadcast %15 : vector<1x128xf32> to vector<4x128xf32>
    %17 = arith.addf %11, %16 : vector<4x128xf32>
    %c0_16 = arith.constant 0 : index
    %c0_17 = arith.constant 0 : index
    %18 = vector.load %arg8[%c0_16, %c0_17] : memref<6x128xf32, #tpu.memory_space<vmem>>, vector<4x128xf32>
    %19 = arith.truncf %18 : vector<4x128xf32> to vector<4x128xbf16>
    %c0_18 = arith.constant 0 : index
    %c0_19 = arith.constant 0 : index
    %20 = vector.load %arg4[%c0_18, %c0_19] : memref<384x128xbf16, #tpu.memory_space<vmem>>, vector<128x128xbf16>
    %cst_20 = arith.constant dense<0.000000e+00> : vector<4x128xf32>
    %21 = tpu.matmul %19, %20, %cst_20 {dimension_numbers = #tpu.dot_dimension_numbers<[1], [0], [0], [1], [0, 0, 1, 1], [], []>} : vector<4x128xbf16>, vector<128x128xbf16>, vector<4x128xf32> -> vector<4x128xf32>
    %22 = arith.addf %17, %21 : vector<4x128xf32>
    %c1_21 = arith.constant 1 : index
    %c0_22 = arith.constant 0 : index
    %23 = vector.load %arg8[%c1_21, %c0_22] : memref<6x128xf32, #tpu.memory_space<vmem>>, vector<4x128xf32>
    %24 = arith.truncf %23 : vector<4x128xf32> to vector<4x128xbf16>
    %c128 = arith.constant 128 : index
    %c0_23 = arith.constant 0 : index
    %25 = vector.load %arg4[%c128, %c0_23] : memref<384x128xbf16, #tpu.memory_space<vmem>>, vector<128x128xbf16>
    %cst_24 = arith.constant dense<0.000000e+00> : vector<4x128xf32>
    %26 = tpu.matmul %24, %25, %cst_24 {dimension_numbers = #tpu.dot_dimension_numbers<[1], [0], [0], [1], [0, 0, 1, 1], [], []>} : vector<4x128xbf16>, vector<128x128xbf16>, vector<4x128xf32> -> vector<4x128xf32>
    %27 = arith.addf %22, %26 : vector<4x128xf32>
    %c2 = arith.constant 2 : index
    %c0_25 = arith.constant 0 : index
    %28 = vector.load %arg8[%c2, %c0_25] : memref<6x128xf32, #tpu.memory_space<vmem>>, vector<4x128xf32>
    %29 = arith.truncf %28 : vector<4x128xf32> to vector<4x128xbf16>
    %c256 = arith.constant 256 : index
    %c0_26 = arith.constant 0 : index
    %30 = vector.load %arg4[%c256, %c0_26] : memref<384x128xbf16, #tpu.memory_space<vmem>>, vector<128x128xbf16>
    %cst_27 = arith.constant dense<0.000000e+00> : vector<4x128xf32>
    %31 = tpu.matmul %29, %30, %cst_27 {dimension_numbers = #tpu.dot_dimension_numbers<[1], [0], [0], [1], [0, 0, 1, 1], [], []>} : vector<4x128xbf16>, vector<128x128xbf16>, vector<4x128xf32> -> vector<4x128xf32>
    %32 = arith.addf %27, %31 : vector<4x128xf32>
    %cst_28 = arith.constant 0.000000e+00 : f32
    %33 = vector.broadcast %cst_28 : f32 to vector<4x128xf32>
    %34 = arith.maximumf %32, %33 : vector<4x128xf32>
    %35 = arith.truncf %34 : vector<4x128xf32> to vector<4x128xbf16>
    %c0_29 = arith.constant 0 : index
    %c0_30 = arith.constant 0 : index
    %c0_31 = arith.constant 0 : index
    %36 = vector.load %arg7[%c0_29, %c0_30, %c0_31] : memref<1x4x128xbf16, #tpu.memory_space<vmem>>, vector<1x4x128xbf16>
    %37 = vector.shape_cast %36 : vector<1x4x128xbf16> to vector<4x128xbf16>
    %38 = vector.shape_cast %35 : vector<4x128xbf16> to vector<1x4x128xbf16>
    tpu.vector_store %arg7[%c0_29, %c0_30, %c0_31], %38 {strides = array<i32>} : memref<1x4x128xbf16, #tpu.memory_space<vmem>>, vector<1x4x128xbf16>,
    return
  }
  func.func @transform_0(%arg0: i32) -> (i32, i32, i32) {
    %c0_i32 = arith.constant 0 : i32
    %c0_i32_0 = arith.constant 0 : i32
    %c0_i32_1 = arith.constant 0 : i32
    return %arg0, %c0_i32, %c0_i32_0 : i32, i32, i32
  }
  func.func @transform_1(%arg0: i32) -> (i32, i32) {
    %c0_i32 = arith.constant 0 : i32
    %c0_i32_0 = arith.constant 0 : i32
    %c0_i32_1 = arith.constant 0 : i32
    return %c0_i32, %c0_i32_0 : i32, i32
  }
  func.func @transform_2(%arg0: i32) -> (i32, i32) {
    %c0_i32 = arith.constant 0 : i32
    %c0_i32_0 = arith.constant 0 : i32
    %c0_i32_1 = arith.constant 0 : i32
    return %c0_i32, %c0_i32_0 : i32, i32
  }
  func.func @transform_3(%arg0: i32) -> (i32, i32) {
    %c0_i32 = arith.constant 0 : i32
    %c0_i32_0 = arith.constant 0 : i32
    %c0_i32_1 = arith.constant 0 : i32
    return %c0_i32, %c0_i32_0 : i32, i32
  }
  func.func @transform_4(%arg0: i32) -> (i32, i32) {
    %c0_i32 = arith.constant 0 : i32
    %c0_i32_0 = arith.constant 0 : i32
    %c0_i32_1 = arith.constant 0 : i32
    return %c0_i32, %c0_i32_0 : i32, i32
  }
  func.func @transform_5(%arg0: i32) -> (i32, i32, i32) {
    %c0_i32 = arith.constant 0 : i32
    %c0_i32_0 = arith.constant 0 : i32
    %c0_i32_1 = arith.constant 0 : i32
    return %arg0, %c0_i32, %c0_i32_0 : i32, i32, i32
  }
  func.func @transform_6(%arg0: i32) -> (i32, i32, i32) {
    %c0_i32 = arith.constant 0 : i32
    %c0_i32_0 = arith.constant 0 : i32
    %c0_i32_1 = arith.constant 0 : i32
    return %arg0, %c0_i32, %c0_i32_0 : i32, i32, i32
  }
}

module attributes {stable_mosaic.version = 11 : i64} {
  func.func @_block_kernel(%arg0: i32, %arg1: memref<1x2x576xbf16, #tpu.memory_space<vmem>>, %arg2: memref<576x128xbf16, #tpu.memory_space<vmem>>, %arg3: memref<1x128xf32, #tpu.memory_space<vmem>>, %arg4: memref<384x128xbf16, #tpu.memory_space<vmem>>, %arg5: memref<1x128xf32, #tpu.memory_space<vmem>>, %arg6: memref<576x128xbf16, #tpu.memory_space<vmem>>, %arg7: memref<1x128xf32, #tpu.memory_space<vmem>>, %arg8: memref<1x2x128xbf16, #tpu.memory_space<vmem>>, %arg9: memref<4x128xf32, #tpu.memory_space<vmem>>) attributes {dimension_semantics = [#tpu.dimension_semantics<parallel>], iteration_bounds = array<i64: 2>, scalar_prefetch = 0 : i64, scratch_operands = 1 : i64, tpu.core_type = #tpu.core_type<tc>, window_params = [{transform_indices = @transform_0, window_bounds = array<i64: 1, 2, 576>}, {pipeline_mode = #tpu.pipeline_mode<synchronous>, transform_indices = @transform_1, window_bounds = array<i64: 576, 128>}, {pipeline_mode = #tpu.pipeline_mode<synchronous>, transform_indices = @transform_2, window_bounds = array<i64: 1, 128>}, {pipeline_mode = #tpu.pipeline_mode<synchronous>, transform_indices = @transform_3, window_bounds = array<i64: 384, 128>}, {pipeline_mode = #tpu.pipeline_mode<synchronous>, transform_indices = @transform_4, window_bounds = array<i64: 1, 128>}, {pipeline_mode = #tpu.pipeline_mode<synchronous>, transform_indices = @transform_5, window_bounds = array<i64: 576, 128>}, {pipeline_mode = #tpu.pipeline_mode<synchronous>, transform_indices = @transform_6, window_bounds = array<i64: 1, 128>}, {transform_indices = @transform_7, window_bounds = array<i64: 1, 2, 128>}]} {
    %c0 = arith.constant 0 : index
    %c0_0 = arith.constant 0 : index
    %c0_1 = arith.constant 0 : index
    %0 = vector.load %arg1[%c0, %c0_0, %c0_1] : memref<1x2x576xbf16, #tpu.memory_space<vmem>>, vector<1x2x576xbf16>
    %1 = vector.shape_cast %0 : vector<1x2x576xbf16> to vector<2x576xbf16>
    %c0_2 = arith.constant 0 : index
    %c0_3 = arith.constant 0 : index
    %2 = vector.load %arg2[%c0_2, %c0_3] : memref<576x128xbf16, #tpu.memory_space<vmem>>, vector<576x128xbf16>
    %cst = arith.constant dense<0.000000e+00> : vector<2x128xf32>
    %3 = tpu.matmul %1, %2, %cst {dimension_numbers = #tpu.dot_dimension_numbers<[1], [0], [0], [1], [0, 0, 1, 1], [], []>} : vector<2x576xbf16>, vector<576x128xbf16>, vector<2x128xf32> -> vector<2x128xf32>
    %c0_4 = arith.constant 0 : index
    %c0_5 = arith.constant 0 : index
    %4 = vector.load %arg3[%c0_4, %c0_5] : memref<1x128xf32, #tpu.memory_space<vmem>>, vector<1x128xf32>
    %5 = vector.broadcast %4 : vector<1x128xf32> to vector<2x128xf32>
    %6 = arith.addf %3, %5 : vector<2x128xf32>
    %cst_6 = arith.constant 0.000000e+00 : f32
    %7 = vector.broadcast %cst_6 : f32 to vector<2x128xf32>
    %8 = arith.maximumf %6, %7 : vector<2x128xf32>
    %c0_7 = arith.constant 0 : index
    %c0_8 = arith.constant 0 : index
    %9 = vector.load %arg6[%c0_7, %c0_8] : memref<576x128xbf16, #tpu.memory_space<vmem>>, vector<576x128xbf16>
    %cst_9 = arith.constant dense<0.000000e+00> : vector<2x128xf32>
    %10 = tpu.matmul %1, %9, %cst_9 {dimension_numbers = #tpu.dot_dimension_numbers<[1], [0], [0], [1], [0, 0, 1, 1], [], []>} : vector<2x576xbf16>, vector<576x128xbf16>, vector<2x128xf32> -> vector<2x128xf32>
    %c0_10 = arith.constant 0 : index
    %c0_11 = arith.constant 0 : index
    %11 = vector.load %arg7[%c0_10, %c0_11] : memref<1x128xf32, #tpu.memory_space<vmem>>, vector<1x128xf32>
    %12 = vector.broadcast %11 : vector<1x128xf32> to vector<2x128xf32>
    %13 = arith.addf %10, %12 : vector<2x128xf32>
    %cst_12 = arith.constant 0.000000e+00 : f32
    %14 = vector.broadcast %cst_12 : f32 to vector<4x128xf32>
    %c0_13 = arith.constant 0 : index
    %c0_14 = arith.constant 0 : index
    %15 = vector.load %arg9[%c0_13, %c0_14] : memref<4x128xf32, #tpu.memory_space<vmem>>, vector<4x128xf32>
    tpu.vector_store %arg9[%c0_13, %c0_14], %14 {strides = array<i32>} : memref<4x128xf32, #tpu.memory_space<vmem>>, vector<4x128xf32>,
    %c1 = arith.constant 1 : index
    %c0_15 = arith.constant 0 : index
    %16 = vector.load %arg9[%c1, %c0_15] : memref<4x128xf32, #tpu.memory_space<vmem>>, vector<2x128xf32>
    tpu.vector_store %arg9[%c1, %c0_15], %8 {strides = array<i32>} : memref<4x128xf32, #tpu.memory_space<vmem>>, vector<2x128xf32>,
    %c0_16 = arith.constant 0 : index
    %c0_17 = arith.constant 0 : index
    %17 = vector.load %arg5[%c0_16, %c0_17] : memref<1x128xf32, #tpu.memory_space<vmem>>, vector<1x128xf32>
    %18 = vector.broadcast %17 : vector<1x128xf32> to vector<2x128xf32>
    %19 = arith.addf %13, %18 : vector<2x128xf32>
    %c0_18 = arith.constant 0 : index
    %c0_19 = arith.constant 0 : index
    %20 = vector.load %arg9[%c0_18, %c0_19] : memref<4x128xf32, #tpu.memory_space<vmem>>, vector<2x128xf32>
    %21 = arith.truncf %20 : vector<2x128xf32> to vector<2x128xbf16>
    %c0_20 = arith.constant 0 : index
    %c0_21 = arith.constant 0 : index
    %22 = vector.load %arg4[%c0_20, %c0_21] : memref<384x128xbf16, #tpu.memory_space<vmem>>, vector<128x128xbf16>
    %cst_22 = arith.constant dense<0.000000e+00> : vector<2x128xf32>
    %23 = tpu.matmul %21, %22, %cst_22 {dimension_numbers = #tpu.dot_dimension_numbers<[1], [0], [0], [1], [0, 0, 1, 1], [], []>} : vector<2x128xbf16>, vector<128x128xbf16>, vector<2x128xf32> -> vector<2x128xf32>
    %24 = arith.addf %19, %23 : vector<2x128xf32>
    %c1_23 = arith.constant 1 : index
    %c0_24 = arith.constant 0 : index
    %25 = vector.load %arg9[%c1_23, %c0_24] : memref<4x128xf32, #tpu.memory_space<vmem>>, vector<2x128xf32>
    %26 = arith.truncf %25 : vector<2x128xf32> to vector<2x128xbf16>
    %c128 = arith.constant 128 : index
    %c0_25 = arith.constant 0 : index
    %27 = vector.load %arg4[%c128, %c0_25] : memref<384x128xbf16, #tpu.memory_space<vmem>>, vector<128x128xbf16>
    %cst_26 = arith.constant dense<0.000000e+00> : vector<2x128xf32>
    %28 = tpu.matmul %26, %27, %cst_26 {dimension_numbers = #tpu.dot_dimension_numbers<[1], [0], [0], [1], [0, 0, 1, 1], [], []>} : vector<2x128xbf16>, vector<128x128xbf16>, vector<2x128xf32> -> vector<2x128xf32>
    %29 = arith.addf %24, %28 : vector<2x128xf32>
    %c2 = arith.constant 2 : index
    %c0_27 = arith.constant 0 : index
    %30 = vector.load %arg9[%c2, %c0_27] : memref<4x128xf32, #tpu.memory_space<vmem>>, vector<2x128xf32>
    %31 = arith.truncf %30 : vector<2x128xf32> to vector<2x128xbf16>
    %c256 = arith.constant 256 : index
    %c0_28 = arith.constant 0 : index
    %32 = vector.load %arg4[%c256, %c0_28] : memref<384x128xbf16, #tpu.memory_space<vmem>>, vector<128x128xbf16>
    %cst_29 = arith.constant dense<0.000000e+00> : vector<2x128xf32>
    %33 = tpu.matmul %31, %32, %cst_29 {dimension_numbers = #tpu.dot_dimension_numbers<[1], [0], [0], [1], [0, 0, 1, 1], [], []>} : vector<2x128xbf16>, vector<128x128xbf16>, vector<2x128xf32> -> vector<2x128xf32>
    %34 = arith.addf %29, %33 : vector<2x128xf32>
    %cst_30 = arith.constant 0.000000e+00 : f32
    %35 = vector.broadcast %cst_30 : f32 to vector<2x128xf32>
    %36 = arith.maximumf %34, %35 : vector<2x128xf32>
    %37 = arith.truncf %36 : vector<2x128xf32> to vector<2x128xbf16>
    %c0_31 = arith.constant 0 : index
    %c0_32 = arith.constant 0 : index
    %c0_33 = arith.constant 0 : index
    %38 = vector.load %arg8[%c0_31, %c0_32, %c0_33] : memref<1x2x128xbf16, #tpu.memory_space<vmem>>, vector<1x2x128xbf16>
    %39 = vector.shape_cast %38 : vector<1x2x128xbf16> to vector<2x128xbf16>
    %40 = vector.shape_cast %37 : vector<2x128xbf16> to vector<1x2x128xbf16>
    tpu.vector_store %arg8[%c0_31, %c0_32, %c0_33], %40 {strides = array<i32>} : memref<1x2x128xbf16, #tpu.memory_space<vmem>>, vector<1x2x128xbf16>,
    return
  }
  func.func @transform_0(%arg0: i32) -> (i32, i32, i32) {
    %c0_i32 = arith.constant 0 : i32
    %c0_i32_0 = arith.constant 0 : i32
    %c0_i32_1 = arith.constant 0 : i32
    return %arg0, %c0_i32, %c0_i32_0 : i32, i32, i32
  }
  func.func @transform_1(%arg0: i32) -> (i32, i32) {
    %c0_i32 = arith.constant 0 : i32
    %c0_i32_0 = arith.constant 0 : i32
    %c0_i32_1 = arith.constant 0 : i32
    return %c0_i32, %c0_i32_0 : i32, i32
  }
  func.func @transform_2(%arg0: i32) -> (i32, i32) {
    %c0_i32 = arith.constant 0 : i32
    %c0_i32_0 = arith.constant 0 : i32
    %c0_i32_1 = arith.constant 0 : i32
    return %c0_i32, %c0_i32_0 : i32, i32
  }
  func.func @transform_3(%arg0: i32) -> (i32, i32) {
    %c0_i32 = arith.constant 0 : i32
    %c0_i32_0 = arith.constant 0 : i32
    %c0_i32_1 = arith.constant 0 : i32
    return %c0_i32, %c0_i32_0 : i32, i32
  }
  func.func @transform_4(%arg0: i32) -> (i32, i32) {
    %c0_i32 = arith.constant 0 : i32
    %c0_i32_0 = arith.constant 0 : i32
    %c0_i32_1 = arith.constant 0 : i32
    return %c0_i32, %c0_i32_0 : i32, i32
  }
  func.func @transform_5(%arg0: i32) -> (i32, i32) {
    %c0_i32 = arith.constant 0 : i32
    %c0_i32_0 = arith.constant 0 : i32
    %c0_i32_1 = arith.constant 0 : i32
    return %c0_i32, %c0_i32_0 : i32, i32
  }
  func.func @transform_6(%arg0: i32) -> (i32, i32) {
    %c0_i32 = arith.constant 0 : i32
    %c0_i32_0 = arith.constant 0 : i32
    %c0_i32_1 = arith.constant 0 : i32
    return %c0_i32, %c0_i32_0 : i32, i32
  }
  func.func @transform_7(%arg0: i32) -> (i32, i32, i32) {
    %c0_i32 = arith.constant 0 : i32
    %c0_i32_0 = arith.constant 0 : i32
    %c0_i32_1 = arith.constant 0 : i32
    return %arg0, %c0_i32, %c0_i32_0 : i32, i32, i32
  }
}

</mosaic_0001>

<llo_original>
// kernel: tile.93
$region0: #{tile.93}
  #allocation0 [shape = 's32[1]{0}', space=sflag, size = 0x4, scoped, tag = 'scoped memory for tile.93']
  %s0 = inlined_call_operand.vmem [shape: f32[8], index: 0, kind: input, shape index: {}]
  %s1 = inlined_call_operand.vmem [shape: f32[32,8], index: 1, kind: output, shape index: {}]
  // Predicated region
  $region2: #{tile.93} parent=0 // pred_check
    _
  $region3: #{tile.93} parent=0 // pred_check_branch
    %3 = sbr.rel (0) target = $region5
  $region4: #{tile.93} parent=0 // pred_region
    _
  $region5: #{tile.93} parent=0 // pred_fallthru
    _
  %v4 = vld [vmem:[%s0] ss:$0 sm:$0xff]
  %5 = vst [vmem:[%s1] sm:$0xff] %v4
  %s6 = scalar_lea.vmem %s1, 8
  %7 = vst [vmem:[%s6] sm:$0xff] %v4
  %s8 = scalar_lea.vmem %s1, 16
  %9 = vst [vmem:[%s8] sm:$0xff] %v4
  %s10 = scalar_lea.vmem %s1, 24
  %11 = vst [vmem:[%s10] sm:$0xff] %v4

// kernel: tile.94
$region0: #{tile.94}
  %s0 = inlined_call_operand.vmem [shape: f32[32,8], index: 0, kind: input, shape index: {}]
  %s1 = inlined_call_operand.vmem [shape: f32[1,256], index: 1, kind: output, shape index: {}]
  $region1: #{tile.94} parent=0
    #allocation0 [shape = 'u8[8192]{0}', space=vmem, size = 0x2000, scoped, tag = 'scoped mem for output reshape']
    %s2 = smov 3
    %v3 = vld [vmem:[%s0] ss:$16 sm:%s2]
    %vm4 = vcmask 64512
    %5 = vst.msk [vmem:[#allocation0] ss:$8 sm:$0x3] %vm4, %v3
    %s6 = scalar_lea.vmem %s0, 15
    %s7 = smov 3
    %v8 = vld [vmem:[%s6] ss:$16 sm:%s7]
    %9 = vrot.lane.b32.xlu0 %v8, 120
    %v10 = vpop.permute.xlu0 %9
    %vm11 = vcmask 1048512
    %12 = vst.msk [vmem:[#allocation0] ss:$8 sm:$0x3] %vm11, %v10
    %s13 = scalar_lea.vmem %s0, 14
    %s14 = smov 3
    %v15 = vld [vmem:[%s13] ss:$16 sm:%s14]
    %16 = vrot.lane.b32.xlu0 %v15, 112
    %v17 = vpop.permute.xlu0 %16
    %vm18 = vcmask 982912
    %19 = vst.msk [vmem:[#allocation0] ss:$8 sm:$0x3] %vm18, %v17
    %s20 = scalar_lea.vmem %s0, 13
    %s21 = smov 3
    %v22 = vld [vmem:[%s20] ss:$16 sm:%s21]
    %23 = vrot.lane.b32.xlu0 %v22, 104
    %v24 = vpop.permute.xlu0 %23
    %vm25 = vcmask 917312
    %26 = vst.msk [vmem:[#allocation0] ss:$8 sm:$0x3] %vm25, %v24
    %s27 = scalar_lea.vmem %s0, 12
    %s28 = smov 3
    %v29 = vld [vmem:[%s27] ss:$16 sm:%s28]
    %30 = vrot.lane.b32.xlu0 %v29, 96
    %v31 = vpop.permute.xlu0 %30
    %vm32 = vcmask 851712
    %33 = vst.msk [vmem:[#allocation0] ss:$8 sm:$0x3] %vm32, %v31
    %s34 = scalar_lea.vmem %s0, 11
    %s35 = smov 3
    %v36 = vld [vmem:[%s34] ss:$16 sm:%s35]
    %37 = vrot.lane.b32.xlu0 %v36, 88
    %v38 = vpop.permute.xlu0 %37
    %vm39 = vcmask 786112
    %40 = vst.msk [vmem:[#allocation0] ss:$8 sm:$0x3] %vm39, %v38
    %s41 = scalar_lea.vmem %s0, 10
    %s42 = smov 3
    %v43 = vld [vmem:[%s41] ss:$16 sm:%s42]
    %44 = vrot.lane.b32.xlu0 %v43, 80
    %v45 = vpop.permute.xlu0 %44
    %vm46 = vcmask 720512
    %47 = vst.msk [vmem:[#allocation0] ss:$8 sm:$0x3] %vm46, %v45
    %s48 = scalar_lea.vmem %s0, 9
    %s49 = smov 3
    %v50 = vld [vmem:[%s48] ss:$16 sm:%s49]
    %51 = vrot.lane.b32.xlu0 %v50, 72
    %v52 = vpop.permute.xlu0 %51
    %vm53 = vcmask 654912
    %54 = vst.msk [vmem:[#allocation0] ss:$8 sm:$0x3] %vm53, %v52
    %s55 = scalar_lea.vmem %s0, 8
    %s56 = smov 3
    %v57 = vld [vmem:[%s55] ss:$16 sm:%s56]
    %58 = vrot.lane.b32.xlu0 %v57, 64
    %v59 = vpop.permute.xlu0 %58
    %vm60 = vcmask 589312
    %61 = vst.msk [vmem:[#allocation0] ss:$8 sm:$0x3] %vm60, %v59
    %s62 = scalar_lea.vmem %s0, 7
    %s63 = smov 3
    %v64 = vld [vmem:[%s62] ss:$16 sm:%s63]
    %65 = vrot.lane.b32.xlu0 %v64, 56
    %v66 = vpop.permute.xlu0 %65
    %vm67 = vcmask 523712
    %68 = vst.msk [vmem:[#allocation0] ss:$8 sm:$0x3] %vm67, %v66
    %s69 = scalar_lea.vmem %s0, 6
    %s70 = smov 3
    %v71 = vld [vmem:[%s69] ss:$16 sm:%s70]
    %72 = vrot.lane.b32.xlu0 %v71, 48
    %v73 = vpop.permute.xlu0 %72
    %vm74 = vcmask 458112
    %75 = vst.msk [vmem:[#allocation0] ss:$8 sm:$0x3] %vm74, %v73
    %s76 = scalar_lea.vmem %s0, 5
    %s77 = smov 3
    %v78 = vld [vmem:[%s76] ss:$16 sm:%s77]
    %79 = vrot.lane.b32.xlu0 %v78, 40
    %v80 = vpop.permute.xlu0 %79
    %vm81 = vcmask 392512
    %82 = vst.msk [vmem:[#allocation0] ss:$8 sm:$0x3] %vm81, %v80
    %s83 = scalar_lea.vmem %s0, 4
    %s84 = smov 3
    %v85 = vld [vmem:[%s83] ss:$16 sm:%s84]
    %86 = vrot.lane.b32.xlu0 %v85, 32
    %v87 = vpop.permute.xlu0 %86
    %vm88 = vcmask 326912
    %89 = vst.msk [vmem:[#allocation0] ss:$8 sm:$0x3] %vm88, %v87
    %s90 = scalar_lea.vmem %s0, 3
    %s91 = smov 3
    %v92 = vld [vmem:[%s90] ss:$16 sm:%s91]
    %93 = vrot.lane.b32.xlu0 %v92, 24
    %v94 = vpop.permute.xlu0 %93
    %vm95 = vcmask 261312
    %96 = vst.msk [vmem:[#allocation0] ss:$8 sm:$0x3] %vm95, %v94
    %s97 = scalar_lea.vmem %s0, 2
    %s98 = smov 3
    %v99 = vld [vmem:[%s97] ss:$16 sm:%s98]
    %100 = vrot.lane.b32.xlu0 %v99, 16
    %v101 = vpop.permute.xlu0 %100
    %vm102 = vcmask 195712
    %103 = vst.msk [vmem:[#allocation0] ss:$8 sm:$0x3] %vm102, %v101
    %s104 = scalar_lea.vmem %s0, 1
    %s105 = smov 3
    %v106 = vld [vmem:[%s104] ss:$16 sm:%s105]
    %107 = vrot.lane.b32.xlu0 %v106, 8
    %v108 = vpop.permute.xlu0 %107
    %vm109 = vcmask 130112
    %110 = vst.msk [vmem:[#allocation0] ss:$8 sm:$0x3] %vm109, %v108
    %s112 = ssub.s32 2, 1
    %v113 = vld [vmem:[#allocation0] sm:%s112]
    %s115 = ssub.s32 2, 1
    %116 = vst [vmem:[%s1] sm:%s115] %v113
    %s117 = scalar_lea.vmem [#allocation0], 8
    %v118 = vld [vmem:[%s117] sm:%s112]
    %s120 = ssub.s32 2, 1
    %s121 = scalar_lea.vmem %s1, 1
    %122 = vst [vmem:[%s121] sm:%s120] %v118

// kernel: conv5_extractor.9
$region0: #{conv5_extractor.9}
  #allocation0 [shape = 'u32[]', space=smem, size = 0x4, offset = 0x4, fixed_abs, tag = 'smem constant byte address 0x4 - core index']
  #allocation1 [shape = 'u32[72,128]{1,0:T(1,128)}', space=vmem, size = 0x9000, scoped, tag = 'internal scratch']
  %s0 = inlined_call_operand.vmem [shape: bf16[2,32,1470], index: 0, kind: input, shape index: {}]
  %s1 = inlined_call_operand.vmem [shape: bf16[1470,256], index: 1, kind: input, shape index: {}]
  %s2 = inlined_call_operand.vmem [shape: f32[1,256], index: 2, kind: input, shape index: {}]
  %s3 = inlined_call_operand.vmem [shape: bf16[2,32,256], index: 3, kind: output, shape index: {}]
  %s4 = sld [smem:[#allocation0]]
  $region45: #{conv5_extractor.9} parent=0
    _
  %s6 = ssub.s32 1, %s4
  %s7 = scalar_select 0, %s6, %s4
  loop: start=0, step=1, limit=4
  $region2: #{conv5_extractor.9} parent=0 // loop_pre_header
    _
  $region3: #{conv5_extractor.9} parent=0 // loop_header
    %s9 = sphi 0, %s13
    %p10 = scmp.ge.s32.totalorder %s9, 4
    %s19 = sphi 0, %s21
    %s22 = sphi 0, %s19
    %s23 = sphi 0, %s22
    %s39 = sphi 0, %s23
    %s43 = sphi 0, %s43
    %s45 = sphi 0, %s43
    %s46 = sphi 0, %s45
    %s60 = sphi 0, %s46
    %s64 = sphi 0, %s64
    %s66 = sphi 0, %s64
    %s67 = sphi 0, %s66
    %s81 = sphi 0, %s67
    %s87 = sphi 0, %s89
    %s90 = sphi 0, %s87
    %s91 = sphi 0, %s90
    %s107 = sphi 0, %s91
  $region4: #{conv5_extractor.9} parent=0 // loop_header_branch
    %12 = sbr.rel (%p10) target = $region8
  $region5: #{conv5_extractor.9} parent=0 // loop_body
    %s14 = ssub.s32 %s9, 1
    %s15 = ssub.s32 %s9, 2
    %s16 = sadd.s32 %s9, 1
    %s17 = ssub.s32 %s9, %s16
    %p18 = scmp.eq.s32.totalorder %s17, 0
    %s20 = sadd.s32 %s19, 1
    %s21 = scalar_select %p18, %s19, %s20
    %p24 = pneg %p18
    %p25 = scmp.eq.s32.totalorder %s9, 1
    %p26 = por %p24, %p25
    %p27 = scmp.ne.s32.totalorder %s19, %s22
    %p28 = scmp.eq.s32.totalorder %s9, 0
    %p29 = por %p27, %p28
    %p30 = scmp.ne.s32.totalorder %s19, %s22
    %p31 = scmp.eq.s32.totalorder %s14, 1
    %p32 = por %p30, %p31
    %p33 = scmp.ne.s32.totalorder %s22, %s23
    %p34 = scmp.eq.s32.totalorder %s14, 0
    %p35 = por %p33, %p34
    %p36 = scmp.ne.s32.totalorder %s22, %s23
    %p37 = scmp.eq.s32.totalorder %s15, 1
    %p38 = por %p36, %p37
    %p40 = scmp.ne.s32.totalorder %s23, %s39
    %p41 = scmp.eq.s32.totalorder %s15, 0
    %p42 = por %p40, %p41
    %s44 = sadd.s32 %s43, 1
    %p47 = scmp.eq.s32.totalorder %s9, 1
    %p48 = scmp.ne.s32.totalorder %s43, %s45
    %p49 = scmp.eq.s32.totalorder %s9, 0
    %p50 = por %p48, %p49
    %p51 = scmp.ne.s32.totalorder %s43, %s45
    %p52 = scmp.eq.s32.totalorder %s14, 1
    %p53 = por %p51, %p52
    %p54 = scmp.ne.s32.totalorder %s45, %s46
    %p55 = scmp.eq.s32.totalorder %s14, 0
    %p56 = por %p54, %p55
    %p57 = scmp.ne.s32.totalorder %s45, %s46
    %p58 = scmp.eq.s32.totalorder %s15, 1
    %p59 = por %p57, %p58
    %p61 = scmp.ne.s32.totalorder %s46, %s60
    %p62 = scmp.eq.s32.totalorder %s15, 0
    %p63 = por %p61, %p62
    %s65 = sadd.s32 %s64, 1
    %p68 = scmp.eq.s32.totalorder %s9, 1
    %p69 = scmp.ne.s32.totalorder %s64, %s66
    %p70 = scmp.eq.s32.totalorder %s9, 0
    %p71 = por %p69, %p70
    %p72 = scmp.ne.s32.totalorder %s64, %s66
    %p73 = scmp.eq.s32.totalorder %s14, 1
    %p74 = por %p72, %p73
    %p75 = scmp.ne.s32.totalorder %s66, %s67
    %p76 = scmp.eq.s32.totalorder %s14, 0
    %p77 = por %p75, %p76
    %p78 = scmp.ne.s32.totalorder %s66, %s67
    %p79 = scmp.eq.s32.totalorder %s15, 1
    %p80 = por %p78, %p79
    %p82 = scmp.ne.s32.totalorder %s67, %s81
    %p83 = scmp.eq.s32.totalorder %s15, 0
    %p84 = por %p82, %p83
    %s85 = ssub.s32 %s9, %s16
    %p86 = scmp.eq.s32.totalorder %s85, 0
    %s88 = sadd.s32 %s87, 1
    %s89 = scalar_select %p86, %s87, %s88
    %p92 = pneg %p86
    %p93 = scmp.eq.s32.totalorder %s9, 1
    %p94 = por %p92, %p93
    %p95 = scmp.ne.s32.totalorder %s87, %s90
    %p96 = scmp.eq.s32.totalorder %s9, 0
    %p97 = por %p95, %p96
    %p98 = scmp.ne.s32.totalorder %s87, %s90
    %p99 = scmp.eq.s32.totalorder %s14, 1
    %p100 = por %p98, %p99
    %p101 = scmp.ne.s32.totalorder %s90, %s91
    %p102 = scmp.eq.s32.totalorder %s14, 0
    %p103 = por %p101, %p102
    %p104 = scmp.ne.s32.totalorder %s90, %s91
    %p105 = scmp.eq.s32.totalorder %s15, 1
    %p106 = por %p104, %p105
    %p108 = scmp.ne.s32.totalorder %s91, %s107
    %p109 = scmp.eq.s32.totalorder %s15, 0
    %p110 = por %p108, %p109
    %p111 = scmp.le.s32.totalorder 1, %s9
    %p112 = scmp.lt.s32.totalorder %s9, 3
    %p113 = pnand %p111, %p112
    %p114 = pneg %p113
    // Predicated region
    $region9: #{conv5_extractor.9} parent=5 // pred_check
      _
    $region10: #{conv5_extractor.9} parent=5 // pred_check_branch
      %116 = sbr.rel (%p113) target = $region12
    $region11: #{conv5_extractor.9} parent=5 // pred_region
      %s117 = ssub.s32 %s9, 1
      // Predicated region
      $region13: #{conv5_extractor.9} parent=11 // pred_check
        %p118 = pneg %p56
      $region14: #{conv5_extractor.9} parent=11 // pred_check_branch
        %120 = sbr.rel (%p118) target = $region16
      $region15: #{conv5_extractor.9} parent=11 // pred_region
        _
      $region16: #{conv5_extractor.9} parent=11 // pred_fallthru
        _
      // Predicated region
      $region17: #{conv5_extractor.9} parent=11 // pred_check
        %p121 = pneg %p77
      $region18: #{conv5_extractor.9} parent=11 // pred_check_branch
        %123 = sbr.rel (%p121) target = $region20
      $region19: #{conv5_extractor.9} parent=11 // pred_region
        _
      $region20: #{conv5_extractor.9} parent=11 // pred_fallthru
        _
    $region12: #{conv5_extractor.9} parent=5 // pred_fallthru
      _
    %p124 = scmp.lt.s32.totalorder %s9, 2
    // Predicated region
    $region21: #{conv5_extractor.9} parent=5 // pred_check
      %p125 = pneg %p124
    $region22: #{conv5_extractor.9} parent=5 // pred_check_branch
      %127 = sbr.rel (%p125) target = $region24
    $region23: #{conv5_extractor.9} parent=5 // pred_region
      // Predicated region
      $region25: #{conv5_extractor.9} parent=23 // pred_check
        %p128 = pneg %p29
      $region26: #{conv5_extractor.9} parent=23 // pred_check_branch
        %130 = sbr.rel (%p128) target = $region28
      $region27: #{conv5_extractor.9} parent=23 // pred_region
        %p131 = scmp.lt.s32.totalorder %s9, 1
        %s132 = scalar_select %p131, %s9, 1
        %s133 = smul.addr %s132, 48
        %s134 = smul.addr %s133, 4
        %s135 = scalar_lea.vmem %s0, %s134
      $region28: #{conv5_extractor.9} parent=23 // pred_fallthru
        _
    $region24: #{conv5_extractor.9} parent=5 // pred_fallthru
      _
    %p136 = scmp.le.s32.totalorder 1, %s9
    %p137 = scmp.lt.s32.totalorder %s9, 3
    %p138 = pnand %p136, %p137
    %p139 = pneg %p138
    // Predicated region
    $region29: #{conv5_extractor.9} parent=5 // pred_check
      _
    $region30: #{conv5_extractor.9} parent=5 // pred_check_branch
      %141 = sbr.rel (%p138) target = $region32
    $region31: #{conv5_extractor.9} parent=5 // pred_region
      %s142 = ssub.s32 %s9, 1
      %p143 = scmp.lt.s32.totalorder %s14, 1
      %s144 = scalar_select %p143, %s14, 1
      %s145 = smul.addr %s144, 48
      %s146 = smul.addr %s145, 4
      %s147 = scalar_lea.vmem %s0, %s146
      %p148 = pneg %p35
      %p149 = pneg %p32
      %p150 = pneg %p56
      %p151 = pneg %p53
      %p152 = pneg %p77
      %p153 = pneg %p74
      %p154 = pneg %p103
      %p155 = pneg %p100
      %p156 = scmp.lt.s32.totalorder %s14, 1
      %s157 = scalar_select %p156, %s14, 1
      %s158 = smul.addr %s157, 8
      %s159 = smul.addr %s158, 4
      %s160 = scalar_lea.vmem %s3, %s159
      %p161 = scmp.lt.s32.totalorder %s14, 1
      %s162 = scalar_select %p161, %s14, 1
      %s163 = smul.addr %s162, 48
      %s164 = smul.addr %s163, 4
      %s165 = scalar_lea.vmem %s0, %s164
      %p166 = scmp.lt.s32.totalorder %s14, 1
      %s167 = scalar_select %p166, %s14, 1
      %s168 = smul.addr %s167, 8
      %s169 = smul.addr %s168, 4
      %s170 = scalar_lea.vmem %s3, %s169
      %v172 = vld [vmem:[%s165] sm:$0xff]
      %v173 = vld [vmem:[%s165 + $0x8] sm:$0xff]
      %v174 = vld [vmem:[%s165 + $0x10] sm:$0xff]
      %v175 = vld [vmem:[%s165 + $0x18] sm:$0xff]
      %v176 = vld [vmem:[%s165 + $0x20] sm:$0xff]
      %v177 = vld [vmem:[%s165 + $0x28] sm:$0xff]
      %v178 = vld [vmem:[%s165 + $0x30] sm:$0xff]
      %v179 = vld [vmem:[%s165 + $0x38] sm:$0xff]
      %v180 = vld [vmem:[%s165 + $0x40] sm:$0xff]
      %v181 = vld [vmem:[%s165 + $0x48] sm:$0xff]
      %v182 = vld [vmem:[%s165 + $0x50] sm:$0xff]
      %v183 = vld [vmem:[%s165 + $0x58] sm:$0xff]
      %v184 = vld [vmem:[%s165 + $0x60] sm:$0xff]
      %v185 = vld [vmem:[%s165 + $0x68] sm:$0xff]
      %v186 = vld [vmem:[%s165 + $0x70] sm:$0xff]
      %v187 = vld [vmem:[%s165 + $0x78] sm:$0xff]
      %v188 = vld [vmem:[%s165 + $0x80] sm:$0xff]
      %v189 = vld [vmem:[%s165 + $0x88] sm:$0xff]
      %v190 = vld [vmem:[%s165 + $0x90] sm:$0xff]
      %v191 = vld [vmem:[%s165 + $0x98] sm:$0xff]
      %v192 = vld [vmem:[%s165 + $0xa0] sm:$0xff]
      %v193 = vld [vmem:[%s165 + $0xa8] sm:$0xff]
      %v194 = vld [vmem:[%s165 + $0xb0] sm:$0xff]
      %v195 = vld [vmem:[%s165 + $0xb8] sm:$0xff]
      %v196 = vld [vmem:[%s1] sm:$0xff]
      %v197 = vld [vmem:[%s1 + $0x8] sm:$0xff]
      %v198 = vld [vmem:[%s1 + $0x10] sm:$0xff]
      %v199 = vld [vmem:[%s1 + $0x18] sm:$0xff]
      %v200 = vld [vmem:[%s1 + $0x20] sm:$0xff]
      %v201 = vld [vmem:[%s1 + $0x28] sm:$0xff]
      %v202 = vld [vmem:[%s1 + $0x30] sm:$0xff]
      %v203 = vld [vmem:[%s1 + $0x38] sm:$0xff]
      %v204 = vld [vmem:[%s1 + $0x40] sm:$0xff]
      %v205 = vld [vmem:[%s1 + $0x48] sm:$0xff]
      %v206 = vld [vmem:[%s1 + $0x50] sm:$0xff]
      %v207 = vld [vmem:[%s1 + $0x58] sm:$0xff]
      %v208 = vld [vmem:[%s1 + $0x60] sm:$0xff]
      %v209 = vld [vmem:[%s1 + $0x68] sm:$0xff]
      %v210 = vld [vmem:[%s1 + $0x70] sm:$0xff]
      %v211 = vld [vmem:[%s1 + $0x78] sm:$0xff]
      %v212 = vld [vmem:[%s1 + $0x80] sm:$0xff]
      %v213 = vld [vmem:[%s1 + $0x88] sm:$0xff]
      %v214 = vld [vmem:[%s1 + $0x90] sm:$0xff]
      %v215 = vld [vmem:[%s1 + $0x98] sm:$0xff]
      %v216 = vld [vmem:[%s1 + $0xa0] sm:$0xff]
      %v217 = vld [vmem:[%s1 + $0xa8] sm:$0xff]
      %v218 = vld [vmem:[%s1 + $0xb0] sm:$0xff]
      %v219 = vld [vmem:[%s1 + $0xb8] sm:$0xff]
      %v220 = vld [vmem:[%s1 + $0xc0] sm:$0xff]
      %v221 = vld [vmem:[%s1 + $0xc8] sm:$0xff]
      %v222 = vld [vmem:[%s1 + $0xd0] sm:$0xff]
      %v223 = vld [vmem:[%s1 + $0xd8] sm:$0xff]
      %v224 = vld [vmem:[%s1 + $0xe0] sm:$0xff]
      %v225 = vld [vmem:[%s1 + $0xe8] sm:$0xff]
      %v226 = vld [vmem:[%s1 + $0xf0] sm:$0xff]
      %v227 = vld [vmem:[%s1 + $0xf8] sm:$0xff]
      %v228 = vld [vmem:[%s1 + $0x100] sm:$0xff]
      %v229 = vld [vmem:[%s1 + $0x108] sm:$0xff]
      %v230 = vld [vmem:[%s1 + $0x110] sm:$0xff]
      %v231 = vld [vmem:[%s1 + $0x118] sm:$0xff]
      %v232 = vld [vmem:[%s1 + $0x120] sm:$0xff]
      %v233 = vld [vmem:[%s1 + $0x128] sm:$0xff]
      %v234 = vld [vmem:[%s1 + $0x130] sm:$0xff]
      %v235 = vld [vmem:[%s1 + $0x138] sm:$0xff]
      %v236 = vld [vmem:[%s1 + $0x140] sm:$0xff]
      %v237 = vld [vmem:[%s1 + $0x148] sm:$0xff]
      %v238 = vld [vmem:[%s1 + $0x150] sm:$0xff]
      %v239 = vld [vmem:[%s1 + $0x158] sm:$0xff]
      %v240 = vld [vmem:[%s1 + $0x160] sm:$0xff]
      %v241 = vld [vmem:[%s1 + $0x168] sm:$0xff]
      %v242 = vld [vmem:[%s1 + $0x170] sm:$0xff]
      %v243 = vld [vmem:[%s1 + $0x178] sm:$0xff]
      %v244 = vld [vmem:[%s1 + $0x180] sm:$0xff]
      %v245 = vld [vmem:[%s1 + $0x188] sm:$0xff]
      %v246 = vld [vmem:[%s1 + $0x190] sm:$0xff]
      %v247 = vld [vmem:[%s1 + $0x198] sm:$0xff]
      %v248 = vld [vmem:[%s1 + $0x1a0] sm:$0xff]
      %v249 = vld [vmem:[%s1 + $0x1a8] sm:$0xff]
      %v250 = vld [vmem:[%s1 + $0x1b0] sm:$0xff]
      %v251 = vld [vmem:[%s1 + $0x1b8] sm:$0xff]
      %v252 = vld [vmem:[%s1 + $0x1c0] sm:$0xff]
      %v253 = vld [vmem:[%s1 + $0x1c8] sm:$0xff]
      %v254 = vld [vmem:[%s1 + $0x1d0] sm:$0xff]
      %v255 = vld [vmem:[%s1 + $0x1d8] sm:$0xff]
      %v256 = vld [vmem:[%s1 + $0x1e0] sm:$0xff]
      %v257 = vld [vmem:[%s1 + $0x1e8] sm:$0xff]
      %v258 = vld [vmem:[%s1 + $0x1f0] sm:$0xff]
      %v259 = vld [vmem:[%s1 + $0x1f8] sm:$0xff]
      %v260 = vld [vmem:[%s1 + $0x200] sm:$0xff]
      %v261 = vld [vmem:[%s1 + $0x208] sm:$0xff]
      %v262 = vld [vmem:[%s1 + $0x210] sm:$0xff]
      %v263 = vld [vmem:[%s1 + $0x218] sm:$0xff]
      %v264 = vld [vmem:[%s1 + $0x220] sm:$0xff]
      %v265 = vld [vmem:[%s1 + $0x228] sm:$0xff]
      %v266 = vld [vmem:[%s1 + $0x230] sm:$0xff]
      %v267 = vld [vmem:[%s1 + $0x238] sm:$0xff]
      %v268 = vld [vmem:[%s1 + $0x240] sm:$0xff]
      %v269 = vld [vmem:[%s1 + $0x248] sm:$0xff]
      %v270 = vld [vmem:[%s1 + $0x250] sm:$0xff]
      %v271 = vld [vmem:[%s1 + $0x258] sm:$0xff]
      %v272 = vld [vmem:[%s1 + $0x260] sm:$0xff]
      %v273 = vld [vmem:[%s1 + $0x268] sm:$0xff]
      %v274 = vld [vmem:[%s1 + $0x270] sm:$0xff]
      %v275 = vld [vmem:[%s1 + $0x278] sm:$0xff]
      %v276 = vld [vmem:[%s1 + $0x280] sm:$0xff]
      %v277 = vld [vmem:[%s1 + $0x288] sm:$0xff]
      %v278 = vld [vmem:[%s1 + $0x290] sm:$0xff]
      %v279 = vld [vmem:[%s1 + $0x298] sm:$0xff]
      %v280 = vld [vmem:[%s1 + $0x2a0] sm:$0xff]
      %v281 = vld [vmem:[%s1 + $0x2a8] sm:$0xff]
      %v282 = vld [vmem:[%s1 + $0x2b0] sm:$0xff]
      %v283 = vld [vmem:[%s1 + $0x2b8] sm:$0xff]
      %v284 = vld [vmem:[%s1 + $0x2c0] sm:$0xff]
      %v285 = vld [vmem:[%s1 + $0x2c8] sm:$0xff]
      %v286 = vld [vmem:[%s1 + $0x2d0] sm:$0xff]
      %v287 = vld [vmem:[%s1 + $0x2d8] sm:$0xff]
      %v288 = vld [vmem:[%s1 + $0x2e0] sm:$0xff]
      %v289 = vld [vmem:[%s1 + $0x2e8] sm:$0xff]
      %v290 = vld [vmem:[%s1 + $0x2f0] sm:$0xff]
      %v291 = vld [vmem:[%s1 + $0x2f8] sm:$0xff]
      %v292 = vld [vmem:[%s1 + $0x300] sm:$0xff]
      %v293 = vld [vmem:[%s1 + $0x308] sm:$0xff]
      %v294 = vld [vmem:[%s1 + $0x310] sm:$0xff]
      %v295 = vld [vmem:[%s1 + $0x318] sm:$0xff]
      %v296 = vld [vmem:[%s1 + $0x320] sm:$0xff]
      %v297 = vld [vmem:[%s1 + $0x328] sm:$0xff]
      %v298 = vld [vmem:[%s1 + $0x330] sm:$0xff]
      %v299 = vld [vmem:[%s1 + $0x338] sm:$0xff]
      %v300 = vld [vmem:[%s1 + $0x340] sm:$0xff]
      %v301 = vld [vmem:[%s1 + $0x348] sm:$0xff]
      %v302 = vld [vmem:[%s1 + $0x350] sm:$0xff]
      %v303 = vld [vmem:[%s1 + $0x358] sm:$0xff]
      %v304 = vld [vmem:[%s1 + $0x360] sm:$0xff]
      %v305 = vld [vmem:[%s1 + $0x368] sm:$0xff]
      %v306 = vld [vmem:[%s1 + $0x370] sm:$0xff]
      %v307 = vld [vmem:[%s1 + $0x378] sm:$0xff]
      %v308 = vld [vmem:[%s1 + $0x380] sm:$0xff]
      %v309 = vld [vmem:[%s1 + $0x388] sm:$0xff]
      %v310 = vld [vmem:[%s1 + $0x390] sm:$0xff]
      %v311 = vld [vmem:[%s1 + $0x398] sm:$0xff]
      %v312 = vld [vmem:[%s1 + $0x3a0] sm:$0xff]
      %v313 = vld [vmem:[%s1 + $0x3a8] sm:$0xff]
      %v314 = vld [vmem:[%s1 + $0x3b0] sm:$0xff]
      %v315 = vld [vmem:[%s1 + $0x3b8] sm:$0xff]
      %v316 = vld [vmem:[%s1 + $0x3c0] sm:$0xff]
      %v317 = vld [vmem:[%s1 + $0x3c8] sm:$0xff]
      %v318 = vld [vmem:[%s1 + $0x3d0] sm:$0xff]
      %v319 = vld [vmem:[%s1 + $0x3d8] sm:$0xff]
      %v320 = vld [vmem:[%s1 + $0x3e0] sm:$0xff]
      %v321 = vld [vmem:[%s1 + $0x3e8] sm:$0xff]
      %v322 = vld [vmem:[%s1 + $0x3f0] sm:$0xff]
      %v323 = vld [vmem:[%s1 + $0x3f8] sm:$0xff]
      %v324 = vld [vmem:[%s1 + $0x400] sm:$0xff]
      %v325 = vld [vmem:[%s1 + $0x408] sm:$0xff]
      %v326 = vld [vmem:[%s1 + $0x410] sm:$0xff]
      %v327 = vld [vmem:[%s1 + $0x418] sm:$0xff]
      %v328 = vld [vmem:[%s1 + $0x420] sm:$0xff]
      %v329 = vld [vmem:[%s1 + $0x428] sm:$0xff]
      %v330 = vld [vmem:[%s1 + $0x430] sm:$0xff]
      %v331 = vld [vmem:[%s1 + $0x438] sm:$0xff]
      %v332 = vld [vmem:[%s1 + $0x440] sm:$0xff]
      %v333 = vld [vmem:[%s1 + $0x448] sm:$0xff]
      %v334 = vld [vmem:[%s1 + $0x450] sm:$0xff]
      %v335 = vld [vmem:[%s1 + $0x458] sm:$0xff]
      %v336 = vld [vmem:[%s1 + $0x460] sm:$0xff]
      %v337 = vld [vmem:[%s1 + $0x468] sm:$0xff]
      %v338 = vld [vmem:[%s1 + $0x470] sm:$0xff]
      %v339 = vld [vmem:[%s1 + $0x478] sm:$0xff]
      %v340 = vld [vmem:[%s1 + $0x480] sm:$0xff]
      %v341 = vld [vmem:[%s1 + $0x488] sm:$0xff]
      %v342 = vld [vmem:[%s1 + $0x490] sm:$0xff]
      %v343 = vld [vmem:[%s1 + $0x498] sm:$0xff]
      %v344 = vld [vmem:[%s1 + $0x4a0] sm:$0xff]
      %v345 = vld [vmem:[%s1 + $0x4a8] sm:$0xff]
      %v346 = vld [vmem:[%s1 + $0x4b0] sm:$0xff]
      %v347 = vld [vmem:[%s1 + $0x4b8] sm:$0xff]
      %v348 = vld [vmem:[%s1 + $0x4c0] sm:$0xff]
      %v349 = vld [vmem:[%s1 + $0x4c8] sm:$0xff]
      %v350 = vld [vmem:[%s1 + $0x4d0] sm:$0xff]
      %v351 = vld [vmem:[%s1 + $0x4d8] sm:$0xff]
      %v352 = vld [vmem:[%s1 + $0x4e0] sm:$0xff]
      %v353 = vld [vmem:[%s1 + $0x4e8] sm:$0xff]
      %v354 = vld [vmem:[%s1 + $0x4f0] sm:$0xff]
      %v355 = vld [vmem:[%s1 + $0x4f8] sm:$0xff]
      %v356 = vld [vmem:[%s1 + $0x500] sm:$0xff]
      %v357 = vld [vmem:[%s1 + $0x508] sm:$0xff]
      %v358 = vld [vmem:[%s1 + $0x510] sm:$0xff]
      %v359 = vld [vmem:[%s1 + $0x518] sm:$0xff]
      %v360 = vld [vmem:[%s1 + $0x520] sm:$0xff]
      %v361 = vld [vmem:[%s1 + $0x528] sm:$0xff]
      %v362 = vld [vmem:[%s1 + $0x530] sm:$0xff]
      %v363 = vld [vmem:[%s1 + $0x538] sm:$0xff]
      %v364 = vld [vmem:[%s1 + $0x540] sm:$0xff]
      %v365 = vld [vmem:[%s1 + $0x548] sm:$0xff]
      %v366 = vld [vmem:[%s1 + $0x550] sm:$0xff]
      %v367 = vld [vmem:[%s1 + $0x558] sm:$0xff]
      %v368 = vld [vmem:[%s1 + $0x560] sm:$0xff]
      %v369 = vld [vmem:[%s1 + $0x568] sm:$0xff]
      %v370 = vld [vmem:[%s1 + $0x570] sm:$0xff]
      %v371 = vld [vmem:[%s1 + $0x578] sm:$0xff]
      %v372 = vld [vmem:[%s1 + $0x580] sm:$0xff]
      %v373 = vld [vmem:[%s1 + $0x588] sm:$0xff]
      %v374 = vld [vmem:[%s1 + $0x590] sm:$0xff]
      %v375 = vld [vmem:[%s1 + $0x598] sm:$0xff]
      %v376 = vld [vmem:[%s1 + $0x5a0] sm:$0xff]
      %v377 = vld [vmem:[%s1 + $0x5a8] sm:$0xff]
      %v378 = vld [vmem:[%s1 + $0x5b0] sm:$0xff]
      %v379 = vld [vmem:[%s1 + $0x5b8] sm:$0x77]
      %v380 = vld [vmem:[%s2] sm:$0x3]
      %v382 = vperm.slane %v380, 0
      %v383 = vperm.slane %v380, 1
      %v410 = vunpack.c.l.b16 %v172
      %v411 = vunpack.c.h.b16 %v172
      %v412 = vunpack.c.l.b16 %v173
      %v413 = vunpack.c.h.b16 %v173
      %v414 = vunpack.c.l.b16 %v174
      %v415 = vunpack.c.h.b16 %v174
      %v416 = vunpack.c.l.b16 %v175
      %v417 = vunpack.c.h.b16 %v175
      %v418 = vunpack.c.l.b16 %v176
      %v419 = vunpack.c.h.b16 %v176
      %v420 = vunpack.c.l.b16 %v177
      %v421 = vunpack.c.h.b16 %v177
      %v422 = vunpack.c.l.b16 %v178
      %v423 = vunpack.c.h.b16 %v178
      %v424 = vunpack.c.l.b16 %v179
      %v425 = vunpack.c.h.b16 %v179
      %v426 = vunpack.c.l.b16 %v180
      %v427 = vunpack.c.h.b16 %v180
      %v428 = vunpack.c.l.b16 %v181
      %v429 = vunpack.c.h.b16 %v181
      %v430 = vunpack.c.l.b16 %v182
      %v431 = vunpack.c.h.b16 %v182
      %v432 = vunpack.c.l.b16 %v183
      %v433 = vunpack.c.h.b16 %v183
      %v434 = vunpack.c.l.b16 %v184
      %v435 = vunpack.c.h.b16 %v184
      %v436 = vunpack.c.l.b16 %v185
      %v437 = vunpack.c.h.b16 %v185
      %v438 = vunpack.c.l.b16 %v186
      %v439 = vunpack.c.h.b16 %v186
      %v440 = vunpack.c.l.b16 %v187
      %v441 = vunpack.c.h.b16 %v187
      %v442 = vunpack.c.l.b16 %v188
      %v443 = vunpack.c.h.b16 %v188
      %v444 = vunpack.c.l.b16 %v189
      %v445 = vunpack.c.h.b16 %v189
      %v446 = vunpack.c.l.b16 %v190
      %v447 = vunpack.c.h.b16 %v190
      %v448 = vunpack.c.l.b16 %v191
      %v449 = vunpack.c.h.b16 %v191
      %v450 = vunpack.c.l.b16 %v192
      %v451 = vunpack.c.h.b16 %v192
      %v452 = vunpack.c.l.b16 %v193
      %v453 = vunpack.c.h.b16 %v193
      %v454 = vunpack.c.l.b16 %v194
      %v455 = vunpack.c.h.b16 %v194
      %v456 = vunpack.c.l.b16 %v195
      %v457 = vunpack.c.h.b16 %v195
      %v458 = vpack.c.b16 %v422, %v410
      %v459 = vpack.c.b16 %v423, %v411
      %v460 = vpack.c.b16 %v424, %v412
      %v461 = vpack.c.b16 %v425, %v413
      %v462 = vpack.c.b16 %v426, %v414
      %v463 = vpack.c.b16 %v427, %v415
      %v464 = vpack.c.b16 %v428, %v416
      %v465 = vpack.c.b16 %v429, %v417
      %v466 = vpack.c.b16 %v430, %v418
      %v467 = vpack.c.b16 %v431, %v419
      %v468 = vpack.c.b16 %v432, %v420
      %v469 = vpack.c.b16 %v433, %v421
      %v470 = vpack.c.b16 %v446, %v434
      %v471 = vpack.c.b16 %v447, %v435
      %v472 = vpack.c.b16 %v448, %v436
      %v473 = vpack.c.b16 %v449, %v437
      %v474 = vpack.c.b16 %v450, %v438
      %v475 = vpack.c.b16 %v451, %v439
      %v476 = vpack.c.b16 %v452, %v440
      %v477 = vpack.c.b16 %v453, %v441
      %v478 = vpack.c.b16 %v454, %v442
      %v479 = vpack.c.b16 %v455, %v443
      %v480 = vpack.c.b16 %v456, %v444
      %v481 = vpack.c.b16 %v457, %v445
      %v688 = vunpack.c.l.b16 %v196
      %v689 = vunpack.c.h.b16 %v196
      %v690 = vunpack.c.l.b16 %v197
      %v691 = vunpack.c.h.b16 %v197
      %v692 = vunpack.c.l.b16 %v198
      %v693 = vunpack.c.h.b16 %v198
      %v694 = vunpack.c.l.b16 %v199
      %v695 = vunpack.c.h.b16 %v199
      %v696 = vunpack.c.l.b16 %v200
      %v697 = vunpack.c.h.b16 %v200
      %v698 = vunpack.c.l.b16 %v201
      %v699 = vunpack.c.h.b16 %v201
      %v700 = vunpack.c.l.b16 %v202
      %v701 = vunpack.c.h.b16 %v202
      %v702 = vunpack.c.l.b16 %v203
      %v703 = vunpack.c.h.b16 %v203
      %v704 = vunpack.c.l.b16 %v204
      %v705 = vunpack.c.h.b16 %v204
      %v706 = vunpack.c.l.b16 %v205
      %v707 = vunpack.c.h.b16 %v205
      %v708 = vunpack.c.l.b16 %v206
      %v709 = vunpack.c.h.b16 %v206
      %v710 = vunpack.c.l.b16 %v207
      %v711 = vunpack.c.h.b16 %v207
      %v712 = vunpack.c.l.b16 %v208
      %v713 = vunpack.c.h.b16 %v208
      %v714 = vunpack.c.l.b16 %v209
      %v715 = vunpack.c.h.b16 %v209
      %v716 = vunpack.c.l.b16 %v210
      %v717 = vunpack.c.h.b16 %v210
      %v718 = vunpack.c.l.b16 %v211
      %v719 = vunpack.c.h.b16 %v211
      %v720 = vunpack.c.l.b16 %v212
      %v721 = vunpack.c.h.b16 %v212
      %v722 = vunpack.c.l.b16 %v213
      %v723 = vunpack.c.h.b16 %v213
      %v724 = vunpack.c.l.b16 %v214
      %v725 = vunpack.c.h.b16 %v214
      %v726 = vunpack.c.l.b16 %v215
      %v727 = vunpack.c.h.b16 %v215
      %v728 = vunpack.c.l.b16 %v216
      %v729 = vunpack.c.h.b16 %v216
      %v730 = vunpack.c.l.b16 %v217
      %v731 = vunpack.c.h.b16 %v217
      %v732 = vunpack.c.l.b16 %v218
      %v733 = vunpack.c.h.b16 %v218
      %v734 = vunpack.c.l.b16 %v219
      %v735 = vunpack.c.h.b16 %v219
      %v736 = vunpack.c.l.b16 %v220
      %v737 = vunpack.c.h.b16 %v220
      %v738 = vunpack.c.l.b16 %v221
      %v739 = vunpack.c.h.b16 %v221
      %v740 = vunpack.c.l.b16 %v222
      %v741 = vunpack.c.h.b16 %v222
      %v742 = vunpack.c.l.b16 %v223
      %v743 = vunpack.c.h.b16 %v223
      %v744 = vunpack.c.l.b16 %v224
      %v745 = vunpack.c.h.b16 %v224
      %v746 = vunpack.c.l.b16 %v225
      %v747 = vunpack.c.h.b16 %v225
      %v748 = vunpack.c.l.b16 %v226
      %v749 = vunpack.c.h.b16 %v226
      %v750 = vunpack.c.l.b16 %v227
      %v751 = vunpack.c.h.b16 %v227
      %v752 = vunpack.c.l.b16 %v228
      %v753 = vunpack.c.h.b16 %v228
      %v754 = vunpack.c.l.b16 %v229
      %v755 = vunpack.c.h.b16 %v229
      %v756 = vunpack.c.l.b16 %v230
      %v757 = vunpack.c.h.b16 %v230
      %v758 = vunpack.c.l.b16 %v231
      %v759 = vunpack.c.h.b16 %v231
      %v760 = vunpack.c.l.b16 %v232
      %v761 = vunpack.c.h.b16 %v232
      %v762 = vunpack.c.l.b16 %v233
      %v763 = vunpack.c.h.b16 %v233
      %v764 = vunpack.c.l.b16 %v234
      %v765 = vunpack.c.h.b16 %v234
      %v766 = vunpack.c.l.b16 %v235
      %v767 = vunpack.c.h.b16 %v235
      %v768 = vunpack.c.l.b16 %v236
      %v769 = vunpack.c.h.b16 %v236
      %v770 = vunpack.c.l.b16 %v237
      %v771 = vunpack.c.h.b16 %v237
      %v772 = vunpack.c.l.b16 %v238
      %v773 = vunpack.c.h.b16 %v238
      %v774 = vunpack.c.l.b16 %v239
      %v775 = vunpack.c.h.b16 %v239
      %v776 = vunpack.c.l.b16 %v240
      %v777 = vunpack.c.h.b16 %v240
      %v778 = vunpack.c.l.b16 %v241
      %v779 = vunpack.c.h.b16 %v241
      %v780 = vunpack.c.l.b16 %v242
      %v781 = vunpack.c.h.b16 %v242
      %v782 = vunpack.c.l.b16 %v243
      %v783 = vunpack.c.h.b16 %v243
      %v784 = vunpack.c.l.b16 %v244
      %v785 = vunpack.c.h.b16 %v244
      %v786 = vunpack.c.l.b16 %v245
      %v787 = vunpack.c.h.b16 %v245
      %v788 = vunpack.c.l.b16 %v246
      %v789 = vunpack.c.h.b16 %v246
      %v790 = vunpack.c.l.b16 %v247
      %v791 = vunpack.c.h.b16 %v247
      %v792 = vunpack.c.l.b16 %v248
      %v793 = vunpack.c.h.b16 %v248
      %v794 = vunpack.c.l.b16 %v249
      %v795 = vunpack.c.h.b16 %v249
      %v796 = vunpack.c.l.b16 %v250
      %v797 = vunpack.c.h.b16 %v250
      %v798 = vunpack.c.l.b16 %v251
      %v799 = vunpack.c.h.b16 %v251
      %v800 = vunpack.c.l.b16 %v252
      %v801 = vunpack.c.h.b16 %v252
      %v802 = vunpack.c.l.b16 %v253
      %v803 = vunpack.c.h.b16 %v253
      %v804 = vunpack.c.l.b16 %v254
      %v805 = vunpack.c.h.b16 %v254
      %v806 = vunpack.c.l.b16 %v255
      %v807 = vunpack.c.h.b16 %v255
      %v808 = vunpack.c.l.b16 %v256
      %v809 = vunpack.c.h.b16 %v256
      %v810 = vunpack.c.l.b16 %v257
      %v811 = vunpack.c.h.b16 %v257
      %v812 = vunpack.c.l.b16 %v258
      %v813 = vunpack.c.h.b16 %v258
      %v814 = vunpack.c.l.b16 %v259
      %v815 = vunpack.c.h.b16 %v259
      %v816 = vunpack.c.l.b16 %v260
      %v817 = vunpack.c.h.b16 %v260
      %v818 = vunpack.c.l.b16 %v261
      %v819 = vunpack.c.h.b16 %v261
      %v820 = vunpack.c.l.b16 %v262
      %v821 = vunpack.c.h.b16 %v262
      %v822 = vunpack.c.l.b16 %v263
      %v823 = vunpack.c.h.b16 %v263
      %v824 = vunpack.c.l.b16 %v264
      %v825 = vunpack.c.h.b16 %v264
      %v826 = vunpack.c.l.b16 %v265
      %v827 = vunpack.c.h.b16 %v265
      %v828 = vunpack.c.l.b16 %v266
      %v829 = vunpack.c.h.b16 %v266
      %v830 = vunpack.c.l.b16 %v267
      %v831 = vunpack.c.h.b16 %v267
      %v832 = vunpack.c.l.b16 %v268
      %v833 = vunpack.c.h.b16 %v268
      %v834 = vunpack.c.l.b16 %v269
      %v835 = vunpack.c.h.b16 %v269
      %v836 = vunpack.c.l.b16 %v270
      %v837 = vunpack.c.h.b16 %v270
      %v838 = vunpack.c.l.b16 %v271
      %v839 = vunpack.c.h.b16 %v271
      %v840 = vunpack.c.l.b16 %v272
      %v841 = vunpack.c.h.b16 %v272
      %v842 = vunpack.c.l.b16 %v273
      %v843 = vunpack.c.h.b16 %v273
      %v844 = vunpack.c.l.b16 %v274
      %v845 = vunpack.c.h.b16 %v274
      %v846 = vunpack.c.l.b16 %v275
      %v847 = vunpack.c.h.b16 %v275
      %v848 = vunpack.c.l.b16 %v276
      %v849 = vunpack.c.h.b16 %v276
      %v850 = vunpack.c.l.b16 %v277
      %v851 = vunpack.c.h.b16 %v277
      %v852 = vunpack.c.l.b16 %v278
      %v853 = vunpack.c.h.b16 %v278
      %v854 = vunpack.c.l.b16 %v279
      %v855 = vunpack.c.h.b16 %v279
      %v856 = vunpack.c.l.b16 %v280
      %v857 = vunpack.c.h.b16 %v280
      %v858 = vunpack.c.l.b16 %v281
      %v859 = vunpack.c.h.b16 %v281
      %v860 = vunpack.c.l.b16 %v282
      %v861 = vunpack.c.h.b16 %v282
      %v862 = vunpack.c.l.b16 %v283
      %v863 = vunpack.c.h.b16 %v283
      %v864 = vunpack.c.l.b16 %v284
      %v865 = vunpack.c.h.b16 %v284
      %v866 = vunpack.c.l.b16 %v285
      %v867 = vunpack.c.h.b16 %v285
      %v868 = vunpack.c.l.b16 %v286
      %v869 = vunpack.c.h.b16 %v286
      %v870 = vunpack.c.l.b16 %v287
      %v871 = vunpack.c.h.b16 %v287
      %v872 = vunpack.c.l.b16 %v288
      %v873 = vunpack.c.h.b16 %v288
      %v874 = vunpack.c.l.b16 %v289
      %v875 = vunpack.c.h.b16 %v289
      %v876 = vunpack.c.l.b16 %v290
      %v877 = vunpack.c.h.b16 %v290
      %v878 = vunpack.c.l.b16 %v291
      %v879 = vunpack.c.h.b16 %v291
      %v880 = vunpack.c.l.b16 %v292
      %v881 = vunpack.c.h.b16 %v292
      %v882 = vunpack.c.l.b16 %v293
      %v883 = vunpack.c.h.b16 %v293
      %v884 = vunpack.c.l.b16 %v294
      %v885 = vunpack.c.h.b16 %v294
      %v886 = vunpack.c.l.b16 %v295
      %v887 = vunpack.c.h.b16 %v295
      %v888 = vunpack.c.l.b16 %v296
      %v889 = vunpack.c.h.b16 %v296
      %v890 = vunpack.c.l.b16 %v297
      %v891 = vunpack.c.h.b16 %v297
      %v892 = vunpack.c.l.b16 %v298
      %v893 = vunpack.c.h.b16 %v298
      %v894 = vunpack.c.l.b16 %v299
      %v895 = vunpack.c.h.b16 %v299
      %v896 = vunpack.c.l.b16 %v300
      %v897 = vunpack.c.h.b16 %v300
      %v898 = vunpack.c.l.b16 %v301
      %v899 = vunpack.c.h.b16 %v301
      %v900 = vunpack.c.l.b16 %v302
      %v901 = vunpack.c.h.b16 %v302
      %v902 = vunpack.c.l.b16 %v303
      %v903 = vunpack.c.h.b16 %v303
      %v904 = vunpack.c.l.b16 %v304
      %v905 = vunpack.c.h.b16 %v304
      %v906 = vunpack.c.l.b16 %v305
      %v907 = vunpack.c.h.b16 %v305
      %v908 = vunpack.c.l.b16 %v306
      %v909 = vunpack.c.h.b16 %v306
      %v910 = vunpack.c.l.b16 %v307
      %v911 = vunpack.c.h.b16 %v307
      %v912 = vunpack.c.l.b16 %v308
      %v913 = vunpack.c.h.b16 %v308
      %v914 = vunpack.c.l.b16 %v309
      %v915 = vunpack.c.h.b16 %v309
      %v916 = vunpack.c.l.b16 %v310
      %v917 = vunpack.c.h.b16 %v310
      %v918 = vunpack.c.l.b16 %v311
      %v919 = vunpack.c.h.b16 %v311
      %v920 = vunpack.c.l.b16 %v312
      %v921 = vunpack.c.h.b16 %v312
      %v922 = vunpack.c.l.b16 %v313
      %v923 = vunpack.c.h.b16 %v313
      %v924 = vunpack.c.l.b16 %v314
      %v925 = vunpack.c.h.b16 %v314
      %v926 = vunpack.c.l.b16 %v315
      %v927 = vunpack.c.h.b16 %v315
      %v928 = vunpack.c.l.b16 %v316
      %v929 = vunpack.c.h.b16 %v316
      %v930 = vunpack.c.l.b16 %v317
      %v931 = vunpack.c.h.b16 %v317
      %v932 = vunpack.c.l.b16 %v318
      %v933 = vunpack.c.h.b16 %v318
      %v934 = vunpack.c.l.b16 %v319
      %v935 = vunpack.c.h.b16 %v319
      %v936 = vunpack.c.l.b16 %v320
      %v937 = vunpack.c.h.b16 %v320
      %v938 = vunpack.c.l.b16 %v321
      %v939 = vunpack.c.h.b16 %v321
      %v940 = vunpack.c.l.b16 %v322
      %v941 = vunpack.c.h.b16 %v322
      %v942 = vunpack.c.l.b16 %v323
      %v943 = vunpack.c.h.b16 %v323
      %v944 = vunpack.c.l.b16 %v324
      %v945 = vunpack.c.h.b16 %v324
      %v946 = vunpack.c.l.b16 %v325
      %v947 = vunpack.c.h.b16 %v325
      %v948 = vunpack.c.l.b16 %v326
      %v949 = vunpack.c.h.b16 %v326
      %v950 = vunpack.c.l.b16 %v327
      %v951 = vunpack.c.h.b16 %v327
      %v952 = vunpack.c.l.b16 %v328
      %v953 = vunpack.c.h.b16 %v328
      %v954 = vunpack.c.l.b16 %v329
      %v955 = vunpack.c.h.b16 %v329
      %v956 = vunpack.c.l.b16 %v330
      %v957 = vunpack.c.h.b16 %v330
      %v958 = vunpack.c.l.b16 %v331
      %v959 = vunpack.c.h.b16 %v331
      %v960 = vunpack.c.l.b16 %v332
      %v961 = vunpack.c.h.b16 %v332
      %v962 = vunpack.c.l.b16 %v333
      %v963 = vunpack.c.h.b16 %v333
      %v964 = vunpack.c.l.b16 %v334
      %v965 = vunpack.c.h.b16 %v334
      %v966 = vunpack.c.l.b16 %v335
      %v967 = vunpack.c.h.b16 %v335
      %v968 = vunpack.c.l.b16 %v336
      %v969 = vunpack.c.h.b16 %v336
      %v970 = vunpack.c.l.b16 %v337
      %v971 = vunpack.c.h.b16 %v337
      %v972 = vunpack.c.l.b16 %v338
      %v973 = vunpack.c.h.b16 %v338
      %v974 = vunpack.c.l.b16 %v339
      %v975 = vunpack.c.h.b16 %v339
      %v976 = vunpack.c.l.b16 %v340
      %v977 = vunpack.c.h.b16 %v340
      %v978 = vunpack.c.l.b16 %v341
      %v979 = vunpack.c.h.b16 %v341
      %v980 = vunpack.c.l.b16 %v342
      %v981 = vunpack.c.h.b16 %v342
      %v982 = vunpack.c.l.b16 %v343
      %v983 = vunpack.c.h.b16 %v343
      %v984 = vunpack.c.l.b16 %v344
      %v985 = vunpack.c.h.b16 %v344
      %v986 = vunpack.c.l.b16 %v345
      %v987 = vunpack.c.h.b16 %v345
      %v988 = vunpack.c.l.b16 %v346
      %v989 = vunpack.c.h.b16 %v346
      %v990 = vunpack.c.l.b16 %v347
      %v991 = vunpack.c.h.b16 %v347
      %v992 = vunpack.c.l.b16 %v348
      %v993 = vunpack.c.h.b16 %v348
      %v994 = vunpack.c.l.b16 %v349
      %v995 = vunpack.c.h.b16 %v349
      %v996 = vunpack.c.l.b16 %v350
      %v997 = vunpack.c.h.b16 %v350
      %v998 = vunpack.c.l.b16 %v351
      %v999 = vunpack.c.h.b16 %v351
      %v1000 = vunpack.c.l.b16 %v352
      %v1001 = vunpack.c.h.b16 %v352
      %v1002 = vunpack.c.l.b16 %v353
      %v1003 = vunpack.c.h.b16 %v353
      %v1004 = vunpack.c.l.b16 %v354
      %v1005 = vunpack.c.h.b16 %v354
      %v1006 = vunpack.c.l.b16 %v355
      %v1007 = vunpack.c.h.b16 %v355
      %v1008 = vunpack.c.l.b16 %v356
      %v1009 = vunpack.c.h.b16 %v356
      %v1010 = vunpack.c.l.b16 %v357
      %v1011 = vunpack.c.h.b16 %v357
      %v1012 = vunpack.c.l.b16 %v358
      %v1013 = vunpack.c.h.b16 %v358
      %v1014 = vunpack.c.l.b16 %v359
      %v1015 = vunpack.c.h.b16 %v359
      %v1016 = vunpack.c.l.b16 %v360
      %v1017 = vunpack.c.h.b16 %v360
      %v1018 = vunpack.c.l.b16 %v361
      %v1019 = vunpack.c.h.b16 %v361
      %v1020 = vunpack.c.l.b16 %v362
      %v1021 = vunpack.c.h.b16 %v362
      %v1022 = vunpack.c.l.b16 %v363
      %v1023 = vunpack.c.h.b16 %v363
      %v1024 = vunpack.c.l.b16 %v364
      %v1025 = vunpack.c.h.b16 %v364
      %v1026 = vunpack.c.l.b16 %v365
      %v1027 = vunpack.c.h.b16 %v365
      %v1028 = vunpack.c.l.b16 %v366
      %v1029 = vunpack.c.h.b16 %v366
      %v1030 = vunpack.c.l.b16 %v367
      %v1031 = vunpack.c.h.b16 %v367
      %v1032 = vunpack.c.l.b16 %v368
      %v1033 = vunpack.c.h.b16 %v368
      %v1034 = vunpack.c.l.b16 %v369
      %v1035 = vunpack.c.h.b16 %v369
      %v1036 = vunpack.c.l.b16 %v370
      %v1037 = vunpack.c.h.b16 %v370
      %v1038 = vunpack.c.l.b16 %v371
      %v1039 = vunpack.c.h.b16 %v371
      %v1040 = vunpack.c.l.b16 %v372
      %v1041 = vunpack.c.h.b16 %v372
      %v1042 = vunpack.c.l.b16 %v373
      %v1043 = vunpack.c.h.b16 %v373
      %v1044 = vunpack.c.l.b16 %v374
      %v1045 = vunpack.c.h.b16 %v374
      %v1046 = vunpack.c.l.b16 %v375
      %v1047 = vunpack.c.h.b16 %v375
      %v1048 = vunpack.c.l.b16 %v376
      %v1049 = vunpack.c.h.b16 %v376
      %v1050 = vunpack.c.l.b16 %v377
      %v1051 = vunpack.c.h.b16 %v377
      %v1052 = vunpack.c.l.b16 %v378
      %v1053 = vunpack.c.h.b16 %v378
      %v1054 = vunpack.c.l.b16 %v379
      %v1055 = vunpack.c.h.b16 %v379
      %v1056 = vpack.c.b16 %v690, %v688
      %v1057 = vpack.c.b16 %v691, %v689
      %v1058 = vpack.c.b16 %v694, %v692
      %v1059 = vpack.c.b16 %v695, %v693
      %v1060 = vpack.c.b16 %v698, %v696
      %v1061 = vpack.c.b16 %v699, %v697
      %v1062 = vpack.c.b16 %v702, %v700
      %v1063 = vpack.c.b16 %v703, %v701
      %v1064 = vpack.c.b16 %v706, %v704
      %v1065 = vpack.c.b16 %v707, %v705
      %v1066 = vpack.c.b16 %v710, %v708
      %v1067 = vpack.c.b16 %v711, %v709
      %v1068 = vpack.c.b16 %v714, %v712
      %v1069 = vpack.c.b16 %v715, %v713
      %v1070 = vpack.c.b16 %v718, %v716
      %v1071 = vpack.c.b16 %v719, %v717
      %v1072 = vpack.c.b16 %v722, %v720
      %v1073 = vpack.c.b16 %v723, %v721
      %v1074 = vpack.c.b16 %v726, %v724
      %v1075 = vpack.c.b16 %v727, %v725
      %v1076 = vpack.c.b16 %v730, %v728
      %v1077 = vpack.c.b16 %v731, %v729
      %v1078 = vpack.c.b16 %v734, %v732
      %v1079 = vpack.c.b16 %v735, %v733
      %v1080 = vpack.c.b16 %v738, %v736
      %v1081 = vpack.c.b16 %v739, %v737
      %v1082 = vpack.c.b16 %v742, %v740
      %v1083 = vpack.c.b16 %v743, %v741
      %v1084 = vpack.c.b16 %v746, %v744
      %v1085 = vpack.c.b16 %v747, %v745
      %v1086 = vpack.c.b16 %v750, %v748
      %v1087 = vpack.c.b16 %v751, %v749
      %v1088 = vpack.c.b16 %v754, %v752
      %v1089 = vpack.c.b16 %v755, %v753
      %v1090 = vpack.c.b16 %v758, %v756
      %v1091 = vpack.c.b16 %v759, %v757
      %v1092 = vpack.c.b16 %v762, %v760
      %v1093 = vpack.c.b16 %v763, %v761
      %v1094 = vpack.c.b16 %v766, %v764
      %v1095 = vpack.c.b16 %v767, %v765
      %v1096 = vpack.c.b16 %v770, %v768
      %v1097 = vpack.c.b16 %v771, %v769
      %v1098 = vpack.c.b16 %v774, %v772
      %v1099 = vpack.c.b16 %v775, %v773
      %v1100 = vpack.c.b16 %v778, %v776
      %v1101 = vpack.c.b16 %v779, %v777
      %v1102 = vpack.c.b16 %v782, %v780
      %v1103 = vpack.c.b16 %v783, %v781
      %v1104 = vpack.c.b16 %v786, %v784
      %v1105 = vpack.c.b16 %v787, %v785
      %v1106 = vpack.c.b16 %v790, %v788
      %v1107 = vpack.c.b16 %v791, %v789
      %v1108 = vpack.c.b16 %v794, %v792
      %v1109 = vpack.c.b16 %v795, %v793
      %v1110 = vpack.c.b16 %v798, %v796
      %v1111 = vpack.c.b16 %v799, %v797
      %v1112 = vpack.c.b16 %v802, %v800
      %v1113 = vpack.c.b16 %v803, %v801
      %v1114 = vpack.c.b16 %v806, %v804
      %v1115 = vpack.c.b16 %v807, %v805
      %v1116 = vpack.c.b16 %v810, %v808
      %v1117 = vpack.c.b16 %v811, %v809
      %v1118 = vpack.c.b16 %v814, %v812
      %v1119 = vpack.c.b16 %v815, %v813
      %v1120 = vpack.c.b16 %v818, %v816
      %v1121 = vpack.c.b16 %v819, %v817
      %v1122 = vpack.c.b16 %v822, %v820
      %v1123 = vpack.c.b16 %v823, %v821
      %v1124 = vpack.c.b16 %v826, %v824
      %v1125 = vpack.c.b16 %v827, %v825
      %v1126 = vpack.c.b16 %v830, %v828
      %v1127 = vpack.c.b16 %v831, %v829
      %v1128 = vpack.c.b16 %v834, %v832
      %v1129 = vpack.c.b16 %v835, %v833
      %v1130 = vpack.c.b16 %v838, %v836
      %v1131 = vpack.c.b16 %v839, %v837
      %v1132 = vpack.c.b16 %v842, %v840
      %v1133 = vpack.c.b16 %v843, %v841
      %v1134 = vpack.c.b16 %v846, %v844
      %v1135 = vpack.c.b16 %v847, %v845
      %v1136 = vpack.c.b16 %v850, %v848
      %v1137 = vpack.c.b16 %v851, %v849
      %v1138 = vpack.c.b16 %v854, %v852
      %v1139 = vpack.c.b16 %v855, %v853
      %v1140 = vpack.c.b16 %v858, %v856
      %v1141 = vpack.c.b16 %v859, %v857
      %v1142 = vpack.c.b16 %v862, %v860
      %v1143 = vpack.c.b16 %v863, %v861
      %v1144 = vpack.c.b16 %v866, %v864
      %v1145 = vpack.c.b16 %v867, %v865
      %v1146 = vpack.c.b16 %v870, %v868
      %v1147 = vpack.c.b16 %v871, %v869
      %v1148 = vpack.c.b16 %v874, %v872
      %v1149 = vpack.c.b16 %v875, %v873
      %v1150 = vpack.c.b16 %v878, %v876
      %v1151 = vpack.c.b16 %v879, %v877
      %v1152 = vpack.c.b16 %v882, %v880
      %v1153 = vpack.c.b16 %v883, %v881
      %v1154 = vpack.c.b16 %v886, %v884
      %v1155 = vpack.c.b16 %v887, %v885
      %v1156 = vpack.c.b16 %v890, %v888
      %v1157 = vpack.c.b16 %v891, %v889
      %v1158 = vpack.c.b16 %v894, %v892
      %v1159 = vpack.c.b16 %v895, %v893
      %v1160 = vpack.c.b16 %v898, %v896
      %v1161 = vpack.c.b16 %v899, %v897
      %v1162 = vpack.c.b16 %v902, %v900
      %v1163 = vpack.c.b16 %v903, %v901
      %v1164 = vpack.c.b16 %v906, %v904
      %v1165 = vpack.c.b16 %v907, %v905
      %v1166 = vpack.c.b16 %v910, %v908
      %v1167 = vpack.c.b16 %v911, %v909
      %v1168 = vpack.c.b16 %v914, %v912
      %v1169 = vpack.c.b16 %v915, %v913
      %v1170 = vpack.c.b16 %v918, %v916
      %v1171 = vpack.c.b16 %v919, %v917
      %v1172 = vpack.c.b16 %v922, %v920
      %v1173 = vpack.c.b16 %v923, %v921
      %v1174 = vpack.c.b16 %v926, %v924
      %v1175 = vpack.c.b16 %v927, %v925
      %v1176 = vpack.c.b16 %v930, %v928
      %v1177 = vpack.c.b16 %v931, %v929
      %v1178 = vpack.c.b16 %v934, %v932
      %v1179 = vpack.c.b16 %v935, %v933
      %v1180 = vpack.c.b16 %v938, %v936
      %v1181 = vpack.c.b16 %v939, %v937
      %v1182 = vpack.c.b16 %v942, %v940
      %v1183 = vpack.c.b16 %v943, %v941
      %v1184 = vpack.c.b16 %v946, %v944
      %v1185 = vpack.c.b16 %v947, %v945
      %v1186 = vpack.c.b16 %v950, %v948
      %v1187 = vpack.c.b16 %v951, %v949
      %v1188 = vpack.c.b16 %v954, %v952
      %v1189 = vpack.c.b16 %v955, %v953
      %v1190 = vpack.c.b16 %v958, %v956
      %v1191 = vpack.c.b16 %v959, %v957
      %v1192 = vpack.c.b16 %v962, %v960
      %v1193 = vpack.c.b16 %v963, %v961
      %v1194 = vpack.c.b16 %v966, %v964
      %v1195 = vpack.c.b16 %v967, %v965
      %v1196 = vpack.c.b16 %v970, %v968
      %v1197 = vpack.c.b16 %v971, %v969
      %v1198 = vpack.c.b16 %v974, %v972
      %v1199 = vpack.c.b16 %v975, %v973
      %v1200 = vpack.c.b16 %v978, %v976
      %v1201 = vpack.c.b16 %v979, %v977
      %v1202 = vpack.c.b16 %v982, %v980
      %v1203 = vpack.c.b16 %v983, %v981
      %v1204 = vpack.c.b16 %v986, %v984
      %v1205 = vpack.c.b16 %v987, %v985
      %v1206 = vpack.c.b16 %v990, %v988
      %v1207 = vpack.c.b16 %v991, %v989
      %v1208 = vpack.c.b16 %v994, %v992
      %v1209 = vpack.c.b16 %v995, %v993
      %v1210 = vpack.c.b16 %v998, %v996
      %v1211 = vpack.c.b16 %v999, %v997
      %v1212 = vpack.c.b16 %v1002, %v1000
      %v1213 = vpack.c.b16 %v1003, %v1001
      %v1214 = vpack.c.b16 %v1006, %v1004
      %v1215 = vpack.c.b16 %v1007, %v1005
      %v1216 = vpack.c.b16 %v1010, %v1008
      %v1217 = vpack.c.b16 %v1011, %v1009
      %v1218 = vpack.c.b16 %v1014, %v1012
      %v1219 = vpack.c.b16 %v1015, %v1013
      %v1220 = vpack.c.b16 %v1018, %v1016
      %v1221 = vpack.c.b16 %v1019, %v1017
      %v1222 = vpack.c.b16 %v1022, %v1020
      %v1223 = vpack.c.b16 %v1023, %v1021
      %v1224 = vpack.c.b16 %v1026, %v1024
      %v1225 = vpack.c.b16 %v1027, %v1025
      %v1226 = vpack.c.b16 %v1030, %v1028
      %v1227 = vpack.c.b16 %v1031, %v1029
      %v1228 = vpack.c.b16 %v1034, %v1032
      %v1229 = vpack.c.b16 %v1035, %v1033
      %v1230 = vpack.c.b16 %v1038, %v1036
      %v1231 = vpack.c.b16 %v1039, %v1037
      %v1232 = vpack.c.b16 %v1042, %v1040
      %v1233 = vpack.c.b16 %v1043, %v1041
      %v1234 = vpack.c.b16 %v1046, %v1044
      %v1235 = vpack.c.b16 %v1047, %v1045
      %v1236 = vpack.c.b16 %v1050, %v1048
      %v1237 = vpack.c.b16 %v1051, %v1049
      %v1238 = vpack.c.b16 %v1054, %v1052
      %v1239 = vpack.c.b16 %v1055, %v1053
      %vm1422 = vcmask 506880
      %v1424 = vsel %vm1422, %v469, 0
      %v1427 = vsel %vm1422, %v481, 0
      %vm1429 = vcmask 1046528
      %v1431 = vsel %vm1429, %v1238, 0
      %v1434 = vsel %vm1429, %v1239, 0
      %1436 = vmatpush.bf16.msra.mxu0 %v1070
      %1437 = vmatpush.bf16.msra.mxu0 %v1068
      %1438 = vmatpush.bf16.msra.mxu0 %v1066
      %1439 = vmatpush.bf16.msra.mxu0 %v1064
      %1440 = vmatpush.bf16.msra.mxu0 %v1062
      %1441 = vmatpush.bf16.msra.mxu0 %v1060
      %1442 = vmatpush.bf16.msra.mxu0 %v1058
      %1443 = vmatpush.bf16.msra.mxu0 %v1056
      %1444 = vmatmul.bf16.gmra.mxu0 %v458
      %v1445 = vpop.f32.mrf.mxu0
      %v1446 = vadd.f32 %v382, %v1445
      %v1447 = vpop.f32.mrf.mxu0
      %v1448 = vadd.f32 %v382, %v1447
      %1449 = vmatmul.bf16.gmra.mxu0 %v470
      %v1450 = vpop.f32.mrf.mxu0
      %v1451 = vadd.f32 %v382, %v1450
      %v1452 = vpop.f32.mrf.mxu0
      %v1453 = vadd.f32 %v382, %v1452
      %1454 = vdwg.mxu0
      %1455 = vmatpush.bf16.msra.mxu0 %v1086
      %1456 = vmatpush.bf16.msra.mxu0 %v1084
      %1457 = vmatpush.bf16.msra.mxu0 %v1082
      %1458 = vmatpush.bf16.msra.mxu0 %v1080
      %1459 = vmatpush.bf16.msra.mxu0 %v1078
      %1460 = vmatpush.bf16.msra.mxu0 %v1076
      %1461 = vmatpush.bf16.msra.mxu0 %v1074
      %1462 = vmatpush.bf16.msra.mxu0 %v1072
      %1463 = vmatmul.bf16.gmra.mxu0 %v459
      %v1464 = vpop.f32.mrf.mxu0
      %v1465 = vadd.f32 %v1446, %v1464
      %v1466 = vpop.f32.mrf.mxu0
      %v1467 = vadd.f32 %v1448, %v1466
      %1468 = vmatmul.bf16.gmra.mxu0 %v471
      %v1469 = vpop.f32.mrf.mxu0
      %v1470 = vadd.f32 %v1451, %v1469
      %v1471 = vpop.f32.mrf.mxu0
      %v1472 = vadd.f32 %v1453, %v1471
      %1473 = vdwg.mxu0
      %1474 = vmatpush.bf16.msra.mxu0 %v1102
      %1475 = vmatpush.bf16.msra.mxu0 %v1100
      %1476 = vmatpush.bf16.msra.mxu0 %v1098
      %1477 = vmatpush.bf16.msra.mxu0 %v1096
      %1478 = vmatpush.bf16.msra.mxu0 %v1094
      %1479 = vmatpush.bf16.msra.mxu0 %v1092
      %1480 = vmatpush.bf16.msra.mxu0 %v1090
      %1481 = vmatpush.bf16.msra.mxu0 %v1088
      %1482 = vmatmul.bf16.gmra.mxu0 %v460
      %v1483 = vpop.f32.mrf.mxu0
      %v1484 = vadd.f32 %v1465, %v1483
      %v1485 = vpop.f32.mrf.mxu0
      %v1486 = vadd.f32 %v1467, %v1485
      %1487 = vmatmul.bf16.gmra.mxu0 %v472
      %v1488 = vpop.f32.mrf.mxu0
      %v1489 = vadd.f32 %v1470, %v1488
      %v1490 = vpop.f32.mrf.mxu0
      %v1491 = vadd.f32 %v1472, %v1490
      %1492 = vdwg.mxu0
      %1493 = vmatpush.bf16.msra.mxu0 %v1118
      %1494 = vmatpush.bf16.msra.mxu0 %v1116
      %1495 = vmatpush.bf16.msra.mxu0 %v1114
      %1496 = vmatpush.bf16.msra.mxu0 %v1112
      %1497 = vmatpush.bf16.msra.mxu0 %v1110
      %1498 = vmatpush.bf16.msra.mxu0 %v1108
      %1499 = vmatpush.bf16.msra.mxu0 %v1106
      %1500 = vmatpush.bf16.msra.mxu0 %v1104
      %1501 = vmatmul.bf16.gmra.mxu0 %v461
      %v1502 = vpop.f32.mrf.mxu0
      %v1503 = vadd.f32 %v1484, %v1502
      %v1504 = vpop.f32.mrf.mxu0
      %v1505 = vadd.f32 %v1486, %v1504
      %1506 = vmatmul.bf16.gmra.mxu0 %v473
      %v1507 = vpop.f32.mrf.mxu0
      %v1508 = vadd.f32 %v1489, %v1507
      %v1509 = vpop.f32.mrf.mxu0
      %v1510 = vadd.f32 %v1491, %v1509
      %1511 = vdwg.mxu0
      %1512 = vmatpush.bf16.msra.mxu0 %v1134
      %1513 = vmatpush.bf16.msra.mxu0 %v1132
      %1514 = vmatpush.bf16.msra.mxu0 %v1130
      %1515 = vmatpush.bf16.msra.mxu0 %v1128
      %1516 = vmatpush.bf16.msra.mxu0 %v1126
      %1517 = vmatpush.bf16.msra.mxu0 %v1124
      %1518 = vmatpush.bf16.msra.mxu0 %v1122
      %1519 = vmatpush.bf16.msra.mxu0 %v1120
      %1520 = vmatmul.bf16.gmra.mxu0 %v462
      %v1521 = vpop.f32.mrf.mxu0
      %v1522 = vadd.f32 %v1503, %v1521
      %v1523 = vpop.f32.mrf.mxu0
      %v1524 = vadd.f32 %v1505, %v1523
      %1525 = vmatmul.bf16.gmra.mxu0 %v474
      %v1526 = vpop.f32.mrf.mxu0
      %v1527 = vadd.f32 %v1508, %v1526
      %v1528 = vpop.f32.mrf.mxu0
      %v1529 = vadd.f32 %v1510, %v1528
      %1530 = vdwg.mxu0
      %1531 = vmatpush.bf16.msra.mxu0 %v1150
      %1532 = vmatpush.bf16.msra.mxu0 %v1148
      %1533 = vmatpush.bf16.msra.mxu0 %v1146
      %1534 = vmatpush.bf16.msra.mxu0 %v1144
      %1535 = vmatpush.bf16.msra.mxu0 %v1142
      %1536 = vmatpush.bf16.msra.mxu0 %v1140
      %1537 = vmatpush.bf16.msra.mxu0 %v1138
      %1538 = vmatpush.bf16.msra.mxu0 %v1136
      %1539 = vmatmul.bf16.gmra.mxu0 %v463
      %v1540 = vpop.f32.mrf.mxu0
      %v1541 = vadd.f32 %v1522, %v1540
      %v1542 = vpop.f32.mrf.mxu0
      %v1543 = vadd.f32 %v1524, %v1542
      %1544 = vmatmul.bf16.gmra.mxu0 %v475
      %v1545 = vpop.f32.mrf.mxu0
      %v1546 = vadd.f32 %v1527, %v1545
      %v1547 = vpop.f32.mrf.mxu0
      %v1548 = vadd.f32 %v1529, %v1547
      %1549 = vdwg.mxu0
      %1550 = vmatpush.bf16.msra.mxu0 %v1166
      %1551 = vmatpush.bf16.msra.mxu0 %v1164
      %1552 = vmatpush.bf16.msra.mxu0 %v1162
      %1553 = vmatpush.bf16.msra.mxu0 %v1160
      %1554 = vmatpush.bf16.msra.mxu0 %v1158
      %1555 = vmatpush.bf16.msra.mxu0 %v1156
      %1556 = vmatpush.bf16.msra.mxu0 %v1154
      %1557 = vmatpush.bf16.msra.mxu0 %v1152
      %1558 = vmatmul.bf16.gmra.mxu0 %v464
      %v1559 = vpop.f32.mrf.mxu0
      %v1560 = vadd.f32 %v1541, %v1559
      %v1561 = vpop.f32.mrf.mxu0
      %v1562 = vadd.f32 %v1543, %v1561
      %1563 = vmatmul.bf16.gmra.mxu0 %v476
      %v1564 = vpop.f32.mrf.mxu0
      %v1565 = vadd.f32 %v1546, %v1564
      %v1566 = vpop.f32.mrf.mxu0
      %v1567 = vadd.f32 %v1548, %v1566
      %1568 = vdwg.mxu0
      %1569 = vmatpush.bf16.msra.mxu0 %v1182
      %1570 = vmatpush.bf16.msra.mxu0 %v1180
      %1571 = vmatpush.bf16.msra.mxu0 %v1178
      %1572 = vmatpush.bf16.msra.mxu0 %v1176
      %1573 = vmatpush.bf16.msra.mxu0 %v1174
      %1574 = vmatpush.bf16.msra.mxu0 %v1172
      %1575 = vmatpush.bf16.msra.mxu0 %v1170
      %1576 = vmatpush.bf16.msra.mxu0 %v1168
      %1577 = vmatmul.bf16.gmra.mxu0 %v465
      %v1578 = vpop.f32.mrf.mxu0
      %v1579 = vadd.f32 %v1560, %v1578
      %v1580 = vpop.f32.mrf.mxu0
      %v1581 = vadd.f32 %v1562, %v1580
      %1582 = vmatmul.bf16.gmra.mxu0 %v477
      %v1583 = vpop.f32.mrf.mxu0
      %v1584 = vadd.f32 %v1565, %v1583
      %v1585 = vpop.f32.mrf.mxu0
      %v1586 = vadd.f32 %v1567, %v1585
      %1587 = vdwg.mxu0
      %1588 = vmatpush.bf16.msra.mxu0 %v1198
      %1589 = vmatpush.bf16.msra.mxu0 %v1196
      %1590 = vmatpush.bf16.msra.mxu0 %v1194
      %1591 = vmatpush.bf16.msra.mxu0 %v1192
      %1592 = vmatpush.bf16.msra.mxu0 %v1190
      %1593 = vmatpush.bf16.msra.mxu0 %v1188
      %1594 = vmatpush.bf16.msra.mxu0 %v1186
      %1595 = vmatpush.bf16.msra.mxu0 %v1184
      %1596 = vmatmul.bf16.gmra.mxu0 %v466
      %v1597 = vpop.f32.mrf.mxu0
      %v1598 = vadd.f32 %v1579, %v1597
      %v1599 = vpop.f32.mrf.mxu0
      %v1600 = vadd.f32 %v1581, %v1599
      %1601 = vmatmul.bf16.gmra.mxu0 %v478
      %v1602 = vpop.f32.mrf.mxu0
      %v1603 = vadd.f32 %v1584, %v1602
      %v1604 = vpop.f32.mrf.mxu0
      %v1605 = vadd.f32 %v1586, %v1604
      %1606 = vdwg.mxu0
      %1607 = vmatpush.bf16.msra.mxu0 %v1214
      %1608 = vmatpush.bf16.msra.mxu0 %v1212
      %1609 = vmatpush.bf16.msra.mxu0 %v1210
      %1610 = vmatpush.bf16.msra.mxu0 %v1208
      %1611 = vmatpush.bf16.msra.mxu0 %v1206
      %1612 = vmatpush.bf16.msra.mxu0 %v1204
      %1613 = vmatpush.bf16.msra.mxu0 %v1202
      %1614 = vmatpush.bf16.msra.mxu0 %v1200
      %1615 = vmatmul.bf16.gmra.mxu0 %v467
      %v1616 = vpop.f32.mrf.mxu0
      %v1617 = vadd.f32 %v1598, %v1616
      %v1618 = vpop.f32.mrf.mxu0
      %v1619 = vadd.f32 %v1600, %v1618
      %1620 = vmatmul.bf16.gmra.mxu0 %v479
      %v1621 = vpop.f32.mrf.mxu0
      %v1622 = vadd.f32 %v1603, %v1621
      %v1623 = vpop.f32.mrf.mxu0
      %v1624 = vadd.f32 %v1605, %v1623
      %1625 = vdwg.mxu0
      %1626 = vmatpush.bf16.msra.mxu0 %v1230
      %1627 = vmatpush.bf16.msra.mxu0 %v1228
      %1628 = vmatpush.bf16.msra.mxu0 %v1226
      %1629 = vmatpush.bf16.msra.mxu0 %v1224
      %1630 = vmatpush.bf16.msra.mxu0 %v1222
      %1631 = vmatpush.bf16.msra.mxu0 %v1220
      %1632 = vmatpush.bf16.msra.mxu0 %v1218
      %1633 = vmatpush.bf16.msra.mxu0 %v1216
      %1634 = vmatmul.bf16.gmra.mxu0 %v468
      %v1635 = vpop.f32.mrf.mxu0
      %v1636 = vadd.f32 %v1617, %v1635
      %v1637 = vpop.f32.mrf.mxu0
      %v1638 = vadd.f32 %v1619, %v1637
      %1639 = vmatmul.bf16.gmra.mxu0 %v480
      %v1640 = vpop.f32.mrf.mxu0
      %v1641 = vadd.f32 %v1622, %v1640
      %v1642 = vpop.f32.mrf.mxu0
      %v1643 = vadd.f32 %v1624, %v1642
      %1644 = vdwg.mxu0
      %1645 = vmatpush.bf16.msra.mxu0 0
      %1646 = vmatpush.bf16.msra.mxu0 0
      %1647 = vmatpush.bf16.msra.mxu0 0
      %1648 = vmatpush.bf16.msra.mxu0 0
      %1649 = vmatpush.bf16.msra.mxu0 %v1431
      %1650 = vmatpush.bf16.msra.mxu0 %v1236
      %1651 = vmatpush.bf16.msra.mxu0 %v1234
      %1652 = vmatpush.bf16.msra.mxu0 %v1232
      %1653 = vmatmul.bf16.gmra.mxu0 %v1424
      %v1654 = vpop.f32.mrf.mxu0
      %v1655 = vadd.f32 %v1636, %v1654
      %v1656 = vpop.f32.mrf.mxu0
      %v1657 = vadd.f32 %v1638, %v1656
      %1658 = vmatmul.bf16.gmra.mxu0 %v1427
      %v1659 = vpop.f32.mrf.mxu0
      %v1660 = vadd.f32 %v1641, %v1659
      %v1661 = vpop.f32.mrf.mxu0
      %v1662 = vadd.f32 %v1643, %v1661
      %1663 = vdwg.mxu0
      %1664 = vmatpush.bf16.msra.mxu0 %v1071
      %1665 = vmatpush.bf16.msra.mxu0 %v1069
      %1666 = vmatpush.bf16.msra.mxu0 %v1067
      %1667 = vmatpush.bf16.msra.mxu0 %v1065
      %1668 = vmatpush.bf16.msra.mxu0 %v1063
      %1669 = vmatpush.bf16.msra.mxu0 %v1061
      %1670 = vmatpush.bf16.msra.mxu0 %v1059
      %1671 = vmatpush.bf16.msra.mxu0 %v1057
      %1672 = vmatmul.bf16.gmra.mxu0 %v458
      %v1673 = vpop.f32.mrf.mxu0
      %v1674 = vadd.f32 %v383, %v1673
      %v1675 = vpop.f32.mrf.mxu0
      %v1676 = vadd.f32 %v383, %v1675
      %1677 = vmatmul.bf16.gmra.mxu0 %v470
      %v1678 = vpop.f32.mrf.mxu0
      %v1679 = vadd.f32 %v383, %v1678
      %v1680 = vpop.f32.mrf.mxu0
      %v1681 = vadd.f32 %v383, %v1680
      %1682 = vdwg.mxu0
      %1683 = vmatpush.bf16.msra.mxu0 %v1087
      %1684 = vmatpush.bf16.msra.mxu0 %v1085
      %1685 = vmatpush.bf16.msra.mxu0 %v1083
      %1686 = vmatpush.bf16.msra.mxu0 %v1081
      %1687 = vmatpush.bf16.msra.mxu0 %v1079
      %1688 = vmatpush.bf16.msra.mxu0 %v1077
      %1689 = vmatpush.bf16.msra.mxu0 %v1075
      %1690 = vmatpush.bf16.msra.mxu0 %v1073
      %1691 = vmatmul.bf16.gmra.mxu0 %v459
      %v1692 = vpop.f32.mrf.mxu0
      %v1693 = vadd.f32 %v1674, %v1692
      %v1694 = vpop.f32.mrf.mxu0
      %v1695 = vadd.f32 %v1676, %v1694
      %1696 = vmatmul.bf16.gmra.mxu0 %v471
      %v1697 = vpop.f32.mrf.mxu0
      %v1698 = vadd.f32 %v1679, %v1697
      %v1699 = vpop.f32.mrf.mxu0
      %v1700 = vadd.f32 %v1681, %v1699
      %1701 = vdwg.mxu0
      %1702 = vmatpush.bf16.msra.mxu0 %v1103
      %1703 = vmatpush.bf16.msra.mxu0 %v1101
      %1704 = vmatpush.bf16.msra.mxu0 %v1099
      %1705 = vmatpush.bf16.msra.mxu0 %v1097
      %1706 = vmatpush.bf16.msra.mxu0 %v1095
      %1707 = vmatpush.bf16.msra.mxu0 %v1093
      %1708 = vmatpush.bf16.msra.mxu0 %v1091
      %1709 = vmatpush.bf16.msra.mxu0 %v1089
      %1710 = vmatmul.bf16.gmra.mxu0 %v460
      %v1711 = vpop.f32.mrf.mxu0
      %v1712 = vadd.f32 %v1693, %v1711
      %v1713 = vpop.f32.mrf.mxu0
      %v1714 = vadd.f32 %v1695, %v1713
      %1715 = vmatmul.bf16.gmra.mxu0 %v472
      %v1716 = vpop.f32.mrf.mxu0
      %v1717 = vadd.f32 %v1698, %v1716
      %v1718 = vpop.f32.mrf.mxu0
      %v1719 = vadd.f32 %v1700, %v1718
      %1720 = vdwg.mxu0
      %1721 = vmatpush.bf16.msra.mxu0 %v1119
      %1722 = vmatpush.bf16.msra.mxu0 %v1117
      %1723 = vmatpush.bf16.msra.mxu0 %v1115
      %1724 = vmatpush.bf16.msra.mxu0 %v1113
      %1725 = vmatpush.bf16.msra.mxu0 %v1111
      %1726 = vmatpush.bf16.msra.mxu0 %v1109
      %1727 = vmatpush.bf16.msra.mxu0 %v1107
      %1728 = vmatpush.bf16.msra.mxu0 %v1105
      %1729 = vmatmul.bf16.gmra.mxu0 %v461
      %v1730 = vpop.f32.mrf.mxu0
      %v1731 = vadd.f32 %v1712, %v1730
      %v1732 = vpop.f32.mrf.mxu0
      %v1733 = vadd.f32 %v1714, %v1732
      %1734 = vmatmul.bf16.gmra.mxu0 %v473
      %v1735 = vpop.f32.mrf.mxu0
      %v1736 = vadd.f32 %v1717, %v1735
      %v1737 = vpop.f32.mrf.mxu0
      %v1738 = vadd.f32 %v1719, %v1737
      %1739 = vdwg.mxu0
      %1740 = vmatpush.bf16.msra.mxu0 %v1135
      %1741 = vmatpush.bf16.msra.mxu0 %v1133
      %1742 = vmatpush.bf16.msra.mxu0 %v1131
      %1743 = vmatpush.bf16.msra.mxu0 %v1129
      %1744 = vmatpush.bf16.msra.mxu0 %v1127
      %1745 = vmatpush.bf16.msra.mxu0 %v1125
      %1746 = vmatpush.bf16.msra.mxu0 %v1123
      %1747 = vmatpush.bf16.msra.mxu0 %v1121
      %1748 = vmatmul.bf16.gmra.mxu0 %v462
      %v1749 = vpop.f32.mrf.mxu0
      %v1750 = vadd.f32 %v1731, %v1749
      %v1751 = vpop.f32.mrf.mxu0
      %v1752 = vadd.f32 %v1733, %v1751
      %1753 = vmatmul.bf16.gmra.mxu0 %v474
      %v1754 = vpop.f32.mrf.mxu0
      %v1755 = vadd.f32 %v1736, %v1754
      %v1756 = vpop.f32.mrf.mxu0
      %v1757 = vadd.f32 %v1738, %v1756
      %1758 = vdwg.mxu0
      %1759 = vmatpush.bf16.msra.mxu0 %v1151
      %1760 = vmatpush.bf16.msra.mxu0 %v1149
      %1761 = vmatpush.bf16.msra.mxu0 %v1147
      %1762 = vmatpush.bf16.msra.mxu0 %v1145
      %1763 = vmatpush.bf16.msra.mxu0 %v1143
      %1764 = vmatpush.bf16.msra.mxu0 %v1141
      %1765 = vmatpush.bf16.msra.mxu0 %v1139
      %1766 = vmatpush.bf16.msra.mxu0 %v1137
      %1767 = vmatmul.bf16.gmra.mxu0 %v463
      %v1768 = vpop.f32.mrf.mxu0
      %v1769 = vadd.f32 %v1750, %v1768
      %v1770 = vpop.f32.mrf.mxu0
      %v1771 = vadd.f32 %v1752, %v1770
      %1772 = vmatmul.bf16.gmra.mxu0 %v475
      %v1773 = vpop.f32.mrf.mxu0
      %v1774 = vadd.f32 %v1755, %v1773
      %v1775 = vpop.f32.mrf.mxu0
      %v1776 = vadd.f32 %v1757, %v1775
      %1777 = vdwg.mxu0
      %1778 = vmatpush.bf16.msra.mxu0 %v1167
      %1779 = vmatpush.bf16.msra.mxu0 %v1165
      %1780 = vmatpush.bf16.msra.mxu0 %v1163
      %1781 = vmatpush.bf16.msra.mxu0 %v1161
      %1782 = vmatpush.bf16.msra.mxu0 %v1159
      %1783 = vmatpush.bf16.msra.mxu0 %v1157
      %1784 = vmatpush.bf16.msra.mxu0 %v1155
      %1785 = vmatpush.bf16.msra.mxu0 %v1153
      %1786 = vmatmul.bf16.gmra.mxu0 %v464
      %v1787 = vpop.f32.mrf.mxu0
      %v1788 = vadd.f32 %v1769, %v1787
      %v1789 = vpop.f32.mrf.mxu0
      %v1790 = vadd.f32 %v1771, %v1789
      %1791 = vmatmul.bf16.gmra.mxu0 %v476
      %v1792 = vpop.f32.mrf.mxu0
      %v1793 = vadd.f32 %v1774, %v1792
      %v1794 = vpop.f32.mrf.mxu0
      %v1795 = vadd.f32 %v1776, %v1794
      %1796 = vdwg.mxu0
      %1797 = vmatpush.bf16.msra.mxu0 %v1183
      %1798 = vmatpush.bf16.msra.mxu0 %v1181
      %1799 = vmatpush.bf16.msra.mxu0 %v1179
      %1800 = vmatpush.bf16.msra.mxu0 %v1177
      %1801 = vmatpush.bf16.msra.mxu0 %v1175
      %1802 = vmatpush.bf16.msra.mxu0 %v1173
      %1803 = vmatpush.bf16.msra.mxu0 %v1171
      %1804 = vmatpush.bf16.msra.mxu0 %v1169
      %1805 = vmatmul.bf16.gmra.mxu0 %v465
      %v1806 = vpop.f32.mrf.mxu0
      %v1807 = vadd.f32 %v1788, %v1806
      %v1808 = vpop.f32.mrf.mxu0
      %v1809 = vadd.f32 %v1790, %v1808
      %1810 = vmatmul.bf16.gmra.mxu0 %v477
      %v1811 = vpop.f32.mrf.mxu0
      %v1812 = vadd.f32 %v1793, %v1811
      %v1813 = vpop.f32.mrf.mxu0
      %v1814 = vadd.f32 %v1795, %v1813
      %1815 = vdwg.mxu0
      %1816 = vmatpush.bf16.msra.mxu0 %v1199
      %1817 = vmatpush.bf16.msra.mxu0 %v1197
      %1818 = vmatpush.bf16.msra.mxu0 %v1195
      %1819 = vmatpush.bf16.msra.mxu0 %v1193
      %1820 = vmatpush.bf16.msra.mxu0 %v1191
      %1821 = vmatpush.bf16.msra.mxu0 %v1189
      %1822 = vmatpush.bf16.msra.mxu0 %v1187
      %1823 = vmatpush.bf16.msra.mxu0 %v1185
      %1824 = vmatmul.bf16.gmra.mxu0 %v466
      %v1825 = vpop.f32.mrf.mxu0
      %v1826 = vadd.f32 %v1807, %v1825
      %v1827 = vpop.f32.mrf.mxu0
      %v1828 = vadd.f32 %v1809, %v1827
      %1829 = vmatmul.bf16.gmra.mxu0 %v478
      %v1830 = vpop.f32.mrf.mxu0
      %v1831 = vadd.f32 %v1812, %v1830
      %v1832 = vpop.f32.mrf.mxu0
      %v1833 = vadd.f32 %v1814, %v1832
      %1834 = vdwg.mxu0
      %1835 = vmatpush.bf16.msra.mxu0 %v1215
      %1836 = vmatpush.bf16.msra.mxu0 %v1213
      %1837 = vmatpush.bf16.msra.mxu0 %v1211
      %1838 = vmatpush.bf16.msra.mxu0 %v1209
      %1839 = vmatpush.bf16.msra.mxu0 %v1207
      %1840 = vmatpush.bf16.msra.mxu0 %v1205
      %1841 = vmatpush.bf16.msra.mxu0 %v1203
      %1842 = vmatpush.bf16.msra.mxu0 %v1201
      %1843 = vmatmul.bf16.gmra.mxu0 %v467
      %v1844 = vpop.f32.mrf.mxu0
      %v1845 = vadd.f32 %v1826, %v1844
      %v1846 = vpop.f32.mrf.mxu0
      %v1847 = vadd.f32 %v1828, %v1846
      %1848 = vmatmul.bf16.gmra.mxu0 %v479
      %v1849 = vpop.f32.mrf.mxu0
      %v1850 = vadd.f32 %v1831, %v1849
      %v1851 = vpop.f32.mrf.mxu0
      %v1852 = vadd.f32 %v1833, %v1851
      %1853 = vdwg.mxu0
      %1854 = vmatpush.bf16.msra.mxu0 %v1231
      %1855 = vmatpush.bf16.msra.mxu0 %v1229
      %1856 = vmatpush.bf16.msra.mxu0 %v1227
      %1857 = vmatpush.bf16.msra.mxu0 %v1225
      %1858 = vmatpush.bf16.msra.mxu0 %v1223
      %1859 = vmatpush.bf16.msra.mxu0 %v1221
      %1860 = vmatpush.bf16.msra.mxu0 %v1219
      %1861 = vmatpush.bf16.msra.mxu0 %v1217
      %1862 = vmatmul.bf16.gmra.mxu0 %v468
      %v1863 = vpop.f32.mrf.mxu0
      %v1864 = vadd.f32 %v1845, %v1863
      %v1865 = vpop.f32.mrf.mxu0
      %v1866 = vadd.f32 %v1847, %v1865
      %1867 = vmatmul.bf16.gmra.mxu0 %v480
      %v1868 = vpop.f32.mrf.mxu0
      %v1869 = vadd.f32 %v1850, %v1868
      %v1870 = vpop.f32.mrf.mxu0
      %v1871 = vadd.f32 %v1852, %v1870
      %1872 = vdwg.mxu0
      %1873 = vmatpush.bf16.msra.mxu0 0
      %1874 = vmatpush.bf16.msra.mxu0 0
      %1875 = vmatpush.bf16.msra.mxu0 0
      %1876 = vmatpush.bf16.msra.mxu0 0
      %1877 = vmatpush.bf16.msra.mxu0 %v1434
      %1878 = vmatpush.bf16.msra.mxu0 %v1237
      %1879 = vmatpush.bf16.msra.mxu0 %v1235
      %1880 = vmatpush.bf16.msra.mxu0 %v1233
      %1881 = vmatmul.bf16.gmra.mxu0 %v1424
      %v1882 = vpop.f32.mrf.mxu0
      %v1883 = vadd.f32 %v1864, %v1882
      %v1884 = vpop.f32.mrf.mxu0
      %v1885 = vadd.f32 %v1866, %v1884
      %1886 = vmatmul.bf16.gmra.mxu0 %v1427
      %v1887 = vpop.f32.mrf.mxu0
      %v1888 = vadd.f32 %v1869, %v1887
      %v1889 = vpop.f32.mrf.mxu0
      %v1890 = vadd.f32 %v1871, %v1889
      %1891 = vdwg.mxu0
      %v1892 = vmax.f32 %v1655, 0.0
      %v1893 = vmax.f32 %v1883, 0.0
      %v1894 = vmax.f32 %v1657, 0.0
      %v1895 = vmax.f32 %v1885, 0.0
      %v1896 = vmax.f32 %v1660, 0.0
      %v1897 = vmax.f32 %v1888, 0.0
      %v1898 = vmax.f32 %v1662, 0.0
      %v1899 = vmax.f32 %v1890, 0.0
      %v1900 = vpack.c.bf16 %v1893, %v1892
      %v1901 = vpack.c.bf16 %v1895, %v1894
      %v1902 = vpack.c.bf16 %v1897, %v1896
      %v1903 = vpack.c.bf16 %v1899, %v1898
      %1904 = vst [vmem:[%s170] sm:$0xff] %v1900
      %1905 = vst [vmem:[%s170 + $0x8] sm:$0xff] %v1901
      %1906 = vst [vmem:[%s170 + $0x10] sm:$0xff] %v1902
      %1907 = vst [vmem:[%s170 + $0x18] sm:$0xff] %v1903
      %p1908 = scmp.lt.s32.totalorder %s14, 1
      %s1909 = scalar_select %p1908, %s14, 1
      %s1910 = smul.addr %s1909, 8
      %s1911 = smul.addr %s1910, 4
      %s1912 = scalar_lea.vmem %s3, %s1911
      // Predicated region
      $region33: #{conv5_extractor.9} parent=31 // pred_check
        %p1913 = pneg %p100
      $region34: #{conv5_extractor.9} parent=31 // pred_check_branch
        %1915 = sbr.rel (%p1913) target = $region36
      $region35: #{conv5_extractor.9} parent=31 // pred_region
        _
      $region36: #{conv5_extractor.9} parent=31 // pred_fallthru
        _
    $region32: #{conv5_extractor.9} parent=5 // pred_fallthru
      _
    %p1916 = scmp.le.s32.totalorder 2, %s9
    // Predicated region
    $region37: #{conv5_extractor.9} parent=5 // pred_check
      %p1917 = pneg %p1916
    $region38: #{conv5_extractor.9} parent=5 // pred_check_branch
      %1919 = sbr.rel (%p1917) target = $region40
    $region39: #{conv5_extractor.9} parent=5 // pred_region
      %s1920 = ssub.s32 %s9, 2
      // Predicated region
      $region41: #{conv5_extractor.9} parent=39 // pred_check
        %p1921 = pneg %p106
      $region42: #{conv5_extractor.9} parent=39 // pred_check_branch
        %1923 = sbr.rel (%p1921) target = $region44
      $region43: #{conv5_extractor.9} parent=39 // pred_region
        %p1924 = scmp.lt.s32.totalorder %s15, 1
        %s1925 = scalar_select %p1924, %s15, 1
        %s1926 = smul.addr %s1925, 8
        %s1927 = smul.addr %s1926, 4
        %s1928 = scalar_lea.vmem %s3, %s1927
      $region44: #{conv5_extractor.9} parent=39 // pred_fallthru
        _
    $region40: #{conv5_extractor.9} parent=5 // pred_fallthru
      _
  $region6: #{conv5_extractor.9} parent=0 // loop_footer
    %s13 = sadd.s32 1, %s9
  $region7: #{conv5_extractor.9} parent=0 // loop_footer_branch
    %8 = sbr.rel target = $region3
  $region8: #{conv5_extractor.9} parent=0 // loop_exit
    _

// kernel: conv5_extractor.10
$region0: #{conv5_extractor.10}
  #allocation0 [shape = 'u32[]', space=smem, size = 0x4, offset = 0x4, fixed_abs, tag = 'smem constant byte address 0x4 - core index']
  #allocation1 [shape = 'u32[72,128]{1,0:T(1,128)}', space=vmem, size = 0x9000, scoped, tag = 'internal scratch']
  %s0 = inlined_call_operand.vmem [shape: bf16[2,48,136], index: 0, kind: input, shape index: {}]
  %s1 = inlined_call_operand.vmem [shape: bf16[2,48,136], index: 1, kind: input, shape index: {}]
  %s2 = inlined_call_operand.vmem [shape: bf16[2,16,128], index: 2, kind: output, shape index: {}]
  %s3 = sld [smem:[#allocation0]]
  $region41: #{conv5_extractor.10} parent=0
    _
  %s5 = ssub.s32 1, %s3
  %s6 = scalar_select 0, %s5, %s3
  loop: start=0, step=1, limit=4
  $region2: #{conv5_extractor.10} parent=0 // loop_pre_header
    _
  $region3: #{conv5_extractor.10} parent=0 // loop_header
    %s8 = sphi 0, %s12
    %p9 = scmp.ge.s32.totalorder %s8, 4
    %s18 = sphi 0, %s20
    %s21 = sphi 0, %s18
    %s22 = sphi 0, %s21
    %s38 = sphi 0, %s22
    %s44 = sphi 0, %s46
    %s47 = sphi 0, %s44
    %s48 = sphi 0, %s47
    %s64 = sphi 0, %s48
    %s70 = sphi 0, %s72
    %s73 = sphi 0, %s70
    %s74 = sphi 0, %s73
    %s90 = sphi 0, %s74
  $region4: #{conv5_extractor.10} parent=0 // loop_header_branch
    %11 = sbr.rel (%p9) target = $region8
  $region5: #{conv5_extractor.10} parent=0 // loop_body
    %s13 = ssub.s32 %s8, 1
    %s14 = ssub.s32 %s8, 2
    %s15 = sadd.s32 %s8, 1
    %s16 = ssub.s32 %s8, %s15
    %p17 = scmp.eq.s32.totalorder %s16, 0
    %s19 = sadd.s32 %s18, 1
    %s20 = scalar_select %p17, %s18, %s19
    %p23 = pneg %p17
    %p24 = scmp.eq.s32.totalorder %s8, 1
    %p25 = por %p23, %p24
    %p26 = scmp.ne.s32.totalorder %s18, %s21
    %p27 = scmp.eq.s32.totalorder %s8, 0
    %p28 = por %p26, %p27
    %p29 = scmp.ne.s32.totalorder %s18, %s21
    %p30 = scmp.eq.s32.totalorder %s13, 1
    %p31 = por %p29, %p30
    %p32 = scmp.ne.s32.totalorder %s21, %s22
    %p33 = scmp.eq.s32.totalorder %s13, 0
    %p34 = por %p32, %p33
    %p35 = scmp.ne.s32.totalorder %s21, %s22
    %p36 = scmp.eq.s32.totalorder %s14, 1
    %p37 = por %p35, %p36
    %p39 = scmp.ne.s32.totalorder %s22, %s38
    %p40 = scmp.eq.s32.totalorder %s14, 0
    %p41 = por %p39, %p40
    %s42 = ssub.s32 %s8, %s15
    %p43 = scmp.eq.s32.totalorder %s42, 0
    %s45 = sadd.s32 %s44, 1
    %s46 = scalar_select %p43, %s44, %s45
    %p49 = pneg %p43
    %p50 = scmp.eq.s32.totalorder %s8, 1
    %p51 = por %p49, %p50
    %p52 = scmp.ne.s32.totalorder %s44, %s47
    %p53 = scmp.eq.s32.totalorder %s8, 0
    %p54 = por %p52, %p53
    %p55 = scmp.ne.s32.totalorder %s44, %s47
    %p56 = scmp.eq.s32.totalorder %s13, 1
    %p57 = por %p55, %p56
    %p58 = scmp.ne.s32.totalorder %s47, %s48
    %p59 = scmp.eq.s32.totalorder %s13, 0
    %p60 = por %p58, %p59
    %p61 = scmp.ne.s32.totalorder %s47, %s48
    %p62 = scmp.eq.s32.totalorder %s14, 1
    %p63 = por %p61, %p62
    %p65 = scmp.ne.s32.totalorder %s48, %s64
    %p66 = scmp.eq.s32.totalorder %s14, 0
    %p67 = por %p65, %p66
    %s68 = ssub.s32 %s8, %s15
    %p69 = scmp.eq.s32.totalorder %s68, 0
    %s71 = sadd.s32 %s70, 1
    %s72 = scalar_select %p69, %s70, %s71
    %p75 = pneg %p69
    %p76 = scmp.eq.s32.totalorder %s8, 1
    %p77 = por %p75, %p76
    %p78 = scmp.ne.s32.totalorder %s70, %s73
    %p79 = scmp.eq.s32.totalorder %s8, 0
    %p80 = por %p78, %p79
    %p81 = scmp.ne.s32.totalorder %s70, %s73
    %p82 = scmp.eq.s32.totalorder %s13, 1
    %p83 = por %p81, %p82
    %p84 = scmp.ne.s32.totalorder %s73, %s74
    %p85 = scmp.eq.s32.totalorder %s13, 0
    %p86 = por %p84, %p85
    %p87 = scmp.ne.s32.totalorder %s73, %s74
    %p88 = scmp.eq.s32.totalorder %s14, 1
    %p89 = por %p87, %p88
    %p91 = scmp.ne.s32.totalorder %s74, %s90
    %p92 = scmp.eq.s32.totalorder %s14, 0
    %p93 = por %p91, %p92
    %p94 = scmp.le.s32.totalorder 1, %s8
    %p95 = scmp.lt.s32.totalorder %s8, 3
    %p96 = pnand %p94, %p95
    %p97 = pneg %p96
    // Predicated region
    $region9: #{conv5_extractor.10} parent=5 // pred_check
      _
    $region10: #{conv5_extractor.10} parent=5 // pred_check_branch
      %99 = sbr.rel (%p96) target = $region12
    $region11: #{conv5_extractor.10} parent=5 // pred_region
      %s100 = ssub.s32 %s8, 1
    $region12: #{conv5_extractor.10} parent=5 // pred_fallthru
      _
    %p101 = scmp.lt.s32.totalorder %s8, 2
    // Predicated region
    $region13: #{conv5_extractor.10} parent=5 // pred_check
      %p102 = pneg %p101
    $region14: #{conv5_extractor.10} parent=5 // pred_check_branch
      %104 = sbr.rel (%p102) target = $region16
    $region15: #{conv5_extractor.10} parent=5 // pred_region
      // Predicated region
      $region17: #{conv5_extractor.10} parent=15 // pred_check
        %p105 = pneg %p28
      $region18: #{conv5_extractor.10} parent=15 // pred_check_branch
        %107 = sbr.rel (%p105) target = $region20
      $region19: #{conv5_extractor.10} parent=15 // pred_region
        %p108 = scmp.lt.s32.totalorder %s8, 1
        %s109 = scalar_select %p108, %s8, 1
        %s110 = smul.addr %s109, 12
        %s111 = smul.addr %s110, 4
        %s112 = scalar_lea.vmem %s0, %s111
      $region20: #{conv5_extractor.10} parent=15 // pred_fallthru
        _
      // Predicated region
      $region21: #{conv5_extractor.10} parent=15 // pred_check
        %p113 = pneg %p54
      $region22: #{conv5_extractor.10} parent=15 // pred_check_branch
        %115 = sbr.rel (%p113) target = $region24
      $region23: #{conv5_extractor.10} parent=15 // pred_region
        %p116 = scmp.lt.s32.totalorder %s8, 1
        %s117 = scalar_select %p116, %s8, 1
        %s118 = smul.addr %s117, 12
        %s119 = smul.addr %s118, 4
        %s120 = scalar_lea.vmem %s1, %s119
      $region24: #{conv5_extractor.10} parent=15 // pred_fallthru
        _
    $region16: #{conv5_extractor.10} parent=5 // pred_fallthru
      _
    %p121 = scmp.le.s32.totalorder 1, %s8
    %p122 = scmp.lt.s32.totalorder %s8, 3
    %p123 = pnand %p121, %p122
    %p124 = pneg %p123
    // Predicated region
    $region25: #{conv5_extractor.10} parent=5 // pred_check
      _
    $region26: #{conv5_extractor.10} parent=5 // pred_check_branch
      %126 = sbr.rel (%p123) target = $region28
    $region27: #{conv5_extractor.10} parent=5 // pred_region
      %s127 = ssub.s32 %s8, 1
      %p128 = scmp.lt.s32.totalorder %s13, 1
      %s129 = scalar_select %p128, %s13, 1
      %s130 = smul.addr %s129, 12
      %s131 = smul.addr %s130, 4
      %s132 = scalar_lea.vmem %s0, %s131
      %p133 = pneg %p34
      %p134 = pneg %p31
      %p135 = scmp.lt.s32.totalorder %s13, 1
      %s136 = scalar_select %p135, %s13, 1
      %s137 = smul.addr %s136, 12
      %s138 = smul.addr %s137, 4
      %s139 = scalar_lea.vmem %s1, %s138
      %p140 = pneg %p60
      %p141 = pneg %p57
      %p142 = pneg %p86
      %p143 = pneg %p83
      %p144 = scmp.lt.s32.totalorder %s13, 1
      %s145 = scalar_select %p144, %s13, 1
      %s146 = smul.addr %s145, 2
      %s147 = smul.addr %s146, 4
      %s148 = scalar_lea.vmem %s2, %s147
      %p149 = scmp.lt.s32.totalorder %s13, 1
      %s150 = scalar_select %p149, %s13, 1
      %s151 = smul.addr %s150, 12
      %s152 = smul.addr %s151, 4
      %s153 = scalar_lea.vmem %s0, %s152
      %p154 = scmp.lt.s32.totalorder %s13, 1
      %s155 = scalar_select %p154, %s13, 1
      %s156 = smul.addr %s155, 12
      %s157 = smul.addr %s156, 4
      %s158 = scalar_lea.vmem %s1, %s157
      %p159 = scmp.lt.s32.totalorder %s13, 1
      %s160 = scalar_select %p159, %s13, 1
      %s161 = smul.addr %s160, 2
      %s162 = smul.addr %s161, 4
      %s163 = scalar_lea.vmem %s2, %s162
      %v164 = vld [vmem:[%s153] sm:$0xff]
      %v165 = vld [vmem:[%s153 + $0x8] sm:$0xff]
      %v166 = vld [vmem:[%s153 + $0x10] sm:$0xff]
      %v167 = vld [vmem:[%s153 + $0x18] sm:$0xff]
      %v168 = vld [vmem:[%s153 + $0x20] sm:$0xff]
      %v169 = vld [vmem:[%s153 + $0x28] sm:$0xff]
      %v170 = vld [vmem:[%s158] sm:$0xff]
      %v171 = vld [vmem:[%s158 + $0x8] sm:$0xff]
      %v172 = vld [vmem:[%s158 + $0x10] sm:$0xff]
      %v173 = vld [vmem:[%s158 + $0x18] sm:$0xff]
      %v174 = vld [vmem:[%s158 + $0x20] sm:$0xff]
      %v175 = vld [vmem:[%s158 + $0x28] sm:$0xff]
      %v176 = vunpack.c.l.bf16 %v164
      %v177 = vunpack.c.l.bf16 %v165
      %v178 = vunpack.c.l.bf16 %v170
      %v179 = vunpack.c.l.bf16 %v171
      %v180 = vmax.f32 %v176, %v178
      %v181 = vmax.f32 %v177, %v179
      %v182 = vpack.c.bf16 %v180, %v180
      %v183 = vpack.c.bf16 %v181, %v181
      %v184 = vunpack.c.l.bf16 %v182
      %v185 = vunpack.c.l.bf16 %v183
      %v186 = vunpack.c.h.bf16 %v164
      %v187 = vunpack.c.h.bf16 %v165
      %192 = vrot.lane.b32.xlu0 %v176, 120
      %v193 = vpop.permute.xlu0 %192
      %194 = vrot.lane.b32.xlu0 %v186, 120
      %v195 = vpop.permute.xlu0 %194
      %196 = vrot.lane.b32.xlu0 %v177, 120
      %v197 = vpop.permute.xlu0 %196
      %198 = vrot.lane.b32.xlu0 %v187, 120
      %v199 = vpop.permute.xlu0 %198
      %vm200 = vcmask 982016
      %v201 = vsel %vm200, %v193, %v195
      %v202 = vsel %vm200, %v197, %v199
      %v205 = vmax.f32 %v184, %v201
      %v206 = vmax.f32 %v185, %v202
      %v207 = vpack.c.bf16 %v205, %v205
      %v208 = vpack.c.bf16 %v206, %v206
      %v209 = vunpack.c.l.bf16 %v166
      %v210 = vunpack.c.l.bf16 %v167
      %v211 = vunpack.c.l.bf16 %v172
      %v212 = vunpack.c.l.bf16 %v173
      %v213 = vmax.f32 %v209, %v211
      %v214 = vmax.f32 %v210, %v212
      %v215 = vpack.c.bf16 %v213, %v213
      %v216 = vpack.c.bf16 %v214, %v214
      %v217 = vunpack.c.l.bf16 %v215
      %v218 = vunpack.c.l.bf16 %v216
      %v219 = vunpack.c.h.bf16 %v166
      %v220 = vunpack.c.h.bf16 %v167
      %225 = vrot.lane.b32.xlu0 %v209, 120
      %v226 = vpop.permute.xlu0 %225
      %227 = vrot.lane.b32.xlu0 %v219, 120
      %v228 = vpop.permute.xlu0 %227
      %229 = vrot.lane.b32.xlu0 %v210, 120
      %v230 = vpop.permute.xlu0 %229
      %231 = vrot.lane.b32.xlu0 %v220, 120
      %v232 = vpop.permute.xlu0 %231
      %v233 = vsel %vm200, %v226, %v228
      %v234 = vsel %vm200, %v230, %v232
      %v237 = vmax.f32 %v217, %v233
      %v238 = vmax.f32 %v218, %v234
      %v239 = vpack.c.bf16 %v237, %v237
      %v240 = vpack.c.bf16 %v238, %v238
      %v241 = vunpack.c.l.bf16 %v207
      %v242 = vunpack.c.l.bf16 %v208
      %v243 = vunpack.c.l.bf16 %v239
      %v244 = vunpack.c.l.bf16 %v240
      %v245 = vmax.f32 %v241, %v243
      %v246 = vmax.f32 %v242, %v244
      %v247 = vpack.c.bf16 %v245, %v245
      %v248 = vpack.c.bf16 %v246, %v246
      %v249 = vunpack.c.l.bf16 %v168
      %v250 = vunpack.c.l.bf16 %v169
      %v251 = vunpack.c.l.bf16 %v174
      %v252 = vunpack.c.l.bf16 %v175
      %v253 = vmax.f32 %v249, %v251
      %v254 = vmax.f32 %v250, %v252
      %v255 = vpack.c.bf16 %v253, %v253
      %v256 = vpack.c.bf16 %v254, %v254
      %v257 = vunpack.c.l.bf16 %v255
      %v258 = vunpack.c.l.bf16 %v256
      %v259 = vunpack.c.h.bf16 %v168
      %v260 = vunpack.c.h.bf16 %v169
      %265 = vrot.lane.b32.xlu0 %v249, 120
      %v266 = vpop.permute.xlu0 %265
      %267 = vrot.lane.b32.xlu0 %v259, 120
      %v268 = vpop.permute.xlu0 %267
      %269 = vrot.lane.b32.xlu0 %v250, 120
      %v270 = vpop.permute.xlu0 %269
      %271 = vrot.lane.b32.xlu0 %v260, 120
      %v272 = vpop.permute.xlu0 %271
      %v273 = vsel %vm200, %v266, %v268
      %v274 = vsel %vm200, %v270, %v272
      %v277 = vmax.f32 %v257, %v273
      %v278 = vmax.f32 %v258, %v274
      %v279 = vpack.c.bf16 %v277, %v277
      %v280 = vpack.c.bf16 %v278, %v278
      %v281 = vunpack.c.l.bf16 %v247
      %v282 = vunpack.c.l.bf16 %v248
      %v283 = vunpack.c.l.bf16 %v279
      %v284 = vunpack.c.l.bf16 %v280
      %v285 = vmax.f32 %v281, %v283
      %v286 = vmax.f32 %v282, %v284
      %v287 = vpack.c.bf16 %v285, %v285
      %v288 = vpack.c.bf16 %v286, %v286
      %289 = vst [vmem:[%s163] sm:$0xf] %v287
      %290 = vst [vmem:[%s163 + $0x4] sm:$0xf] %v288
      %p291 = scmp.lt.s32.totalorder %s13, 1
      %s292 = scalar_select %p291, %s13, 1
      %s293 = smul.addr %s292, 2
      %s294 = smul.addr %s293, 4
      %s295 = scalar_lea.vmem %s2, %s294
      // Predicated region
      $region29: #{conv5_extractor.10} parent=27 // pred_check
        %p296 = pneg %p83
      $region30: #{conv5_extractor.10} parent=27 // pred_check_branch
        %298 = sbr.rel (%p296) target = $region32
      $region31: #{conv5_extractor.10} parent=27 // pred_region
        _
      $region32: #{conv5_extractor.10} parent=27 // pred_fallthru
        _
    $region28: #{conv5_extractor.10} parent=5 // pred_fallthru
      _
    %p299 = scmp.le.s32.totalorder 2, %s8
    // Predicated region
    $region33: #{conv5_extractor.10} parent=5 // pred_check
      %p300 = pneg %p299
    $region34: #{conv5_extractor.10} parent=5 // pred_check_branch
      %302 = sbr.rel (%p300) target = $region36
    $region35: #{conv5_extractor.10} parent=5 // pred_region
      %s303 = ssub.s32 %s8, 2
      // Predicated region
      $region37: #{conv5_extractor.10} parent=35 // pred_check
        %p304 = pneg %p89
      $region38: #{conv5_extractor.10} parent=35 // pred_check_branch
        %306 = sbr.rel (%p304) target = $region40
      $region39: #{conv5_extractor.10} parent=35 // pred_region
        %p307 = scmp.lt.s32.totalorder %s14, 1
        %s308 = scalar_select %p307, %s14, 1
        %s309 = smul.addr %s308, 2
        %s310 = smul.addr %s309, 4
        %s311 = scalar_lea.vmem %s2, %s310
      $region40: #{conv5_extractor.10} parent=35 // pred_fallthru
        _
    $region36: #{conv5_extractor.10} parent=5 // pred_fallthru
      _
  $region6: #{conv5_extractor.10} parent=0 // loop_footer
    %s12 = sadd.s32 1, %s8
  $region7: #{conv5_extractor.10} parent=0 // loop_footer_branch
    %7 = sbr.rel target = $region3
  $region8: #{conv5_extractor.10} parent=0 // loop_exit
    _

// kernel: tile.103
$region0: #{tile.103}
  #allocation0 [shape = 's32[1]{0}', space=sflag, size = 0x4, scoped, tag = 'scoped memory for tile.103']
  %s0 = inlined_call_operand.vmem [shape: f32[8], index: 0, kind: input, shape index: {}]
  %s1 = inlined_call_operand.vmem [shape: f32[16,8], index: 1, kind: output, shape index: {}]
  // Predicated region
  $region2: #{tile.103} parent=0 // pred_check
    _
  $region3: #{tile.103} parent=0 // pred_check_branch
    %3 = sbr.rel (0) target = $region5
  $region4: #{tile.103} parent=0 // pred_region
    _
  $region5: #{tile.103} parent=0 // pred_fallthru
    _
  %v4 = vld [vmem:[%s0] ss:$0 sm:$0xff]
  %5 = vst [vmem:[%s1] sm:$0xff] %v4
  %s6 = scalar_lea.vmem %s1, 8
  %7 = vst [vmem:[%s6] sm:$0xff] %v4

// kernel: tile.104
$region0: #{tile.104}
  %s0 = inlined_call_operand.vmem [shape: f32[16,8], index: 0, kind: input, shape index: {}]
  %s1 = inlined_call_operand.vmem [shape: f32[1,128], index: 1, kind: output, shape index: {}]
  $region1: #{tile.104} parent=0
    #allocation0 [shape = 'u8[4096]{0}', space=vmem, size = 0x1000, scoped, tag = 'scoped mem for output reshape']
    %v2 = vld [vmem:[%s0] sm:$0x1]
    %vm3 = vcmask 64512
    %4 = vst.msk [vmem:[#allocation0] sm:$0x1] %vm3, %v2
    %s5 = scalar_lea.vmem %s0, 15
    %v6 = vld [vmem:[%s5] sm:$0x1]
    %7 = vrot.lane.b32.xlu0 %v6, 120
    %v8 = vpop.permute.xlu0 %7
    %vm9 = vcmask 1048512
    %10 = vst.msk [vmem:[#allocation0] sm:$0x1] %vm9, %v8
    %s11 = scalar_lea.vmem %s0, 14
    %v12 = vld [vmem:[%s11] sm:$0x1]
    %13 = vrot.lane.b32.xlu0 %v12, 112
    %v14 = vpop.permute.xlu0 %13
    %vm15 = vcmask 982912
    %16 = vst.msk [vmem:[#allocation0] sm:$0x1] %vm15, %v14
    %s17 = scalar_lea.vmem %s0, 13
    %v18 = vld [vmem:[%s17] sm:$0x1]
    %19 = vrot.lane.b32.xlu0 %v18, 104
    %v20 = vpop.permute.xlu0 %19
    %vm21 = vcmask 917312
    %22 = vst.msk [vmem:[#allocation0] sm:$0x1] %vm21, %v20
    %s23 = scalar_lea.vmem %s0, 12
    %v24 = vld [vmem:[%s23] sm:$0x1]
    %25 = vrot.lane.b32.xlu0 %v24, 96
    %v26 = vpop.permute.xlu0 %25
    %vm27 = vcmask 851712
    %28 = vst.msk [vmem:[#allocation0] sm:$0x1] %vm27, %v26
    %s29 = scalar_lea.vmem %s0, 11
    %v30 = vld [vmem:[%s29] sm:$0x1]
    %31 = vrot.lane.b32.xlu0 %v30, 88
    %v32 = vpop.permute.xlu0 %31
    %vm33 = vcmask 786112
    %34 = vst.msk [vmem:[#allocation0] sm:$0x1] %vm33, %v32
    %s35 = scalar_lea.vmem %s0, 10
    %v36 = vld [vmem:[%s35] sm:$0x1]
    %37 = vrot.lane.b32.xlu0 %v36, 80
    %v38 = vpop.permute.xlu0 %37
    %vm39 = vcmask 720512
    %40 = vst.msk [vmem:[#allocation0] sm:$0x1] %vm39, %v38
    %s41 = scalar_lea.vmem %s0, 9
    %v42 = vld [vmem:[%s41] sm:$0x1]
    %43 = vrot.lane.b32.xlu0 %v42, 72
    %v44 = vpop.permute.xlu0 %43
    %vm45 = vcmask 654912
    %46 = vst.msk [vmem:[#allocation0] sm:$0x1] %vm45, %v44
    %s47 = scalar_lea.vmem %s0, 8
    %v48 = vld [vmem:[%s47] sm:$0x1]
    %49 = vrot.lane.b32.xlu0 %v48, 64
    %v50 = vpop.permute.xlu0 %49
    %vm51 = vcmask 589312
    %52 = vst.msk [vmem:[#allocation0] sm:$0x1] %vm51, %v50
    %s53 = scalar_lea.vmem %s0, 7
    %v54 = vld [vmem:[%s53] sm:$0x1]
    %55 = vrot.lane.b32.xlu0 %v54, 56
    %v56 = vpop.permute.xlu0 %55
    %vm57 = vcmask 523712
    %58 = vst.msk [vmem:[#allocation0] sm:$0x1] %vm57, %v56
    %s59 = scalar_lea.vmem %s0, 6
    %v60 = vld [vmem:[%s59] sm:$0x1]
    %61 = vrot.lane.b32.xlu0 %v60, 48
    %v62 = vpop.permute.xlu0 %61
    %vm63 = vcmask 458112
    %64 = vst.msk [vmem:[#allocation0] sm:$0x1] %vm63, %v62
    %s65 = scalar_lea.vmem %s0, 5
    %v66 = vld [vmem:[%s65] sm:$0x1]
    %67 = vrot.lane.b32.xlu0 %v66, 40
    %v68 = vpop.permute.xlu0 %67
    %vm69 = vcmask 392512
    %70 = vst.msk [vmem:[#allocation0] sm:$0x1] %vm69, %v68
    %s71 = scalar_lea.vmem %s0, 4
    %v72 = vld [vmem:[%s71] sm:$0x1]
    %73 = vrot.lane.b32.xlu0 %v72, 32
    %v74 = vpop.permute.xlu0 %73
    %vm75 = vcmask 326912
    %76 = vst.msk [vmem:[#allocation0] sm:$0x1] %vm75, %v74
    %s77 = scalar_lea.vmem %s0, 3
    %v78 = vld [vmem:[%s77] sm:$0x1]
    %79 = vrot.lane.b32.xlu0 %v78, 24
    %v80 = vpop.permute.xlu0 %79
    %vm81 = vcmask 261312
    %82 = vst.msk [vmem:[#allocation0] sm:$0x1] %vm81, %v80
    %s83 = scalar_lea.vmem %s0, 2
    %v84 = vld [vmem:[%s83] sm:$0x1]
    %85 = vrot.lane.b32.xlu0 %v84, 16
    %v86 = vpop.permute.xlu0 %85
    %vm87 = vcmask 195712
    %88 = vst.msk [vmem:[#allocation0] sm:$0x1] %vm87, %v86
    %s89 = scalar_lea.vmem %s0, 1
    %v90 = vld [vmem:[%s89] sm:$0x1]
    %91 = vrot.lane.b32.xlu0 %v90, 8
    %v92 = vpop.permute.xlu0 %91
    %vm93 = vcmask 130112
    %94 = vst.msk [vmem:[#allocation0] sm:$0x1] %vm93, %v92
    %s96 = ssub.s32 2, 1
    %v97 = vld [vmem:[#allocation0] sm:%s96]
    %s99 = ssub.s32 2, 1
    %100 = vst [vmem:[%s1] sm:%s99] %v97

// kernel: conv5_extractor.11
$region0: #{conv5_extractor.11}
  #allocation0 [shape = 'u32[]', space=smem, size = 0x4, offset = 0x4, fixed_abs, tag = 'smem constant byte address 0x4 - core index']
  #allocation1 [shape = 'u32[72,128]{1,0:T(1,128)}', space=vmem, size = 0x9000, scoped, tag = 'internal scratch']
  #allocation2 [shape = 'f32[18,128]{1,0:T(8,128)}', space=vmem, size = 0x3000, scoped, tag = 'scratch operand']
  %s0 = inlined_call_operand.vmem [shape: bf16[2,16,432], index: 0, kind: input, shape index: {}]
  %s1 = inlined_call_operand.vmem [shape: bf16[432,128], index: 1, kind: input, shape index: {}]
  %s2 = inlined_call_operand.vmem [shape: f32[1,128], index: 2, kind: input, shape index: {}]
  %s3 = inlined_call_operand.vmem [shape: bf16[384,128], index: 3, kind: input, shape index: {}]
  %s4 = inlined_call_operand.vmem [shape: f32[1,128], index: 4, kind: input, shape index: {}]
  %s5 = inlined_call_operand.vmem [shape: bf16[2,16,128], index: 5, kind: input, shape index: {}]
  %s6 = inlined_call_operand.vmem [shape: bf16[2,16,128], index: 6, kind: output, shape index: {}]
  %s7 = sld [smem:[#allocation0]]
  $region57: #{conv5_extractor.11} parent=0
    _
  %s9 = ssub.s32 1, %s7
  %s10 = scalar_select 0, %s9, %s7
  loop: start=0, step=1, limit=4
  $region2: #{conv5_extractor.11} parent=0 // loop_pre_header
    _
  $region3: #{conv5_extractor.11} parent=0 // loop_header
    %s12 = sphi 0, %s16
    %p13 = scmp.ge.s32.totalorder %s12, 4
    %s22 = sphi 0, %s24
    %s25 = sphi 0, %s22
    %s26 = sphi 0, %s25
    %s42 = sphi 0, %s26
    %s46 = sphi 0, %s46
    %s48 = sphi 0, %s46
    %s49 = sphi 0, %s48
    %s63 = sphi 0, %s49
    %s67 = sphi 0, %s67
    %s69 = sphi 0, %s67
    %s70 = sphi 0, %s69
    %s84 = sphi 0, %s70
    %s88 = sphi 0, %s88
    %s90 = sphi 0, %s88
    %s91 = sphi 0, %s90
    %s105 = sphi 0, %s91
    %s109 = sphi 0, %s109
    %s111 = sphi 0, %s109
    %s112 = sphi 0, %s111
    %s126 = sphi 0, %s112
    %s132 = sphi 0, %s134
    %s135 = sphi 0, %s132
    %s136 = sphi 0, %s135
    %s152 = sphi 0, %s136
    %s158 = sphi 0, %s160
    %s161 = sphi 0, %s158
    %s162 = sphi 0, %s161
    %s178 = sphi 0, %s162
  $region4: #{conv5_extractor.11} parent=0 // loop_header_branch
    %15 = sbr.rel (%p13) target = $region8
  $region5: #{conv5_extractor.11} parent=0 // loop_body
    %s17 = ssub.s32 %s12, 1
    %s18 = ssub.s32 %s12, 2
    %s19 = sadd.s32 %s12, 1
    %s20 = ssub.s32 %s12, %s19
    %p21 = scmp.eq.s32.totalorder %s20, 0
    %s23 = sadd.s32 %s22, 1
    %s24 = scalar_select %p21, %s22, %s23
    %p27 = pneg %p21
    %p28 = scmp.eq.s32.totalorder %s12, 1
    %p29 = por %p27, %p28
    %p30 = scmp.ne.s32.totalorder %s22, %s25
    %p31 = scmp.eq.s32.totalorder %s12, 0
    %p32 = por %p30, %p31
    %p33 = scmp.ne.s32.totalorder %s22, %s25
    %p34 = scmp.eq.s32.totalorder %s17, 1
    %p35 = por %p33, %p34
    %p36 = scmp.ne.s32.totalorder %s25, %s26
    %p37 = scmp.eq.s32.totalorder %s17, 0
    %p38 = por %p36, %p37
    %p39 = scmp.ne.s32.totalorder %s25, %s26
    %p40 = scmp.eq.s32.totalorder %s18, 1
    %p41 = por %p39, %p40
    %p43 = scmp.ne.s32.totalorder %s26, %s42
    %p44 = scmp.eq.s32.totalorder %s18, 0
    %p45 = por %p43, %p44
    %s47 = sadd.s32 %s46, 1
    %p50 = scmp.eq.s32.totalorder %s12, 1
    %p51 = scmp.ne.s32.totalorder %s46, %s48
    %p52 = scmp.eq.s32.totalorder %s12, 0
    %p53 = por %p51, %p52
    %p54 = scmp.ne.s32.totalorder %s46, %s48
    %p55 = scmp.eq.s32.totalorder %s17, 1
    %p56 = por %p54, %p55
    %p57 = scmp.ne.s32.totalorder %s48, %s49
    %p58 = scmp.eq.s32.totalorder %s17, 0
    %p59 = por %p57, %p58
    %p60 = scmp.ne.s32.totalorder %s48, %s49
    %p61 = scmp.eq.s32.totalorder %s18, 1
    %p62 = por %p60, %p61
    %p64 = scmp.ne.s32.totalorder %s49, %s63
    %p65 = scmp.eq.s32.totalorder %s18, 0
    %p66 = por %p64, %p65
    %s68 = sadd.s32 %s67, 1
    %p71 = scmp.eq.s32.totalorder %s12, 1
    %p72 = scmp.ne.s32.totalorder %s67, %s69
    %p73 = scmp.eq.s32.totalorder %s12, 0
    %p74 = por %p72, %p73
    %p75 = scmp.ne.s32.totalorder %s67, %s69
    %p76 = scmp.eq.s32.totalorder %s17, 1
    %p77 = por %p75, %p76
    %p78 = scmp.ne.s32.totalorder %s69, %s70
    %p79 = scmp.eq.s32.totalorder %s17, 0
    %p80 = por %p78, %p79
    %p81 = scmp.ne.s32.totalorder %s69, %s70
    %p82 = scmp.eq.s32.totalorder %s18, 1
    %p83 = por %p81, %p82
    %p85 = scmp.ne.s32.totalorder %s70, %s84
    %p86 = scmp.eq.s32.totalorder %s18, 0
    %p87 = por %p85, %p86
    %s89 = sadd.s32 %s88, 1
    %p92 = scmp.eq.s32.totalorder %s12, 1
    %p93 = scmp.ne.s32.totalorder %s88, %s90
    %p94 = scmp.eq.s32.totalorder %s12, 0
    %p95 = por %p93, %p94
    %p96 = scmp.ne.s32.totalorder %s88, %s90
    %p97 = scmp.eq.s32.totalorder %s17, 1
    %p98 = por %p96, %p97
    %p99 = scmp.ne.s32.totalorder %s90, %s91
    %p100 = scmp.eq.s32.totalorder %s17, 0
    %p101 = por %p99, %p100
    %p102 = scmp.ne.s32.totalorder %s90, %s91
    %p103 = scmp.eq.s32.totalorder %s18, 1
    %p104 = por %p102, %p103
    %p106 = scmp.ne.s32.totalorder %s91, %s105
    %p107 = scmp.eq.s32.totalorder %s18, 0
    %p108 = por %p106, %p107
    %s110 = sadd.s32 %s109, 1
    %p113 = scmp.eq.s32.totalorder %s12, 1
    %p114 = scmp.ne.s32.totalorder %s109, %s111
    %p115 = scmp.eq.s32.totalorder %s12, 0
    %p116 = por %p114, %p115
    %p117 = scmp.ne.s32.totalorder %s109, %s111
    %p118 = scmp.eq.s32.totalorder %s17, 1
    %p119 = por %p117, %p118
    %p120 = scmp.ne.s32.totalorder %s111, %s112
    %p121 = scmp.eq.s32.totalorder %s17, 0
    %p122 = por %p120, %p121
    %p123 = scmp.ne.s32.totalorder %s111, %s112
    %p124 = scmp.eq.s32.totalorder %s18, 1
    %p125 = por %p123, %p124
    %p127 = scmp.ne.s32.totalorder %s112, %s126
    %p128 = scmp.eq.s32.totalorder %s18, 0
    %p129 = por %p127, %p128
    %s130 = ssub.s32 %s12, %s19
    %p131 = scmp.eq.s32.totalorder %s130, 0
    %s133 = sadd.s32 %s132, 1
    %s134 = scalar_select %p131, %s132, %s133
    %p137 = pneg %p131
    %p138 = scmp.eq.s32.totalorder %s12, 1
    %p139 = por %p137, %p138
    %p140 = scmp.ne.s32.totalorder %s132, %s135
    %p141 = scmp.eq.s32.totalorder %s12, 0
    %p142 = por %p140, %p141
    %p143 = scmp.ne.s32.totalorder %s132, %s135
    %p144 = scmp.eq.s32.totalorder %s17, 1
    %p145 = por %p143, %p144
    %p146 = scmp.ne.s32.totalorder %s135, %s136
    %p147 = scmp.eq.s32.totalorder %s17, 0
    %p148 = por %p146, %p147
    %p149 = scmp.ne.s32.totalorder %s135, %s136
    %p150 = scmp.eq.s32.totalorder %s18, 1
    %p151 = por %p149, %p150
    %p153 = scmp.ne.s32.totalorder %s136, %s152
    %p154 = scmp.eq.s32.totalorder %s18, 0
    %p155 = por %p153, %p154
    %s156 = ssub.s32 %s12, %s19
    %p157 = scmp.eq.s32.totalorder %s156, 0
    %s159 = sadd.s32 %s158, 1
    %s160 = scalar_select %p157, %s158, %s159
    %p163 = pneg %p157
    %p164 = scmp.eq.s32.totalorder %s12, 1
    %p165 = por %p163, %p164
    %p166 = scmp.ne.s32.totalorder %s158, %s161
    %p167 = scmp.eq.s32.totalorder %s12, 0
    %p168 = por %p166, %p167
    %p169 = scmp.ne.s32.totalorder %s158, %s161
    %p170 = scmp.eq.s32.totalorder %s17, 1
    %p171 = por %p169, %p170
    %p172 = scmp.ne.s32.totalorder %s161, %s162
    %p173 = scmp.eq.s32.totalorder %s17, 0
    %p174 = por %p172, %p173
    %p175 = scmp.ne.s32.totalorder %s161, %s162
    %p176 = scmp.eq.s32.totalorder %s18, 1
    %p177 = por %p175, %p176
    %p179 = scmp.ne.s32.totalorder %s162, %s178
    %p180 = scmp.eq.s32.totalorder %s18, 0
    %p181 = por %p179, %p180
    %p182 = scmp.le.s32.totalorder 1, %s12
    %p183 = scmp.lt.s32.totalorder %s12, 3
    %p184 = pnand %p182, %p183
    %p185 = pneg %p184
    // Predicated region
    $region9: #{conv5_extractor.11} parent=5 // pred_check
      _
    $region10: #{conv5_extractor.11} parent=5 // pred_check_branch
      %187 = sbr.rel (%p184) target = $region12
    $region11: #{conv5_extractor.11} parent=5 // pred_region
      %s188 = ssub.s32 %s12, 1
      // Predicated region
      $region13: #{conv5_extractor.11} parent=11 // pred_check
        %p189 = pneg %p59
      $region14: #{conv5_extractor.11} parent=11 // pred_check_branch
        %191 = sbr.rel (%p189) target = $region16
      $region15: #{conv5_extractor.11} parent=11 // pred_region
        _
      $region16: #{conv5_extractor.11} parent=11 // pred_fallthru
        _
      // Predicated region
      $region17: #{conv5_extractor.11} parent=11 // pred_check
        %p192 = pneg %p80
      $region18: #{conv5_extractor.11} parent=11 // pred_check_branch
        %194 = sbr.rel (%p192) target = $region20
      $region19: #{conv5_extractor.11} parent=11 // pred_region
        _
      $region20: #{conv5_extractor.11} parent=11 // pred_fallthru
        _
      // Predicated region
      $region21: #{conv5_extractor.11} parent=11 // pred_check
        %p195 = pneg %p101
      $region22: #{conv5_extractor.11} parent=11 // pred_check_branch
        %197 = sbr.rel (%p195) target = $region24
      $region23: #{conv5_extractor.11} parent=11 // pred_region
        _
      $region24: #{conv5_extractor.11} parent=11 // pred_fallthru
        _
      // Predicated region
      $region25: #{conv5_extractor.11} parent=11 // pred_check
        %p198 = pneg %p122
      $region26: #{conv5_extractor.11} parent=11 // pred_check_branch
        %200 = sbr.rel (%p198) target = $region28
      $region27: #{conv5_extractor.11} parent=11 // pred_region
        _
      $region28: #{conv5_extractor.11} parent=11 // pred_fallthru
        _
    $region12: #{conv5_extractor.11} parent=5 // pred_fallthru
      _
    %p201 = scmp.lt.s32.totalorder %s12, 2
    // Predicated region
    $region29: #{conv5_extractor.11} parent=5 // pred_check
      %p202 = pneg %p201
    $region30: #{conv5_extractor.11} parent=5 // pred_check_branch
      %204 = sbr.rel (%p202) target = $region32
    $region31: #{conv5_extractor.11} parent=5 // pred_region
      // Predicated region
      $region33: #{conv5_extractor.11} parent=31 // pred_check
        %p205 = pneg %p32
      $region34: #{conv5_extractor.11} parent=31 // pred_check_branch
        %207 = sbr.rel (%p205) target = $region36
      $region35: #{conv5_extractor.11} parent=31 // pred_region
        %p208 = scmp.lt.s32.totalorder %s12, 1
        %s209 = scalar_select %p208, %s12, 1
        %s210 = smul.addr %s209, 8
        %s211 = smul.addr %s210, 4
        %s212 = scalar_lea.vmem %s0, %s211
      $region36: #{conv5_extractor.11} parent=31 // pred_fallthru
        _
      // Predicated region
      $region37: #{conv5_extractor.11} parent=31 // pred_check
        %p213 = pneg %p142
      $region38: #{conv5_extractor.11} parent=31 // pred_check_branch
        %215 = sbr.rel (%p213) target = $region40
      $region39: #{conv5_extractor.11} parent=31 // pred_region
        %p216 = scmp.lt.s32.totalorder %s12, 1
        %s217 = scalar_select %p216, %s12, 1
        %s218 = smul.addr %s217, 2
        %s219 = smul.addr %s218, 4
        %s220 = scalar_lea.vmem %s5, %s219
      $region40: #{conv5_extractor.11} parent=31 // pred_fallthru
        _
    $region32: #{conv5_extractor.11} parent=5 // pred_fallthru
      _
    %p221 = scmp.le.s32.totalorder 1, %s12
    %p222 = scmp.lt.s32.totalorder %s12, 3
    %p223 = pnand %p221, %p222
    %p224 = pneg %p223
    // Predicated region
    $region41: #{conv5_extractor.11} parent=5 // pred_check
      _
    $region42: #{conv5_extractor.11} parent=5 // pred_check_branch
      %226 = sbr.rel (%p223) target = $region44
    $region43: #{conv5_extractor.11} parent=5 // pred_region
      %s227 = ssub.s32 %s12, 1
      %p228 = scmp.lt.s32.totalorder %s17, 1
      %s229 = scalar_select %p228, %s17, 1
      %s230 = smul.addr %s229, 8
      %s231 = smul.addr %s230, 4
      %s232 = scalar_lea.vmem %s0, %s231
      %p233 = pneg %p38
      %p234 = pneg %p35
      %p235 = pneg %p59
      %p236 = pneg %p56
      %p237 = pneg %p80
      %p238 = pneg %p77
      %p239 = pneg %p101
      %p240 = pneg %p98
      %p241 = pneg %p122
      %p242 = pneg %p119
      %p243 = scmp.lt.s32.totalorder %s17, 1
      %s244 = scalar_select %p243, %s17, 1
      %s245 = smul.addr %s244, 2
      %s246 = smul.addr %s245, 4
      %s247 = scalar_lea.vmem %s5, %s246
      %p248 = pneg %p148
      %p249 = pneg %p145
      %p250 = pneg %p174
      %p251 = pneg %p171
      %p252 = scmp.lt.s32.totalorder %s17, 1
      %s253 = scalar_select %p252, %s17, 1
      %s254 = smul.addr %s253, 2
      %s255 = smul.addr %s254, 4
      %s256 = scalar_lea.vmem %s6, %s255
      %p257 = scmp.lt.s32.totalorder %s17, 1
      %s258 = scalar_select %p257, %s17, 1
      %s259 = smul.addr %s258, 8
      %s260 = smul.addr %s259, 4
      %s261 = scalar_lea.vmem %s0, %s260
      %p262 = scmp.lt.s32.totalorder %s17, 1
      %s263 = scalar_select %p262, %s17, 1
      %s264 = smul.addr %s263, 2
      %s265 = smul.addr %s264, 4
      %s266 = scalar_lea.vmem %s5, %s265
      %p267 = scmp.lt.s32.totalorder %s17, 1
      %s268 = scalar_select %p267, %s17, 1
      %s269 = smul.addr %s268, 2
      %s270 = smul.addr %s269, 4
      %s271 = scalar_lea.vmem %s6, %s270
      %v273 = vld [vmem:[%s261] sm:$0xff]
      %v274 = vld [vmem:[%s261 + $0x8] sm:$0xff]
      %v275 = vld [vmem:[%s261 + $0x10] sm:$0xff]
      %v276 = vld [vmem:[%s261 + $0x18] sm:$0xff]
      %v277 = vld [vmem:[%s1] sm:$0xf]
      %v278 = vld [vmem:[%s1 + $0x4] sm:$0xf]
      %v279 = vld [vmem:[%s1 + $0x8] sm:$0xf]
      %v280 = vld [vmem:[%s1 + $0xc] sm:$0xf]
      %v281 = vld [vmem:[%s1 + $0x10] sm:$0xf]
      %v282 = vld [vmem:[%s1 + $0x14] sm:$0xf]
      %v283 = vld [vmem:[%s1 + $0x18] sm:$0xf]
      %v284 = vld [vmem:[%s1 + $0x1c] sm:$0xf]
      %v285 = vld [vmem:[%s1 + $0x20] sm:$0xf]
      %v286 = vld [vmem:[%s1 + $0x24] sm:$0xf]
      %v287 = vld [vmem:[%s1 + $0x28] sm:$0xf]
      %v288 = vld [vmem:[%s1 + $0x2c] sm:$0xf]
      %v289 = vld [vmem:[%s1 + $0x30] sm:$0xf]
      %v290 = vld [vmem:[%s1 + $0x34] sm:$0xf]
      %v291 = vld [vmem:[%s1 + $0x38] sm:$0xf]
      %v292 = vld [vmem:[%s1 + $0x3c] sm:$0xf]
      %v293 = vld [vmem:[%s1 + $0x40] sm:$0xf]
      %v294 = vld [vmem:[%s1 + $0x44] sm:$0xf]
      %v295 = vld [vmem:[%s1 + $0x48] sm:$0xf]
      %v296 = vld [vmem:[%s1 + $0x4c] sm:$0xf]
      %v297 = vld [vmem:[%s1 + $0x50] sm:$0xf]
      %v298 = vld [vmem:[%s1 + $0x54] sm:$0xf]
      %v299 = vld [vmem:[%s1 + $0x58] sm:$0xf]
      %v300 = vld [vmem:[%s1 + $0x5c] sm:$0xf]
      %v301 = vld [vmem:[%s1 + $0x60] sm:$0xf]
      %v302 = vld [vmem:[%s1 + $0x64] sm:$0xf]
      %v303 = vld [vmem:[%s1 + $0x68] sm:$0xf]
      %v304 = vld [vmem:[%s1 + $0x6c] sm:$0xf]
      %v305 = vld [vmem:[%s1 + $0x70] sm:$0xf]
      %v306 = vld [vmem:[%s1 + $0x74] sm:$0xf]
      %v307 = vld [vmem:[%s1 + $0x78] sm:$0xf]
      %v308 = vld [vmem:[%s1 + $0x7c] sm:$0xf]
      %v309 = vld [vmem:[%s1 + $0x80] sm:$0xf]
      %v310 = vld [vmem:[%s1 + $0x84] sm:$0xf]
      %v311 = vld [vmem:[%s1 + $0x88] sm:$0xf]
      %v312 = vld [vmem:[%s1 + $0x8c] sm:$0xf]
      %v313 = vld [vmem:[%s1 + $0x90] sm:$0xf]
      %v314 = vld [vmem:[%s1 + $0x94] sm:$0xf]
      %v315 = vld [vmem:[%s1 + $0x98] sm:$0xf]
      %v316 = vld [vmem:[%s1 + $0x9c] sm:$0xf]
      %v317 = vld [vmem:[%s1 + $0xa0] sm:$0xf]
      %v318 = vld [vmem:[%s1 + $0xa4] sm:$0xf]
      %v319 = vld [vmem:[%s1 + $0xa8] sm:$0xf]
      %v320 = vld [vmem:[%s1 + $0xac] sm:$0xf]
      %v321 = vld [vmem:[%s1 + $0xb0] sm:$0xf]
      %v322 = vld [vmem:[%s1 + $0xb4] sm:$0xf]
      %v323 = vld [vmem:[%s1 + $0xb8] sm:$0xf]
      %v324 = vld [vmem:[%s1 + $0xbc] sm:$0xf]
      %v325 = vld [vmem:[%s1 + $0xc0] sm:$0xf]
      %v326 = vld [vmem:[%s1 + $0xc4] sm:$0xf]
      %v327 = vld [vmem:[%s1 + $0xc8] sm:$0xf]
      %v328 = vld [vmem:[%s1 + $0xcc] sm:$0xf]
      %v329 = vld [vmem:[%s1 + $0xd0] sm:$0xf]
      %v330 = vld [vmem:[%s1 + $0xd4] sm:$0xf]
      %v331 = vld [vmem:[%s2] sm:$0x1]
      %v333 = vperm.slane %v331, 0
      %v339 = vunpack.c.l.b16 %v273
      %v340 = vunpack.c.h.b16 %v273
      %v341 = vunpack.c.l.b16 %v274
      %v342 = vunpack.c.h.b16 %v274
      %v343 = vunpack.c.l.b16 %v275
      %v344 = vunpack.c.h.b16 %v275
      %v345 = vunpack.c.l.b16 %v276
      %v346 = vunpack.c.h.b16 %v276
      %v347 = vpack.c.b16 %v343, %v339
      %v348 = vpack.c.b16 %v344, %v340
      %v349 = vpack.c.b16 %v345, %v341
      %v350 = vpack.c.b16 %v346, %v342
      %v408 = vunpack.c.l.b16 %v277
      %v409 = vunpack.c.l.b16 %v278
      %v410 = vunpack.c.l.b16 %v279
      %v411 = vunpack.c.l.b16 %v280
      %v412 = vunpack.c.l.b16 %v281
      %v413 = vunpack.c.l.b16 %v282
      %v414 = vunpack.c.l.b16 %v283
      %v415 = vunpack.c.l.b16 %v284
      %v416 = vunpack.c.l.b16 %v285
      %v417 = vunpack.c.l.b16 %v286
      %v418 = vunpack.c.l.b16 %v287
      %v419 = vunpack.c.l.b16 %v288
      %v420 = vunpack.c.l.b16 %v289
      %v421 = vunpack.c.l.b16 %v290
      %v422 = vunpack.c.l.b16 %v291
      %v423 = vunpack.c.l.b16 %v292
      %v424 = vunpack.c.l.b16 %v293
      %v425 = vunpack.c.l.b16 %v294
      %v426 = vunpack.c.l.b16 %v295
      %v427 = vunpack.c.l.b16 %v296
      %v428 = vunpack.c.l.b16 %v297
      %v429 = vunpack.c.l.b16 %v298
      %v430 = vunpack.c.l.b16 %v299
      %v431 = vunpack.c.l.b16 %v300
      %v432 = vunpack.c.l.b16 %v301
      %v433 = vunpack.c.l.b16 %v302
      %v434 = vunpack.c.l.b16 %v303
      %v435 = vunpack.c.l.b16 %v304
      %v436 = vunpack.c.l.b16 %v305
      %v437 = vunpack.c.l.b16 %v306
      %v438 = vunpack.c.l.b16 %v307
      %v439 = vunpack.c.l.b16 %v308
      %v440 = vunpack.c.l.b16 %v309
      %v441 = vunpack.c.l.b16 %v310
      %v442 = vunpack.c.l.b16 %v311
      %v443 = vunpack.c.l.b16 %v312
      %v444 = vunpack.c.l.b16 %v313
      %v445 = vunpack.c.l.b16 %v314
      %v446 = vunpack.c.l.b16 %v315
      %v447 = vunpack.c.l.b16 %v316
      %v448 = vunpack.c.l.b16 %v317
      %v449 = vunpack.c.l.b16 %v318
      %v450 = vunpack.c.l.b16 %v319
      %v451 = vunpack.c.l.b16 %v320
      %v452 = vunpack.c.l.b16 %v321
      %v453 = vunpack.c.l.b16 %v322
      %v454 = vunpack.c.l.b16 %v323
      %v455 = vunpack.c.l.b16 %v324
      %v456 = vunpack.c.l.b16 %v325
      %v457 = vunpack.c.l.b16 %v326
      %v458 = vunpack.c.l.b16 %v327
      %v459 = vunpack.c.l.b16 %v328
      %v460 = vunpack.c.l.b16 %v329
      %v461 = vunpack.c.l.b16 %v330
      %v462 = vpack.c.b16 %v409, %v408
      %v463 = vpack.c.b16 %v411, %v410
      %v464 = vpack.c.b16 %v413, %v412
      %v465 = vpack.c.b16 %v415, %v414
      %v466 = vpack.c.b16 %v417, %v416
      %v467 = vpack.c.b16 %v419, %v418
      %v468 = vpack.c.b16 %v421, %v420
      %v469 = vpack.c.b16 %v423, %v422
      %v470 = vpack.c.b16 %v425, %v424
      %v471 = vpack.c.b16 %v427, %v426
      %v472 = vpack.c.b16 %v429, %v428
      %v473 = vpack.c.b16 %v431, %v430
      %v474 = vpack.c.b16 %v433, %v432
      %v475 = vpack.c.b16 %v435, %v434
      %v476 = vpack.c.b16 %v437, %v436
      %v477 = vpack.c.b16 %v439, %v438
      %v478 = vpack.c.b16 %v441, %v440
      %v479 = vpack.c.b16 %v443, %v442
      %v480 = vpack.c.b16 %v445, %v444
      %v481 = vpack.c.b16 %v447, %v446
      %v482 = vpack.c.b16 %v449, %v448
      %v483 = vpack.c.b16 %v451, %v450
      %v484 = vpack.c.b16 %v453, %v452
      %v485 = vpack.c.b16 %v455, %v454
      %v486 = vpack.c.b16 %v457, %v456
      %v487 = vpack.c.b16 %v459, %v458
      %v488 = vpack.c.b16 %v461, %v460
      %vm516 = vcmask 392192
      %v518 = vsel %vm516, %v350, 0
      %520 = vmatpush.bf16.msra.mxu0 %v469
      %521 = vmatpush.bf16.msra.mxu0 %v468
      %522 = vmatpush.bf16.msra.mxu0 %v467
      %523 = vmatpush.bf16.msra.mxu0 %v466
      %524 = vmatpush.bf16.msra.mxu0 %v465
      %525 = vmatpush.bf16.msra.mxu0 %v464
      %526 = vmatpush.bf16.msra.mxu0 %v463
      %527 = vmatpush.bf16.msra.mxu0 %v462
      %528 = vmatmul.bf16.gmra.mxu0 %v347
      %v529 = vpop.f32.mrf.mxu0
      %v530 = vadd.f32 %v333, %v529
      %v531 = vpop.f32.mrf.mxu0
      %v532 = vadd.f32 %v333, %v531
      %533 = vdwg.mxu0
      %534 = vmatpush.bf16.msra.mxu0 %v477
      %535 = vmatpush.bf16.msra.mxu0 %v476
      %536 = vmatpush.bf16.msra.mxu0 %v475
      %537 = vmatpush.bf16.msra.mxu0 %v474
      %538 = vmatpush.bf16.msra.mxu0 %v473
      %539 = vmatpush.bf16.msra.mxu0 %v472
      %540 = vmatpush.bf16.msra.mxu0 %v471
      %541 = vmatpush.bf16.msra.mxu0 %v470
      %542 = vmatmul.bf16.gmra.mxu0 %v348
      %v543 = vpop.f32.mrf.mxu0
      %v544 = vadd.f32 %v530, %v543
      %v545 = vpop.f32.mrf.mxu0
      %v546 = vadd.f32 %v532, %v545
      %547 = vdwg.mxu0
      %548 = vmatpush.bf16.msra.mxu0 %v485
      %549 = vmatpush.bf16.msra.mxu0 %v484
      %550 = vmatpush.bf16.msra.mxu0 %v483
      %551 = vmatpush.bf16.msra.mxu0 %v482
      %552 = vmatpush.bf16.msra.mxu0 %v481
      %553 = vmatpush.bf16.msra.mxu0 %v480
      %554 = vmatpush.bf16.msra.mxu0 %v479
      %555 = vmatpush.bf16.msra.mxu0 %v478
      %556 = vmatmul.bf16.gmra.mxu0 %v349
      %v557 = vpop.f32.mrf.mxu0
      %v558 = vadd.f32 %v544, %v557
      %v559 = vpop.f32.mrf.mxu0
      %v560 = vadd.f32 %v546, %v559
      %561 = vdwg.mxu0
      %562 = vmatpush.bf16.msra.mxu0 0
      %563 = vmatpush.bf16.msra.mxu0 0
      %564 = vmatpush.bf16.msra.mxu0 0
      %565 = vmatpush.bf16.msra.mxu0 0
      %566 = vmatpush.bf16.msra.mxu0 0
      %567 = vmatpush.bf16.msra.mxu0 %v488
      %568 = vmatpush.bf16.msra.mxu0 %v487
      %569 = vmatpush.bf16.msra.mxu0 %v486
      %570 = vmatmul.bf16.gmra.mxu0 %v518
      %v571 = vpop.f32.mrf.mxu0
      %v572 = vadd.f32 %v558, %v571
      %v573 = vpop.f32.mrf.mxu0
      %v574 = vadd.f32 %v560, %v573
      %575 = vdwg.mxu0
      %v576 = vmax.f32 %v572, 0.0
      %v577 = vmax.f32 %v574, 0.0
      %v578 = vld [vmem:[%s266] sm:$0xf]
      %v579 = vld [vmem:[%s266 + $0x4] sm:$0xf]
      %v580 = vunpack.c.l.bf16 %v578
      %v581 = vunpack.c.l.bf16 %v579
      %582 = vst [vmem:[#allocation2] sm:$0xff] 0.0
      %583 = vst [vmem:[#allocation2 + $0x8] sm:$0xff] 0.0
      %584 = vst [vmem:[#allocation2 + $0x10] sm:$0x3] 0.0
      %585 = vst [vmem:[#allocation2 + $0x1] sm:$0xff] %v576
      %586 = vst [vmem:[#allocation2 + $0x9] sm:$0xff] %v577
      %v587 = vld [vmem:[%s4] sm:$0x1]
      %v589 = vperm.slane %v587, 0
      %v591 = vadd.f32 %v580, %v589
      %v592 = vadd.f32 %v581, %v589
      %v593 = vld [vmem:[#allocation2] sm:$0xff]
      %v594 = vld [vmem:[#allocation2 + $0x8] sm:$0xff]
      %v595 = vpack.c.bf16 %v594, %v593
      %v596 = vld [vmem:[%s3] sm:$0xf]
      %v597 = vld [vmem:[%s3 + $0x4] sm:$0xf]
      %v598 = vld [vmem:[%s3 + $0x8] sm:$0xf]
      %v599 = vld [vmem:[%s3 + $0xc] sm:$0xf]
      %v600 = vld [vmem:[%s3 + $0x10] sm:$0xf]
      %v601 = vld [vmem:[%s3 + $0x14] sm:$0xf]
      %v602 = vld [vmem:[%s3 + $0x18] sm:$0xf]
      %v603 = vld [vmem:[%s3 + $0x1c] sm:$0xf]
      %v604 = vld [vmem:[%s3 + $0x20] sm:$0xf]
      %v605 = vld [vmem:[%s3 + $0x24] sm:$0xf]
      %v606 = vld [vmem:[%s3 + $0x28] sm:$0xf]
      %v607 = vld [vmem:[%s3 + $0x2c] sm:$0xf]
      %v608 = vld [vmem:[%s3 + $0x30] sm:$0xf]
      %v609 = vld [vmem:[%s3 + $0x34] sm:$0xf]
      %v610 = vld [vmem:[%s3 + $0x38] sm:$0xf]
      %v611 = vld [vmem:[%s3 + $0x3c] sm:$0xf]
      %v628 = vunpack.c.l.b16 %v596
      %v629 = vunpack.c.l.b16 %v597
      %v630 = vunpack.c.l.b16 %v598
      %v631 = vunpack.c.l.b16 %v599
      %v632 = vunpack.c.l.b16 %v600
      %v633 = vunpack.c.l.b16 %v601
      %v634 = vunpack.c.l.b16 %v602
      %v635 = vunpack.c.l.b16 %v603
      %v636 = vunpack.c.l.b16 %v604
      %v637 = vunpack.c.l.b16 %v605
      %v638 = vunpack.c.l.b16 %v606
      %v639 = vunpack.c.l.b16 %v607
      %v640 = vunpack.c.l.b16 %v608
      %v641 = vunpack.c.l.b16 %v609
      %v642 = vunpack.c.l.b16 %v610
      %v643 = vunpack.c.l.b16 %v611
      %v644 = vpack.c.b16 %v629, %v628
      %v645 = vpack.c.b16 %v631, %v630
      %v646 = vpack.c.b16 %v633, %v632
      %v647 = vpack.c.b16 %v635, %v634
      %v648 = vpack.c.b16 %v637, %v636
      %v649 = vpack.c.b16 %v639, %v638
      %v650 = vpack.c.b16 %v641, %v640
      %v651 = vpack.c.b16 %v643, %v642
      %660 = vmatpush.bf16.msra.mxu0 %v651
      %661 = vmatpush.bf16.msra.mxu0 %v650
      %662 = vmatpush.bf16.msra.mxu0 %v649
      %663 = vmatpush.bf16.msra.mxu0 %v648
      %664 = vmatpush.bf16.msra.mxu0 %v647
      %665 = vmatpush.bf16.msra.mxu0 %v646
      %666 = vmatpush.bf16.msra.mxu0 %v645
      %667 = vmatpush.bf16.msra.mxu0 %v644
      %668 = vmatmul.bf16.gmra.mxu0 %v595
      %v669 = vpop.f32.mrf.mxu0
      %v670 = vadd.f32 0.0, %v669
      %v671 = vpop.f32.mrf.mxu0
      %v672 = vadd.f32 0.0, %v671
      %673 = vdwg.mxu0
      %v674 = vadd.f32 %v591, %v670
      %v675 = vadd.f32 %v592, %v672
      %v676 = vld [vmem:[#allocation2 + $0x1] sm:$0xff]
      %v677 = vld [vmem:[#allocation2 + $0x9] sm:$0xff]
      %v678 = vpack.c.bf16 %v677, %v676
      %v679 = vld [vmem:[%s3 + $0x40] sm:$0xf]
      %v680 = vld [vmem:[%s3 + $0x44] sm:$0xf]
      %v681 = vld [vmem:[%s3 + $0x48] sm:$0xf]
      %v682 = vld [vmem:[%s3 + $0x4c] sm:$0xf]
      %v683 = vld [vmem:[%s3 + $0x50] sm:$0xf]
      %v684 = vld [vmem:[%s3 + $0x54] sm:$0xf]
      %v685 = vld [vmem:[%s3 + $0x58] sm:$0xf]
      %v686 = vld [vmem:[%s3 + $0x5c] sm:$0xf]
      %v687 = vld [vmem:[%s3 + $0x60] sm:$0xf]
      %v688 = vld [vmem:[%s3 + $0x64] sm:$0xf]
      %v689 = vld [vmem:[%s3 + $0x68] sm:$0xf]
      %v690 = vld [vmem:[%s3 + $0x6c] sm:$0xf]
      %v691 = vld [vmem:[%s3 + $0x70] sm:$0xf]
      %v692 = vld [vmem:[%s3 + $0x74] sm:$0xf]
      %v693 = vld [vmem:[%s3 + $0x78] sm:$0xf]
      %v694 = vld [vmem:[%s3 + $0x7c] sm:$0xf]
      %v711 = vunpack.c.l.b16 %v679
      %v712 = vunpack.c.l.b16 %v680
      %v713 = vunpack.c.l.b16 %v681
      %v714 = vunpack.c.l.b16 %v682
      %v715 = vunpack.c.l.b16 %v683
      %v716 = vunpack.c.l.b16 %v684
      %v717 = vunpack.c.l.b16 %v685
      %v718 = vunpack.c.l.b16 %v686
      %v719 = vunpack.c.l.b16 %v687
      %v720 = vunpack.c.l.b16 %v688
      %v721 = vunpack.c.l.b16 %v689
      %v722 = vunpack.c.l.b16 %v690
      %v723 = vunpack.c.l.b16 %v691
      %v724 = vunpack.c.l.b16 %v692
      %v725 = vunpack.c.l.b16 %v693
      %v726 = vunpack.c.l.b16 %v694
      %v727 = vpack.c.b16 %v712, %v711
      %v728 = vpack.c.b16 %v714, %v713
      %v729 = vpack.c.b16 %v716, %v715
      %v730 = vpack.c.b16 %v718, %v717
      %v731 = vpack.c.b16 %v720, %v719
      %v732 = vpack.c.b16 %v722, %v721
      %v733 = vpack.c.b16 %v724, %v723
      %v734 = vpack.c.b16 %v726, %v725
      %743 = vmatpush.bf16.msra.mxu0 %v734
      %744 = vmatpush.bf16.msra.mxu0 %v733
      %745 = vmatpush.bf16.msra.mxu0 %v732
      %746 = vmatpush.bf16.msra.mxu0 %v731
      %747 = vmatpush.bf16.msra.mxu0 %v730
      %748 = vmatpush.bf16.msra.mxu0 %v729
      %749 = vmatpush.bf16.msra.mxu0 %v728
      %750 = vmatpush.bf16.msra.mxu0 %v727
      %751 = vmatmul.bf16.gmra.mxu0 %v678
      %v752 = vpop.f32.mrf.mxu0
      %v753 = vadd.f32 0.0, %v752
      %v754 = vpop.f32.mrf.mxu0
      %v755 = vadd.f32 0.0, %v754
      %756 = vdwg.mxu0
      %v757 = vadd.f32 %v674, %v753
      %v758 = vadd.f32 %v675, %v755
      %v759 = vld [vmem:[#allocation2 + $0x2] sm:$0xff]
      %v760 = vld [vmem:[#allocation2 + $0xa] sm:$0xff]
      %v761 = vpack.c.bf16 %v760, %v759
      %v762 = vld [vmem:[%s3 + $0x80] sm:$0xf]
      %v763 = vld [vmem:[%s3 + $0x84] sm:$0xf]
      %v764 = vld [vmem:[%s3 + $0x88] sm:$0xf]
      %v765 = vld [vmem:[%s3 + $0x8c] sm:$0xf]
      %v766 = vld [vmem:[%s3 + $0x90] sm:$0xf]
      %v767 = vld [vmem:[%s3 + $0x94] sm:$0xf]
      %v768 = vld [vmem:[%s3 + $0x98] sm:$0xf]
      %v769 = vld [vmem:[%s3 + $0x9c] sm:$0xf]
      %v770 = vld [vmem:[%s3 + $0xa0] sm:$0xf]
      %v771 = vld [vmem:[%s3 + $0xa4] sm:$0xf]
      %v772 = vld [vmem:[%s3 + $0xa8] sm:$0xf]
      %v773 = vld [vmem:[%s3 + $0xac] sm:$0xf]
      %v774 = vld [vmem:[%s3 + $0xb0] sm:$0xf]
      %v775 = vld [vmem:[%s3 + $0xb4] sm:$0xf]
      %v776 = vld [vmem:[%s3 + $0xb8] sm:$0xf]
      %v777 = vld [vmem:[%s3 + $0xbc] sm:$0xf]
      %v794 = vunpack.c.l.b16 %v762
      %v795 = vunpack.c.l.b16 %v763
      %v796 = vunpack.c.l.b16 %v764
      %v797 = vunpack.c.l.b16 %v765
      %v798 = vunpack.c.l.b16 %v766
      %v799 = vunpack.c.l.b16 %v767
      %v800 = vunpack.c.l.b16 %v768
      %v801 = vunpack.c.l.b16 %v769
      %v802 = vunpack.c.l.b16 %v770
      %v803 = vunpack.c.l.b16 %v771
      %v804 = vunpack.c.l.b16 %v772
      %v805 = vunpack.c.l.b16 %v773
      %v806 = vunpack.c.l.b16 %v774
      %v807 = vunpack.c.l.b16 %v775
      %v808 = vunpack.c.l.b16 %v776
      %v809 = vunpack.c.l.b16 %v777
      %v810 = vpack.c.b16 %v795, %v794
      %v811 = vpack.c.b16 %v797, %v796
      %v812 = vpack.c.b16 %v799, %v798
      %v813 = vpack.c.b16 %v801, %v800
      %v814 = vpack.c.b16 %v803, %v802
      %v815 = vpack.c.b16 %v805, %v804
      %v816 = vpack.c.b16 %v807, %v806
      %v817 = vpack.c.b16 %v809, %v808
      %826 = vmatpush.bf16.msra.mxu0 %v817
      %827 = vmatpush.bf16.msra.mxu0 %v816
      %828 = vmatpush.bf16.msra.mxu0 %v815
      %829 = vmatpush.bf16.msra.mxu0 %v814
      %830 = vmatpush.bf16.msra.mxu0 %v813
      %831 = vmatpush.bf16.msra.mxu0 %v812
      %832 = vmatpush.bf16.msra.mxu0 %v811
      %833 = vmatpush.bf16.msra.mxu0 %v810
      %834 = vmatmul.bf16.gmra.mxu0 %v761
      %v835 = vpop.f32.mrf.mxu0
      %v836 = vadd.f32 0.0, %v835
      %v837 = vpop.f32.mrf.mxu0
      %v838 = vadd.f32 0.0, %v837
      %839 = vdwg.mxu0
      %v840 = vadd.f32 %v757, %v836
      %v841 = vadd.f32 %v758, %v838
      %v842 = vmax.f32 %v840, 0.0
      %v843 = vmax.f32 %v841, 0.0
      %v844 = vpack.c.bf16 %v842, %v842
      %v845 = vpack.c.bf16 %v843, %v843
      %846 = vst [vmem:[%s271] sm:$0xf] %v844
      %847 = vst [vmem:[%s271 + $0x4] sm:$0xf] %v845
      %p848 = scmp.lt.s32.totalorder %s17, 1
      %s849 = scalar_select %p848, %s17, 1
      %s850 = smul.addr %s849, 2
      %s851 = smul.addr %s850, 4
      %s852 = scalar_lea.vmem %s6, %s851
      // Predicated region
      $region45: #{conv5_extractor.11} parent=43 // pred_check
        %p853 = pneg %p171
      $region46: #{conv5_extractor.11} parent=43 // pred_check_branch
        %855 = sbr.rel (%p853) target = $region48
      $region47: #{conv5_extractor.11} parent=43 // pred_region
        _
      $region48: #{conv5_extractor.11} parent=43 // pred_fallthru
        _
    $region44: #{conv5_extractor.11} parent=5 // pred_fallthru
      _
    %p856 = scmp.le.s32.totalorder 2, %s12
    // Predicated region
    $region49: #{conv5_extractor.11} parent=5 // pred_check
      %p857 = pneg %p856
    $region50: #{conv5_extractor.11} parent=5 // pred_check_branch
      %859 = sbr.rel (%p857) target = $region52
    $region51: #{conv5_extractor.11} parent=5 // pred_region
      %s860 = ssub.s32 %s12, 2
      // Predicated region
      $region53: #{conv5_extractor.11} parent=51 // pred_check
        %p861 = pneg %p177
      $region54: #{conv5_extractor.11} parent=51 // pred_check_branch
        %863 = sbr.rel (%p861) target = $region56
      $region55: #{conv5_extractor.11} parent=51 // pred_region
        %p864 = scmp.lt.s32.totalorder %s18, 1
        %s865 = scalar_select %p864, %s18, 1
        %s866 = smul.addr %s865, 2
        %s867 = smul.addr %s866, 4
        %s868 = scalar_lea.vmem %s6, %s867
      $region56: #{conv5_extractor.11} parent=51 // pred_fallthru
        _
    $region52: #{conv5_extractor.11} parent=5 // pred_fallthru
      _
  $region6: #{conv5_extractor.11} parent=0 // loop_footer
    %s16 = sadd.s32 1, %s12
  $region7: #{conv5_extractor.11} parent=0 // loop_footer_branch
    %11 = sbr.rel target = $region3
  $region8: #{conv5_extractor.11} parent=0 // loop_exit
    _

// kernel: tile.118
$region0: #{tile.118}
  #allocation0 [shape = 's32[1]{0}', space=sflag, size = 0x4, scoped, tag = 'scoped memory for tile.118']
  %s0 = inlined_call_operand.vmem [shape: f32[16], index: 0, kind: input, shape index: {}]
  %s1 = inlined_call_operand.vmem [shape: f32[8,16], index: 1, kind: output, shape index: {}]
  // Predicated region
  $region2: #{tile.118} parent=0 // pred_check
    _
  $region3: #{tile.118} parent=0 // pred_check_branch
    %3 = sbr.rel (0) target = $region5
  $region4: #{tile.118} parent=0 // pred_region
    _
  $region5: #{tile.118} parent=0 // pred_fallthru
    _
  %v4 = vld [vmem:[%s0] ss:$0 sm:$0xff]
  %5 = vst [vmem:[%s1] sm:$0xff] %v4

// kernel: tile.119
$region0: #{tile.119}
  %s0 = inlined_call_operand.vmem [shape: f32[8,16], index: 0, kind: input, shape index: {}]
  %s1 = inlined_call_operand.vmem [shape: f32[1,128], index: 1, kind: output, shape index: {}]
  $region1: #{tile.119} parent=0
    #allocation0 [shape = 'u8[4096]{0}', space=vmem, size = 0x1000, scoped, tag = 'scoped mem for output reshape']
    %v2 = vld [vmem:[%s0] sm:$0x1]
    %vm3 = vcmask 130048
    %4 = vst.msk [vmem:[#allocation0] sm:$0x1] %vm3, %v2
    %s5 = scalar_lea.vmem %s0, 7
    %v6 = vld [vmem:[%s5] sm:$0x1]
    %7 = vrot.lane.b32.xlu0 %v6, 112
    %v8 = vpop.permute.xlu0 %7
    %vm9 = vcmask 1048448
    %10 = vst.msk [vmem:[#allocation0] sm:$0x1] %vm9, %v8
    %s11 = scalar_lea.vmem %s0, 6
    %v12 = vld [vmem:[%s11] sm:$0x1]
    %13 = vrot.lane.b32.xlu0 %v12, 96
    %v14 = vpop.permute.xlu0 %13
    %vm15 = vcmask 917248
    %16 = vst.msk [vmem:[#allocation0] sm:$0x1] %vm15, %v14
    %s17 = scalar_lea.vmem %s0, 5
    %v18 = vld [vmem:[%s17] sm:$0x1]
    %19 = vrot.lane.b32.xlu0 %v18, 80
    %v20 = vpop.permute.xlu0 %19
    %vm21 = vcmask 786048
    %22 = vst.msk [vmem:[#allocation0] sm:$0x1] %vm21, %v20
    %s23 = scalar_lea.vmem %s0, 4
    %v24 = vld [vmem:[%s23] sm:$0x1]
    %25 = vrot.lane.b32.xlu0 %v24, 64
    %v26 = vpop.permute.xlu0 %25
    %vm27 = vcmask 654848
    %28 = vst.msk [vmem:[#allocation0] sm:$0x1] %vm27, %v26
    %s29 = scalar_lea.vmem %s0, 3
    %v30 = vld [vmem:[%s29] sm:$0x1]
    %31 = vrot.lane.b32.xlu0 %v30, 48
    %v32 = vpop.permute.xlu0 %31
    %vm33 = vcmask 523648
    %34 = vst.msk [vmem:[#allocation0] sm:$0x1] %vm33, %v32
    %s35 = scalar_lea.vmem %s0, 2
    %v36 = vld [vmem:[%s35] sm:$0x1]
    %37 = vrot.lane.b32.xlu0 %v36, 32
    %v38 = vpop.permute.xlu0 %37
    %vm39 = vcmask 392448
    %40 = vst.msk [vmem:[#allocation0] sm:$0x1] %vm39, %v38
    %s41 = scalar_lea.vmem %s0, 1
    %v42 = vld [vmem:[%s41] sm:$0x1]
    %43 = vrot.lane.b32.xlu0 %v42, 16
    %v44 = vpop.permute.xlu0 %43
    %vm45 = vcmask 261248
    %46 = vst.msk [vmem:[#allocation0] sm:$0x1] %vm45, %v44
    %s48 = ssub.s32 2, 1
    %v49 = vld [vmem:[#allocation0] sm:%s48]
    %s51 = ssub.s32 2, 1
    %52 = vst [vmem:[%s1] sm:%s51] %v49

// kernel: conv5_extractor.13
$region0: #{conv5_extractor.13}
  #allocation0 [shape = 'u32[]', space=smem, size = 0x4, offset = 0x4, fixed_abs, tag = 'smem constant byte address 0x4 - core index']
  #allocation1 [shape = 'u32[72,128]{1,0:T(1,128)}', space=vmem, size = 0x9000, scoped, tag = 'internal scratch']
  #allocation2 [shape = 'f32[10,128]{1,0:T(8,128)}', space=vmem, size = 0x2000, scoped, tag = 'scratch operand']
  %s0 = inlined_call_operand.vmem [shape: bf16[2,8,432], index: 0, kind: input, shape index: {}]
  %s1 = inlined_call_operand.vmem [shape: bf16[432,128], index: 1, kind: input, shape index: {}]
  %s2 = inlined_call_operand.vmem [shape: f32[1,128], index: 2, kind: input, shape index: {}]
  %s3 = inlined_call_operand.vmem [shape: bf16[384,128], index: 3, kind: input, shape index: {}]
  %s4 = inlined_call_operand.vmem [shape: f32[1,128], index: 4, kind: input, shape index: {}]
  %s5 = inlined_call_operand.vmem [shape: bf16[432,128], index: 5, kind: input, shape index: {}]
  %s6 = inlined_call_operand.vmem [shape: f32[1,128], index: 6, kind: input, shape index: {}]
  %s7 = inlined_call_operand.vmem [shape: bf16[2,8,128], index: 7, kind: output, shape index: {}]
  %s8 = sld [smem:[#allocation0]]
  $region61: #{conv5_extractor.13} parent=0
    _
  %s10 = ssub.s32 1, %s8
  %s11 = scalar_select 0, %s10, %s8
  loop: start=0, step=1, limit=4
  $region2: #{conv5_extractor.13} parent=0 // loop_pre_header
    _
  $region3: #{conv5_extractor.13} parent=0 // loop_header
    %s13 = sphi 0, %s17
    %p14 = scmp.ge.s32.totalorder %s13, 4
    %s23 = sphi 0, %s25
    %s26 = sphi 0, %s23
    %s27 = sphi 0, %s26
    %s43 = sphi 0, %s27
    %s47 = sphi 0, %s47
    %s49 = sphi 0, %s47
    %s50 = sphi 0, %s49
    %s64 = sphi 0, %s50
    %s68 = sphi 0, %s68
    %s70 = sphi 0, %s68
    %s71 = sphi 0, %s70
    %s85 = sphi 0, %s71
    %s89 = sphi 0, %s89
    %s91 = sphi 0, %s89
    %s92 = sphi 0, %s91
    %s106 = sphi 0, %s92
    %s110 = sphi 0, %s110
    %s112 = sphi 0, %s110
    %s113 = sphi 0, %s112
    %s127 = sphi 0, %s113
    %s131 = sphi 0, %s131
    %s133 = sphi 0, %s131
    %s134 = sphi 0, %s133
    %s148 = sphi 0, %s134
    %s152 = sphi 0, %s152
    %s154 = sphi 0, %s152
    %s155 = sphi 0, %s154
    %s169 = sphi 0, %s155
    %s175 = sphi 0, %s177
    %s178 = sphi 0, %s175
    %s179 = sphi 0, %s178
    %s195 = sphi 0, %s179
  $region4: #{conv5_extractor.13} parent=0 // loop_header_branch
    %16 = sbr.rel (%p14) target = $region8
  $region5: #{conv5_extractor.13} parent=0 // loop_body
    %s18 = ssub.s32 %s13, 1
    %s19 = ssub.s32 %s13, 2
    %s20 = sadd.s32 %s13, 1
    %s21 = ssub.s32 %s13, %s20
    %p22 = scmp.eq.s32.totalorder %s21, 0
    %s24 = sadd.s32 %s23, 1
    %s25 = scalar_select %p22, %s23, %s24
    %p28 = pneg %p22
    %p29 = scmp.eq.s32.totalorder %s13, 1
    %p30 = por %p28, %p29
    %p31 = scmp.ne.s32.totalorder %s23, %s26
    %p32 = scmp.eq.s32.totalorder %s13, 0
    %p33 = por %p31, %p32
    %p34 = scmp.ne.s32.totalorder %s23, %s26
    %p35 = scmp.eq.s32.totalorder %s18, 1
    %p36 = por %p34, %p35
    %p37 = scmp.ne.s32.totalorder %s26, %s27
    %p38 = scmp.eq.s32.totalorder %s18, 0
    %p39 = por %p37, %p38
    %p40 = scmp.ne.s32.totalorder %s26, %s27
    %p41 = scmp.eq.s32.totalorder %s19, 1
    %p42 = por %p40, %p41
    %p44 = scmp.ne.s32.totalorder %s27, %s43
    %p45 = scmp.eq.s32.totalorder %s19, 0
    %p46 = por %p44, %p45
    %s48 = sadd.s32 %s47, 1
    %p51 = scmp.eq.s32.totalorder %s13, 1
    %p52 = scmp.ne.s32.totalorder %s47, %s49
    %p53 = scmp.eq.s32.totalorder %s13, 0
    %p54 = por %p52, %p53
    %p55 = scmp.ne.s32.totalorder %s47, %s49
    %p56 = scmp.eq.s32.totalorder %s18, 1
    %p57 = por %p55, %p56
    %p58 = scmp.ne.s32.totalorder %s49, %s50
    %p59 = scmp.eq.s32.totalorder %s18, 0
    %p60 = por %p58, %p59
    %p61 = scmp.ne.s32.totalorder %s49, %s50
    %p62 = scmp.eq.s32.totalorder %s19, 1
    %p63 = por %p61, %p62
    %p65 = scmp.ne.s32.totalorder %s50, %s64
    %p66 = scmp.eq.s32.totalorder %s19, 0
    %p67 = por %p65, %p66
    %s69 = sadd.s32 %s68, 1
    %p72 = scmp.eq.s32.totalorder %s13, 1
    %p73 = scmp.ne.s32.totalorder %s68, %s70
    %p74 = scmp.eq.s32.totalorder %s13, 0
    %p75 = por %p73, %p74
    %p76 = scmp.ne.s32.totalorder %s68, %s70
    %p77 = scmp.eq.s32.totalorder %s18, 1
    %p78 = por %p76, %p77
    %p79 = scmp.ne.s32.totalorder %s70, %s71
    %p80 = scmp.eq.s32.totalorder %s18, 0
    %p81 = por %p79, %p80
    %p82 = scmp.ne.s32.totalorder %s70, %s71
    %p83 = scmp.eq.s32.totalorder %s19, 1
    %p84 = por %p82, %p83
    %p86 = scmp.ne.s32.totalorder %s71, %s85
    %p87 = scmp.eq.s32.totalorder %s19, 0
    %p88 = por %p86, %p87
    %s90 = sadd.s32 %s89, 1
    %p93 = scmp.eq.s32.totalorder %s13, 1
    %p94 = scmp.ne.s32.totalorder %s89, %s91
    %p95 = scmp.eq.s32.totalorder %s13, 0
    %p96 = por %p94, %p95
    %p97 = scmp.ne.s32.totalorder %s89, %s91
    %p98 = scmp.eq.s32.totalorder %s18, 1
    %p99 = por %p97, %p98
    %p100 = scmp.ne.s32.totalorder %s91, %s92
    %p101 = scmp.eq.s32.totalorder %s18, 0
    %p102 = por %p100, %p101
    %p103 = scmp.ne.s32.totalorder %s91, %s92
    %p104 = scmp.eq.s32.totalorder %s19, 1
    %p105 = por %p103, %p104
    %p107 = scmp.ne.s32.totalorder %s92, %s106
    %p108 = scmp.eq.s32.totalorder %s19, 0
    %p109 = por %p107, %p108
    %s111 = sadd.s32 %s110, 1
    %p114 = scmp.eq.s32.totalorder %s13, 1
    %p115 = scmp.ne.s32.totalorder %s110, %s112
    %p116 = scmp.eq.s32.totalorder %s13, 0
    %p117 = por %p115, %p116
    %p118 = scmp.ne.s32.totalorder %s110, %s112
    %p119 = scmp.eq.s32.totalorder %s18, 1
    %p120 = por %p118, %p119
    %p121 = scmp.ne.s32.totalorder %s112, %s113
    %p122 = scmp.eq.s32.totalorder %s18, 0
    %p123 = por %p121, %p122
    %p124 = scmp.ne.s32.totalorder %s112, %s113
    %p125 = scmp.eq.s32.totalorder %s19, 1
    %p126 = por %p124, %p125
    %p128 = scmp.ne.s32.totalorder %s113, %s127
    %p129 = scmp.eq.s32.totalorder %s19, 0
    %p130 = por %p128, %p129
    %s132 = sadd.s32 %s131, 1
    %p135 = scmp.eq.s32.totalorder %s13, 1
    %p136 = scmp.ne.s32.totalorder %s131, %s133
    %p137 = scmp.eq.s32.totalorder %s13, 0
    %p138 = por %p136, %p137
    %p139 = scmp.ne.s32.totalorder %s131, %s133
    %p140 = scmp.eq.s32.totalorder %s18, 1
    %p141 = por %p139, %p140
    %p142 = scmp.ne.s32.totalorder %s133, %s134
    %p143 = scmp.eq.s32.totalorder %s18, 0
    %p144 = por %p142, %p143
    %p145 = scmp.ne.s32.totalorder %s133, %s134
    %p146 = scmp.eq.s32.totalorder %s19, 1
    %p147 = por %p145, %p146
    %p149 = scmp.ne.s32.totalorder %s134, %s148
    %p150 = scmp.eq.s32.totalorder %s19, 0
    %p151 = por %p149, %p150
    %s153 = sadd.s32 %s152, 1
    %p156 = scmp.eq.s32.totalorder %s13, 1
    %p157 = scmp.ne.s32.totalorder %s152, %s154
    %p158 = scmp.eq.s32.totalorder %s13, 0
    %p159 = por %p157, %p158
    %p160 = scmp.ne.s32.totalorder %s152, %s154
    %p161 = scmp.eq.s32.totalorder %s18, 1
    %p162 = por %p160, %p161
    %p163 = scmp.ne.s32.totalorder %s154, %s155
    %p164 = scmp.eq.s32.totalorder %s18, 0
    %p165 = por %p163, %p164
    %p166 = scmp.ne.s32.totalorder %s154, %s155
    %p167 = scmp.eq.s32.totalorder %s19, 1
    %p168 = por %p166, %p167
    %p170 = scmp.ne.s32.totalorder %s155, %s169
    %p171 = scmp.eq.s32.totalorder %s19, 0
    %p172 = por %p170, %p171
    %s173 = ssub.s32 %s13, %s20
    %p174 = scmp.eq.s32.totalorder %s173, 0
    %s176 = sadd.s32 %s175, 1
    %s177 = scalar_select %p174, %s175, %s176
    %p180 = pneg %p174
    %p181 = scmp.eq.s32.totalorder %s13, 1
    %p182 = por %p180, %p181
    %p183 = scmp.ne.s32.totalorder %s175, %s178
    %p184 = scmp.eq.s32.totalorder %s13, 0
    %p185 = por %p183, %p184
    %p186 = scmp.ne.s32.totalorder %s175, %s178
    %p187 = scmp.eq.s32.totalorder %s18, 1
    %p188 = por %p186, %p187
    %p189 = scmp.ne.s32.totalorder %s178, %s179
    %p190 = scmp.eq.s32.totalorder %s18, 0
    %p191 = por %p189, %p190
    %p192 = scmp.ne.s32.totalorder %s178, %s179
    %p193 = scmp.eq.s32.totalorder %s19, 1
    %p194 = por %p192, %p193
    %p196 = scmp.ne.s32.totalorder %s179, %s195
    %p197 = scmp.eq.s32.totalorder %s19, 0
    %p198 = por %p196, %p197
    %p199 = scmp.le.s32.totalorder 1, %s13
    %p200 = scmp.lt.s32.totalorder %s13, 3
    %p201 = pnand %p199, %p200
    %p202 = pneg %p201
    // Predicated region
    $region9: #{conv5_extractor.13} parent=5 // pred_check
      _
    $region10: #{conv5_extractor.13} parent=5 // pred_check_branch
      %204 = sbr.rel (%p201) target = $region12
    $region11: #{conv5_extractor.13} parent=5 // pred_region
      %s205 = ssub.s32 %s13, 1
      // Predicated region
      $region13: #{conv5_extractor.13} parent=11 // pred_check
        %p206 = pneg %p60
      $region14: #{conv5_extractor.13} parent=11 // pred_check_branch
        %208 = sbr.rel (%p206) target = $region16
      $region15: #{conv5_extractor.13} parent=11 // pred_region
        _
      $region16: #{conv5_extractor.13} parent=11 // pred_fallthru
        _
      // Predicated region
      $region17: #{conv5_extractor.13} parent=11 // pred_check
        %p209 = pneg %p81
      $region18: #{conv5_extractor.13} parent=11 // pred_check_branch
        %211 = sbr.rel (%p209) target = $region20
      $region19: #{conv5_extractor.13} parent=11 // pred_region
        _
      $region20: #{conv5_extractor.13} parent=11 // pred_fallthru
        _
      // Predicated region
      $region21: #{conv5_extractor.13} parent=11 // pred_check
        %p212 = pneg %p102
      $region22: #{conv5_extractor.13} parent=11 // pred_check_branch
        %214 = sbr.rel (%p212) target = $region24
      $region23: #{conv5_extractor.13} parent=11 // pred_region
        _
      $region24: #{conv5_extractor.13} parent=11 // pred_fallthru
        _
      // Predicated region
      $region25: #{conv5_extractor.13} parent=11 // pred_check
        %p215 = pneg %p123
      $region26: #{conv5_extractor.13} parent=11 // pred_check_branch
        %217 = sbr.rel (%p215) target = $region28
      $region27: #{conv5_extractor.13} parent=11 // pred_region
        _
      $region28: #{conv5_extractor.13} parent=11 // pred_fallthru
        _
      // Predicated region
      $region29: #{conv5_extractor.13} parent=11 // pred_check
        %p218 = pneg %p144
      $region30: #{conv5_extractor.13} parent=11 // pred_check_branch
        %220 = sbr.rel (%p218) target = $region32
      $region31: #{conv5_extractor.13} parent=11 // pred_region
        _
      $region32: #{conv5_extractor.13} parent=11 // pred_fallthru
        _
      // Predicated region
      $region33: #{conv5_extractor.13} parent=11 // pred_check
        %p221 = pneg %p165
      $region34: #{conv5_extractor.13} parent=11 // pred_check_branch
        %223 = sbr.rel (%p221) target = $region36
      $region35: #{conv5_extractor.13} parent=11 // pred_region
        _
      $region36: #{conv5_extractor.13} parent=11 // pred_fallthru
        _
    $region12: #{conv5_extractor.13} parent=5 // pred_fallthru
      _
    %p224 = scmp.lt.s32.totalorder %s13, 2
    // Predicated region
    $region37: #{conv5_extractor.13} parent=5 // pred_check
      %p225 = pneg %p224
    $region38: #{conv5_extractor.13} parent=5 // pred_check_branch
      %227 = sbr.rel (%p225) target = $region40
    $region39: #{conv5_extractor.13} parent=5 // pred_region
      // Predicated region
      $region41: #{conv5_extractor.13} parent=39 // pred_check
        %p228 = pneg %p33
      $region42: #{conv5_extractor.13} parent=39 // pred_check_branch
        %230 = sbr.rel (%p228) target = $region44
      $region43: #{conv5_extractor.13} parent=39 // pred_region
        %p231 = scmp.lt.s32.totalorder %s13, 1
        %s232 = scalar_select %p231, %s13, 1
        %s233 = smul.addr %s232, 4
        %s234 = smul.addr %s233, 4
        %s235 = scalar_lea.vmem %s0, %s234
      $region44: #{conv5_extractor.13} parent=39 // pred_fallthru
        _
    $region40: #{conv5_extractor.13} parent=5 // pred_fallthru
      _
    %p236 = scmp.le.s32.totalorder 1, %s13
    %p237 = scmp.lt.s32.totalorder %s13, 3
    %p238 = pnand %p236, %p237
    %p239 = pneg %p238
    // Predicated region
    $region45: #{conv5_extractor.13} parent=5 // pred_check
      _
    $region46: #{conv5_extractor.13} parent=5 // pred_check_branch
      %241 = sbr.rel (%p238) target = $region48
    $region47: #{conv5_extractor.13} parent=5 // pred_region
      %s242 = ssub.s32 %s13, 1
      %p243 = scmp.lt.s32.totalorder %s18, 1
      %s244 = scalar_select %p243, %s18, 1
      %s245 = smul.addr %s244, 4
      %s246 = smul.addr %s245, 4
      %s247 = scalar_lea.vmem %s0, %s246
      %p248 = pneg %p39
      %p249 = pneg %p36
      %p250 = pneg %p60
      %p251 = pneg %p57
      %p252 = pneg %p81
      %p253 = pneg %p78
      %p254 = pneg %p102
      %p255 = pneg %p99
      %p256 = pneg %p123
      %p257 = pneg %p120
      %p258 = pneg %p144
      %p259 = pneg %p141
      %p260 = pneg %p165
      %p261 = pneg %p162
      %p262 = pneg %p191
      %p263 = pneg %p188
      %p264 = scmp.lt.s32.totalorder %s18, 1
      %s265 = scalar_select %p264, %s18, 1
      %s266 = smul.addr %s265, 4
      %s267 = scalar_lea.vmem %s7, %s266
      %p268 = scmp.lt.s32.totalorder %s18, 1
      %s269 = scalar_select %p268, %s18, 1
      %s270 = smul.addr %s269, 4
      %s271 = smul.addr %s270, 4
      %s272 = scalar_lea.vmem %s0, %s271
      %p273 = scmp.lt.s32.totalorder %s18, 1
      %s274 = scalar_select %p273, %s18, 1
      %s275 = smul.addr %s274, 4
      %s276 = scalar_lea.vmem %s7, %s275
      %v278 = vld [vmem:[%s272] sm:$0xff]
      %v279 = vld [vmem:[%s272 + $0x8] sm:$0xff]
      %v280 = vld [vmem:[%s1] sm:$0xf]
      %v281 = vld [vmem:[%s1 + $0x4] sm:$0xf]
      %v282 = vld [vmem:[%s1 + $0x8] sm:$0xf]
      %v283 = vld [vmem:[%s1 + $0xc] sm:$0xf]
      %v284 = vld [vmem:[%s1 + $0x10] sm:$0xf]
      %v285 = vld [vmem:[%s1 + $0x14] sm:$0xf]
      %v286 = vld [vmem:[%s1 + $0x18] sm:$0xf]
      %v287 = vld [vmem:[%s1 + $0x1c] sm:$0xf]
      %v288 = vld [vmem:[%s1 + $0x20] sm:$0xf]
      %v289 = vld [vmem:[%s1 + $0x24] sm:$0xf]
      %v290 = vld [vmem:[%s1 + $0x28] sm:$0xf]
      %v291 = vld [vmem:[%s1 + $0x2c] sm:$0xf]
      %v292 = vld [vmem:[%s1 + $0x30] sm:$0xf]
      %v293 = vld [vmem:[%s1 + $0x34] sm:$0xf]
      %v294 = vld [vmem:[%s1 + $0x38] sm:$0xf]
      %v295 = vld [vmem:[%s1 + $0x3c] sm:$0xf]
      %v296 = vld [vmem:[%s1 + $0x40] sm:$0xf]
      %v297 = vld [vmem:[%s1 + $0x44] sm:$0xf]
      %v298 = vld [vmem:[%s1 + $0x48] sm:$0xf]
      %v299 = vld [vmem:[%s1 + $0x4c] sm:$0xf]
      %v300 = vld [vmem:[%s1 + $0x50] sm:$0xf]
      %v301 = vld [vmem:[%s1 + $0x54] sm:$0xf]
      %v302 = vld [vmem:[%s1 + $0x58] sm:$0xf]
      %v303 = vld [vmem:[%s1 + $0x5c] sm:$0xf]
      %v304 = vld [vmem:[%s1 + $0x60] sm:$0xf]
      %v305 = vld [vmem:[%s1 + $0x64] sm:$0xf]
      %v306 = vld [vmem:[%s1 + $0x68] sm:$0xf]
      %v307 = vld [vmem:[%s1 + $0x6c] sm:$0xf]
      %v308 = vld [vmem:[%s1 + $0x70] sm:$0xf]
      %v309 = vld [vmem:[%s1 + $0x74] sm:$0xf]
      %v310 = vld [vmem:[%s1 + $0x78] sm:$0xf]
      %v311 = vld [vmem:[%s1 + $0x7c] sm:$0xf]
      %v312 = vld [vmem:[%s1 + $0x80] sm:$0xf]
      %v313 = vld [vmem:[%s1 + $0x84] sm:$0xf]
      %v314 = vld [vmem:[%s1 + $0x88] sm:$0xf]
      %v315 = vld [vmem:[%s1 + $0x8c] sm:$0xf]
      %v316 = vld [vmem:[%s1 + $0x90] sm:$0xf]
      %v317 = vld [vmem:[%s1 + $0x94] sm:$0xf]
      %v318 = vld [vmem:[%s1 + $0x98] sm:$0xf]
      %v319 = vld [vmem:[%s1 + $0x9c] sm:$0xf]
      %v320 = vld [vmem:[%s1 + $0xa0] sm:$0xf]
      %v321 = vld [vmem:[%s1 + $0xa4] sm:$0xf]
      %v322 = vld [vmem:[%s1 + $0xa8] sm:$0xf]
      %v323 = vld [vmem:[%s1 + $0xac] sm:$0xf]
      %v324 = vld [vmem:[%s1 + $0xb0] sm:$0xf]
      %v325 = vld [vmem:[%s1 + $0xb4] sm:$0xf]
      %v326 = vld [vmem:[%s1 + $0xb8] sm:$0xf]
      %v327 = vld [vmem:[%s1 + $0xbc] sm:$0xf]
      %v328 = vld [vmem:[%s1 + $0xc0] sm:$0xf]
      %v329 = vld [vmem:[%s1 + $0xc4] sm:$0xf]
      %v330 = vld [vmem:[%s1 + $0xc8] sm:$0xf]
      %v331 = vld [vmem:[%s1 + $0xcc] sm:$0xf]
      %v332 = vld [vmem:[%s1 + $0xd0] sm:$0xf]
      %v333 = vld [vmem:[%s1 + $0xd4] sm:$0xf]
      %v334 = vld [vmem:[%s2] sm:$0x1]
      %v336 = vperm.slane %v334, 0
      %v340 = vunpack.c.l.b16 %v278
      %v341 = vunpack.c.h.b16 %v278
      %v342 = vunpack.c.l.b16 %v279
      %v343 = vunpack.c.h.b16 %v279
      %v344 = vpack.c.b16 %v340, %v340
      %v345 = vpack.c.b16 %v341, %v341
      %v346 = vpack.c.b16 %v342, %v342
      %v347 = vpack.c.b16 %v343, %v343
      %v405 = vunpack.c.l.b16 %v280
      %v406 = vunpack.c.l.b16 %v281
      %v407 = vunpack.c.l.b16 %v282
      %v408 = vunpack.c.l.b16 %v283
      %v409 = vunpack.c.l.b16 %v284
      %v410 = vunpack.c.l.b16 %v285
      %v411 = vunpack.c.l.b16 %v286
      %v412 = vunpack.c.l.b16 %v287
      %v413 = vunpack.c.l.b16 %v288
      %v414 = vunpack.c.l.b16 %v289
      %v415 = vunpack.c.l.b16 %v290
      %v416 = vunpack.c.l.b16 %v291
      %v417 = vunpack.c.l.b16 %v292
      %v418 = vunpack.c.l.b16 %v293
      %v419 = vunpack.c.l.b16 %v294
      %v420 = vunpack.c.l.b16 %v295
      %v421 = vunpack.c.l.b16 %v296
      %v422 = vunpack.c.l.b16 %v297
      %v423 = vunpack.c.l.b16 %v298
      %v424 = vunpack.c.l.b16 %v299
      %v425 = vunpack.c.l.b16 %v300
      %v426 = vunpack.c.l.b16 %v301
      %v427 = vunpack.c.l.b16 %v302
      %v428 = vunpack.c.l.b16 %v303
      %v429 = vunpack.c.l.b16 %v304
      %v430 = vunpack.c.l.b16 %v305
      %v431 = vunpack.c.l.b16 %v306
      %v432 = vunpack.c.l.b16 %v307
      %v433 = vunpack.c.l.b16 %v308
      %v434 = vunpack.c.l.b16 %v309
      %v435 = vunpack.c.l.b16 %v310
      %v436 = vunpack.c.l.b16 %v311
      %v437 = vunpack.c.l.b16 %v312
      %v438 = vunpack.c.l.b16 %v313
      %v439 = vunpack.c.l.b16 %v314
      %v440 = vunpack.c.l.b16 %v315
      %v441 = vunpack.c.l.b16 %v316
      %v442 = vunpack.c.l.b16 %v317
      %v443 = vunpack.c.l.b16 %v318
      %v444 = vunpack.c.l.b16 %v319
      %v445 = vunpack.c.l.b16 %v320
      %v446 = vunpack.c.l.b16 %v321
      %v447 = vunpack.c.l.b16 %v322
      %v448 = vunpack.c.l.b16 %v323
      %v449 = vunpack.c.l.b16 %v324
      %v450 = vunpack.c.l.b16 %v325
      %v451 = vunpack.c.l.b16 %v326
      %v452 = vunpack.c.l.b16 %v327
      %v453 = vunpack.c.l.b16 %v328
      %v454 = vunpack.c.l.b16 %v329
      %v455 = vunpack.c.l.b16 %v330
      %v456 = vunpack.c.l.b16 %v331
      %v457 = vunpack.c.l.b16 %v332
      %v458 = vunpack.c.l.b16 %v333
      %v459 = vpack.c.b16 %v406, %v405
      %v460 = vpack.c.b16 %v408, %v407
      %v461 = vpack.c.b16 %v410, %v409
      %v462 = vpack.c.b16 %v412, %v411
      %v463 = vpack.c.b16 %v414, %v413
      %v464 = vpack.c.b16 %v416, %v415
      %v465 = vpack.c.b16 %v418, %v417
      %v466 = vpack.c.b16 %v420, %v419
      %v467 = vpack.c.b16 %v422, %v421
      %v468 = vpack.c.b16 %v424, %v423
      %v469 = vpack.c.b16 %v426, %v425
      %v470 = vpack.c.b16 %v428, %v427
      %v471 = vpack.c.b16 %v430, %v429
      %v472 = vpack.c.b16 %v432, %v431
      %v473 = vpack.c.b16 %v434, %v433
      %v474 = vpack.c.b16 %v436, %v435
      %v475 = vpack.c.b16 %v438, %v437
      %v476 = vpack.c.b16 %v440, %v439
      %v477 = vpack.c.b16 %v442, %v441
      %v478 = vpack.c.b16 %v444, %v443
      %v479 = vpack.c.b16 %v446, %v445
      %v480 = vpack.c.b16 %v448, %v447
      %v481 = vpack.c.b16 %v450, %v449
      %v482 = vpack.c.b16 %v452, %v451
      %v483 = vpack.c.b16 %v454, %v453
      %v484 = vpack.c.b16 %v456, %v455
      %v485 = vpack.c.b16 %v458, %v457
      %vm513 = vcmask 392192
      %v515 = vsel %vm513, %v347, 0
      %517 = vmatpush.bf16.msra.mxu0 %v466
      %518 = vmatpush.bf16.msra.mxu0 %v465
      %519 = vmatpush.bf16.msra.mxu0 %v464
      %520 = vmatpush.bf16.msra.mxu0 %v463
      %521 = vmatpush.bf16.msra.mxu0 %v462
      %522 = vmatpush.bf16.msra.mxu0 %v461
      %523 = vmatpush.bf16.msra.mxu0 %v460
      %524 = vmatpush.bf16.msra.mxu0 %v459
      %525 = vmatmul.bf16.gmra.mxu0 %v344
      %v526 = vpop.f32.mrf.mxu0
      %v527 = vadd.f32 %v336, %v526
      %v528 = vpop.f32.mrf.mxu0
      %529 = vdwg.mxu0
      %530 = vmatpush.bf16.msra.mxu0 %v474
      %531 = vmatpush.bf16.msra.mxu0 %v473
      %532 = vmatpush.bf16.msra.mxu0 %v472
      %533 = vmatpush.bf16.msra.mxu0 %v471
      %534 = vmatpush.bf16.msra.mxu0 %v470
      %535 = vmatpush.bf16.msra.mxu0 %v469
      %536 = vmatpush.bf16.msra.mxu0 %v468
      %537 = vmatpush.bf16.msra.mxu0 %v467
      %538 = vmatmul.bf16.gmra.mxu0 %v345
      %v539 = vpop.f32.mrf.mxu0
      %v540 = vadd.f32 %v527, %v539
      %v541 = vpop.f32.mrf.mxu0
      %542 = vdwg.mxu0
      %543 = vmatpush.bf16.msra.mxu0 %v482
      %544 = vmatpush.bf16.msra.mxu0 %v481
      %545 = vmatpush.bf16.msra.mxu0 %v480
      %546 = vmatpush.bf16.msra.mxu0 %v479
      %547 = vmatpush.bf16.msra.mxu0 %v478
      %548 = vmatpush.bf16.msra.mxu0 %v477
      %549 = vmatpush.bf16.msra.mxu0 %v476
      %550 = vmatpush.bf16.msra.mxu0 %v475
      %551 = vmatmul.bf16.gmra.mxu0 %v346
      %v552 = vpop.f32.mrf.mxu0
      %v553 = vadd.f32 %v540, %v552
      %v554 = vpop.f32.mrf.mxu0
      %555 = vdwg.mxu0
      %556 = vmatpush.bf16.msra.mxu0 0
      %557 = vmatpush.bf16.msra.mxu0 0
      %558 = vmatpush.bf16.msra.mxu0 0
      %559 = vmatpush.bf16.msra.mxu0 0
      %560 = vmatpush.bf16.msra.mxu0 0
      %561 = vmatpush.bf16.msra.mxu0 %v485
      %562 = vmatpush.bf16.msra.mxu0 %v484
      %563 = vmatpush.bf16.msra.mxu0 %v483
      %564 = vmatmul.bf16.gmra.mxu0 %v515
      %v565 = vpop.f32.mrf.mxu0
      %v566 = vadd.f32 %v553, %v565
      %v567 = vpop.f32.mrf.mxu0
      %568 = vdwg.mxu0
      %v569 = vmax.f32 %v566, 0.0
      %v570 = vld [vmem:[%s5] sm:$0xf]
      %v571 = vld [vmem:[%s5 + $0x4] sm:$0xf]
      %v572 = vld [vmem:[%s5 + $0x8] sm:$0xf]
      %v573 = vld [vmem:[%s5 + $0xc] sm:$0xf]
      %v574 = vld [vmem:[%s5 + $0x10] sm:$0xf]
      %v575 = vld [vmem:[%s5 + $0x14] sm:$0xf]
      %v576 = vld [vmem:[%s5 + $0x18] sm:$0xf]
      %v577 = vld [vmem:[%s5 + $0x1c] sm:$0xf]
      %v578 = vld [vmem:[%s5 + $0x20] sm:$0xf]
      %v579 = vld [vmem:[%s5 + $0x24] sm:$0xf]
      %v580 = vld [vmem:[%s5 + $0x28] sm:$0xf]
      %v581 = vld [vmem:[%s5 + $0x2c] sm:$0xf]
      %v582 = vld [vmem:[%s5 + $0x30] sm:$0xf]
      %v583 = vld [vmem:[%s5 + $0x34] sm:$0xf]
      %v584 = vld [vmem:[%s5 + $0x38] sm:$0xf]
      %v585 = vld [vmem:[%s5 + $0x3c] sm:$0xf]
      %v586 = vld [vmem:[%s5 + $0x40] sm:$0xf]
      %v587 = vld [vmem:[%s5 + $0x44] sm:$0xf]
      %v588 = vld [vmem:[%s5 + $0x48] sm:$0xf]
      %v589 = vld [vmem:[%s5 + $0x4c] sm:$0xf]
      %v590 = vld [vmem:[%s5 + $0x50] sm:$0xf]
      %v591 = vld [vmem:[%s5 + $0x54] sm:$0xf]
      %v592 = vld [vmem:[%s5 + $0x58] sm:$0xf]
      %v593 = vld [vmem:[%s5 + $0x5c] sm:$0xf]
      %v594 = vld [vmem:[%s5 + $0x60] sm:$0xf]
      %v595 = vld [vmem:[%s5 + $0x64] sm:$0xf]
      %v596 = vld [vmem:[%s5 + $0x68] sm:$0xf]
      %v597 = vld [vmem:[%s5 + $0x6c] sm:$0xf]
      %v598 = vld [vmem:[%s5 + $0x70] sm:$0xf]
      %v599 = vld [vmem:[%s5 + $0x74] sm:$0xf]
      %v600 = vld [vmem:[%s5 + $0x78] sm:$0xf]
      %v601 = vld [vmem:[%s5 + $0x7c] sm:$0xf]
      %v602 = vld [vmem:[%s5 + $0x80] sm:$0xf]
      %v603 = vld [vmem:[%s5 + $0x84] sm:$0xf]
      %v604 = vld [vmem:[%s5 + $0x88] sm:$0xf]
      %v605 = vld [vmem:[%s5 + $0x8c] sm:$0xf]
      %v606 = vld [vmem:[%s5 + $0x90] sm:$0xf]
      %v607 = vld [vmem:[%s5 + $0x94] sm:$0xf]
      %v608 = vld [vmem:[%s5 + $0x98] sm:$0xf]
      %v609 = vld [vmem:[%s5 + $0x9c] sm:$0xf]
      %v610 = vld [vmem:[%s5 + $0xa0] sm:$0xf]
      %v611 = vld [vmem:[%s5 + $0xa4] sm:$0xf]
      %v612 = vld [vmem:[%s5 + $0xa8] sm:$0xf]
      %v613 = vld [vmem:[%s5 + $0xac] sm:$0xf]
      %v614 = vld [vmem:[%s5 + $0xb0] sm:$0xf]
      %v615 = vld [vmem:[%s5 + $0xb4] sm:$0xf]
      %v616 = vld [vmem:[%s5 + $0xb8] sm:$0xf]
      %v617 = vld [vmem:[%s5 + $0xbc] sm:$0xf]
      %v618 = vld [vmem:[%s5 + $0xc0] sm:$0xf]
      %v619 = vld [vmem:[%s5 + $0xc4] sm:$0xf]
      %v620 = vld [vmem:[%s5 + $0xc8] sm:$0xf]
      %v621 = vld [vmem:[%s5 + $0xcc] sm:$0xf]
      %v622 = vld [vmem:[%s5 + $0xd0] sm:$0xf]
      %v623 = vld [vmem:[%s5 + $0xd4] sm:$0xf]
      %v624 = vld [vmem:[%s6] sm:$0x1]
      %v626 = vperm.slane %v624, 0
      %v682 = vunpack.c.l.b16 %v570
      %v683 = vunpack.c.l.b16 %v571
      %v684 = vunpack.c.l.b16 %v572
      %v685 = vunpack.c.l.b16 %v573
      %v686 = vunpack.c.l.b16 %v574
      %v687 = vunpack.c.l.b16 %v575
      %v688 = vunpack.c.l.b16 %v576
      %v689 = vunpack.c.l.b16 %v577
      %v690 = vunpack.c.l.b16 %v578
      %v691 = vunpack.c.l.b16 %v579
      %v692 = vunpack.c.l.b16 %v580
      %v693 = vunpack.c.l.b16 %v581
      %v694 = vunpack.c.l.b16 %v582
      %v695 = vunpack.c.l.b16 %v583
      %v696 = vunpack.c.l.b16 %v584
      %v697 = vunpack.c.l.b16 %v585
      %v698 = vunpack.c.l.b16 %v586
      %v699 = vunpack.c.l.b16 %v587
      %v700 = vunpack.c.l.b16 %v588
      %v701 = vunpack.c.l.b16 %v589
      %v702 = vunpack.c.l.b16 %v590
      %v703 = vunpack.c.l.b16 %v591
      %v704 = vunpack.c.l.b16 %v592
      %v705 = vunpack.c.l.b16 %v593
      %v706 = vunpack.c.l.b16 %v594
      %v707 = vunpack.c.l.b16 %v595
      %v708 = vunpack.c.l.b16 %v596
      %v709 = vunpack.c.l.b16 %v597
      %v710 = vunpack.c.l.b16 %v598
      %v711 = vunpack.c.l.b16 %v599
      %v712 = vunpack.c.l.b16 %v600
      %v713 = vunpack.c.l.b16 %v601
      %v714 = vunpack.c.l.b16 %v602
      %v715 = vunpack.c.l.b16 %v603
      %v716 = vunpack.c.l.b16 %v604
      %v717 = vunpack.c.l.b16 %v605
      %v718 = vunpack.c.l.b16 %v606
      %v719 = vunpack.c.l.b16 %v607
      %v720 = vunpack.c.l.b16 %v608
      %v721 = vunpack.c.l.b16 %v609
      %v722 = vunpack.c.l.b16 %v610
      %v723 = vunpack.c.l.b16 %v611
      %v724 = vunpack.c.l.b16 %v612
      %v725 = vunpack.c.l.b16 %v613
      %v726 = vunpack.c.l.b16 %v614
      %v727 = vunpack.c.l.b16 %v615
      %v728 = vunpack.c.l.b16 %v616
      %v729 = vunpack.c.l.b16 %v617
      %v730 = vunpack.c.l.b16 %v618
      %v731 = vunpack.c.l.b16 %v619
      %v732 = vunpack.c.l.b16 %v620
      %v733 = vunpack.c.l.b16 %v621
      %v734 = vunpack.c.l.b16 %v622
      %v735 = vunpack.c.l.b16 %v623
      %v736 = vpack.c.b16 %v683, %v682
      %v737 = vpack.c.b16 %v685, %v684
      %v738 = vpack.c.b16 %v687, %v686
      %v739 = vpack.c.b16 %v689, %v688
      %v740 = vpack.c.b16 %v691, %v690
      %v741 = vpack.c.b16 %v693, %v692
      %v742 = vpack.c.b16 %v695, %v694
      %v743 = vpack.c.b16 %v697, %v696
      %v744 = vpack.c.b16 %v699, %v698
      %v745 = vpack.c.b16 %v701, %v700
      %v746 = vpack.c.b16 %v703, %v702
      %v747 = vpack.c.b16 %v705, %v704
      %v748 = vpack.c.b16 %v707, %v706
      %v749 = vpack.c.b16 %v709, %v708
      %v750 = vpack.c.b16 %v711, %v710
      %v751 = vpack.c.b16 %v713, %v712
      %v752 = vpack.c.b16 %v715, %v714
      %v753 = vpack.c.b16 %v717, %v716
      %v754 = vpack.c.b16 %v719, %v718
      %v755 = vpack.c.b16 %v721, %v720
      %v756 = vpack.c.b16 %v723, %v722
      %v757 = vpack.c.b16 %v725, %v724
      %v758 = vpack.c.b16 %v727, %v726
      %v759 = vpack.c.b16 %v729, %v728
      %v760 = vpack.c.b16 %v731, %v730
      %v761 = vpack.c.b16 %v733, %v732
      %v762 = vpack.c.b16 %v735, %v734
      %790 = vmatpush.bf16.msra.mxu0 %v743
      %791 = vmatpush.bf16.msra.mxu0 %v742
      %792 = vmatpush.bf16.msra.mxu0 %v741
      %793 = vmatpush.bf16.msra.mxu0 %v740
      %794 = vmatpush.bf16.msra.mxu0 %v739
      %795 = vmatpush.bf16.msra.mxu0 %v738
      %796 = vmatpush.bf16.msra.mxu0 %v737
      %797 = vmatpush.bf16.msra.mxu0 %v736
      %798 = vmatmul.bf16.gmra.mxu0 %v344
      %v799 = vpop.f32.mrf.mxu0
      %v800 = vadd.f32 %v626, %v799
      %v801 = vpop.f32.mrf.mxu0
      %802 = vdwg.mxu0
      %803 = vmatpush.bf16.msra.mxu0 %v751
      %804 = vmatpush.bf16.msra.mxu0 %v750
      %805 = vmatpush.bf16.msra.mxu0 %v749
      %806 = vmatpush.bf16.msra.mxu0 %v748
      %807 = vmatpush.bf16.msra.mxu0 %v747
      %808 = vmatpush.bf16.msra.mxu0 %v746
      %809 = vmatpush.bf16.msra.mxu0 %v745
      %810 = vmatpush.bf16.msra.mxu0 %v744
      %811 = vmatmul.bf16.gmra.mxu0 %v345
      %v812 = vpop.f32.mrf.mxu0
      %v813 = vadd.f32 %v800, %v812
      %v814 = vpop.f32.mrf.mxu0
      %815 = vdwg.mxu0
      %816 = vmatpush.bf16.msra.mxu0 %v759
      %817 = vmatpush.bf16.msra.mxu0 %v758
      %818 = vmatpush.bf16.msra.mxu0 %v757
      %819 = vmatpush.bf16.msra.mxu0 %v756
      %820 = vmatpush.bf16.msra.mxu0 %v755
      %821 = vmatpush.bf16.msra.mxu0 %v754
      %822 = vmatpush.bf16.msra.mxu0 %v753
      %823 = vmatpush.bf16.msra.mxu0 %v752
      %824 = vmatmul.bf16.gmra.mxu0 %v346
      %v825 = vpop.f32.mrf.mxu0
      %v826 = vadd.f32 %v813, %v825
      %v827 = vpop.f32.mrf.mxu0
      %828 = vdwg.mxu0
      %829 = vmatpush.bf16.msra.mxu0 0
      %830 = vmatpush.bf16.msra.mxu0 0
      %831 = vmatpush.bf16.msra.mxu0 0
      %832 = vmatpush.bf16.msra.mxu0 0
      %833 = vmatpush.bf16.msra.mxu0 0
      %834 = vmatpush.bf16.msra.mxu0 %v762
      %835 = vmatpush.bf16.msra.mxu0 %v761
      %836 = vmatpush.bf16.msra.mxu0 %v760
      %837 = vmatmul.bf16.gmra.mxu0 %v515
      %v838 = vpop.f32.mrf.mxu0
      %v839 = vadd.f32 %v826, %v838
      %v840 = vpop.f32.mrf.mxu0
      %841 = vdwg.mxu0
      %842 = vst [vmem:[#allocation2] sm:$0xff] 0.0
      %843 = vst [vmem:[#allocation2 + $0x8] sm:$0x3] 0.0
      %844 = vst [vmem:[#allocation2 + $0x1] sm:$0xff] %v569
      %v845 = vld [vmem:[%s4] sm:$0x1]
      %v847 = vperm.slane %v845, 0
      %v849 = vadd.f32 %v839, %v847
      %v850 = vld [vmem:[#allocation2] sm:$0xff]
      %v851 = vpack.c.bf16 %v850, %v850
      %v852 = vld [vmem:[%s3] sm:$0xf]
      %v853 = vld [vmem:[%s3 + $0x4] sm:$0xf]
      %v854 = vld [vmem:[%s3 + $0x8] sm:$0xf]
      %v855 = vld [vmem:[%s3 + $0xc] sm:$0xf]
      %v856 = vld [vmem:[%s3 + $0x10] sm:$0xf]
      %v857 = vld [vmem:[%s3 + $0x14] sm:$0xf]
      %v858 = vld [vmem:[%s3 + $0x18] sm:$0xf]
      %v859 = vld [vmem:[%s3 + $0x1c] sm:$0xf]
      %v860 = vld [vmem:[%s3 + $0x20] sm:$0xf]
      %v861 = vld [vmem:[%s3 + $0x24] sm:$0xf]
      %v862 = vld [vmem:[%s3 + $0x28] sm:$0xf]
      %v863 = vld [vmem:[%s3 + $0x2c] sm:$0xf]
      %v864 = vld [vmem:[%s3 + $0x30] sm:$0xf]
      %v865 = vld [vmem:[%s3 + $0x34] sm:$0xf]
      %v866 = vld [vmem:[%s3 + $0x38] sm:$0xf]
      %v867 = vld [vmem:[%s3 + $0x3c] sm:$0xf]
      %v884 = vunpack.c.l.b16 %v852
      %v885 = vunpack.c.l.b16 %v853
      %v886 = vunpack.c.l.b16 %v854
      %v887 = vunpack.c.l.b16 %v855
      %v888 = vunpack.c.l.b16 %v856
      %v889 = vunpack.c.l.b16 %v857
      %v890 = vunpack.c.l.b16 %v858
      %v891 = vunpack.c.l.b16 %v859
      %v892 = vunpack.c.l.b16 %v860
      %v893 = vunpack.c.l.b16 %v861
      %v894 = vunpack.c.l.b16 %v862
      %v895 = vunpack.c.l.b16 %v863
      %v896 = vunpack.c.l.b16 %v864
      %v897 = vunpack.c.l.b16 %v865
      %v898 = vunpack.c.l.b16 %v866
      %v899 = vunpack.c.l.b16 %v867
      %v900 = vpack.c.b16 %v885, %v884
      %v901 = vpack.c.b16 %v887, %v886
      %v902 = vpack.c.b16 %v889, %v888
      %v903 = vpack.c.b16 %v891, %v890
      %v904 = vpack.c.b16 %v893, %v892
      %v905 = vpack.c.b16 %v895, %v894
      %v906 = vpack.c.b16 %v897, %v896
      %v907 = vpack.c.b16 %v899, %v898
      %916 = vmatpush.bf16.msra.mxu0 %v907
      %917 = vmatpush.bf16.msra.mxu0 %v906
      %918 = vmatpush.bf16.msra.mxu0 %v905
      %919 = vmatpush.bf16.msra.mxu0 %v904
      %920 = vmatpush.bf16.msra.mxu0 %v903
      %921 = vmatpush.bf16.msra.mxu0 %v902
      %922 = vmatpush.bf16.msra.mxu0 %v901
      %923 = vmatpush.bf16.msra.mxu0 %v900
      %924 = vmatmul.bf16.gmra.mxu0 %v851
      %v925 = vpop.f32.mrf.mxu0
      %v926 = vadd.f32 0.0, %v925
      %v927 = vpop.f32.mrf.mxu0
      %928 = vdwg.mxu0
      %v929 = vadd.f32 %v849, %v926
      %v930 = vld [vmem:[#allocation2 + $0x1] sm:$0xff]
      %v931 = vpack.c.bf16 %v930, %v930
      %v932 = vld [vmem:[%s3 + $0x40] sm:$0xf]
      %v933 = vld [vmem:[%s3 + $0x44] sm:$0xf]
      %v934 = vld [vmem:[%s3 + $0x48] sm:$0xf]
      %v935 = vld [vmem:[%s3 + $0x4c] sm:$0xf]
      %v936 = vld [vmem:[%s3 + $0x50] sm:$0xf]
      %v937 = vld [vmem:[%s3 + $0x54] sm:$0xf]
      %v938 = vld [vmem:[%s3 + $0x58] sm:$0xf]
      %v939 = vld [vmem:[%s3 + $0x5c] sm:$0xf]
      %v940 = vld [vmem:[%s3 + $0x60] sm:$0xf]
      %v941 = vld [vmem:[%s3 + $0x64] sm:$0xf]
      %v942 = vld [vmem:[%s3 + $0x68] sm:$0xf]
      %v943 = vld [vmem:[%s3 + $0x6c] sm:$0xf]
      %v944 = vld [vmem:[%s3 + $0x70] sm:$0xf]
      %v945 = vld [vmem:[%s3 + $0x74] sm:$0xf]
      %v946 = vld [vmem:[%s3 + $0x78] sm:$0xf]
      %v947 = vld [vmem:[%s3 + $0x7c] sm:$0xf]
      %v964 = vunpack.c.l.b16 %v932
      %v965 = vunpack.c.l.b16 %v933
      %v966 = vunpack.c.l.b16 %v934
      %v967 = vunpack.c.l.b16 %v935
      %v968 = vunpack.c.l.b16 %v936
      %v969 = vunpack.c.l.b16 %v937
      %v970 = vunpack.c.l.b16 %v938
      %v971 = vunpack.c.l.b16 %v939
      %v972 = vunpack.c.l.b16 %v940
      %v973 = vunpack.c.l.b16 %v941
      %v974 = vunpack.c.l.b16 %v942
      %v975 = vunpack.c.l.b16 %v943
      %v976 = vunpack.c.l.b16 %v944
      %v977 = vunpack.c.l.b16 %v945
      %v978 = vunpack.c.l.b16 %v946
      %v979 = vunpack.c.l.b16 %v947
      %v980 = vpack.c.b16 %v965, %v964
      %v981 = vpack.c.b16 %v967, %v966
      %v982 = vpack.c.b16 %v969, %v968
      %v983 = vpack.c.b16 %v971, %v970
      %v984 = vpack.c.b16 %v973, %v972
      %v985 = vpack.c.b16 %v975, %v974
      %v986 = vpack.c.b16 %v977, %v976
      %v987 = vpack.c.b16 %v979, %v978
      %996 = vmatpush.bf16.msra.mxu0 %v987
      %997 = vmatpush.bf16.msra.mxu0 %v986
      %998 = vmatpush.bf16.msra.mxu0 %v985
      %999 = vmatpush.bf16.msra.mxu0 %v984
      %1000 = vmatpush.bf16.msra.mxu0 %v983
      %1001 = vmatpush.bf16.msra.mxu0 %v982
      %1002 = vmatpush.bf16.msra.mxu0 %v981
      %1003 = vmatpush.bf16.msra.mxu0 %v980
      %1004 = vmatmul.bf16.gmra.mxu0 %v931
      %v1005 = vpop.f32.mrf.mxu0
      %v1006 = vadd.f32 0.0, %v1005
      %v1007 = vpop.f32.mrf.mxu0
      %1008 = vdwg.mxu0
      %v1009 = vadd.f32 %v929, %v1006
      %v1010 = vld [vmem:[#allocation2 + $0x2] sm:$0xff]
      %v1011 = vpack.c.bf16 %v1010, %v1010
      %v1012 = vld [vmem:[%s3 + $0x80] sm:$0xf]
      %v1013 = vld [vmem:[%s3 + $0x84] sm:$0xf]
      %v1014 = vld [vmem:[%s3 + $0x88] sm:$0xf]
      %v1015 = vld [vmem:[%s3 + $0x8c] sm:$0xf]
      %v1016 = vld [vmem:[%s3 + $0x90] sm:$0xf]
      %v1017 = vld [vmem:[%s3 + $0x94] sm:$0xf]
      %v1018 = vld [vmem:[%s3 + $0x98] sm:$0xf]
      %v1019 = vld [vmem:[%s3 + $0x9c] sm:$0xf]
      %v1020 = vld [vmem:[%s3 + $0xa0] sm:$0xf]
      %v1021 = vld [vmem:[%s3 + $0xa4] sm:$0xf]
      %v1022 = vld [vmem:[%s3 + $0xa8] sm:$0xf]
      %v1023 = vld [vmem:[%s3 + $0xac] sm:$0xf]
      %v1024 = vld [vmem:[%s3 + $0xb0] sm:$0xf]
      %v1025 = vld [vmem:[%s3 + $0xb4] sm:$0xf]
      %v1026 = vld [vmem:[%s3 + $0xb8] sm:$0xf]
      %v1027 = vld [vmem:[%s3 + $0xbc] sm:$0xf]
      %v1044 = vunpack.c.l.b16 %v1012
      %v1045 = vunpack.c.l.b16 %v1013
      %v1046 = vunpack.c.l.b16 %v1014
      %v1047 = vunpack.c.l.b16 %v1015
      %v1048 = vunpack.c.l.b16 %v1016
      %v1049 = vunpack.c.l.b16 %v1017
      %v1050 = vunpack.c.l.b16 %v1018
      %v1051 = vunpack.c.l.b16 %v1019
      %v1052 = vunpack.c.l.b16 %v1020
      %v1053 = vunpack.c.l.b16 %v1021
      %v1054 = vunpack.c.l.b16 %v1022
      %v1055 = vunpack.c.l.b16 %v1023
      %v1056 = vunpack.c.l.b16 %v1024
      %v1057 = vunpack.c.l.b16 %v1025
      %v1058 = vunpack.c.l.b16 %v1026
      %v1059 = vunpack.c.l.b16 %v1027
      %v1060 = vpack.c.b16 %v1045, %v1044
      %v1061 = vpack.c.b16 %v1047, %v1046
      %v1062 = vpack.c.b16 %v1049, %v1048
      %v1063 = vpack.c.b16 %v1051, %v1050
      %v1064 = vpack.c.b16 %v1053, %v1052
      %v1065 = vpack.c.b16 %v1055, %v1054
      %v1066 = vpack.c.b16 %v1057, %v1056
      %v1067 = vpack.c.b16 %v1059, %v1058
      %1076 = vmatpush.bf16.msra.mxu0 %v1067
      %1077 = vmatpush.bf16.msra.mxu0 %v1066
      %1078 = vmatpush.bf16.msra.mxu0 %v1065
      %1079 = vmatpush.bf16.msra.mxu0 %v1064
      %1080 = vmatpush.bf16.msra.mxu0 %v1063
      %1081 = vmatpush.bf16.msra.mxu0 %v1062
      %1082 = vmatpush.bf16.msra.mxu0 %v1061
      %1083 = vmatpush.bf16.msra.mxu0 %v1060
      %1084 = vmatmul.bf16.gmra.mxu0 %v1011
      %v1085 = vpop.f32.mrf.mxu0
      %v1086 = vadd.f32 0.0, %v1085
      %v1087 = vpop.f32.mrf.mxu0
      %1088 = vdwg.mxu0
      %v1089 = vadd.f32 %v1009, %v1086
      %v1090 = vmax.f32 %v1089, 0.0
      %v1091 = vpack.c.bf16 %v1090, %v1090
      %1092 = vst [vmem:[%s276] sm:$0xf] %v1091
      %p1093 = scmp.lt.s32.totalorder %s18, 1
      %s1094 = scalar_select %p1093, %s18, 1
      %s1095 = smul.addr %s1094, 4
      %s1096 = scalar_lea.vmem %s7, %s1095
      // Predicated region
      $region49: #{conv5_extractor.13} parent=47 // pred_check
        %p1097 = pneg %p188
      $region50: #{conv5_extractor.13} parent=47 // pred_check_branch
        %1099 = sbr.rel (%p1097) target = $region52
      $region51: #{conv5_extractor.13} parent=47 // pred_region
        _
      $region52: #{conv5_extractor.13} parent=47 // pred_fallthru
        _
    $region48: #{conv5_extractor.13} parent=5 // pred_fallthru
      _
    %p1100 = scmp.le.s32.totalorder 2, %s13
    // Predicated region
    $region53: #{conv5_extractor.13} parent=5 // pred_check
      %p1101 = pneg %p1100
    $region54: #{conv5_extractor.13} parent=5 // pred_check_branch
      %1103 = sbr.rel (%p1101) target = $region56
    $region55: #{conv5_extractor.13} parent=5 // pred_region
      %s1104 = ssub.s32 %s13, 2
      // Predicated region
      $region57: #{conv5_extractor.13} parent=55 // pred_check
        %p1105 = pneg %p194
      $region58: #{conv5_extractor.13} parent=55 // pred_check_branch
        %1107 = sbr.rel (%p1105) target = $region60
      $region59: #{conv5_extractor.13} parent=55 // pred_region
        %p1108 = scmp.lt.s32.totalorder %s19, 1
        %s1109 = scalar_select %p1108, %s19, 1
        %s1110 = smul.addr %s1109, 4
        %s1111 = scalar_lea.vmem %s7, %s1110
      $region60: #{conv5_extractor.13} parent=55 // pred_fallthru
        _
    $region56: #{conv5_extractor.13} parent=5 // pred_fallthru
      _
  $region6: #{conv5_extractor.13} parent=0 // loop_footer
    %s17 = sadd.s32 1, %s13
  $region7: #{conv5_extractor.13} parent=0 // loop_footer_branch
    %12 = sbr.rel target = $region3
  $region8: #{conv5_extractor.13} parent=0 // loop_exit
    _

// kernel: conv5_extractor.14
$region0: #{conv5_extractor.14}
  #allocation0 [shape = 'u32[]', space=smem, size = 0x4, offset = 0x4, fixed_abs, tag = 'smem constant byte address 0x4 - core index']
  #allocation1 [shape = 'u32[72,128]{1,0:T(1,128)}', space=vmem, size = 0x9000, scoped, tag = 'internal scratch']
  #allocation2 [shape = 'f32[10,128]{1,0:T(8,128)}', space=vmem, size = 0x2000, scoped, tag = 'scratch operand']
  %s0 = inlined_call_operand.vmem [shape: bf16[2,8,480], index: 0, kind: input, shape index: {}]
  %s1 = inlined_call_operand.vmem [shape: bf16[480,128], index: 1, kind: input, shape index: {}]
  %s2 = inlined_call_operand.vmem [shape: f32[1,128], index: 2, kind: input, shape index: {}]
  %s3 = inlined_call_operand.vmem [shape: bf16[384,128], index: 3, kind: input, shape index: {}]
  %s4 = inlined_call_operand.vmem [shape: f32[1,128], index: 4, kind: input, shape index: {}]
  %s5 = inlined_call_operand.vmem [shape: bf16[2,8,128], index: 5, kind: input, shape index: {}]
  %s6 = inlined_call_operand.vmem [shape: bf16[2,8,128], index: 6, kind: output, shape index: {}]
  %s7 = sld [smem:[#allocation0]]
  $region57: #{conv5_extractor.14} parent=0
    _
  %s9 = ssub.s32 1, %s7
  %s10 = scalar_select 0, %s9, %s7
  loop: start=0, step=1, limit=4
  $region2: #{conv5_extractor.14} parent=0 // loop_pre_header
    _
  $region3: #{conv5_extractor.14} parent=0 // loop_header
    %s12 = sphi 0, %s16
    %p13 = scmp.ge.s32.totalorder %s12, 4
    %s22 = sphi 0, %s24
    %s25 = sphi 0, %s22
    %s26 = sphi 0, %s25
    %s42 = sphi 0, %s26
    %s46 = sphi 0, %s46
    %s48 = sphi 0, %s46
    %s49 = sphi 0, %s48
    %s63 = sphi 0, %s49
    %s67 = sphi 0, %s67
    %s69 = sphi 0, %s67
    %s70 = sphi 0, %s69
    %s84 = sphi 0, %s70
    %s88 = sphi 0, %s88
    %s90 = sphi 0, %s88
    %s91 = sphi 0, %s90
    %s105 = sphi 0, %s91
    %s109 = sphi 0, %s109
    %s111 = sphi 0, %s109
    %s112 = sphi 0, %s111
    %s126 = sphi 0, %s112
    %s132 = sphi 0, %s134
    %s135 = sphi 0, %s132
    %s136 = sphi 0, %s135
    %s152 = sphi 0, %s136
    %s158 = sphi 0, %s160
    %s161 = sphi 0, %s158
    %s162 = sphi 0, %s161
    %s178 = sphi 0, %s162
  $region4: #{conv5_extractor.14} parent=0 // loop_header_branch
    %15 = sbr.rel (%p13) target = $region8
  $region5: #{conv5_extractor.14} parent=0 // loop_body
    %s17 = ssub.s32 %s12, 1
    %s18 = ssub.s32 %s12, 2
    %s19 = sadd.s32 %s12, 1
    %s20 = ssub.s32 %s12, %s19
    %p21 = scmp.eq.s32.totalorder %s20, 0
    %s23 = sadd.s32 %s22, 1
    %s24 = scalar_select %p21, %s22, %s23
    %p27 = pneg %p21
    %p28 = scmp.eq.s32.totalorder %s12, 1
    %p29 = por %p27, %p28
    %p30 = scmp.ne.s32.totalorder %s22, %s25
    %p31 = scmp.eq.s32.totalorder %s12, 0
    %p32 = por %p30, %p31
    %p33 = scmp.ne.s32.totalorder %s22, %s25
    %p34 = scmp.eq.s32.totalorder %s17, 1
    %p35 = por %p33, %p34
    %p36 = scmp.ne.s32.totalorder %s25, %s26
    %p37 = scmp.eq.s32.totalorder %s17, 0
    %p38 = por %p36, %p37
    %p39 = scmp.ne.s32.totalorder %s25, %s26
    %p40 = scmp.eq.s32.totalorder %s18, 1
    %p41 = por %p39, %p40
    %p43 = scmp.ne.s32.totalorder %s26, %s42
    %p44 = scmp.eq.s32.totalorder %s18, 0
    %p45 = por %p43, %p44
    %s47 = sadd.s32 %s46, 1
    %p50 = scmp.eq.s32.totalorder %s12, 1
    %p51 = scmp.ne.s32.totalorder %s46, %s48
    %p52 = scmp.eq.s32.totalorder %s12, 0
    %p53 = por %p51, %p52
    %p54 = scmp.ne.s32.totalorder %s46, %s48
    %p55 = scmp.eq.s32.totalorder %s17, 1
    %p56 = por %p54, %p55
    %p57 = scmp.ne.s32.totalorder %s48, %s49
    %p58 = scmp.eq.s32.totalorder %s17, 0
    %p59 = por %p57, %p58
    %p60 = scmp.ne.s32.totalorder %s48, %s49
    %p61 = scmp.eq.s32.totalorder %s18, 1
    %p62 = por %p60, %p61
    %p64 = scmp.ne.s32.totalorder %s49, %s63
    %p65 = scmp.eq.s32.totalorder %s18, 0
    %p66 = por %p64, %p65
    %s68 = sadd.s32 %s67, 1
    %p71 = scmp.eq.s32.totalorder %s12, 1
    %p72 = scmp.ne.s32.totalorder %s67, %s69
    %p73 = scmp.eq.s32.totalorder %s12, 0
    %p74 = por %p72, %p73
    %p75 = scmp.ne.s32.totalorder %s67, %s69
    %p76 = scmp.eq.s32.totalorder %s17, 1
    %p77 = por %p75, %p76
    %p78 = scmp.ne.s32.totalorder %s69, %s70
    %p79 = scmp.eq.s32.totalorder %s17, 0
    %p80 = por %p78, %p79
    %p81 = scmp.ne.s32.totalorder %s69, %s70
    %p82 = scmp.eq.s32.totalorder %s18, 1
    %p83 = por %p81, %p82
    %p85 = scmp.ne.s32.totalorder %s70, %s84
    %p86 = scmp.eq.s32.totalorder %s18, 0
    %p87 = por %p85, %p86
    %s89 = sadd.s32 %s88, 1
    %p92 = scmp.eq.s32.totalorder %s12, 1
    %p93 = scmp.ne.s32.totalorder %s88, %s90
    %p94 = scmp.eq.s32.totalorder %s12, 0
    %p95 = por %p93, %p94
    %p96 = scmp.ne.s32.totalorder %s88, %s90
    %p97 = scmp.eq.s32.totalorder %s17, 1
    %p98 = por %p96, %p97
    %p99 = scmp.ne.s32.totalorder %s90, %s91
    %p100 = scmp.eq.s32.totalorder %s17, 0
    %p101 = por %p99, %p100
    %p102 = scmp.ne.s32.totalorder %s90, %s91
    %p103 = scmp.eq.s32.totalorder %s18, 1
    %p104 = por %p102, %p103
    %p106 = scmp.ne.s32.totalorder %s91, %s105
    %p107 = scmp.eq.s32.totalorder %s18, 0
    %p108 = por %p106, %p107
    %s110 = sadd.s32 %s109, 1
    %p113 = scmp.eq.s32.totalorder %s12, 1
    %p114 = scmp.ne.s32.totalorder %s109, %s111
    %p115 = scmp.eq.s32.totalorder %s12, 0
    %p116 = por %p114, %p115
    %p117 = scmp.ne.s32.totalorder %s109, %s111
    %p118 = scmp.eq.s32.totalorder %s17, 1
    %p119 = por %p117, %p118
    %p120 = scmp.ne.s32.totalorder %s111, %s112
    %p121 = scmp.eq.s32.totalorder %s17, 0
    %p122 = por %p120, %p121
    %p123 = scmp.ne.s32.totalorder %s111, %s112
    %p124 = scmp.eq.s32.totalorder %s18, 1
    %p125 = por %p123, %p124
    %p127 = scmp.ne.s32.totalorder %s112, %s126
    %p128 = scmp.eq.s32.totalorder %s18, 0
    %p129 = por %p127, %p128
    %s130 = ssub.s32 %s12, %s19
    %p131 = scmp.eq.s32.totalorder %s130, 0
    %s133 = sadd.s32 %s132, 1
    %s134 = scalar_select %p131, %s132, %s133
    %p137 = pneg %p131
    %p138 = scmp.eq.s32.totalorder %s12, 1
    %p139 = por %p137, %p138
    %p140 = scmp.ne.s32.totalorder %s132, %s135
    %p141 = scmp.eq.s32.totalorder %s12, 0
    %p142 = por %p140, %p141
    %p143 = scmp.ne.s32.totalorder %s132, %s135
    %p144 = scmp.eq.s32.totalorder %s17, 1
    %p145 = por %p143, %p144
    %p146 = scmp.ne.s32.totalorder %s135, %s136
    %p147 = scmp.eq.s32.totalorder %s17, 0
    %p148 = por %p146, %p147
    %p149 = scmp.ne.s32.totalorder %s135, %s136
    %p150 = scmp.eq.s32.totalorder %s18, 1
    %p151 = por %p149, %p150
    %p153 = scmp.ne.s32.totalorder %s136, %s152
    %p154 = scmp.eq.s32.totalorder %s18, 0
    %p155 = por %p153, %p154
    %s156 = ssub.s32 %s12, %s19
    %p157 = scmp.eq.s32.totalorder %s156, 0
    %s159 = sadd.s32 %s158, 1
    %s160 = scalar_select %p157, %s158, %s159
    %p163 = pneg %p157
    %p164 = scmp.eq.s32.totalorder %s12, 1
    %p165 = por %p163, %p164
    %p166 = scmp.ne.s32.totalorder %s158, %s161
    %p167 = scmp.eq.s32.totalorder %s12, 0
    %p168 = por %p166, %p167
    %p169 = scmp.ne.s32.totalorder %s158, %s161
    %p170 = scmp.eq.s32.totalorder %s17, 1
    %p171 = por %p169, %p170
    %p172 = scmp.ne.s32.totalorder %s161, %s162
    %p173 = scmp.eq.s32.totalorder %s17, 0
    %p174 = por %p172, %p173
    %p175 = scmp.ne.s32.totalorder %s161, %s162
    %p176 = scmp.eq.s32.totalorder %s18, 1
    %p177 = por %p175, %p176
    %p179 = scmp.ne.s32.totalorder %s162, %s178
    %p180 = scmp.eq.s32.totalorder %s18, 0
    %p181 = por %p179, %p180
    %p182 = scmp.le.s32.totalorder 1, %s12
    %p183 = scmp.lt.s32.totalorder %s12, 3
    %p184 = pnand %p182, %p183
    %p185 = pneg %p184
    // Predicated region
    $region9: #{conv5_extractor.14} parent=5 // pred_check
      _
    $region10: #{conv5_extractor.14} parent=5 // pred_check_branch
      %187 = sbr.rel (%p184) target = $region12
    $region11: #{conv5_extractor.14} parent=5 // pred_region
      %s188 = ssub.s32 %s12, 1
      // Predicated region
      $region13: #{conv5_extractor.14} parent=11 // pred_check
        %p189 = pneg %p59
      $region14: #{conv5_extractor.14} parent=11 // pred_check_branch
        %191 = sbr.rel (%p189) target = $region16
      $region15: #{conv5_extractor.14} parent=11 // pred_region
        _
      $region16: #{conv5_extractor.14} parent=11 // pred_fallthru
        _
      // Predicated region
      $region17: #{conv5_extractor.14} parent=11 // pred_check
        %p192 = pneg %p80
      $region18: #{conv5_extractor.14} parent=11 // pred_check_branch
        %194 = sbr.rel (%p192) target = $region20
      $region19: #{conv5_extractor.14} parent=11 // pred_region
        _
      $region20: #{conv5_extractor.14} parent=11 // pred_fallthru
        _
      // Predicated region
      $region21: #{conv5_extractor.14} parent=11 // pred_check
        %p195 = pneg %p101
      $region22: #{conv5_extractor.14} parent=11 // pred_check_branch
        %197 = sbr.rel (%p195) target = $region24
      $region23: #{conv5_extractor.14} parent=11 // pred_region
        _
      $region24: #{conv5_extractor.14} parent=11 // pred_fallthru
        _
      // Predicated region
      $region25: #{conv5_extractor.14} parent=11 // pred_check
        %p198 = pneg %p122
      $region26: #{conv5_extractor.14} parent=11 // pred_check_branch
        %200 = sbr.rel (%p198) target = $region28
      $region27: #{conv5_extractor.14} parent=11 // pred_region
        _
      $region28: #{conv5_extractor.14} parent=11 // pred_fallthru
        _
    $region12: #{conv5_extractor.14} parent=5 // pred_fallthru
      _
    %p201 = scmp.lt.s32.totalorder %s12, 2
    // Predicated region
    $region29: #{conv5_extractor.14} parent=5 // pred_check
      %p202 = pneg %p201
    $region30: #{conv5_extractor.14} parent=5 // pred_check_branch
      %204 = sbr.rel (%p202) target = $region32
    $region31: #{conv5_extractor.14} parent=5 // pred_region
      // Predicated region
      $region33: #{conv5_extractor.14} parent=31 // pred_check
        %p205 = pneg %p32
      $region34: #{conv5_extractor.14} parent=31 // pred_check_branch
        %207 = sbr.rel (%p205) target = $region36
      $region35: #{conv5_extractor.14} parent=31 // pred_region
        %p208 = scmp.lt.s32.totalorder %s12, 1
        %s209 = scalar_select %p208, %s12, 1
        %s210 = smul.addr %s209, 4
        %s211 = smul.addr %s210, 4
        %s212 = scalar_lea.vmem %s0, %s211
      $region36: #{conv5_extractor.14} parent=31 // pred_fallthru
        _
      // Predicated region
      $region37: #{conv5_extractor.14} parent=31 // pred_check
        %p213 = pneg %p142
      $region38: #{conv5_extractor.14} parent=31 // pred_check_branch
        %215 = sbr.rel (%p213) target = $region40
      $region39: #{conv5_extractor.14} parent=31 // pred_region
        %p216 = scmp.lt.s32.totalorder %s12, 1
        %s217 = scalar_select %p216, %s12, 1
        %s218 = smul.addr %s217, 4
        %s219 = scalar_lea.vmem %s5, %s218
      $region40: #{conv5_extractor.14} parent=31 // pred_fallthru
        _
    $region32: #{conv5_extractor.14} parent=5 // pred_fallthru
      _
    %p220 = scmp.le.s32.totalorder 1, %s12
    %p221 = scmp.lt.s32.totalorder %s12, 3
    %p222 = pnand %p220, %p221
    %p223 = pneg %p222
    // Predicated region
    $region41: #{conv5_extractor.14} parent=5 // pred_check
      _
    $region42: #{conv5_extractor.14} parent=5 // pred_check_branch
      %225 = sbr.rel (%p222) target = $region44
    $region43: #{conv5_extractor.14} parent=5 // pred_region
      %s226 = ssub.s32 %s12, 1
      %p227 = scmp.lt.s32.totalorder %s17, 1
      %s228 = scalar_select %p227, %s17, 1
      %s229 = smul.addr %s228, 4
      %s230 = smul.addr %s229, 4
      %s231 = scalar_lea.vmem %s0, %s230
      %p232 = pneg %p38
      %p233 = pneg %p35
      %p234 = pneg %p59
      %p235 = pneg %p56
      %p236 = pneg %p80
      %p237 = pneg %p77
      %p238 = pneg %p101
      %p239 = pneg %p98
      %p240 = pneg %p122
      %p241 = pneg %p119
      %p242 = scmp.lt.s32.totalorder %s17, 1
      %s243 = scalar_select %p242, %s17, 1
      %s244 = smul.addr %s243, 4
      %s245 = scalar_lea.vmem %s5, %s244
      %p246 = pneg %p148
      %p247 = pneg %p145
      %p248 = pneg %p174
      %p249 = pneg %p171
      %p250 = scmp.lt.s32.totalorder %s17, 1
      %s251 = scalar_select %p250, %s17, 1
      %s252 = smul.addr %s251, 4
      %s253 = scalar_lea.vmem %s6, %s252
      %p254 = scmp.lt.s32.totalorder %s17, 1
      %s255 = scalar_select %p254, %s17, 1
      %s256 = smul.addr %s255, 4
      %s257 = smul.addr %s256, 4
      %s258 = scalar_lea.vmem %s0, %s257
      %p259 = scmp.lt.s32.totalorder %s17, 1
      %s260 = scalar_select %p259, %s17, 1
      %s261 = smul.addr %s260, 4
      %s262 = scalar_lea.vmem %s5, %s261
      %p263 = scmp.lt.s32.totalorder %s17, 1
      %s264 = scalar_select %p263, %s17, 1
      %s265 = smul.addr %s264, 4
      %s266 = scalar_lea.vmem %s6, %s265
      %v268 = vld [vmem:[%s258] sm:$0xff]
      %v269 = vld [vmem:[%s258 + $0x8] sm:$0xff]
      %v270 = vld [vmem:[%s1] sm:$0xf]
      %v271 = vld [vmem:[%s1 + $0x4] sm:$0xf]
      %v272 = vld [vmem:[%s1 + $0x8] sm:$0xf]
      %v273 = vld [vmem:[%s1 + $0xc] sm:$0xf]
      %v274 = vld [vmem:[%s1 + $0x10] sm:$0xf]
      %v275 = vld [vmem:[%s1 + $0x14] sm:$0xf]
      %v276 = vld [vmem:[%s1 + $0x18] sm:$0xf]
      %v277 = vld [vmem:[%s1 + $0x1c] sm:$0xf]
      %v278 = vld [vmem:[%s1 + $0x20] sm:$0xf]
      %v279 = vld [vmem:[%s1 + $0x24] sm:$0xf]
      %v280 = vld [vmem:[%s1 + $0x28] sm:$0xf]
      %v281 = vld [vmem:[%s1 + $0x2c] sm:$0xf]
      %v282 = vld [vmem:[%s1 + $0x30] sm:$0xf]
      %v283 = vld [vmem:[%s1 + $0x34] sm:$0xf]
      %v284 = vld [vmem:[%s1 + $0x38] sm:$0xf]
      %v285 = vld [vmem:[%s1 + $0x3c] sm:$0xf]
      %v286 = vld [vmem:[%s1 + $0x40] sm:$0xf]
      %v287 = vld [vmem:[%s1 + $0x44] sm:$0xf]
      %v288 = vld [vmem:[%s1 + $0x48] sm:$0xf]
      %v289 = vld [vmem:[%s1 + $0x4c] sm:$0xf]
      %v290 = vld [vmem:[%s1 + $0x50] sm:$0xf]
      %v291 = vld [vmem:[%s1 + $0x54] sm:$0xf]
      %v292 = vld [vmem:[%s1 + $0x58] sm:$0xf]
      %v293 = vld [vmem:[%s1 + $0x5c] sm:$0xf]
      %v294 = vld [vmem:[%s1 + $0x60] sm:$0xf]
      %v295 = vld [vmem:[%s1 + $0x64] sm:$0xf]
      %v296 = vld [vmem:[%s1 + $0x68] sm:$0xf]
      %v297 = vld [vmem:[%s1 + $0x6c] sm:$0xf]
      %v298 = vld [vmem:[%s1 + $0x70] sm:$0xf]
      %v299 = vld [vmem:[%s1 + $0x74] sm:$0xf]
      %v300 = vld [vmem:[%s1 + $0x78] sm:$0xf]
      %v301 = vld [vmem:[%s1 + $0x7c] sm:$0xf]
      %v302 = vld [vmem:[%s1 + $0x80] sm:$0xf]
      %v303 = vld [vmem:[%s1 + $0x84] sm:$0xf]
      %v304 = vld [vmem:[%s1 + $0x88] sm:$0xf]
      %v305 = vld [vmem:[%s1 + $0x8c] sm:$0xf]
      %v306 = vld [vmem:[%s1 + $0x90] sm:$0xf]
      %v307 = vld [vmem:[%s1 + $0x94] sm:$0xf]
      %v308 = vld [vmem:[%s1 + $0x98] sm:$0xf]
      %v309 = vld [vmem:[%s1 + $0x9c] sm:$0xf]
      %v310 = vld [vmem:[%s1 + $0xa0] sm:$0xf]
      %v311 = vld [vmem:[%s1 + $0xa4] sm:$0xf]
      %v312 = vld [vmem:[%s1 + $0xa8] sm:$0xf]
      %v313 = vld [vmem:[%s1 + $0xac] sm:$0xf]
      %v314 = vld [vmem:[%s1 + $0xb0] sm:$0xf]
      %v315 = vld [vmem:[%s1 + $0xb4] sm:$0xf]
      %v316 = vld [vmem:[%s1 + $0xb8] sm:$0xf]
      %v317 = vld [vmem:[%s1 + $0xbc] sm:$0xf]
      %v318 = vld [vmem:[%s1 + $0xc0] sm:$0xf]
      %v319 = vld [vmem:[%s1 + $0xc4] sm:$0xf]
      %v320 = vld [vmem:[%s1 + $0xc8] sm:$0xf]
      %v321 = vld [vmem:[%s1 + $0xcc] sm:$0xf]
      %v322 = vld [vmem:[%s1 + $0xd0] sm:$0xf]
      %v323 = vld [vmem:[%s1 + $0xd4] sm:$0xf]
      %v324 = vld [vmem:[%s1 + $0xd8] sm:$0xf]
      %v325 = vld [vmem:[%s1 + $0xdc] sm:$0xf]
      %v326 = vld [vmem:[%s1 + $0xe0] sm:$0xf]
      %v327 = vld [vmem:[%s1 + $0xe4] sm:$0xf]
      %v328 = vld [vmem:[%s1 + $0xe8] sm:$0xf]
      %v329 = vld [vmem:[%s1 + $0xec] sm:$0xf]
      %v330 = vld [vmem:[%s2] sm:$0x1]
      %v332 = vperm.slane %v330, 0
      %v336 = vunpack.c.l.b16 %v268
      %v337 = vunpack.c.h.b16 %v268
      %v338 = vunpack.c.l.b16 %v269
      %v339 = vunpack.c.h.b16 %v269
      %v340 = vpack.c.b16 %v336, %v336
      %v341 = vpack.c.b16 %v337, %v337
      %v342 = vpack.c.b16 %v338, %v338
      %v343 = vpack.c.b16 %v339, %v339
      %v407 = vunpack.c.l.b16 %v270
      %v408 = vunpack.c.l.b16 %v271
      %v409 = vunpack.c.l.b16 %v272
      %v410 = vunpack.c.l.b16 %v273
      %v411 = vunpack.c.l.b16 %v274
      %v412 = vunpack.c.l.b16 %v275
      %v413 = vunpack.c.l.b16 %v276
      %v414 = vunpack.c.l.b16 %v277
      %v415 = vunpack.c.l.b16 %v278
      %v416 = vunpack.c.l.b16 %v279
      %v417 = vunpack.c.l.b16 %v280
      %v418 = vunpack.c.l.b16 %v281
      %v419 = vunpack.c.l.b16 %v282
      %v420 = vunpack.c.l.b16 %v283
      %v421 = vunpack.c.l.b16 %v284
      %v422 = vunpack.c.l.b16 %v285
      %v423 = vunpack.c.l.b16 %v286
      %v424 = vunpack.c.l.b16 %v287
      %v425 = vunpack.c.l.b16 %v288
      %v426 = vunpack.c.l.b16 %v289
      %v427 = vunpack.c.l.b16 %v290
      %v428 = vunpack.c.l.b16 %v291
      %v429 = vunpack.c.l.b16 %v292
      %v430 = vunpack.c.l.b16 %v293
      %v431 = vunpack.c.l.b16 %v294
      %v432 = vunpack.c.l.b16 %v295
      %v433 = vunpack.c.l.b16 %v296
      %v434 = vunpack.c.l.b16 %v297
      %v435 = vunpack.c.l.b16 %v298
      %v436 = vunpack.c.l.b16 %v299
      %v437 = vunpack.c.l.b16 %v300
      %v438 = vunpack.c.l.b16 %v301
      %v439 = vunpack.c.l.b16 %v302
      %v440 = vunpack.c.l.b16 %v303
      %v441 = vunpack.c.l.b16 %v304
      %v442 = vunpack.c.l.b16 %v305
      %v443 = vunpack.c.l.b16 %v306
      %v444 = vunpack.c.l.b16 %v307
      %v445 = vunpack.c.l.b16 %v308
      %v446 = vunpack.c.l.b16 %v309
      %v447 = vunpack.c.l.b16 %v310
      %v448 = vunpack.c.l.b16 %v311
      %v449 = vunpack.c.l.b16 %v312
      %v450 = vunpack.c.l.b16 %v313
      %v451 = vunpack.c.l.b16 %v314
      %v452 = vunpack.c.l.b16 %v315
      %v453 = vunpack.c.l.b16 %v316
      %v454 = vunpack.c.l.b16 %v317
      %v455 = vunpack.c.l.b16 %v318
      %v456 = vunpack.c.l.b16 %v319
      %v457 = vunpack.c.l.b16 %v320
      %v458 = vunpack.c.l.b16 %v321
      %v459 = vunpack.c.l.b16 %v322
      %v460 = vunpack.c.l.b16 %v323
      %v461 = vunpack.c.l.b16 %v324
      %v462 = vunpack.c.l.b16 %v325
      %v463 = vunpack.c.l.b16 %v326
      %v464 = vunpack.c.l.b16 %v327
      %v465 = vunpack.c.l.b16 %v328
      %v466 = vunpack.c.l.b16 %v329
      %v467 = vpack.c.b16 %v408, %v407
      %v468 = vpack.c.b16 %v410, %v409
      %v469 = vpack.c.b16 %v412, %v411
      %v470 = vpack.c.b16 %v414, %v413
      %v471 = vpack.c.b16 %v416, %v415
      %v472 = vpack.c.b16 %v418, %v417
      %v473 = vpack.c.b16 %v420, %v419
      %v474 = vpack.c.b16 %v422, %v421
      %v475 = vpack.c.b16 %v424, %v423
      %v476 = vpack.c.b16 %v426, %v425
      %v477 = vpack.c.b16 %v428, %v427
      %v478 = vpack.c.b16 %v430, %v429
      %v479 = vpack.c.b16 %v432, %v431
      %v480 = vpack.c.b16 %v434, %v433
      %v481 = vpack.c.b16 %v436, %v435
      %v482 = vpack.c.b16 %v438, %v437
      %v483 = vpack.c.b16 %v440, %v439
      %v484 = vpack.c.b16 %v442, %v441
      %v485 = vpack.c.b16 %v444, %v443
      %v486 = vpack.c.b16 %v446, %v445
      %v487 = vpack.c.b16 %v448, %v447
      %v488 = vpack.c.b16 %v450, %v449
      %v489 = vpack.c.b16 %v452, %v451
      %v490 = vpack.c.b16 %v454, %v453
      %v491 = vpack.c.b16 %v456, %v455
      %v492 = vpack.c.b16 %v458, %v457
      %v493 = vpack.c.b16 %v460, %v459
      %v494 = vpack.c.b16 %v462, %v461
      %v495 = vpack.c.b16 %v464, %v463
      %v496 = vpack.c.b16 %v466, %v465
      %vm527 = vcmask 785408
      %v529 = vsel %vm527, %v343, 0
      %531 = vmatpush.bf16.msra.mxu0 %v474
      %532 = vmatpush.bf16.msra.mxu0 %v473
      %533 = vmatpush.bf16.msra.mxu0 %v472
      %534 = vmatpush.bf16.msra.mxu0 %v471
      %535 = vmatpush.bf16.msra.mxu0 %v470
      %536 = vmatpush.bf16.msra.mxu0 %v469
      %537 = vmatpush.bf16.msra.mxu0 %v468
      %538 = vmatpush.bf16.msra.mxu0 %v467
      %539 = vmatmul.bf16.gmra.mxu0 %v340
      %v540 = vpop.f32.mrf.mxu0
      %v541 = vadd.f32 %v332, %v540
      %v542 = vpop.f32.mrf.mxu0
      %543 = vdwg.mxu0
      %544 = vmatpush.bf16.msra.mxu0 %v482
      %545 = vmatpush.bf16.msra.mxu0 %v481
      %546 = vmatpush.bf16.msra.mxu0 %v480
      %547 = vmatpush.bf16.msra.mxu0 %v479
      %548 = vmatpush.bf16.msra.mxu0 %v478
      %549 = vmatpush.bf16.msra.mxu0 %v477
      %550 = vmatpush.bf16.msra.mxu0 %v476
      %551 = vmatpush.bf16.msra.mxu0 %v475
      %552 = vmatmul.bf16.gmra.mxu0 %v341
      %v553 = vpop.f32.mrf.mxu0
      %v554 = vadd.f32 %v541, %v553
      %v555 = vpop.f32.mrf.mxu0
      %556 = vdwg.mxu0
      %557 = vmatpush.bf16.msra.mxu0 %v490
      %558 = vmatpush.bf16.msra.mxu0 %v489
      %559 = vmatpush.bf16.msra.mxu0 %v488
      %560 = vmatpush.bf16.msra.mxu0 %v487
      %561 = vmatpush.bf16.msra.mxu0 %v486
      %562 = vmatpush.bf16.msra.mxu0 %v485
      %563 = vmatpush.bf16.msra.mxu0 %v484
      %564 = vmatpush.bf16.msra.mxu0 %v483
      %565 = vmatmul.bf16.gmra.mxu0 %v342
      %v566 = vpop.f32.mrf.mxu0
      %v567 = vadd.f32 %v554, %v566
      %v568 = vpop.f32.mrf.mxu0
      %569 = vdwg.mxu0
      %570 = vmatpush.bf16.msra.mxu0 0
      %571 = vmatpush.bf16.msra.mxu0 0
      %572 = vmatpush.bf16.msra.mxu0 %v496
      %573 = vmatpush.bf16.msra.mxu0 %v495
      %574 = vmatpush.bf16.msra.mxu0 %v494
      %575 = vmatpush.bf16.msra.mxu0 %v493
      %576 = vmatpush.bf16.msra.mxu0 %v492
      %577 = vmatpush.bf16.msra.mxu0 %v491
      %578 = vmatmul.bf16.gmra.mxu0 %v529
      %v579 = vpop.f32.mrf.mxu0
      %v580 = vadd.f32 %v567, %v579
      %v581 = vpop.f32.mrf.mxu0
      %582 = vdwg.mxu0
      %v583 = vmax.f32 %v580, 0.0
      %v584 = vld [vmem:[%s262] sm:$0xf]
      %v585 = vunpack.c.l.bf16 %v584
      %586 = vst [vmem:[#allocation2] sm:$0xff] 0.0
      %587 = vst [vmem:[#allocation2 + $0x8] sm:$0x3] 0.0
      %588 = vst [vmem:[#allocation2 + $0x1] sm:$0xff] %v583
      %v589 = vld [vmem:[%s4] sm:$0x1]
      %v591 = vperm.slane %v589, 0
      %v593 = vadd.f32 %v585, %v591
      %v594 = vld [vmem:[#allocation2] sm:$0xff]
      %v595 = vpack.c.bf16 %v594, %v594
      %v596 = vld [vmem:[%s3] sm:$0xf]
      %v597 = vld [vmem:[%s3 + $0x4] sm:$0xf]
      %v598 = vld [vmem:[%s3 + $0x8] sm:$0xf]
      %v599 = vld [vmem:[%s3 + $0xc] sm:$0xf]
      %v600 = vld [vmem:[%s3 + $0x10] sm:$0xf]
      %v601 = vld [vmem:[%s3 + $0x14] sm:$0xf]
      %v602 = vld [vmem:[%s3 + $0x18] sm:$0xf]
      %v603 = vld [vmem:[%s3 + $0x1c] sm:$0xf]
      %v604 = vld [vmem:[%s3 + $0x20] sm:$0xf]
      %v605 = vld [vmem:[%s3 + $0x24] sm:$0xf]
      %v606 = vld [vmem:[%s3 + $0x28] sm:$0xf]
      %v607 = vld [vmem:[%s3 + $0x2c] sm:$0xf]
      %v608 = vld [vmem:[%s3 + $0x30] sm:$0xf]
      %v609 = vld [vmem:[%s3 + $0x34] sm:$0xf]
      %v610 = vld [vmem:[%s3 + $0x38] sm:$0xf]
      %v611 = vld [vmem:[%s3 + $0x3c] sm:$0xf]
      %v628 = vunpack.c.l.b16 %v596
      %v629 = vunpack.c.l.b16 %v597
      %v630 = vunpack.c.l.b16 %v598
      %v631 = vunpack.c.l.b16 %v599
      %v632 = vunpack.c.l.b16 %v600
      %v633 = vunpack.c.l.b16 %v601
      %v634 = vunpack.c.l.b16 %v602
      %v635 = vunpack.c.l.b16 %v603
      %v636 = vunpack.c.l.b16 %v604
      %v637 = vunpack.c.l.b16 %v605
      %v638 = vunpack.c.l.b16 %v606
      %v639 = vunpack.c.l.b16 %v607
      %v640 = vunpack.c.l.b16 %v608
      %v641 = vunpack.c.l.b16 %v609
      %v642 = vunpack.c.l.b16 %v610
      %v643 = vunpack.c.l.b16 %v611
      %v644 = vpack.c.b16 %v629, %v628
      %v645 = vpack.c.b16 %v631, %v630
      %v646 = vpack.c.b16 %v633, %v632
      %v647 = vpack.c.b16 %v635, %v634
      %v648 = vpack.c.b16 %v637, %v636
      %v649 = vpack.c.b16 %v639, %v638
      %v650 = vpack.c.b16 %v641, %v640
      %v651 = vpack.c.b16 %v643, %v642
      %660 = vmatpush.bf16.msra.mxu0 %v651
      %661 = vmatpush.bf16.msra.mxu0 %v650
      %662 = vmatpush.bf16.msra.mxu0 %v649
      %663 = vmatpush.bf16.msra.mxu0 %v648
      %664 = vmatpush.bf16.msra.mxu0 %v647
      %665 = vmatpush.bf16.msra.mxu0 %v646
      %666 = vmatpush.bf16.msra.mxu0 %v645
      %667 = vmatpush.bf16.msra.mxu0 %v644
      %668 = vmatmul.bf16.gmra.mxu0 %v595
      %v669 = vpop.f32.mrf.mxu0
      %v670 = vadd.f32 0.0, %v669
      %v671 = vpop.f32.mrf.mxu0
      %672 = vdwg.mxu0
      %v673 = vadd.f32 %v593, %v670
      %v674 = vld [vmem:[#allocation2 + $0x1] sm:$0xff]
      %v675 = vpack.c.bf16 %v674, %v674
      %v676 = vld [vmem:[%s3 + $0x40] sm:$0xf]
      %v677 = vld [vmem:[%s3 + $0x44] sm:$0xf]
      %v678 = vld [vmem:[%s3 + $0x48] sm:$0xf]
      %v679 = vld [vmem:[%s3 + $0x4c] sm:$0xf]
      %v680 = vld [vmem:[%s3 + $0x50] sm:$0xf]
      %v681 = vld [vmem:[%s3 + $0x54] sm:$0xf]
      %v682 = vld [vmem:[%s3 + $0x58] sm:$0xf]
      %v683 = vld [vmem:[%s3 + $0x5c] sm:$0xf]
      %v684 = vld [vmem:[%s3 + $0x60] sm:$0xf]
      %v685 = vld [vmem:[%s3 + $0x64] sm:$0xf]
      %v686 = vld [vmem:[%s3 + $0x68] sm:$0xf]
      %v687 = vld [vmem:[%s3 + $0x6c] sm:$0xf]
      %v688 = vld [vmem:[%s3 + $0x70] sm:$0xf]
      %v689 = vld [vmem:[%s3 + $0x74] sm:$0xf]
      %v690 = vld [vmem:[%s3 + $0x78] sm:$0xf]
      %v691 = vld [vmem:[%s3 + $0x7c] sm:$0xf]
      %v708 = vunpack.c.l.b16 %v676
      %v709 = vunpack.c.l.b16 %v677
      %v710 = vunpack.c.l.b16 %v678
      %v711 = vunpack.c.l.b16 %v679
      %v712 = vunpack.c.l.b16 %v680
      %v713 = vunpack.c.l.b16 %v681
      %v714 = vunpack.c.l.b16 %v682
      %v715 = vunpack.c.l.b16 %v683
      %v716 = vunpack.c.l.b16 %v684
      %v717 = vunpack.c.l.b16 %v685
      %v718 = vunpack.c.l.b16 %v686
      %v719 = vunpack.c.l.b16 %v687
      %v720 = vunpack.c.l.b16 %v688
      %v721 = vunpack.c.l.b16 %v689
      %v722 = vunpack.c.l.b16 %v690
      %v723 = vunpack.c.l.b16 %v691
      %v724 = vpack.c.b16 %v709, %v708
      %v725 = vpack.c.b16 %v711, %v710
      %v726 = vpack.c.b16 %v713, %v712
      %v727 = vpack.c.b16 %v715, %v714
      %v728 = vpack.c.b16 %v717, %v716
      %v729 = vpack.c.b16 %v719, %v718
      %v730 = vpack.c.b16 %v721, %v720
      %v731 = vpack.c.b16 %v723, %v722
      %740 = vmatpush.bf16.msra.mxu0 %v731
      %741 = vmatpush.bf16.msra.mxu0 %v730
      %742 = vmatpush.bf16.msra.mxu0 %v729
      %743 = vmatpush.bf16.msra.mxu0 %v728
      %744 = vmatpush.bf16.msra.mxu0 %v727
      %745 = vmatpush.bf16.msra.mxu0 %v726
      %746 = vmatpush.bf16.msra.mxu0 %v725
      %747 = vmatpush.bf16.msra.mxu0 %v724
      %748 = vmatmul.bf16.gmra.mxu0 %v675
      %v749 = vpop.f32.mrf.mxu0
      %v750 = vadd.f32 0.0, %v749
      %v751 = vpop.f32.mrf.mxu0
      %752 = vdwg.mxu0
      %v753 = vadd.f32 %v673, %v750
      %v754 = vld [vmem:[#allocation2 + $0x2] sm:$0xff]
      %v755 = vpack.c.bf16 %v754, %v754
      %v756 = vld [vmem:[%s3 + $0x80] sm:$0xf]
      %v757 = vld [vmem:[%s3 + $0x84] sm:$0xf]
      %v758 = vld [vmem:[%s3 + $0x88] sm:$0xf]
      %v759 = vld [vmem:[%s3 + $0x8c] sm:$0xf]
      %v760 = vld [vmem:[%s3 + $0x90] sm:$0xf]
      %v761 = vld [vmem:[%s3 + $0x94] sm:$0xf]
      %v762 = vld [vmem:[%s3 + $0x98] sm:$0xf]
      %v763 = vld [vmem:[%s3 + $0x9c] sm:$0xf]
      %v764 = vld [vmem:[%s3 + $0xa0] sm:$0xf]
      %v765 = vld [vmem:[%s3 + $0xa4] sm:$0xf]
      %v766 = vld [vmem:[%s3 + $0xa8] sm:$0xf]
      %v767 = vld [vmem:[%s3 + $0xac] sm:$0xf]
      %v768 = vld [vmem:[%s3 + $0xb0] sm:$0xf]
      %v769 = vld [vmem:[%s3 + $0xb4] sm:$0xf]
      %v770 = vld [vmem:[%s3 + $0xb8] sm:$0xf]
      %v771 = vld [vmem:[%s3 + $0xbc] sm:$0xf]
      %v788 = vunpack.c.l.b16 %v756
      %v789 = vunpack.c.l.b16 %v757
      %v790 = vunpack.c.l.b16 %v758
      %v791 = vunpack.c.l.b16 %v759
      %v792 = vunpack.c.l.b16 %v760
      %v793 = vunpack.c.l.b16 %v761
      %v794 = vunpack.c.l.b16 %v762
      %v795 = vunpack.c.l.b16 %v763
      %v796 = vunpack.c.l.b16 %v764
      %v797 = vunpack.c.l.b16 %v765
      %v798 = vunpack.c.l.b16 %v766
      %v799 = vunpack.c.l.b16 %v767
      %v800 = vunpack.c.l.b16 %v768
      %v801 = vunpack.c.l.b16 %v769
      %v802 = vunpack.c.l.b16 %v770
      %v803 = vunpack.c.l.b16 %v771
      %v804 = vpack.c.b16 %v789, %v788
      %v805 = vpack.c.b16 %v791, %v790
      %v806 = vpack.c.b16 %v793, %v792
      %v807 = vpack.c.b16 %v795, %v794
      %v808 = vpack.c.b16 %v797, %v796
      %v809 = vpack.c.b16 %v799, %v798
      %v810 = vpack.c.b16 %v801, %v800
      %v811 = vpack.c.b16 %v803, %v802
      %820 = vmatpush.bf16.msra.mxu0 %v811
      %821 = vmatpush.bf16.msra.mxu0 %v810
      %822 = vmatpush.bf16.msra.mxu0 %v809
      %823 = vmatpush.bf16.msra.mxu0 %v808
      %824 = vmatpush.bf16.msra.mxu0 %v807
      %825 = vmatpush.bf16.msra.mxu0 %v806
      %826 = vmatpush.bf16.msra.mxu0 %v805
      %827 = vmatpush.bf16.msra.mxu0 %v804
      %828 = vmatmul.bf16.gmra.mxu0 %v755
      %v829 = vpop.f32.mrf.mxu0
      %v830 = vadd.f32 0.0, %v829
      %v831 = vpop.f32.mrf.mxu0
      %832 = vdwg.mxu0
      %v833 = vadd.f32 %v753, %v830
      %v834 = vmax.f32 %v833, 0.0
      %v835 = vpack.c.bf16 %v834, %v834
      %836 = vst [vmem:[%s266] sm:$0xf] %v835
      %p837 = scmp.lt.s32.totalorder %s17, 1
      %s838 = scalar_select %p837, %s17, 1
      %s839 = smul.addr %s838, 4
      %s840 = scalar_lea.vmem %s6, %s839
      // Predicated region
      $region45: #{conv5_extractor.14} parent=43 // pred_check
        %p841 = pneg %p171
      $region46: #{conv5_extractor.14} parent=43 // pred_check_branch
        %843 = sbr.rel (%p841) target = $region48
      $region47: #{conv5_extractor.14} parent=43 // pred_region
        _
      $region48: #{conv5_extractor.14} parent=43 // pred_fallthru
        _
    $region44: #{conv5_extractor.14} parent=5 // pred_fallthru
      _
    %p844 = scmp.le.s32.totalorder 2, %s12
    // Predicated region
    $region49: #{conv5_extractor.14} parent=5 // pred_check
      %p845 = pneg %p844
    $region50: #{conv5_extractor.14} parent=5 // pred_check_branch
      %847 = sbr.rel (%p845) target = $region52
    $region51: #{conv5_extractor.14} parent=5 // pred_region
      %s848 = ssub.s32 %s12, 2
      // Predicated region
      $region53: #{conv5_extractor.14} parent=51 // pred_check
        %p849 = pneg %p177
      $region54: #{conv5_extractor.14} parent=51 // pred_check_branch
        %851 = sbr.rel (%p849) target = $region56
      $region55: #{conv5_extractor.14} parent=51 // pred_region
        %p852 = scmp.lt.s32.totalorder %s18, 1
        %s853 = scalar_select %p852, %s18, 1
        %s854 = smul.addr %s853, 4
        %s855 = scalar_lea.vmem %s6, %s854
      $region56: #{conv5_extractor.14} parent=51 // pred_fallthru
        _
    $region52: #{conv5_extractor.14} parent=5 // pred_fallthru
      _
  $region6: #{conv5_extractor.14} parent=0 // loop_footer
    %s16 = sadd.s32 1, %s12
  $region7: #{conv5_extractor.14} parent=0 // loop_footer_branch
    %11 = sbr.rel target = $region3
  $region8: #{conv5_extractor.14} parent=0 // loop_exit
    _

// kernel: tile.143
$region0: #{tile.143}
  #allocation0 [shape = 's32[1]{0}', space=sflag, size = 0x4, scoped, tag = 'scoped memory for tile.143']
  %s0 = inlined_call_operand.vmem [shape: f32[32], index: 0, kind: input, shape index: {}]
  %s1 = inlined_call_operand.vmem [shape: f32[4,32], index: 1, kind: output, shape index: {}]
  // Predicated region
  $region2: #{tile.143} parent=0 // pred_check
    _
  $region3: #{tile.143} parent=0 // pred_check_branch
    %3 = sbr.rel (0) target = $region5
  $region4: #{tile.143} parent=0 // pred_region
    _
  $region5: #{tile.143} parent=0 // pred_fallthru
    _
  %v4 = vld [vmem:[%s0] ss:$0 sm:$0xff]
  %5 = vst [vmem:[%s1] sm:$0xf] %v4

// kernel: tile.144
$region0: #{tile.144}
  %s0 = inlined_call_operand.vmem [shape: f32[4,32], index: 0, kind: input, shape index: {}]
  %s1 = inlined_call_operand.vmem [shape: f32[1,128], index: 1, kind: output, shape index: {}]
  $region1: #{tile.144} parent=0
    #allocation0 [shape = 'u8[4096]{0}', space=vmem, size = 0x1000, scoped, tag = 'scoped mem for output reshape']
    #allocation1 [shape = 'u8[4096]{0}', space=vmem, size = 0x1000, scoped, tag = 'scoped mem for input reshape']
    %s3 = ssub.s32 16, 1
    %v4 = vld [vmem:[%s0] sm:%s3]
    %5 = vst [vmem:[#allocation1] sm:%s3] %v4
    %v6 = vld [vmem:[#allocation1] sm:$0x1]
    %vm7 = vcmask 261120
    %8 = vst.msk [vmem:[#allocation0] sm:$0x1] %vm7, %v6
    %s9 = scalar_lea.vmem [#allocation1], 3
    %v10 = vld [vmem:[%s9] sm:$0x1]
    %11 = vrot.lane.b32.xlu0 %v10, 96
    %v12 = vpop.permute.xlu0 %11
    %vm13 = vcmask 1048320
    %14 = vst.msk [vmem:[#allocation0] sm:$0x1] %vm13, %v12
    %s15 = scalar_lea.vmem [#allocation1], 2
    %v16 = vld [vmem:[%s15] sm:$0x1]
    %17 = vrot.lane.b32.xlu0 %v16, 64
    %v18 = vpop.permute.xlu0 %17
    %vm19 = vcmask 785920
    %20 = vst.msk [vmem:[#allocation0] sm:$0x1] %vm19, %v18
    %s21 = scalar_lea.vmem [#allocation1], 1
    %v22 = vld [vmem:[%s21] sm:$0x1]
    %23 = vrot.lane.b32.xlu0 %v22, 32
    %v24 = vpop.permute.xlu0 %23
    %vm25 = vcmask 523520
    %26 = vst.msk [vmem:[#allocation0] sm:$0x1] %vm25, %v24
    %s28 = ssub.s32 2, 1
    %v29 = vld [vmem:[#allocation0] sm:%s28]
    %s31 = ssub.s32 2, 1
    %32 = vst [vmem:[%s1] sm:%s31] %v29

// kernel: conv5_extractor.15
$region0: #{conv5_extractor.15}
  #allocation0 [shape = 'u32[]', space=smem, size = 0x4, offset = 0x4, fixed_abs, tag = 'smem constant byte address 0x4 - core index']
  #allocation1 [shape = 'u32[72,128]{1,0:T(1,128)}', space=vmem, size = 0x9000, scoped, tag = 'internal scratch']
  #allocation2 [shape = 'f32[6,128]{1,0:T(8,128)}', space=vmem, size = 0x1000, scoped, tag = 'scratch operand']
  %s0 = inlined_call_operand.vmem [shape: bf16[2,4,480], index: 0, kind: input, shape index: {}]
  %s1 = inlined_call_operand.vmem [shape: bf16[480,128], index: 1, kind: input, shape index: {}]
  %s2 = inlined_call_operand.vmem [shape: f32[1,128], index: 2, kind: input, shape index: {}]
  %s3 = inlined_call_operand.vmem [shape: bf16[384,128], index: 3, kind: input, shape index: {}]
  %s4 = inlined_call_operand.vmem [shape: f32[1,128], index: 4, kind: input, shape index: {}]
  %s5 = inlined_call_operand.vmem [shape: bf16[480,128], index: 5, kind: input, shape index: {}]
  %s6 = inlined_call_operand.vmem [shape: f32[1,128], index: 6, kind: input, shape index: {}]
  %s7 = inlined_call_operand.vmem [shape: bf16[2,4,128], index: 7, kind: output, shape index: {}]
  %s8 = sld [smem:[#allocation0]]
  $region61: #{conv5_extractor.15} parent=0
    _
  %s10 = ssub.s32 1, %s8
  %s11 = scalar_select 0, %s10, %s8
  loop: start=0, step=1, limit=4
  $region2: #{conv5_extractor.15} parent=0 // loop_pre_header
    _
  $region3: #{conv5_extractor.15} parent=0 // loop_header
    %s13 = sphi 0, %s17
    %p14 = scmp.ge.s32.totalorder %s13, 4
    %s23 = sphi 0, %s25
    %s26 = sphi 0, %s23
    %s27 = sphi 0, %s26
    %s43 = sphi 0, %s27
    %s47 = sphi 0, %s47
    %s49 = sphi 0, %s47
    %s50 = sphi 0, %s49
    %s64 = sphi 0, %s50
    %s68 = sphi 0, %s68
    %s70 = sphi 0, %s68
    %s71 = sphi 0, %s70
    %s85 = sphi 0, %s71
    %s89 = sphi 0, %s89
    %s91 = sphi 0, %s89
    %s92 = sphi 0, %s91
    %s106 = sphi 0, %s92
    %s110 = sphi 0, %s110
    %s112 = sphi 0, %s110
    %s113 = sphi 0, %s112
    %s127 = sphi 0, %s113
    %s131 = sphi 0, %s131
    %s133 = sphi 0, %s131
    %s134 = sphi 0, %s133
    %s148 = sphi 0, %s134
    %s152 = sphi 0, %s152
    %s154 = sphi 0, %s152
    %s155 = sphi 0, %s154
    %s169 = sphi 0, %s155
    %s175 = sphi 0, %s177
    %s178 = sphi 0, %s175
    %s179 = sphi 0, %s178
    %s195 = sphi 0, %s179
  $region4: #{conv5_extractor.15} parent=0 // loop_header_branch
    %16 = sbr.rel (%p14) target = $region8
  $region5: #{conv5_extractor.15} parent=0 // loop_body
    %s18 = ssub.s32 %s13, 1
    %s19 = ssub.s32 %s13, 2
    %s20 = sadd.s32 %s13, 1
    %s21 = ssub.s32 %s13, %s20
    %p22 = scmp.eq.s32.totalorder %s21, 0
    %s24 = sadd.s32 %s23, 1
    %s25 = scalar_select %p22, %s23, %s24
    %p28 = pneg %p22
    %p29 = scmp.eq.s32.totalorder %s13, 1
    %p30 = por %p28, %p29
    %p31 = scmp.ne.s32.totalorder %s23, %s26
    %p32 = scmp.eq.s32.totalorder %s13, 0
    %p33 = por %p31, %p32
    %p34 = scmp.ne.s32.totalorder %s23, %s26
    %p35 = scmp.eq.s32.totalorder %s18, 1
    %p36 = por %p34, %p35
    %p37 = scmp.ne.s32.totalorder %s26, %s27
    %p38 = scmp.eq.s32.totalorder %s18, 0
    %p39 = por %p37, %p38
    %p40 = scmp.ne.s32.totalorder %s26, %s27
    %p41 = scmp.eq.s32.totalorder %s19, 1
    %p42 = por %p40, %p41
    %p44 = scmp.ne.s32.totalorder %s27, %s43
    %p45 = scmp.eq.s32.totalorder %s19, 0
    %p46 = por %p44, %p45
    %s48 = sadd.s32 %s47, 1
    %p51 = scmp.eq.s32.totalorder %s13, 1
    %p52 = scmp.ne.s32.totalorder %s47, %s49
    %p53 = scmp.eq.s32.totalorder %s13, 0
    %p54 = por %p52, %p53
    %p55 = scmp.ne.s32.totalorder %s47, %s49
    %p56 = scmp.eq.s32.totalorder %s18, 1
    %p57 = por %p55, %p56
    %p58 = scmp.ne.s32.totalorder %s49, %s50
    %p59 = scmp.eq.s32.totalorder %s18, 0
    %p60 = por %p58, %p59
    %p61 = scmp.ne.s32.totalorder %s49, %s50
    %p62 = scmp.eq.s32.totalorder %s19, 1
    %p63 = por %p61, %p62
    %p65 = scmp.ne.s32.totalorder %s50, %s64
    %p66 = scmp.eq.s32.totalorder %s19, 0
    %p67 = por %p65, %p66
    %s69 = sadd.s32 %s68, 1
    %p72 = scmp.eq.s32.totalorder %s13, 1
    %p73 = scmp.ne.s32.totalorder %s68, %s70
    %p74 = scmp.eq.s32.totalorder %s13, 0
    %p75 = por %p73, %p74
    %p76 = scmp.ne.s32.totalorder %s68, %s70
    %p77 = scmp.eq.s32.totalorder %s18, 1
    %p78 = por %p76, %p77
    %p79 = scmp.ne.s32.totalorder %s70, %s71
    %p80 = scmp.eq.s32.totalorder %s18, 0
    %p81 = por %p79, %p80
    %p82 = scmp.ne.s32.totalorder %s70, %s71
    %p83 = scmp.eq.s32.totalorder %s19, 1
    %p84 = por %p82, %p83
    %p86 = scmp.ne.s32.totalorder %s71, %s85
    %p87 = scmp.eq.s32.totalorder %s19, 0
    %p88 = por %p86, %p87
    %s90 = sadd.s32 %s89, 1
    %p93 = scmp.eq.s32.totalorder %s13, 1
    %p94 = scmp.ne.s32.totalorder %s89, %s91
    %p95 = scmp.eq.s32.totalorder %s13, 0
    %p96 = por %p94, %p95
    %p97 = scmp.ne.s32.totalorder %s89, %s91
    %p98 = scmp.eq.s32.totalorder %s18, 1
    %p99 = por %p97, %p98
    %p100 = scmp.ne.s32.totalorder %s91, %s92
    %p101 = scmp.eq.s32.totalorder %s18, 0
    %p102 = por %p100, %p101
    %p103 = scmp.ne.s32.totalorder %s91, %s92
    %p104 = scmp.eq.s32.totalorder %s19, 1
    %p105 = por %p103, %p104
    %p107 = scmp.ne.s32.totalorder %s92, %s106
    %p108 = scmp.eq.s32.totalorder %s19, 0
    %p109 = por %p107, %p108
    %s111 = sadd.s32 %s110, 1
    %p114 = scmp.eq.s32.totalorder %s13, 1
    %p115 = scmp.ne.s32.totalorder %s110, %s112
    %p116 = scmp.eq.s32.totalorder %s13, 0
    %p117 = por %p115, %p116
    %p118 = scmp.ne.s32.totalorder %s110, %s112
    %p119 = scmp.eq.s32.totalorder %s18, 1
    %p120 = por %p118, %p119
    %p121 = scmp.ne.s32.totalorder %s112, %s113
    %p122 = scmp.eq.s32.totalorder %s18, 0
    %p123 = por %p121, %p122
    %p124 = scmp.ne.s32.totalorder %s112, %s113
    %p125 = scmp.eq.s32.totalorder %s19, 1
    %p126 = por %p124, %p125
    %p128 = scmp.ne.s32.totalorder %s113, %s127
    %p129 = scmp.eq.s32.totalorder %s19, 0
    %p130 = por %p128, %p129
    %s132 = sadd.s32 %s131, 1
    %p135 = scmp.eq.s32.totalorder %s13, 1
    %p136 = scmp.ne.s32.totalorder %s131, %s133
    %p137 = scmp.eq.s32.totalorder %s13, 0
    %p138 = por %p136, %p137
    %p139 = scmp.ne.s32.totalorder %s131, %s133
    %p140 = scmp.eq.s32.totalorder %s18, 1
    %p141 = por %p139, %p140
    %p142 = scmp.ne.s32.totalorder %s133, %s134
    %p143 = scmp.eq.s32.totalorder %s18, 0
    %p144 = por %p142, %p143
    %p145 = scmp.ne.s32.totalorder %s133, %s134
    %p146 = scmp.eq.s32.totalorder %s19, 1
    %p147 = por %p145, %p146
    %p149 = scmp.ne.s32.totalorder %s134, %s148
    %p150 = scmp.eq.s32.totalorder %s19, 0
    %p151 = por %p149, %p150
    %s153 = sadd.s32 %s152, 1
    %p156 = scmp.eq.s32.totalorder %s13, 1
    %p157 = scmp.ne.s32.totalorder %s152, %s154
    %p158 = scmp.eq.s32.totalorder %s13, 0
    %p159 = por %p157, %p158
    %p160 = scmp.ne.s32.totalorder %s152, %s154
    %p161 = scmp.eq.s32.totalorder %s18, 1
    %p162 = por %p160, %p161
    %p163 = scmp.ne.s32.totalorder %s154, %s155
    %p164 = scmp.eq.s32.totalorder %s18, 0
    %p165 = por %p163, %p164
    %p166 = scmp.ne.s32.totalorder %s154, %s155
    %p167 = scmp.eq.s32.totalorder %s19, 1
    %p168 = por %p166, %p167
    %p170 = scmp.ne.s32.totalorder %s155, %s169
    %p171 = scmp.eq.s32.totalorder %s19, 0
    %p172 = por %p170, %p171
    %s173 = ssub.s32 %s13, %s20
    %p174 = scmp.eq.s32.totalorder %s173, 0
    %s176 = sadd.s32 %s175, 1
    %s177 = scalar_select %p174, %s175, %s176
    %p180 = pneg %p174
    %p181 = scmp.eq.s32.totalorder %s13, 1
    %p182 = por %p180, %p181
    %p183 = scmp.ne.s32.totalorder %s175, %s178
    %p184 = scmp.eq.s32.totalorder %s13, 0
    %p185 = por %p183, %p184
    %p186 = scmp.ne.s32.totalorder %s175, %s178
    %p187 = scmp.eq.s32.totalorder %s18, 1
    %p188 = por %p186, %p187
    %p189 = scmp.ne.s32.totalorder %s178, %s179
    %p190 = scmp.eq.s32.totalorder %s18, 0
    %p191 = por %p189, %p190
    %p192 = scmp.ne.s32.totalorder %s178, %s179
    %p193 = scmp.eq.s32.totalorder %s19, 1
    %p194 = por %p192, %p193
    %p196 = scmp.ne.s32.totalorder %s179, %s195
    %p197 = scmp.eq.s32.totalorder %s19, 0
    %p198 = por %p196, %p197
    %p199 = scmp.le.s32.totalorder 1, %s13
    %p200 = scmp.lt.s32.totalorder %s13, 3
    %p201 = pnand %p199, %p200
    %p202 = pneg %p201
    // Predicated region
    $region9: #{conv5_extractor.15} parent=5 // pred_check
      _
    $region10: #{conv5_extractor.15} parent=5 // pred_check_branch
      %204 = sbr.rel (%p201) target = $region12
    $region11: #{conv5_extractor.15} parent=5 // pred_region
      %s205 = ssub.s32 %s13, 1
      // Predicated region
      $region13: #{conv5_extractor.15} parent=11 // pred_check
        %p206 = pneg %p60
      $region14: #{conv5_extractor.15} parent=11 // pred_check_branch
        %208 = sbr.rel (%p206) target = $region16
      $region15: #{conv5_extractor.15} parent=11 // pred_region
        _
      $region16: #{conv5_extractor.15} parent=11 // pred_fallthru
        _
      // Predicated region
      $region17: #{conv5_extractor.15} parent=11 // pred_check
        %p209 = pneg %p81
      $region18: #{conv5_extractor.15} parent=11 // pred_check_branch
        %211 = sbr.rel (%p209) target = $region20
      $region19: #{conv5_extractor.15} parent=11 // pred_region
        _
      $region20: #{conv5_extractor.15} parent=11 // pred_fallthru
        _
      // Predicated region
      $region21: #{conv5_extractor.15} parent=11 // pred_check
        %p212 = pneg %p102
      $region22: #{conv5_extractor.15} parent=11 // pred_check_branch
        %214 = sbr.rel (%p212) target = $region24
      $region23: #{conv5_extractor.15} parent=11 // pred_region
        _
      $region24: #{conv5_extractor.15} parent=11 // pred_fallthru
        _
      // Predicated region
      $region25: #{conv5_extractor.15} parent=11 // pred_check
        %p215 = pneg %p123
      $region26: #{conv5_extractor.15} parent=11 // pred_check_branch
        %217 = sbr.rel (%p215) target = $region28
      $region27: #{conv5_extractor.15} parent=11 // pred_region
        _
      $region28: #{conv5_extractor.15} parent=11 // pred_fallthru
        _
      // Predicated region
      $region29: #{conv5_extractor.15} parent=11 // pred_check
        %p218 = pneg %p144
      $region30: #{conv5_extractor.15} parent=11 // pred_check_branch
        %220 = sbr.rel (%p218) target = $region32
      $region31: #{conv5_extractor.15} parent=11 // pred_region
        _
      $region32: #{conv5_extractor.15} parent=11 // pred_fallthru
        _
      // Predicated region
      $region33: #{conv5_extractor.15} parent=11 // pred_check
        %p221 = pneg %p165
      $region34: #{conv5_extractor.15} parent=11 // pred_check_branch
        %223 = sbr.rel (%p221) target = $region36
      $region35: #{conv5_extractor.15} parent=11 // pred_region
        _
      $region36: #{conv5_extractor.15} parent=11 // pred_fallthru
        _
    $region12: #{conv5_extractor.15} parent=5 // pred_fallthru
      _
    %p224 = scmp.lt.s32.totalorder %s13, 2
    // Predicated region
    $region37: #{conv5_extractor.15} parent=5 // pred_check
      %p225 = pneg %p224
    $region38: #{conv5_extractor.15} parent=5 // pred_check_branch
      %227 = sbr.rel (%p225) target = $region40
    $region39: #{conv5_extractor.15} parent=5 // pred_region
      // Predicated region
      $region41: #{conv5_extractor.15} parent=39 // pred_check
        %p228 = pneg %p33
      $region42: #{conv5_extractor.15} parent=39 // pred_check_branch
        %230 = sbr.rel (%p228) target = $region44
      $region43: #{conv5_extractor.15} parent=39 // pred_region
        %p231 = scmp.lt.s32.totalorder %s13, 1
        %s232 = scalar_select %p231, %s13, 1
        %s233 = smul.addr %s232, 4
        %s234 = smul.addr %s233, 2
        %s235 = scalar_lea.vmem %s0, %s234
      $region44: #{conv5_extractor.15} parent=39 // pred_fallthru
        _
    $region40: #{conv5_extractor.15} parent=5 // pred_fallthru
      _
    %p236 = scmp.le.s32.totalorder 1, %s13
    %p237 = scmp.lt.s32.totalorder %s13, 3
    %p238 = pnand %p236, %p237
    %p239 = pneg %p238
    // Predicated region
    $region45: #{conv5_extractor.15} parent=5 // pred_check
      _
    $region46: #{conv5_extractor.15} parent=5 // pred_check_branch
      %241 = sbr.rel (%p238) target = $region48
    $region47: #{conv5_extractor.15} parent=5 // pred_region
      %s242 = ssub.s32 %s13, 1
      %p243 = scmp.lt.s32.totalorder %s18, 1
      %s244 = scalar_select %p243, %s18, 1
      %s245 = smul.addr %s244, 4
      %s246 = smul.addr %s245, 2
      %s247 = scalar_lea.vmem %s0, %s246
      %p248 = pneg %p39
      %p249 = pneg %p36
      %p250 = pneg %p60
      %p251 = pneg %p57
      %p252 = pneg %p81
      %p253 = pneg %p78
      %p254 = pneg %p102
      %p255 = pneg %p99
      %p256 = pneg %p123
      %p257 = pneg %p120
      %p258 = pneg %p144
      %p259 = pneg %p141
      %p260 = pneg %p165
      %p261 = pneg %p162
      %p262 = pneg %p191
      %p263 = pneg %p188
      %p264 = scmp.lt.s32.totalorder %s18, 1
      %s265 = scalar_select %p264, %s18, 1
      %s266 = smul.addr %s265, 2
      %s267 = scalar_lea.vmem %s7, %s266
      %p268 = scmp.lt.s32.totalorder %s18, 1
      %s269 = scalar_select %p268, %s18, 1
      %s270 = smul.addr %s269, 4
      %s271 = smul.addr %s270, 2
      %s272 = scalar_lea.vmem %s0, %s271
      %p273 = scmp.lt.s32.totalorder %s18, 1
      %s274 = scalar_select %p273, %s18, 1
      %s275 = smul.addr %s274, 2
      %s276 = scalar_lea.vmem %s7, %s275
      %v278 = vld [vmem:[%s272] sm:$0xff]
      %v279 = vld [vmem:[%s1] sm:$0xf]
      %v280 = vld [vmem:[%s1 + $0x4] sm:$0xf]
      %v281 = vld [vmem:[%s1 + $0x8] sm:$0xf]
      %v282 = vld [vmem:[%s1 + $0xc] sm:$0xf]
      %v283 = vld [vmem:[%s1 + $0x10] sm:$0xf]
      %v284 = vld [vmem:[%s1 + $0x14] sm:$0xf]
      %v285 = vld [vmem:[%s1 + $0x18] sm:$0xf]
      %v286 = vld [vmem:[%s1 + $0x1c] sm:$0xf]
      %v287 = vld [vmem:[%s1 + $0x20] sm:$0xf]
      %v288 = vld [vmem:[%s1 + $0x24] sm:$0xf]
      %v289 = vld [vmem:[%s1 + $0x28] sm:$0xf]
      %v290 = vld [vmem:[%s1 + $0x2c] sm:$0xf]
      %v291 = vld [vmem:[%s1 + $0x30] sm:$0xf]
      %v292 = vld [vmem:[%s1 + $0x34] sm:$0xf]
      %v293 = vld [vmem:[%s1 + $0x38] sm:$0xf]
      %v294 = vld [vmem:[%s1 + $0x3c] sm:$0xf]
      %v295 = vld [vmem:[%s1 + $0x40] sm:$0xf]
      %v296 = vld [vmem:[%s1 + $0x44] sm:$0xf]
      %v297 = vld [vmem:[%s1 + $0x48] sm:$0xf]
      %v298 = vld [vmem:[%s1 + $0x4c] sm:$0xf]
      %v299 = vld [vmem:[%s1 + $0x50] sm:$0xf]
      %v300 = vld [vmem:[%s1 + $0x54] sm:$0xf]
      %v301 = vld [vmem:[%s1 + $0x58] sm:$0xf]
      %v302 = vld [vmem:[%s1 + $0x5c] sm:$0xf]
      %v303 = vld [vmem:[%s1 + $0x60] sm:$0xf]
      %v304 = vld [vmem:[%s1 + $0x64] sm:$0xf]
      %v305 = vld [vmem:[%s1 + $0x68] sm:$0xf]
      %v306 = vld [vmem:[%s1 + $0x6c] sm:$0xf]
      %v307 = vld [vmem:[%s1 + $0x70] sm:$0xf]
      %v308 = vld [vmem:[%s1 + $0x74] sm:$0xf]
      %v309 = vld [vmem:[%s1 + $0x78] sm:$0xf]
      %v310 = vld [vmem:[%s1 + $0x7c] sm:$0xf]
      %v311 = vld [vmem:[%s1 + $0x80] sm:$0xf]
      %v312 = vld [vmem:[%s1 + $0x84] sm:$0xf]
      %v313 = vld [vmem:[%s1 + $0x88] sm:$0xf]
      %v314 = vld [vmem:[%s1 + $0x8c] sm:$0xf]
      %v315 = vld [vmem:[%s1 + $0x90] sm:$0xf]
      %v316 = vld [vmem:[%s1 + $0x94] sm:$0xf]
      %v317 = vld [vmem:[%s1 + $0x98] sm:$0xf]
      %v318 = vld [vmem:[%s1 + $0x9c] sm:$0xf]
      %v319 = vld [vmem:[%s1 + $0xa0] sm:$0xf]
      %v320 = vld [vmem:[%s1 + $0xa4] sm:$0xf]
      %v321 = vld [vmem:[%s1 + $0xa8] sm:$0xf]
      %v322 = vld [vmem:[%s1 + $0xac] sm:$0xf]
      %v323 = vld [vmem:[%s1 + $0xb0] sm:$0xf]
      %v324 = vld [vmem:[%s1 + $0xb4] sm:$0xf]
      %v325 = vld [vmem:[%s1 + $0xb8] sm:$0xf]
      %v326 = vld [vmem:[%s1 + $0xbc] sm:$0xf]
      %v327 = vld [vmem:[%s1 + $0xc0] sm:$0xf]
      %v328 = vld [vmem:[%s1 + $0xc4] sm:$0xf]
      %v329 = vld [vmem:[%s1 + $0xc8] sm:$0xf]
      %v330 = vld [vmem:[%s1 + $0xcc] sm:$0xf]
      %v331 = vld [vmem:[%s1 + $0xd0] sm:$0xf]
      %v332 = vld [vmem:[%s1 + $0xd4] sm:$0xf]
      %v333 = vld [vmem:[%s1 + $0xd8] sm:$0xf]
      %v334 = vld [vmem:[%s1 + $0xdc] sm:$0xf]
      %v335 = vld [vmem:[%s1 + $0xe0] sm:$0xf]
      %v336 = vld [vmem:[%s1 + $0xe4] sm:$0xf]
      %v337 = vld [vmem:[%s1 + $0xe8] sm:$0xf]
      %v338 = vld [vmem:[%s1 + $0xec] sm:$0xf]
      %v339 = vld [vmem:[%s2] sm:$0x1]
      %v341 = vperm.slane %v339, 0
      %344 = vst [vmem:[#allocation1] ss:$4 sm:$0xff] %v278
      %v345 = vld.sshfl [vmem:[#allocation1] sm:$0xff pattern:$0x73625140]
      %v346 = vld.sshfl [vmem:[#allocation1 + $0x8] sm:$0xff pattern:$0x73625140]
      %v347 = vld.sshfl [vmem:[#allocation1 + $0x10] sm:$0xff pattern:$0x73625140]
      %v348 = vld.sshfl [vmem:[#allocation1 + $0x18] sm:$0xff pattern:$0x73625140]
      %v412 = vunpack.c.l.b16 %v279
      %v413 = vunpack.c.l.b16 %v280
      %v414 = vunpack.c.l.b16 %v281
      %v415 = vunpack.c.l.b16 %v282
      %v416 = vunpack.c.l.b16 %v283
      %v417 = vunpack.c.l.b16 %v284
      %v418 = vunpack.c.l.b16 %v285
      %v419 = vunpack.c.l.b16 %v286
      %v420 = vunpack.c.l.b16 %v287
      %v421 = vunpack.c.l.b16 %v288
      %v422 = vunpack.c.l.b16 %v289
      %v423 = vunpack.c.l.b16 %v290
      %v424 = vunpack.c.l.b16 %v291
      %v425 = vunpack.c.l.b16 %v292
      %v426 = vunpack.c.l.b16 %v293
      %v427 = vunpack.c.l.b16 %v294
      %v428 = vunpack.c.l.b16 %v295
      %v429 = vunpack.c.l.b16 %v296
      %v430 = vunpack.c.l.b16 %v297
      %v431 = vunpack.c.l.b16 %v298
      %v432 = vunpack.c.l.b16 %v299
      %v433 = vunpack.c.l.b16 %v300
      %v434 = vunpack.c.l.b16 %v301
      %v435 = vunpack.c.l.b16 %v302
      %v436 = vunpack.c.l.b16 %v303
      %v437 = vunpack.c.l.b16 %v304
      %v438 = vunpack.c.l.b16 %v305
      %v439 = vunpack.c.l.b16 %v306
      %v440 = vunpack.c.l.b16 %v307
      %v441 = vunpack.c.l.b16 %v308
      %v442 = vunpack.c.l.b16 %v309
      %v443 = vunpack.c.l.b16 %v310
      %v444 = vunpack.c.l.b16 %v311
      %v445 = vunpack.c.l.b16 %v312
      %v446 = vunpack.c.l.b16 %v313
      %v447 = vunpack.c.l.b16 %v314
      %v448 = vunpack.c.l.b16 %v315
      %v449 = vunpack.c.l.b16 %v316
      %v450 = vunpack.c.l.b16 %v317
      %v451 = vunpack.c.l.b16 %v318
      %v452 = vunpack.c.l.b16 %v319
      %v453 = vunpack.c.l.b16 %v320
      %v454 = vunpack.c.l.b16 %v321
      %v455 = vunpack.c.l.b16 %v322
      %v456 = vunpack.c.l.b16 %v323
      %v457 = vunpack.c.l.b16 %v324
      %v458 = vunpack.c.l.b16 %v325
      %v459 = vunpack.c.l.b16 %v326
      %v460 = vunpack.c.l.b16 %v327
      %v461 = vunpack.c.l.b16 %v328
      %v462 = vunpack.c.l.b16 %v329
      %v463 = vunpack.c.l.b16 %v330
      %v464 = vunpack.c.l.b16 %v331
      %v465 = vunpack.c.l.b16 %v332
      %v466 = vunpack.c.l.b16 %v333
      %v467 = vunpack.c.l.b16 %v334
      %v468 = vunpack.c.l.b16 %v335
      %v469 = vunpack.c.l.b16 %v336
      %v470 = vunpack.c.l.b16 %v337
      %v471 = vunpack.c.l.b16 %v338
      %v472 = vpack.c.b16 %v413, %v412
      %v473 = vpack.c.b16 %v415, %v414
      %v474 = vpack.c.b16 %v417, %v416
      %v475 = vpack.c.b16 %v419, %v418
      %v476 = vpack.c.b16 %v421, %v420
      %v477 = vpack.c.b16 %v423, %v422
      %v478 = vpack.c.b16 %v425, %v424
      %v479 = vpack.c.b16 %v427, %v426
      %v480 = vpack.c.b16 %v429, %v428
      %v481 = vpack.c.b16 %v431, %v430
      %v482 = vpack.c.b16 %v433, %v432
      %v483 = vpack.c.b16 %v435, %v434
      %v484 = vpack.c.b16 %v437, %v436
      %v485 = vpack.c.b16 %v439, %v438
      %v486 = vpack.c.b16 %v441, %v440
      %v487 = vpack.c.b16 %v443, %v442
      %v488 = vpack.c.b16 %v445, %v444
      %v489 = vpack.c.b16 %v447, %v446
      %v490 = vpack.c.b16 %v449, %v448
      %v491 = vpack.c.b16 %v451, %v450
      %v492 = vpack.c.b16 %v453, %v452
      %v493 = vpack.c.b16 %v455, %v454
      %v494 = vpack.c.b16 %v457, %v456
      %v495 = vpack.c.b16 %v459, %v458
      %v496 = vpack.c.b16 %v461, %v460
      %v497 = vpack.c.b16 %v463, %v462
      %v498 = vpack.c.b16 %v465, %v464
      %v499 = vpack.c.b16 %v467, %v466
      %v500 = vpack.c.b16 %v469, %v468
      %v501 = vpack.c.b16 %v471, %v470
      %vm532 = vcmask 785408
      %v533 = vsel %vm532, %v348, 0
      %535 = vmatpush.bf16.msra.mxu0 %v479
      %536 = vmatpush.bf16.msra.mxu0 %v478
      %537 = vmatpush.bf16.msra.mxu0 %v477
      %538 = vmatpush.bf16.msra.mxu0 %v476
      %539 = vmatpush.bf16.msra.mxu0 %v475
      %540 = vmatpush.bf16.msra.mxu0 %v474
      %541 = vmatpush.bf16.msra.mxu0 %v473
      %542 = vmatpush.bf16.msra.mxu0 %v472
      %543 = vmatmul.bf16.gmra.mxu0 %v345
      %v544 = vpop.f32.mrf.mxu0
      %v545 = vadd.f32 %v341, %v544
      %v546 = vpop.f32.mrf.mxu0
      %547 = vdwg.mxu0
      %548 = vmatpush.bf16.msra.mxu0 %v487
      %549 = vmatpush.bf16.msra.mxu0 %v486
      %550 = vmatpush.bf16.msra.mxu0 %v485
      %551 = vmatpush.bf16.msra.mxu0 %v484
      %552 = vmatpush.bf16.msra.mxu0 %v483
      %553 = vmatpush.bf16.msra.mxu0 %v482
      %554 = vmatpush.bf16.msra.mxu0 %v481
      %555 = vmatpush.bf16.msra.mxu0 %v480
      %556 = vmatmul.bf16.gmra.mxu0 %v346
      %v557 = vpop.f32.mrf.mxu0
      %v558 = vadd.f32 %v545, %v557
      %v559 = vpop.f32.mrf.mxu0
      %560 = vdwg.mxu0
      %561 = vmatpush.bf16.msra.mxu0 %v495
      %562 = vmatpush.bf16.msra.mxu0 %v494
      %563 = vmatpush.bf16.msra.mxu0 %v493
      %564 = vmatpush.bf16.msra.mxu0 %v492
      %565 = vmatpush.bf16.msra.mxu0 %v491
      %566 = vmatpush.bf16.msra.mxu0 %v490
      %567 = vmatpush.bf16.msra.mxu0 %v489
      %568 = vmatpush.bf16.msra.mxu0 %v488
      %569 = vmatmul.bf16.gmra.mxu0 %v347
      %v570 = vpop.f32.mrf.mxu0
      %v571 = vadd.f32 %v558, %v570
      %v572 = vpop.f32.mrf.mxu0
      %573 = vdwg.mxu0
      %574 = vmatpush.bf16.msra.mxu0 0
      %575 = vmatpush.bf16.msra.mxu0 0
      %576 = vmatpush.bf16.msra.mxu0 %v501
      %577 = vmatpush.bf16.msra.mxu0 %v500
      %578 = vmatpush.bf16.msra.mxu0 %v499
      %579 = vmatpush.bf16.msra.mxu0 %v498
      %580 = vmatpush.bf16.msra.mxu0 %v497
      %581 = vmatpush.bf16.msra.mxu0 %v496
      %582 = vmatmul.bf16.gmra.mxu0 %v533
      %v583 = vpop.f32.mrf.mxu0
      %v584 = vadd.f32 %v571, %v583
      %v585 = vpop.f32.mrf.mxu0
      %586 = vdwg.mxu0
      %v587 = vmax.f32 %v584, 0.0
      %v588 = vld [vmem:[%s5] sm:$0xf]
      %v589 = vld [vmem:[%s5 + $0x4] sm:$0xf]
      %v590 = vld [vmem:[%s5 + $0x8] sm:$0xf]
      %v591 = vld [vmem:[%s5 + $0xc] sm:$0xf]
      %v592 = vld [vmem:[%s5 + $0x10] sm:$0xf]
      %v593 = vld [vmem:[%s5 + $0x14] sm:$0xf]
      %v594 = vld [vmem:[%s5 + $0x18] sm:$0xf]
      %v595 = vld [vmem:[%s5 + $0x1c] sm:$0xf]
      %v596 = vld [vmem:[%s5 + $0x20] sm:$0xf]
      %v597 = vld [vmem:[%s5 + $0x24] sm:$0xf]
      %v598 = vld [vmem:[%s5 + $0x28] sm:$0xf]
      %v599 = vld [vmem:[%s5 + $0x2c] sm:$0xf]
      %v600 = vld [vmem:[%s5 + $0x30] sm:$0xf]
      %v601 = vld [vmem:[%s5 + $0x34] sm:$0xf]
      %v602 = vld [vmem:[%s5 + $0x38] sm:$0xf]
      %v603 = vld [vmem:[%s5 + $0x3c] sm:$0xf]
      %v604 = vld [vmem:[%s5 + $0x40] sm:$0xf]
      %v605 = vld [vmem:[%s5 + $0x44] sm:$0xf]
      %v606 = vld [vmem:[%s5 + $0x48] sm:$0xf]
      %v607 = vld [vmem:[%s5 + $0x4c] sm:$0xf]
      %v608 = vld [vmem:[%s5 + $0x50] sm:$0xf]
      %v609 = vld [vmem:[%s5 + $0x54] sm:$0xf]
      %v610 = vld [vmem:[%s5 + $0x58] sm:$0xf]
      %v611 = vld [vmem:[%s5 + $0x5c] sm:$0xf]
      %v612 = vld [vmem:[%s5 + $0x60] sm:$0xf]
      %v613 = vld [vmem:[%s5 + $0x64] sm:$0xf]
      %v614 = vld [vmem:[%s5 + $0x68] sm:$0xf]
      %v615 = vld [vmem:[%s5 + $0x6c] sm:$0xf]
      %v616 = vld [vmem:[%s5 + $0x70] sm:$0xf]
      %v617 = vld [vmem:[%s5 + $0x74] sm:$0xf]
      %v618 = vld [vmem:[%s5 + $0x78] sm:$0xf]
      %v619 = vld [vmem:[%s5 + $0x7c] sm:$0xf]
      %v620 = vld [vmem:[%s5 + $0x80] sm:$0xf]
      %v621 = vld [vmem:[%s5 + $0x84] sm:$0xf]
      %v622 = vld [vmem:[%s5 + $0x88] sm:$0xf]
      %v623 = vld [vmem:[%s5 + $0x8c] sm:$0xf]
      %v624 = vld [vmem:[%s5 + $0x90] sm:$0xf]
      %v625 = vld [vmem:[%s5 + $0x94] sm:$0xf]
      %v626 = vld [vmem:[%s5 + $0x98] sm:$0xf]
      %v627 = vld [vmem:[%s5 + $0x9c] sm:$0xf]
      %v628 = vld [vmem:[%s5 + $0xa0] sm:$0xf]
      %v629 = vld [vmem:[%s5 + $0xa4] sm:$0xf]
      %v630 = vld [vmem:[%s5 + $0xa8] sm:$0xf]
      %v631 = vld [vmem:[%s5 + $0xac] sm:$0xf]
      %v632 = vld [vmem:[%s5 + $0xb0] sm:$0xf]
      %v633 = vld [vmem:[%s5 + $0xb4] sm:$0xf]
      %v634 = vld [vmem:[%s5 + $0xb8] sm:$0xf]
      %v635 = vld [vmem:[%s5 + $0xbc] sm:$0xf]
      %v636 = vld [vmem:[%s5 + $0xc0] sm:$0xf]
      %v637 = vld [vmem:[%s5 + $0xc4] sm:$0xf]
      %v638 = vld [vmem:[%s5 + $0xc8] sm:$0xf]
      %v639 = vld [vmem:[%s5 + $0xcc] sm:$0xf]
      %v640 = vld [vmem:[%s5 + $0xd0] sm:$0xf]
      %v641 = vld [vmem:[%s5 + $0xd4] sm:$0xf]
      %v642 = vld [vmem:[%s5 + $0xd8] sm:$0xf]
      %v643 = vld [vmem:[%s5 + $0xdc] sm:$0xf]
      %v644 = vld [vmem:[%s5 + $0xe0] sm:$0xf]
      %v645 = vld [vmem:[%s5 + $0xe4] sm:$0xf]
      %v646 = vld [vmem:[%s5 + $0xe8] sm:$0xf]
      %v647 = vld [vmem:[%s5 + $0xec] sm:$0xf]
      %v648 = vld [vmem:[%s6] sm:$0x1]
      %v650 = vperm.slane %v648, 0
      %652 = vst [vmem:[#allocation1] ss:$4 sm:$0xff] %v278
      %v653 = vld.sshfl [vmem:[#allocation1] sm:$0xff pattern:$0x73625140]
      %v654 = vld.sshfl [vmem:[#allocation1 + $0x8] sm:$0xff pattern:$0x73625140]
      %v655 = vld.sshfl [vmem:[#allocation1 + $0x10] sm:$0xff pattern:$0x73625140]
      %v656 = vld.sshfl [vmem:[#allocation1 + $0x18] sm:$0xff pattern:$0x73625140]
      %v720 = vunpack.c.l.b16 %v588
      %v721 = vunpack.c.l.b16 %v589
      %v722 = vunpack.c.l.b16 %v590
      %v723 = vunpack.c.l.b16 %v591
      %v724 = vunpack.c.l.b16 %v592
      %v725 = vunpack.c.l.b16 %v593
      %v726 = vunpack.c.l.b16 %v594
      %v727 = vunpack.c.l.b16 %v595
      %v728 = vunpack.c.l.b16 %v596
      %v729 = vunpack.c.l.b16 %v597
      %v730 = vunpack.c.l.b16 %v598
      %v731 = vunpack.c.l.b16 %v599
      %v732 = vunpack.c.l.b16 %v600
      %v733 = vunpack.c.l.b16 %v601
      %v734 = vunpack.c.l.b16 %v602
      %v735 = vunpack.c.l.b16 %v603
      %v736 = vunpack.c.l.b16 %v604
      %v737 = vunpack.c.l.b16 %v605
      %v738 = vunpack.c.l.b16 %v606
      %v739 = vunpack.c.l.b16 %v607
      %v740 = vunpack.c.l.b16 %v608
      %v741 = vunpack.c.l.b16 %v609
      %v742 = vunpack.c.l.b16 %v610
      %v743 = vunpack.c.l.b16 %v611
      %v744 = vunpack.c.l.b16 %v612
      %v745 = vunpack.c.l.b16 %v613
      %v746 = vunpack.c.l.b16 %v614
      %v747 = vunpack.c.l.b16 %v615
      %v748 = vunpack.c.l.b16 %v616
      %v749 = vunpack.c.l.b16 %v617
      %v750 = vunpack.c.l.b16 %v618
      %v751 = vunpack.c.l.b16 %v619
      %v752 = vunpack.c.l.b16 %v620
      %v753 = vunpack.c.l.b16 %v621
      %v754 = vunpack.c.l.b16 %v622
      %v755 = vunpack.c.l.b16 %v623
      %v756 = vunpack.c.l.b16 %v624
      %v757 = vunpack.c.l.b16 %v625
      %v758 = vunpack.c.l.b16 %v626
      %v759 = vunpack.c.l.b16 %v627
      %v760 = vunpack.c.l.b16 %v628
      %v761 = vunpack.c.l.b16 %v629
      %v762 = vunpack.c.l.b16 %v630
      %v763 = vunpack.c.l.b16 %v631
      %v764 = vunpack.c.l.b16 %v632
      %v765 = vunpack.c.l.b16 %v633
      %v766 = vunpack.c.l.b16 %v634
      %v767 = vunpack.c.l.b16 %v635
      %v768 = vunpack.c.l.b16 %v636
      %v769 = vunpack.c.l.b16 %v637
      %v770 = vunpack.c.l.b16 %v638
      %v771 = vunpack.c.l.b16 %v639
      %v772 = vunpack.c.l.b16 %v640
      %v773 = vunpack.c.l.b16 %v641
      %v774 = vunpack.c.l.b16 %v642
      %v775 = vunpack.c.l.b16 %v643
      %v776 = vunpack.c.l.b16 %v644
      %v777 = vunpack.c.l.b16 %v645
      %v778 = vunpack.c.l.b16 %v646
      %v779 = vunpack.c.l.b16 %v647
      %v780 = vpack.c.b16 %v721, %v720
      %v781 = vpack.c.b16 %v723, %v722
      %v782 = vpack.c.b16 %v725, %v724
      %v783 = vpack.c.b16 %v727, %v726
      %v784 = vpack.c.b16 %v729, %v728
      %v785 = vpack.c.b16 %v731, %v730
      %v786 = vpack.c.b16 %v733, %v732
      %v787 = vpack.c.b16 %v735, %v734
      %v788 = vpack.c.b16 %v737, %v736
      %v789 = vpack.c.b16 %v739, %v738
      %v790 = vpack.c.b16 %v741, %v740
      %v791 = vpack.c.b16 %v743, %v742
      %v792 = vpack.c.b16 %v745, %v744
      %v793 = vpack.c.b16 %v747, %v746
      %v794 = vpack.c.b16 %v749, %v748
      %v795 = vpack.c.b16 %v751, %v750
      %v796 = vpack.c.b16 %v753, %v752
      %v797 = vpack.c.b16 %v755, %v754
      %v798 = vpack.c.b16 %v757, %v756
      %v799 = vpack.c.b16 %v759, %v758
      %v800 = vpack.c.b16 %v761, %v760
      %v801 = vpack.c.b16 %v763, %v762
      %v802 = vpack.c.b16 %v765, %v764
      %v803 = vpack.c.b16 %v767, %v766
      %v804 = vpack.c.b16 %v769, %v768
      %v805 = vpack.c.b16 %v771, %v770
      %v806 = vpack.c.b16 %v773, %v772
      %v807 = vpack.c.b16 %v775, %v774
      %v808 = vpack.c.b16 %v777, %v776
      %v809 = vpack.c.b16 %v779, %v778
      %v840 = vsel %vm532, %v656, 0
      %842 = vmatpush.bf16.msra.mxu0 %v787
      %843 = vmatpush.bf16.msra.mxu0 %v786
      %844 = vmatpush.bf16.msra.mxu0 %v785
      %845 = vmatpush.bf16.msra.mxu0 %v784
      %846 = vmatpush.bf16.msra.mxu0 %v783
      %847 = vmatpush.bf16.msra.mxu0 %v782
      %848 = vmatpush.bf16.msra.mxu0 %v781
      %849 = vmatpush.bf16.msra.mxu0 %v780
      %850 = vmatmul.bf16.gmra.mxu0 %v653
      %v851 = vpop.f32.mrf.mxu0
      %v852 = vadd.f32 %v650, %v851
      %v853 = vpop.f32.mrf.mxu0
      %854 = vdwg.mxu0
      %855 = vmatpush.bf16.msra.mxu0 %v795
      %856 = vmatpush.bf16.msra.mxu0 %v794
      %857 = vmatpush.bf16.msra.mxu0 %v793
      %858 = vmatpush.bf16.msra.mxu0 %v792
      %859 = vmatpush.bf16.msra.mxu0 %v791
      %860 = vmatpush.bf16.msra.mxu0 %v790
      %861 = vmatpush.bf16.msra.mxu0 %v789
      %862 = vmatpush.bf16.msra.mxu0 %v788
      %863 = vmatmul.bf16.gmra.mxu0 %v654
      %v864 = vpop.f32.mrf.mxu0
      %v865 = vadd.f32 %v852, %v864
      %v866 = vpop.f32.mrf.mxu0
      %867 = vdwg.mxu0
      %868 = vmatpush.bf16.msra.mxu0 %v803
      %869 = vmatpush.bf16.msra.mxu0 %v802
      %870 = vmatpush.bf16.msra.mxu0 %v801
      %871 = vmatpush.bf16.msra.mxu0 %v800
      %872 = vmatpush.bf16.msra.mxu0 %v799
      %873 = vmatpush.bf16.msra.mxu0 %v798
      %874 = vmatpush.bf16.msra.mxu0 %v797
      %875 = vmatpush.bf16.msra.mxu0 %v796
      %876 = vmatmul.bf16.gmra.mxu0 %v655
      %v877 = vpop.f32.mrf.mxu0
      %v878 = vadd.f32 %v865, %v877
      %v879 = vpop.f32.mrf.mxu0
      %880 = vdwg.mxu0
      %881 = vmatpush.bf16.msra.mxu0 0
      %882 = vmatpush.bf16.msra.mxu0 0
      %883 = vmatpush.bf16.msra.mxu0 %v809
      %884 = vmatpush.bf16.msra.mxu0 %v808
      %885 = vmatpush.bf16.msra.mxu0 %v807
      %886 = vmatpush.bf16.msra.mxu0 %v806
      %887 = vmatpush.bf16.msra.mxu0 %v805
      %888 = vmatpush.bf16.msra.mxu0 %v804
      %889 = vmatmul.bf16.gmra.mxu0 %v840
      %v890 = vpop.f32.mrf.mxu0
      %v891 = vadd.f32 %v878, %v890
      %v892 = vpop.f32.mrf.mxu0
      %893 = vdwg.mxu0
      %894 = vst [vmem:[#allocation2] sm:$0x3f] 0.0
      %895 = vst [vmem:[#allocation2 + $0x1] sm:$0xf] %v587
      %v896 = vld [vmem:[%s4] sm:$0x1]
      %v898 = vperm.slane %v896, 0
      %v900 = vadd.f32 %v891, %v898
      %v901 = vld [vmem:[#allocation2] sm:$0xf]
      %v902 = vpack.c.bf16 %v901, %v901
      %v903 = vld [vmem:[%s3] sm:$0xf]
      %v904 = vld [vmem:[%s3 + $0x4] sm:$0xf]
      %v905 = vld [vmem:[%s3 + $0x8] sm:$0xf]
      %v906 = vld [vmem:[%s3 + $0xc] sm:$0xf]
      %v907 = vld [vmem:[%s3 + $0x10] sm:$0xf]
      %v908 = vld [vmem:[%s3 + $0x14] sm:$0xf]
      %v909 = vld [vmem:[%s3 + $0x18] sm:$0xf]
      %v910 = vld [vmem:[%s3 + $0x1c] sm:$0xf]
      %v911 = vld [vmem:[%s3 + $0x20] sm:$0xf]
      %v912 = vld [vmem:[%s3 + $0x24] sm:$0xf]
      %v913 = vld [vmem:[%s3 + $0x28] sm:$0xf]
      %v914 = vld [vmem:[%s3 + $0x2c] sm:$0xf]
      %v915 = vld [vmem:[%s3 + $0x30] sm:$0xf]
      %v916 = vld [vmem:[%s3 + $0x34] sm:$0xf]
      %v917 = vld [vmem:[%s3 + $0x38] sm:$0xf]
      %v918 = vld [vmem:[%s3 + $0x3c] sm:$0xf]
      %v935 = vunpack.c.l.b16 %v903
      %v936 = vunpack.c.l.b16 %v904
      %v937 = vunpack.c.l.b16 %v905
      %v938 = vunpack.c.l.b16 %v906
      %v939 = vunpack.c.l.b16 %v907
      %v940 = vunpack.c.l.b16 %v908
      %v941 = vunpack.c.l.b16 %v909
      %v942 = vunpack.c.l.b16 %v910
      %v943 = vunpack.c.l.b16 %v911
      %v944 = vunpack.c.l.b16 %v912
      %v945 = vunpack.c.l.b16 %v913
      %v946 = vunpack.c.l.b16 %v914
      %v947 = vunpack.c.l.b16 %v915
      %v948 = vunpack.c.l.b16 %v916
      %v949 = vunpack.c.l.b16 %v917
      %v950 = vunpack.c.l.b16 %v918
      %v951 = vpack.c.b16 %v936, %v935
      %v952 = vpack.c.b16 %v938, %v937
      %v953 = vpack.c.b16 %v940, %v939
      %v954 = vpack.c.b16 %v942, %v941
      %v955 = vpack.c.b16 %v944, %v943
      %v956 = vpack.c.b16 %v946, %v945
      %v957 = vpack.c.b16 %v948, %v947
      %v958 = vpack.c.b16 %v950, %v949
      %967 = vmatpush.bf16.msra.mxu0 %v958
      %968 = vmatpush.bf16.msra.mxu0 %v957
      %969 = vmatpush.bf16.msra.mxu0 %v956
      %970 = vmatpush.bf16.msra.mxu0 %v955
      %971 = vmatpush.bf16.msra.mxu0 %v954
      %972 = vmatpush.bf16.msra.mxu0 %v953
      %973 = vmatpush.bf16.msra.mxu0 %v952
      %974 = vmatpush.bf16.msra.mxu0 %v951
      %975 = vmatmul.bf16.gmra.mxu0 %v902
      %v976 = vpop.f32.mrf.mxu0
      %v977 = vadd.f32 0.0, %v976
      %v978 = vpop.f32.mrf.mxu0
      %979 = vdwg.mxu0
      %v980 = vadd.f32 %v900, %v977
      %v981 = vld [vmem:[#allocation2 + $0x1] sm:$0xf]
      %v982 = vpack.c.bf16 %v981, %v981
      %v983 = vld [vmem:[%s3 + $0x40] sm:$0xf]
      %v984 = vld [vmem:[%s3 + $0x44] sm:$0xf]
      %v985 = vld [vmem:[%s3 + $0x48] sm:$0xf]
      %v986 = vld [vmem:[%s3 + $0x4c] sm:$0xf]
      %v987 = vld [vmem:[%s3 + $0x50] sm:$0xf]
      %v988 = vld [vmem:[%s3 + $0x54] sm:$0xf]
      %v989 = vld [vmem:[%s3 + $0x58] sm:$0xf]
      %v990 = vld [vmem:[%s3 + $0x5c] sm:$0xf]
      %v991 = vld [vmem:[%s3 + $0x60] sm:$0xf]
      %v992 = vld [vmem:[%s3 + $0x64] sm:$0xf]
      %v993 = vld [vmem:[%s3 + $0x68] sm:$0xf]
      %v994 = vld [vmem:[%s3 + $0x6c] sm:$0xf]
      %v995 = vld [vmem:[%s3 + $0x70] sm:$0xf]
      %v996 = vld [vmem:[%s3 + $0x74] sm:$0xf]
      %v997 = vld [vmem:[%s3 + $0x78] sm:$0xf]
      %v998 = vld [vmem:[%s3 + $0x7c] sm:$0xf]
      %v1015 = vunpack.c.l.b16 %v983
      %v1016 = vunpack.c.l.b16 %v984
      %v1017 = vunpack.c.l.b16 %v985
      %v1018 = vunpack.c.l.b16 %v986
      %v1019 = vunpack.c.l.b16 %v987
      %v1020 = vunpack.c.l.b16 %v988
      %v1021 = vunpack.c.l.b16 %v989
      %v1022 = vunpack.c.l.b16 %v990
      %v1023 = vunpack.c.l.b16 %v991
      %v1024 = vunpack.c.l.b16 %v992
      %v1025 = vunpack.c.l.b16 %v993
      %v1026 = vunpack.c.l.b16 %v994
      %v1027 = vunpack.c.l.b16 %v995
      %v1028 = vunpack.c.l.b16 %v996
      %v1029 = vunpack.c.l.b16 %v997
      %v1030 = vunpack.c.l.b16 %v998
      %v1031 = vpack.c.b16 %v1016, %v1015
      %v1032 = vpack.c.b16 %v1018, %v1017
      %v1033 = vpack.c.b16 %v1020, %v1019
      %v1034 = vpack.c.b16 %v1022, %v1021
      %v1035 = vpack.c.b16 %v1024, %v1023
      %v1036 = vpack.c.b16 %v1026, %v1025
      %v1037 = vpack.c.b16 %v1028, %v1027
      %v1038 = vpack.c.b16 %v1030, %v1029
      %1047 = vmatpush.bf16.msra.mxu0 %v1038
      %1048 = vmatpush.bf16.msra.mxu0 %v1037
      %1049 = vmatpush.bf16.msra.mxu0 %v1036
      %1050 = vmatpush.bf16.msra.mxu0 %v1035
      %1051 = vmatpush.bf16.msra.mxu0 %v1034
      %1052 = vmatpush.bf16.msra.mxu0 %v1033
      %1053 = vmatpush.bf16.msra.mxu0 %v1032
      %1054 = vmatpush.bf16.msra.mxu0 %v1031
      %1055 = vmatmul.bf16.gmra.mxu0 %v982
      %v1056 = vpop.f32.mrf.mxu0
      %v1057 = vadd.f32 0.0, %v1056
      %v1058 = vpop.f32.mrf.mxu0
      %1059 = vdwg.mxu0
      %v1060 = vadd.f32 %v980, %v1057
      %v1061 = vld [vmem:[#allocation2 + $0x2] sm:$0xf]
      %v1062 = vpack.c.bf16 %v1061, %v1061
      %v1063 = vld [vmem:[%s3 + $0x80] sm:$0xf]
      %v1064 = vld [vmem:[%s3 + $0x84] sm:$0xf]
      %v1065 = vld [vmem:[%s3 + $0x88] sm:$0xf]
      %v1066 = vld [vmem:[%s3 + $0x8c] sm:$0xf]
      %v1067 = vld [vmem:[%s3 + $0x90] sm:$0xf]
      %v1068 = vld [vmem:[%s3 + $0x94] sm:$0xf]
      %v1069 = vld [vmem:[%s3 + $0x98] sm:$0xf]
      %v1070 = vld [vmem:[%s3 + $0x9c] sm:$0xf]
      %v1071 = vld [vmem:[%s3 + $0xa0] sm:$0xf]
      %v1072 = vld [vmem:[%s3 + $0xa4] sm:$0xf]
      %v1073 = vld [vmem:[%s3 + $0xa8] sm:$0xf]
      %v1074 = vld [vmem:[%s3 + $0xac] sm:$0xf]
      %v1075 = vld [vmem:[%s3 + $0xb0] sm:$0xf]
      %v1076 = vld [vmem:[%s3 + $0xb4] sm:$0xf]
      %v1077 = vld [vmem:[%s3 + $0xb8] sm:$0xf]
      %v1078 = vld [vmem:[%s3 + $0xbc] sm:$0xf]
      %v1095 = vunpack.c.l.b16 %v1063
      %v1096 = vunpack.c.l.b16 %v1064
      %v1097 = vunpack.c.l.b16 %v1065
      %v1098 = vunpack.c.l.b16 %v1066
      %v1099 = vunpack.c.l.b16 %v1067
      %v1100 = vunpack.c.l.b16 %v1068
      %v1101 = vunpack.c.l.b16 %v1069
      %v1102 = vunpack.c.l.b16 %v1070
      %v1103 = vunpack.c.l.b16 %v1071
      %v1104 = vunpack.c.l.b16 %v1072
      %v1105 = vunpack.c.l.b16 %v1073
      %v1106 = vunpack.c.l.b16 %v1074
      %v1107 = vunpack.c.l.b16 %v1075
      %v1108 = vunpack.c.l.b16 %v1076
      %v1109 = vunpack.c.l.b16 %v1077
      %v1110 = vunpack.c.l.b16 %v1078
      %v1111 = vpack.c.b16 %v1096, %v1095
      %v1112 = vpack.c.b16 %v1098, %v1097
      %v1113 = vpack.c.b16 %v1100, %v1099
      %v1114 = vpack.c.b16 %v1102, %v1101
      %v1115 = vpack.c.b16 %v1104, %v1103
      %v1116 = vpack.c.b16 %v1106, %v1105
      %v1117 = vpack.c.b16 %v1108, %v1107
      %v1118 = vpack.c.b16 %v1110, %v1109
      %1127 = vmatpush.bf16.msra.mxu0 %v1118
      %1128 = vmatpush.bf16.msra.mxu0 %v1117
      %1129 = vmatpush.bf16.msra.mxu0 %v1116
      %1130 = vmatpush.bf16.msra.mxu0 %v1115
      %1131 = vmatpush.bf16.msra.mxu0 %v1114
      %1132 = vmatpush.bf16.msra.mxu0 %v1113
      %1133 = vmatpush.bf16.msra.mxu0 %v1112
      %1134 = vmatpush.bf16.msra.mxu0 %v1111
      %1135 = vmatmul.bf16.gmra.mxu0 %v1062
      %v1136 = vpop.f32.mrf.mxu0
      %v1137 = vadd.f32 0.0, %v1136
      %v1138 = vpop.f32.mrf.mxu0
      %1139 = vdwg.mxu0
      %v1140 = vadd.f32 %v1060, %v1137
      %v1141 = vmax.f32 %v1140, 0.0
      %v1142 = vpack.c.bf16 %v1141, %v1141
      %1143 = vst [vmem:[%s276] sm:$0x3] %v1142
      %p1144 = scmp.lt.s32.totalorder %s18, 1
      %s1145 = scalar_select %p1144, %s18, 1
      %s1146 = smul.addr %s1145, 2
      %s1147 = scalar_lea.vmem %s7, %s1146
      // Predicated region
      $region49: #{conv5_extractor.15} parent=47 // pred_check
        %p1148 = pneg %p188
      $region50: #{conv5_extractor.15} parent=47 // pred_check_branch
        %1150 = sbr.rel (%p1148) target = $region52
      $region51: #{conv5_extractor.15} parent=47 // pred_region
        _
      $region52: #{conv5_extractor.15} parent=47 // pred_fallthru
        _
    $region48: #{conv5_extractor.15} parent=5 // pred_fallthru
      _
    %p1151 = scmp.le.s32.totalorder 2, %s13
    // Predicated region
    $region53: #{conv5_extractor.15} parent=5 // pred_check
      %p1152 = pneg %p1151
    $region54: #{conv5_extractor.15} parent=5 // pred_check_branch
      %1154 = sbr.rel (%p1152) target = $region56
    $region55: #{conv5_extractor.15} parent=5 // pred_region
      %s1155 = ssub.s32 %s13, 2
      // Predicated region
      $region57: #{conv5_extractor.15} parent=55 // pred_check
        %p1156 = pneg %p194
      $region58: #{conv5_extractor.15} parent=55 // pred_check_branch
        %1158 = sbr.rel (%p1156) target = $region60
      $region59: #{conv5_extractor.15} parent=55 // pred_region
        %p1159 = scmp.lt.s32.totalorder %s19, 1
        %s1160 = scalar_select %p1159, %s19, 1
        %s1161 = smul.addr %s1160, 2
        %s1162 = scalar_lea.vmem %s7, %s1161
      $region60: #{conv5_extractor.15} parent=55 // pred_fallthru
        _
    $region56: #{conv5_extractor.15} parent=5 // pred_fallthru
      _
  $region6: #{conv5_extractor.15} parent=0 // loop_footer
    %s17 = sadd.s32 1, %s13
  $region7: #{conv5_extractor.15} parent=0 // loop_footer_branch
    %12 = sbr.rel target = $region3
  $region8: #{conv5_extractor.15} parent=0 // loop_exit
    _

// kernel: conv5_extractor.16
$region0: #{conv5_extractor.16}
  #allocation0 [shape = 'u32[]', space=smem, size = 0x4, offset = 0x4, fixed_abs, tag = 'smem constant byte address 0x4 - core index']
  #allocation1 [shape = 'u32[72,128]{1,0:T(1,128)}', space=vmem, size = 0x9000, scoped, tag = 'internal scratch']
  #allocation2 [shape = 'f32[6,128]{1,0:T(8,128)}', space=vmem, size = 0x1000, scoped, tag = 'scratch operand']
  %s0 = inlined_call_operand.vmem [shape: bf16[2,4,576], index: 0, kind: input, shape index: {}]
  %s1 = inlined_call_operand.vmem [shape: bf16[576,128], index: 1, kind: input, shape index: {}]
  %s2 = inlined_call_operand.vmem [shape: f32[1,128], index: 2, kind: input, shape index: {}]
  %s3 = inlined_call_operand.vmem [shape: bf16[384,128], index: 3, kind: input, shape index: {}]
  %s4 = inlined_call_operand.vmem [shape: f32[1,128], index: 4, kind: input, shape index: {}]
  %s5 = inlined_call_operand.vmem [shape: bf16[2,4,128], index: 5, kind: input, shape index: {}]
  %s6 = inlined_call_operand.vmem [shape: bf16[2,4,128], index: 6, kind: output, shape index: {}]
  %s7 = sld [smem:[#allocation0]]
  $region57: #{conv5_extractor.16} parent=0
    _
  %s9 = ssub.s32 1, %s7
  %s10 = scalar_select 0, %s9, %s7
  loop: start=0, step=1, limit=4
  $region2: #{conv5_extractor.16} parent=0 // loop_pre_header
    _
  $region3: #{conv5_extractor.16} parent=0 // loop_header
    %s12 = sphi 0, %s16
    %p13 = scmp.ge.s32.totalorder %s12, 4
    %s22 = sphi 0, %s24
    %s25 = sphi 0, %s22
    %s26 = sphi 0, %s25
    %s42 = sphi 0, %s26
    %s46 = sphi 0, %s46
    %s48 = sphi 0, %s46
    %s49 = sphi 0, %s48
    %s63 = sphi 0, %s49
    %s67 = sphi 0, %s67
    %s69 = sphi 0, %s67
    %s70 = sphi 0, %s69
    %s84 = sphi 0, %s70
    %s88 = sphi 0, %s88
    %s90 = sphi 0, %s88
    %s91 = sphi 0, %s90
    %s105 = sphi 0, %s91
    %s109 = sphi 0, %s109
    %s111 = sphi 0, %s109
    %s112 = sphi 0, %s111
    %s126 = sphi 0, %s112
    %s132 = sphi 0, %s134
    %s135 = sphi 0, %s132
    %s136 = sphi 0, %s135
    %s152 = sphi 0, %s136
    %s158 = sphi 0, %s160
    %s161 = sphi 0, %s158
    %s162 = sphi 0, %s161
    %s178 = sphi 0, %s162
  $region4: #{conv5_extractor.16} parent=0 // loop_header_branch
    %15 = sbr.rel (%p13) target = $region8
  $region5: #{conv5_extractor.16} parent=0 // loop_body
    %s17 = ssub.s32 %s12, 1
    %s18 = ssub.s32 %s12, 2
    %s19 = sadd.s32 %s12, 1
    %s20 = ssub.s32 %s12, %s19
    %p21 = scmp.eq.s32.totalorder %s20, 0
    %s23 = sadd.s32 %s22, 1
    %s24 = scalar_select %p21, %s22, %s23
    %p27 = pneg %p21
    %p28 = scmp.eq.s32.totalorder %s12, 1
    %p29 = por %p27, %p28
    %p30 = scmp.ne.s32.totalorder %s22, %s25
    %p31 = scmp.eq.s32.totalorder %s12, 0
    %p32 = por %p30, %p31
    %p33 = scmp.ne.s32.totalorder %s22, %s25
    %p34 = scmp.eq.s32.totalorder %s17, 1
    %p35 = por %p33, %p34
    %p36 = scmp.ne.s32.totalorder %s25, %s26
    %p37 = scmp.eq.s32.totalorder %s17, 0
    %p38 = por %p36, %p37
    %p39 = scmp.ne.s32.totalorder %s25, %s26
    %p40 = scmp.eq.s32.totalorder %s18, 1
    %p41 = por %p39, %p40
    %p43 = scmp.ne.s32.totalorder %s26, %s42
    %p44 = scmp.eq.s32.totalorder %s18, 0
    %p45 = por %p43, %p44
    %s47 = sadd.s32 %s46, 1
    %p50 = scmp.eq.s32.totalorder %s12, 1
    %p51 = scmp.ne.s32.totalorder %s46, %s48
    %p52 = scmp.eq.s32.totalorder %s12, 0
    %p53 = por %p51, %p52
    %p54 = scmp.ne.s32.totalorder %s46, %s48
    %p55 = scmp.eq.s32.totalorder %s17, 1
    %p56 = por %p54, %p55
    %p57 = scmp.ne.s32.totalorder %s48, %s49
    %p58 = scmp.eq.s32.totalorder %s17, 0
    %p59 = por %p57, %p58
    %p60 = scmp.ne.s32.totalorder %s48, %s49
    %p61 = scmp.eq.s32.totalorder %s18, 1
    %p62 = por %p60, %p61
    %p64 = scmp.ne.s32.totalorder %s49, %s63
    %p65 = scmp.eq.s32.totalorder %s18, 0
    %p66 = por %p64, %p65
    %s68 = sadd.s32 %s67, 1
    %p71 = scmp.eq.s32.totalorder %s12, 1
    %p72 = scmp.ne.s32.totalorder %s67, %s69
    %p73 = scmp.eq.s32.totalorder %s12, 0
    %p74 = por %p72, %p73
    %p75 = scmp.ne.s32.totalorder %s67, %s69
    %p76 = scmp.eq.s32.totalorder %s17, 1
    %p77 = por %p75, %p76
    %p78 = scmp.ne.s32.totalorder %s69, %s70
    %p79 = scmp.eq.s32.totalorder %s17, 0
    %p80 = por %p78, %p79
    %p81 = scmp.ne.s32.totalorder %s69, %s70
    %p82 = scmp.eq.s32.totalorder %s18, 1
    %p83 = por %p81, %p82
    %p85 = scmp.ne.s32.totalorder %s70, %s84
    %p86 = scmp.eq.s32.totalorder %s18, 0
    %p87 = por %p85, %p86
    %s89 = sadd.s32 %s88, 1
    %p92 = scmp.eq.s32.totalorder %s12, 1
    %p93 = scmp.ne.s32.totalorder %s88, %s90
    %p94 = scmp.eq.s32.totalorder %s12, 0
    %p95 = por %p93, %p94
    %p96 = scmp.ne.s32.totalorder %s88, %s90
    %p97 = scmp.eq.s32.totalorder %s17, 1
    %p98 = por %p96, %p97
    %p99 = scmp.ne.s32.totalorder %s90, %s91
    %p100 = scmp.eq.s32.totalorder %s17, 0
    %p101 = por %p99, %p100
    %p102 = scmp.ne.s32.totalorder %s90, %s91
    %p103 = scmp.eq.s32.totalorder %s18, 1
    %p104 = por %p102, %p103
    %p106 = scmp.ne.s32.totalorder %s91, %s105
    %p107 = scmp.eq.s32.totalorder %s18, 0
    %p108 = por %p106, %p107
    %s110 = sadd.s32 %s109, 1
    %p113 = scmp.eq.s32.totalorder %s12, 1
    %p114 = scmp.ne.s32.totalorder %s109, %s111
    %p115 = scmp.eq.s32.totalorder %s12, 0
    %p116 = por %p114, %p115
    %p117 = scmp.ne.s32.totalorder %s109, %s111
    %p118 = scmp.eq.s32.totalorder %s17, 1
    %p119 = por %p117, %p118
    %p120 = scmp.ne.s32.totalorder %s111, %s112
    %p121 = scmp.eq.s32.totalorder %s17, 0
    %p122 = por %p120, %p121
    %p123 = scmp.ne.s32.totalorder %s111, %s112
    %p124 = scmp.eq.s32.totalorder %s18, 1
    %p125 = por %p123, %p124
    %p127 = scmp.ne.s32.totalorder %s112, %s126
    %p128 = scmp.eq.s32.totalorder %s18, 0
    %p129 = por %p127, %p128
    %s130 = ssub.s32 %s12, %s19
    %p131 = scmp.eq.s32.totalorder %s130, 0
    %s133 = sadd.s32 %s132, 1
    %s134 = scalar_select %p131, %s132, %s133
    %p137 = pneg %p131
    %p138 = scmp.eq.s32.totalorder %s12, 1
    %p139 = por %p137, %p138
    %p140 = scmp.ne.s32.totalorder %s132, %s135
    %p141 = scmp.eq.s32.totalorder %s12, 0
    %p142 = por %p140, %p141
    %p143 = scmp.ne.s32.totalorder %s132, %s135
    %p144 = scmp.eq.s32.totalorder %s17, 1
    %p145 = por %p143, %p144
    %p146 = scmp.ne.s32.totalorder %s135, %s136
    %p147 = scmp.eq.s32.totalorder %s17, 0
    %p148 = por %p146, %p147
    %p149 = scmp.ne.s32.totalorder %s135, %s136
    %p150 = scmp.eq.s32.totalorder %s18, 1
    %p151 = por %p149, %p150
    %p153 = scmp.ne.s32.totalorder %s136, %s152
    %p154 = scmp.eq.s32.totalorder %s18, 0
    %p155 = por %p153, %p154
    %s156 = ssub.s32 %s12, %s19
    %p157 = scmp.eq.s32.totalorder %s156, 0
    %s159 = sadd.s32 %s158, 1
    %s160 = scalar_select %p157, %s158, %s159
    %p163 = pneg %p157
    %p164 = scmp.eq.s32.totalorder %s12, 1
    %p165 = por %p163, %p164
    %p166 = scmp.ne.s32.totalorder %s158, %s161
    %p167 = scmp.eq.s32.totalorder %s12, 0
    %p168 = por %p166, %p167
    %p169 = scmp.ne.s32.totalorder %s158, %s161
    %p170 = scmp.eq.s32.totalorder %s17, 1
    %p171 = por %p169, %p170
    %p172 = scmp.ne.s32.totalorder %s161, %s162
    %p173 = scmp.eq.s32.totalorder %s17, 0
    %p174 = por %p172, %p173
    %p175 = scmp.ne.s32.totalorder %s161, %s162
    %p176 = scmp.eq.s32.totalorder %s18, 1
    %p177 = por %p175, %p176
    %p179 = scmp.ne.s32.totalorder %s162, %s178
    %p180 = scmp.eq.s32.totalorder %s18, 0
    %p181 = por %p179, %p180
    %p182 = scmp.le.s32.totalorder 1, %s12
    %p183 = scmp.lt.s32.totalorder %s12, 3
    %p184 = pnand %p182, %p183
    %p185 = pneg %p184
    // Predicated region
    $region9: #{conv5_extractor.16} parent=5 // pred_check
      _
    $region10: #{conv5_extractor.16} parent=5 // pred_check_branch
      %187 = sbr.rel (%p184) target = $region12
    $region11: #{conv5_extractor.16} parent=5 // pred_region
      %s188 = ssub.s32 %s12, 1
      // Predicated region
      $region13: #{conv5_extractor.16} parent=11 // pred_check
        %p189 = pneg %p59
      $region14: #{conv5_extractor.16} parent=11 // pred_check_branch
        %191 = sbr.rel (%p189) target = $region16
      $region15: #{conv5_extractor.16} parent=11 // pred_region
        _
      $region16: #{conv5_extractor.16} parent=11 // pred_fallthru
        _
      // Predicated region
      $region17: #{conv5_extractor.16} parent=11 // pred_check
        %p192 = pneg %p80
      $region18: #{conv5_extractor.16} parent=11 // pred_check_branch
        %194 = sbr.rel (%p192) target = $region20
      $region19: #{conv5_extractor.16} parent=11 // pred_region
        _
      $region20: #{conv5_extractor.16} parent=11 // pred_fallthru
        _
      // Predicated region
      $region21: #{conv5_extractor.16} parent=11 // pred_check
        %p195 = pneg %p101
      $region22: #{conv5_extractor.16} parent=11 // pred_check_branch
        %197 = sbr.rel (%p195) target = $region24
      $region23: #{conv5_extractor.16} parent=11 // pred_region
        _
      $region24: #{conv5_extractor.16} parent=11 // pred_fallthru
        _
      // Predicated region
      $region25: #{conv5_extractor.16} parent=11 // pred_check
        %p198 = pneg %p122
      $region26: #{conv5_extractor.16} parent=11 // pred_check_branch
        %200 = sbr.rel (%p198) target = $region28
      $region27: #{conv5_extractor.16} parent=11 // pred_region
        _
      $region28: #{conv5_extractor.16} parent=11 // pred_fallthru
        _
    $region12: #{conv5_extractor.16} parent=5 // pred_fallthru
      _
    %p201 = scmp.lt.s32.totalorder %s12, 2
    // Predicated region
    $region29: #{conv5_extractor.16} parent=5 // pred_check
      %p202 = pneg %p201
    $region30: #{conv5_extractor.16} parent=5 // pred_check_branch
      %204 = sbr.rel (%p202) target = $region32
    $region31: #{conv5_extractor.16} parent=5 // pred_region
      // Predicated region
      $region33: #{conv5_extractor.16} parent=31 // pred_check
        %p205 = pneg %p32
      $region34: #{conv5_extractor.16} parent=31 // pred_check_branch
        %207 = sbr.rel (%p205) target = $region36
      $region35: #{conv5_extractor.16} parent=31 // pred_region
        %p208 = scmp.lt.s32.totalorder %s12, 1
        %s209 = scalar_select %p208, %s12, 1
        %s210 = smul.addr %s209, 5
        %s211 = smul.addr %s210, 2
        %s212 = scalar_lea.vmem %s0, %s211
      $region36: #{conv5_extractor.16} parent=31 // pred_fallthru
        _
      // Predicated region
      $region37: #{conv5_extractor.16} parent=31 // pred_check
        %p213 = pneg %p142
      $region38: #{conv5_extractor.16} parent=31 // pred_check_branch
        %215 = sbr.rel (%p213) target = $region40
      $region39: #{conv5_extractor.16} parent=31 // pred_region
        %p216 = scmp.lt.s32.totalorder %s12, 1
        %s217 = scalar_select %p216, %s12, 1
        %s218 = smul.addr %s217, 2
        %s219 = scalar_lea.vmem %s5, %s218
      $region40: #{conv5_extractor.16} parent=31 // pred_fallthru
        _
    $region32: #{conv5_extractor.16} parent=5 // pred_fallthru
      _
    %p220 = scmp.le.s32.totalorder 1, %s12
    %p221 = scmp.lt.s32.totalorder %s12, 3
    %p222 = pnand %p220, %p221
    %p223 = pneg %p222
    // Predicated region
    $region41: #{conv5_extractor.16} parent=5 // pred_check
      _
    $region42: #{conv5_extractor.16} parent=5 // pred_check_branch
      %225 = sbr.rel (%p222) target = $region44
    $region43: #{conv5_extractor.16} parent=5 // pred_region
      %s226 = ssub.s32 %s12, 1
      %p227 = scmp.lt.s32.totalorder %s17, 1
      %s228 = scalar_select %p227, %s17, 1
      %s229 = smul.addr %s228, 5
      %s230 = smul.addr %s229, 2
      %s231 = scalar_lea.vmem %s0, %s230
      %p232 = pneg %p38
      %p233 = pneg %p35
      %p234 = pneg %p59
      %p235 = pneg %p56
      %p236 = pneg %p80
      %p237 = pneg %p77
      %p238 = pneg %p101
      %p239 = pneg %p98
      %p240 = pneg %p122
      %p241 = pneg %p119
      %p242 = scmp.lt.s32.totalorder %s17, 1
      %s243 = scalar_select %p242, %s17, 1
      %s244 = smul.addr %s243, 2
      %s245 = scalar_lea.vmem %s5, %s244
      %p246 = pneg %p148
      %p247 = pneg %p145
      %p248 = pneg %p174
      %p249 = pneg %p171
      %p250 = scmp.lt.s32.totalorder %s17, 1
      %s251 = scalar_select %p250, %s17, 1
      %s252 = smul.addr %s251, 2
      %s253 = scalar_lea.vmem %s6, %s252
      %p254 = scmp.lt.s32.totalorder %s17, 1
      %s255 = scalar_select %p254, %s17, 1
      %s256 = smul.addr %s255, 5
      %s257 = smul.addr %s256, 2
      %s258 = scalar_lea.vmem %s0, %s257
      %p259 = scmp.lt.s32.totalorder %s17, 1
      %s260 = scalar_select %p259, %s17, 1
      %s261 = smul.addr %s260, 2
      %s262 = scalar_lea.vmem %s5, %s261
      %p263 = scmp.lt.s32.totalorder %s17, 1
      %s264 = scalar_select %p263, %s17, 1
      %s265 = smul.addr %s264, 2
      %s266 = scalar_lea.vmem %s6, %s265
      %v268 = vld [vmem:[%s258] sm:$0xff]
      %v269 = vld [vmem:[%s258 + $0x8] sm:$0x3]
      %v270 = vld [vmem:[%s1] sm:$0xf]
      %v271 = vld [vmem:[%s1 + $0x4] sm:$0xf]
      %v272 = vld [vmem:[%s1 + $0x8] sm:$0xf]
      %v273 = vld [vmem:[%s1 + $0xc] sm:$0xf]
      %v274 = vld [vmem:[%s1 + $0x10] sm:$0xf]
      %v275 = vld [vmem:[%s1 + $0x14] sm:$0xf]
      %v276 = vld [vmem:[%s1 + $0x18] sm:$0xf]
      %v277 = vld [vmem:[%s1 + $0x1c] sm:$0xf]
      %v278 = vld [vmem:[%s1 + $0x20] sm:$0xf]
      %v279 = vld [vmem:[%s1 + $0x24] sm:$0xf]
      %v280 = vld [vmem:[%s1 + $0x28] sm:$0xf]
      %v281 = vld [vmem:[%s1 + $0x2c] sm:$0xf]
      %v282 = vld [vmem:[%s1 + $0x30] sm:$0xf]
      %v283 = vld [vmem:[%s1 + $0x34] sm:$0xf]
      %v284 = vld [vmem:[%s1 + $0x38] sm:$0xf]
      %v285 = vld [vmem:[%s1 + $0x3c] sm:$0xf]
      %v286 = vld [vmem:[%s1 + $0x40] sm:$0xf]
      %v287 = vld [vmem:[%s1 + $0x44] sm:$0xf]
      %v288 = vld [vmem:[%s1 + $0x48] sm:$0xf]
      %v289 = vld [vmem:[%s1 + $0x4c] sm:$0xf]
      %v290 = vld [vmem:[%s1 + $0x50] sm:$0xf]
      %v291 = vld [vmem:[%s1 + $0x54] sm:$0xf]
      %v292 = vld [vmem:[%s1 + $0x58] sm:$0xf]
      %v293 = vld [vmem:[%s1 + $0x5c] sm:$0xf]
      %v294 = vld [vmem:[%s1 + $0x60] sm:$0xf]
      %v295 = vld [vmem:[%s1 + $0x64] sm:$0xf]
      %v296 = vld [vmem:[%s1 + $0x68] sm:$0xf]
      %v297 = vld [vmem:[%s1 + $0x6c] sm:$0xf]
      %v298 = vld [vmem:[%s1 + $0x70] sm:$0xf]
      %v299 = vld [vmem:[%s1 + $0x74] sm:$0xf]
      %v300 = vld [vmem:[%s1 + $0x78] sm:$0xf]
      %v301 = vld [vmem:[%s1 + $0x7c] sm:$0xf]
      %v302 = vld [vmem:[%s1 + $0x80] sm:$0xf]
      %v303 = vld [vmem:[%s1 + $0x84] sm:$0xf]
      %v304 = vld [vmem:[%s1 + $0x88] sm:$0xf]
      %v305 = vld [vmem:[%s1 + $0x8c] sm:$0xf]
      %v306 = vld [vmem:[%s1 + $0x90] sm:$0xf]
      %v307 = vld [vmem:[%s1 + $0x94] sm:$0xf]
      %v308 = vld [vmem:[%s1 + $0x98] sm:$0xf]
      %v309 = vld [vmem:[%s1 + $0x9c] sm:$0xf]
      %v310 = vld [vmem:[%s1 + $0xa0] sm:$0xf]
      %v311 = vld [vmem:[%s1 + $0xa4] sm:$0xf]
      %v312 = vld [vmem:[%s1 + $0xa8] sm:$0xf]
      %v313 = vld [vmem:[%s1 + $0xac] sm:$0xf]
      %v314 = vld [vmem:[%s1 + $0xb0] sm:$0xf]
      %v315 = vld [vmem:[%s1 + $0xb4] sm:$0xf]
      %v316 = vld [vmem:[%s1 + $0xb8] sm:$0xf]
      %v317 = vld [vmem:[%s1 + $0xbc] sm:$0xf]
      %v318 = vld [vmem:[%s1 + $0xc0] sm:$0xf]
      %v319 = vld [vmem:[%s1 + $0xc4] sm:$0xf]
      %v320 = vld [vmem:[%s1 + $0xc8] sm:$0xf]
      %v321 = vld [vmem:[%s1 + $0xcc] sm:$0xf]
      %v322 = vld [vmem:[%s1 + $0xd0] sm:$0xf]
      %v323 = vld [vmem:[%s1 + $0xd4] sm:$0xf]
      %v324 = vld [vmem:[%s1 + $0xd8] sm:$0xf]
      %v325 = vld [vmem:[%s1 + $0xdc] sm:$0xf]
      %v326 = vld [vmem:[%s1 + $0xe0] sm:$0xf]
      %v327 = vld [vmem:[%s1 + $0xe4] sm:$0xf]
      %v328 = vld [vmem:[%s1 + $0xe8] sm:$0xf]
      %v329 = vld [vmem:[%s1 + $0xec] sm:$0xf]
      %v330 = vld [vmem:[%s1 + $0xf0] sm:$0xf]
      %v331 = vld [vmem:[%s1 + $0xf4] sm:$0xf]
      %v332 = vld [vmem:[%s1 + $0xf8] sm:$0xf]
      %v333 = vld [vmem:[%s1 + $0xfc] sm:$0xf]
      %v334 = vld [vmem:[%s1 + $0x100] sm:$0xf]
      %v335 = vld [vmem:[%s1 + $0x104] sm:$0xf]
      %v336 = vld [vmem:[%s1 + $0x108] sm:$0xf]
      %v337 = vld [vmem:[%s1 + $0x10c] sm:$0xf]
      %v338 = vld [vmem:[%s1 + $0x110] sm:$0xf]
      %v339 = vld [vmem:[%s1 + $0x114] sm:$0xf]
      %v340 = vld [vmem:[%s1 + $0x118] sm:$0xf]
      %v341 = vld [vmem:[%s1 + $0x11c] sm:$0xf]
      %v342 = vld [vmem:[%s2] sm:$0x1]
      %v344 = vperm.slane %v342, 0
      %347 = vst [vmem:[#allocation1] ss:$4 sm:$0xff] %v268
      %s349 = scalar_lea.vmem [#allocation1], 32
      %350 = vst [vmem:[%s349] ss:$4 sm:$0xff] %v269
      %v351 = vld.sshfl [vmem:[#allocation1] sm:$0xff pattern:$0x73625140]
      %v352 = vld.sshfl [vmem:[#allocation1 + $0x8] sm:$0xff pattern:$0x73625140]
      %v353 = vld.sshfl [vmem:[#allocation1 + $0x10] sm:$0xff pattern:$0x73625140]
      %v354 = vld.sshfl [vmem:[#allocation1 + $0x18] sm:$0xff pattern:$0x73625140]
      %v355 = vld.sshfl [vmem:[#allocation1 + $0x20] sm:$0xff pattern:$0x73625140]
      %v432 = vunpack.c.l.b16 %v270
      %v433 = vunpack.c.l.b16 %v271
      %v434 = vunpack.c.l.b16 %v272
      %v435 = vunpack.c.l.b16 %v273
      %v436 = vunpack.c.l.b16 %v274
      %v437 = vunpack.c.l.b16 %v275
      %v438 = vunpack.c.l.b16 %v276
      %v439 = vunpack.c.l.b16 %v277
      %v440 = vunpack.c.l.b16 %v278
      %v441 = vunpack.c.l.b16 %v279
      %v442 = vunpack.c.l.b16 %v280
      %v443 = vunpack.c.l.b16 %v281
      %v444 = vunpack.c.l.b16 %v282
      %v445 = vunpack.c.l.b16 %v283
      %v446 = vunpack.c.l.b16 %v284
      %v447 = vunpack.c.l.b16 %v285
      %v448 = vunpack.c.l.b16 %v286
      %v449 = vunpack.c.l.b16 %v287
      %v450 = vunpack.c.l.b16 %v288
      %v451 = vunpack.c.l.b16 %v289
      %v452 = vunpack.c.l.b16 %v290
      %v453 = vunpack.c.l.b16 %v291
      %v454 = vunpack.c.l.b16 %v292
      %v455 = vunpack.c.l.b16 %v293
      %v456 = vunpack.c.l.b16 %v294
      %v457 = vunpack.c.l.b16 %v295
      %v458 = vunpack.c.l.b16 %v296
      %v459 = vunpack.c.l.b16 %v297
      %v460 = vunpack.c.l.b16 %v298
      %v461 = vunpack.c.l.b16 %v299
      %v462 = vunpack.c.l.b16 %v300
      %v463 = vunpack.c.l.b16 %v301
      %v464 = vunpack.c.l.b16 %v302
      %v465 = vunpack.c.l.b16 %v303
      %v466 = vunpack.c.l.b16 %v304
      %v467 = vunpack.c.l.b16 %v305
      %v468 = vunpack.c.l.b16 %v306
      %v469 = vunpack.c.l.b16 %v307
      %v470 = vunpack.c.l.b16 %v308
      %v471 = vunpack.c.l.b16 %v309
      %v472 = vunpack.c.l.b16 %v310
      %v473 = vunpack.c.l.b16 %v311
      %v474 = vunpack.c.l.b16 %v312
      %v475 = vunpack.c.l.b16 %v313
      %v476 = vunpack.c.l.b16 %v314
      %v477 = vunpack.c.l.b16 %v315
      %v478 = vunpack.c.l.b16 %v316
      %v479 = vunpack.c.l.b16 %v317
      %v480 = vunpack.c.l.b16 %v318
      %v481 = vunpack.c.l.b16 %v319
      %v482 = vunpack.c.l.b16 %v320
      %v483 = vunpack.c.l.b16 %v321
      %v484 = vunpack.c.l.b16 %v322
      %v485 = vunpack.c.l.b16 %v323
      %v486 = vunpack.c.l.b16 %v324
      %v487 = vunpack.c.l.b16 %v325
      %v488 = vunpack.c.l.b16 %v326
      %v489 = vunpack.c.l.b16 %v327
      %v490 = vunpack.c.l.b16 %v328
      %v491 = vunpack.c.l.b16 %v329
      %v492 = vunpack.c.l.b16 %v330
      %v493 = vunpack.c.l.b16 %v331
      %v494 = vunpack.c.l.b16 %v332
      %v495 = vunpack.c.l.b16 %v333
      %v496 = vunpack.c.l.b16 %v334
      %v497 = vunpack.c.l.b16 %v335
      %v498 = vunpack.c.l.b16 %v336
      %v499 = vunpack.c.l.b16 %v337
      %v500 = vunpack.c.l.b16 %v338
      %v501 = vunpack.c.l.b16 %v339
      %v502 = vunpack.c.l.b16 %v340
      %v503 = vunpack.c.l.b16 %v341
      %v504 = vpack.c.b16 %v433, %v432
      %v505 = vpack.c.b16 %v435, %v434
      %v506 = vpack.c.b16 %v437, %v436
      %v507 = vpack.c.b16 %v439, %v438
      %v508 = vpack.c.b16 %v441, %v440
      %v509 = vpack.c.b16 %v443, %v442
      %v510 = vpack.c.b16 %v445, %v444
      %v511 = vpack.c.b16 %v447, %v446
      %v512 = vpack.c.b16 %v449, %v448
      %v513 = vpack.c.b16 %v451, %v450
      %v514 = vpack.c.b16 %v453, %v452
      %v515 = vpack.c.b16 %v455, %v454
      %v516 = vpack.c.b16 %v457, %v456
      %v517 = vpack.c.b16 %v459, %v458
      %v518 = vpack.c.b16 %v461, %v460
      %v519 = vpack.c.b16 %v463, %v462
      %v520 = vpack.c.b16 %v465, %v464
      %v521 = vpack.c.b16 %v467, %v466
      %v522 = vpack.c.b16 %v469, %v468
      %v523 = vpack.c.b16 %v471, %v470
      %v524 = vpack.c.b16 %v473, %v472
      %v525 = vpack.c.b16 %v475, %v474
      %v526 = vpack.c.b16 %v477, %v476
      %v527 = vpack.c.b16 %v479, %v478
      %v528 = vpack.c.b16 %v481, %v480
      %v529 = vpack.c.b16 %v483, %v482
      %v530 = vpack.c.b16 %v485, %v484
      %v531 = vpack.c.b16 %v487, %v486
      %v532 = vpack.c.b16 %v489, %v488
      %v533 = vpack.c.b16 %v491, %v490
      %v534 = vpack.c.b16 %v493, %v492
      %v535 = vpack.c.b16 %v495, %v494
      %v536 = vpack.c.b16 %v497, %v496
      %v537 = vpack.c.b16 %v499, %v498
      %v538 = vpack.c.b16 %v501, %v500
      %v539 = vpack.c.b16 %v503, %v502
      %vm576 = vcmask 523264
      %v577 = vsel %vm576, %v355, 0
      %579 = vmatpush.bf16.msra.mxu0 %v511
      %580 = vmatpush.bf16.msra.mxu0 %v510
      %581 = vmatpush.bf16.msra.mxu0 %v509
      %582 = vmatpush.bf16.msra.mxu0 %v508
      %583 = vmatpush.bf16.msra.mxu0 %v507
      %584 = vmatpush.bf16.msra.mxu0 %v506
      %585 = vmatpush.bf16.msra.mxu0 %v505
      %586 = vmatpush.bf16.msra.mxu0 %v504
      %587 = vmatmul.bf16.gmra.mxu0 %v351
      %v588 = vpop.f32.mrf.mxu0
      %v589 = vadd.f32 %v344, %v588
      %v590 = vpop.f32.mrf.mxu0
      %591 = vdwg.mxu0
      %592 = vmatpush.bf16.msra.mxu0 %v519
      %593 = vmatpush.bf16.msra.mxu0 %v518
      %594 = vmatpush.bf16.msra.mxu0 %v517
      %595 = vmatpush.bf16.msra.mxu0 %v516
      %596 = vmatpush.bf16.msra.mxu0 %v515
      %597 = vmatpush.bf16.msra.mxu0 %v514
      %598 = vmatpush.bf16.msra.mxu0 %v513
      %599 = vmatpush.bf16.msra.mxu0 %v512
      %600 = vmatmul.bf16.gmra.mxu0 %v352
      %v601 = vpop.f32.mrf.mxu0
      %v602 = vadd.f32 %v589, %v601
      %v603 = vpop.f32.mrf.mxu0
      %604 = vdwg.mxu0
      %605 = vmatpush.bf16.msra.mxu0 %v527
      %606 = vmatpush.bf16.msra.mxu0 %v526
      %607 = vmatpush.bf16.msra.mxu0 %v525
      %608 = vmatpush.bf16.msra.mxu0 %v524
      %609 = vmatpush.bf16.msra.mxu0 %v523
      %610 = vmatpush.bf16.msra.mxu0 %v522
      %611 = vmatpush.bf16.msra.mxu0 %v521
      %612 = vmatpush.bf16.msra.mxu0 %v520
      %613 = vmatmul.bf16.gmra.mxu0 %v353
      %v614 = vpop.f32.mrf.mxu0
      %v615 = vadd.f32 %v602, %v614
      %v616 = vpop.f32.mrf.mxu0
      %617 = vdwg.mxu0
      %618 = vmatpush.bf16.msra.mxu0 %v535
      %619 = vmatpush.bf16.msra.mxu0 %v534
      %620 = vmatpush.bf16.msra.mxu0 %v533
      %621 = vmatpush.bf16.msra.mxu0 %v532
      %622 = vmatpush.bf16.msra.mxu0 %v531
      %623 = vmatpush.bf16.msra.mxu0 %v530
      %624 = vmatpush.bf16.msra.mxu0 %v529
      %625 = vmatpush.bf16.msra.mxu0 %v528
      %626 = vmatmul.bf16.gmra.mxu0 %v354
      %v627 = vpop.f32.mrf.mxu0
      %v628 = vadd.f32 %v615, %v627
      %v629 = vpop.f32.mrf.mxu0
      %630 = vdwg.mxu0
      %631 = vmatpush.bf16.msra.mxu0 0
      %632 = vmatpush.bf16.msra.mxu0 0
      %633 = vmatpush.bf16.msra.mxu0 0
      %634 = vmatpush.bf16.msra.mxu0 0
      %635 = vmatpush.bf16.msra.mxu0 %v539
      %636 = vmatpush.bf16.msra.mxu0 %v538
      %637 = vmatpush.bf16.msra.mxu0 %v537
      %638 = vmatpush.bf16.msra.mxu0 %v536
      %639 = vmatmul.bf16.gmra.mxu0 %v577
      %v640 = vpop.f32.mrf.mxu0
      %v641 = vadd.f32 %v628, %v640
      %v642 = vpop.f32.mrf.mxu0
      %643 = vdwg.mxu0
      %v644 = vmax.f32 %v641, 0.0
      %v645 = vld [vmem:[%s262] sm:$0x3]
      %v646 = vunpack.c.l.bf16 %v645
      %647 = vst [vmem:[#allocation2] sm:$0x3f] 0.0
      %648 = vst [vmem:[#allocation2 + $0x1] sm:$0xf] %v644
      %v649 = vld [vmem:[%s4] sm:$0x1]
      %v651 = vperm.slane %v649, 0
      %v653 = vadd.f32 %v646, %v651
      %v654 = vld [vmem:[#allocation2] sm:$0xf]
      %v655 = vpack.c.bf16 %v654, %v654
      %v656 = vld [vmem:[%s3] sm:$0xf]
      %v657 = vld [vmem:[%s3 + $0x4] sm:$0xf]
      %v658 = vld [vmem:[%s3 + $0x8] sm:$0xf]
      %v659 = vld [vmem:[%s3 + $0xc] sm:$0xf]
      %v660 = vld [vmem:[%s3 + $0x10] sm:$0xf]
      %v661 = vld [vmem:[%s3 + $0x14] sm:$0xf]
      %v662 = vld [vmem:[%s3 + $0x18] sm:$0xf]
      %v663 = vld [vmem:[%s3 + $0x1c] sm:$0xf]
      %v664 = vld [vmem:[%s3 + $0x20] sm:$0xf]
      %v665 = vld [vmem:[%s3 + $0x24] sm:$0xf]
      %v666 = vld [vmem:[%s3 + $0x28] sm:$0xf]
      %v667 = vld [vmem:[%s3 + $0x2c] sm:$0xf]
      %v668 = vld [vmem:[%s3 + $0x30] sm:$0xf]
      %v669 = vld [vmem:[%s3 + $0x34] sm:$0xf]
      %v670 = vld [vmem:[%s3 + $0x38] sm:$0xf]
      %v671 = vld [vmem:[%s3 + $0x3c] sm:$0xf]
      %v688 = vunpack.c.l.b16 %v656
      %v689 = vunpack.c.l.b16 %v657
      %v690 = vunpack.c.l.b16 %v658
      %v691 = vunpack.c.l.b16 %v659
      %v692 = vunpack.c.l.b16 %v660
      %v693 = vunpack.c.l.b16 %v661
      %v694 = vunpack.c.l.b16 %v662
      %v695 = vunpack.c.l.b16 %v663
      %v696 = vunpack.c.l.b16 %v664
      %v697 = vunpack.c.l.b16 %v665
      %v698 = vunpack.c.l.b16 %v666
      %v699 = vunpack.c.l.b16 %v667
      %v700 = vunpack.c.l.b16 %v668
      %v701 = vunpack.c.l.b16 %v669
      %v702 = vunpack.c.l.b16 %v670
      %v703 = vunpack.c.l.b16 %v671
      %v704 = vpack.c.b16 %v689, %v688
      %v705 = vpack.c.b16 %v691, %v690
      %v706 = vpack.c.b16 %v693, %v692
      %v707 = vpack.c.b16 %v695, %v694
      %v708 = vpack.c.b16 %v697, %v696
      %v709 = vpack.c.b16 %v699, %v698
      %v710 = vpack.c.b16 %v701, %v700
      %v711 = vpack.c.b16 %v703, %v702
      %720 = vmatpush.bf16.msra.mxu0 %v711
      %721 = vmatpush.bf16.msra.mxu0 %v710
      %722 = vmatpush.bf16.msra.mxu0 %v709
      %723 = vmatpush.bf16.msra.mxu0 %v708
      %724 = vmatpush.bf16.msra.mxu0 %v707
      %725 = vmatpush.bf16.msra.mxu0 %v706
      %726 = vmatpush.bf16.msra.mxu0 %v705
      %727 = vmatpush.bf16.msra.mxu0 %v704
      %728 = vmatmul.bf16.gmra.mxu0 %v655
      %v729 = vpop.f32.mrf.mxu0
      %v730 = vadd.f32 0.0, %v729
      %v731 = vpop.f32.mrf.mxu0
      %732 = vdwg.mxu0
      %v733 = vadd.f32 %v653, %v730
      %v734 = vld [vmem:[#allocation2 + $0x1] sm:$0xf]
      %v735 = vpack.c.bf16 %v734, %v734
      %v736 = vld [vmem:[%s3 + $0x40] sm:$0xf]
      %v737 = vld [vmem:[%s3 + $0x44] sm:$0xf]
      %v738 = vld [vmem:[%s3 + $0x48] sm:$0xf]
      %v739 = vld [vmem:[%s3 + $0x4c] sm:$0xf]
      %v740 = vld [vmem:[%s3 + $0x50] sm:$0xf]
      %v741 = vld [vmem:[%s3 + $0x54] sm:$0xf]
      %v742 = vld [vmem:[%s3 + $0x58] sm:$0xf]
      %v743 = vld [vmem:[%s3 + $0x5c] sm:$0xf]
      %v744 = vld [vmem:[%s3 + $0x60] sm:$0xf]
      %v745 = vld [vmem:[%s3 + $0x64] sm:$0xf]
      %v746 = vld [vmem:[%s3 + $0x68] sm:$0xf]
      %v747 = vld [vmem:[%s3 + $0x6c] sm:$0xf]
      %v748 = vld [vmem:[%s3 + $0x70] sm:$0xf]
      %v749 = vld [vmem:[%s3 + $0x74] sm:$0xf]
      %v750 = vld [vmem:[%s3 + $0x78] sm:$0xf]
      %v751 = vld [vmem:[%s3 + $0x7c] sm:$0xf]
      %v768 = vunpack.c.l.b16 %v736
      %v769 = vunpack.c.l.b16 %v737
      %v770 = vunpack.c.l.b16 %v738
      %v771 = vunpack.c.l.b16 %v739
      %v772 = vunpack.c.l.b16 %v740
      %v773 = vunpack.c.l.b16 %v741
      %v774 = vunpack.c.l.b16 %v742
      %v775 = vunpack.c.l.b16 %v743
      %v776 = vunpack.c.l.b16 %v744
      %v777 = vunpack.c.l.b16 %v745
      %v778 = vunpack.c.l.b16 %v746
      %v779 = vunpack.c.l.b16 %v747
      %v780 = vunpack.c.l.b16 %v748
      %v781 = vunpack.c.l.b16 %v749
      %v782 = vunpack.c.l.b16 %v750
      %v783 = vunpack.c.l.b16 %v751
      %v784 = vpack.c.b16 %v769, %v768
      %v785 = vpack.c.b16 %v771, %v770
      %v786 = vpack.c.b16 %v773, %v772
      %v787 = vpack.c.b16 %v775, %v774
      %v788 = vpack.c.b16 %v777, %v776
      %v789 = vpack.c.b16 %v779, %v778
      %v790 = vpack.c.b16 %v781, %v780
      %v791 = vpack.c.b16 %v783, %v782
      %800 = vmatpush.bf16.msra.mxu0 %v791
      %801 = vmatpush.bf16.msra.mxu0 %v790
      %802 = vmatpush.bf16.msra.mxu0 %v789
      %803 = vmatpush.bf16.msra.mxu0 %v788
      %804 = vmatpush.bf16.msra.mxu0 %v787
      %805 = vmatpush.bf16.msra.mxu0 %v786
      %806 = vmatpush.bf16.msra.mxu0 %v785
      %807 = vmatpush.bf16.msra.mxu0 %v784
      %808 = vmatmul.bf16.gmra.mxu0 %v735
      %v809 = vpop.f32.mrf.mxu0
      %v810 = vadd.f32 0.0, %v809
      %v811 = vpop.f32.mrf.mxu0
      %812 = vdwg.mxu0
      %v813 = vadd.f32 %v733, %v810
      %v814 = vld [vmem:[#allocation2 + $0x2] sm:$0xf]
      %v815 = vpack.c.bf16 %v814, %v814
      %v816 = vld [vmem:[%s3 + $0x80] sm:$0xf]
      %v817 = vld [vmem:[%s3 + $0x84] sm:$0xf]
      %v818 = vld [vmem:[%s3 + $0x88] sm:$0xf]
      %v819 = vld [vmem:[%s3 + $0x8c] sm:$0xf]
      %v820 = vld [vmem:[%s3 + $0x90] sm:$0xf]
      %v821 = vld [vmem:[%s3 + $0x94] sm:$0xf]
      %v822 = vld [vmem:[%s3 + $0x98] sm:$0xf]
      %v823 = vld [vmem:[%s3 + $0x9c] sm:$0xf]
      %v824 = vld [vmem:[%s3 + $0xa0] sm:$0xf]
      %v825 = vld [vmem:[%s3 + $0xa4] sm:$0xf]
      %v826 = vld [vmem:[%s3 + $0xa8] sm:$0xf]
      %v827 = vld [vmem:[%s3 + $0xac] sm:$0xf]
      %v828 = vld [vmem:[%s3 + $0xb0] sm:$0xf]
      %v829 = vld [vmem:[%s3 + $0xb4] sm:$0xf]
      %v830 = vld [vmem:[%s3 + $0xb8] sm:$0xf]
      %v831 = vld [vmem:[%s3 + $0xbc] sm:$0xf]
      %v848 = vunpack.c.l.b16 %v816
      %v849 = vunpack.c.l.b16 %v817
      %v850 = vunpack.c.l.b16 %v818
      %v851 = vunpack.c.l.b16 %v819
      %v852 = vunpack.c.l.b16 %v820
      %v853 = vunpack.c.l.b16 %v821
      %v854 = vunpack.c.l.b16 %v822
      %v855 = vunpack.c.l.b16 %v823
      %v856 = vunpack.c.l.b16 %v824
      %v857 = vunpack.c.l.b16 %v825
      %v858 = vunpack.c.l.b16 %v826
      %v859 = vunpack.c.l.b16 %v827
      %v860 = vunpack.c.l.b16 %v828
      %v861 = vunpack.c.l.b16 %v829
      %v862 = vunpack.c.l.b16 %v830
      %v863 = vunpack.c.l.b16 %v831
      %v864 = vpack.c.b16 %v849, %v848
      %v865 = vpack.c.b16 %v851, %v850
      %v866 = vpack.c.b16 %v853, %v852
      %v867 = vpack.c.b16 %v855, %v854
      %v868 = vpack.c.b16 %v857, %v856
      %v869 = vpack.c.b16 %v859, %v858
      %v870 = vpack.c.b16 %v861, %v860
      %v871 = vpack.c.b16 %v863, %v862
      %880 = vmatpush.bf16.msra.mxu0 %v871
      %881 = vmatpush.bf16.msra.mxu0 %v870
      %882 = vmatpush.bf16.msra.mxu0 %v869
      %883 = vmatpush.bf16.msra.mxu0 %v868
      %884 = vmatpush.bf16.msra.mxu0 %v867
      %885 = vmatpush.bf16.msra.mxu0 %v866
      %886 = vmatpush.bf16.msra.mxu0 %v865
      %887 = vmatpush.bf16.msra.mxu0 %v864
      %888 = vmatmul.bf16.gmra.mxu0 %v815
      %v889 = vpop.f32.mrf.mxu0
      %v890 = vadd.f32 0.0, %v889
      %v891 = vpop.f32.mrf.mxu0
      %892 = vdwg.mxu0
      %v893 = vadd.f32 %v813, %v890
      %v894 = vmax.f32 %v893, 0.0
      %v895 = vpack.c.bf16 %v894, %v894
      %896 = vst [vmem:[%s266] sm:$0x3] %v895
      %p897 = scmp.lt.s32.totalorder %s17, 1
      %s898 = scalar_select %p897, %s17, 1
      %s899 = smul.addr %s898, 2
      %s900 = scalar_lea.vmem %s6, %s899
      // Predicated region
      $region45: #{conv5_extractor.16} parent=43 // pred_check
        %p901 = pneg %p171
      $region46: #{conv5_extractor.16} parent=43 // pred_check_branch
        %903 = sbr.rel (%p901) target = $region48
      $region47: #{conv5_extractor.16} parent=43 // pred_region
        _
      $region48: #{conv5_extractor.16} parent=43 // pred_fallthru
        _
    $region44: #{conv5_extractor.16} parent=5 // pred_fallthru
      _
    %p904 = scmp.le.s32.totalorder 2, %s12
    // Predicated region
    $region49: #{conv5_extractor.16} parent=5 // pred_check
      %p905 = pneg %p904
    $region50: #{conv5_extractor.16} parent=5 // pred_check_branch
      %907 = sbr.rel (%p905) target = $region52
    $region51: #{conv5_extractor.16} parent=5 // pred_region
      %s908 = ssub.s32 %s12, 2
      // Predicated region
      $region53: #{conv5_extractor.16} parent=51 // pred_check
        %p909 = pneg %p177
      $region54: #{conv5_extractor.16} parent=51 // pred_check_branch
        %911 = sbr.rel (%p909) target = $region56
      $region55: #{conv5_extractor.16} parent=51 // pred_region
        %p912 = scmp.lt.s32.totalorder %s18, 1
        %s913 = scalar_select %p912, %s18, 1
        %s914 = smul.addr %s913, 2
        %s915 = scalar_lea.vmem %s6, %s914
      $region56: #{conv5_extractor.16} parent=51 // pred_fallthru
        _
    $region52: #{conv5_extractor.16} parent=5 // pred_fallthru
      _
  $region6: #{conv5_extractor.16} parent=0 // loop_footer
    %s16 = sadd.s32 1, %s12
  $region7: #{conv5_extractor.16} parent=0 // loop_footer_branch
    %11 = sbr.rel target = $region3
  $region8: #{conv5_extractor.16} parent=0 // loop_exit
    _

// kernel: tile.168
$region0: #{tile.168}
  #allocation0 [shape = 's32[1]{0}', space=sflag, size = 0x4, scoped, tag = 'scoped memory for tile.168']
  %s0 = inlined_call_operand.vmem [shape: f32[64], index: 0, kind: input, shape index: {}]
  %s1 = inlined_call_operand.vmem [shape: f32[2,64], index: 1, kind: output, shape index: {}]
  // Predicated region
  $region2: #{tile.168} parent=0 // pred_check
    _
  $region3: #{tile.168} parent=0 // pred_check_branch
    %3 = sbr.rel (0) target = $region5
  $region4: #{tile.168} parent=0 // pred_region
    _
  $region5: #{tile.168} parent=0 // pred_fallthru
    _
  %v4 = vld [vmem:[%s0] ss:$0 sm:$0xff]
  %5 = vst [vmem:[%s1] sm:$0x3] %v4

// kernel: tile.169
$region0: #{tile.169}
  %s0 = inlined_call_operand.vmem [shape: f32[2,64], index: 0, kind: input, shape index: {}]
  %s1 = inlined_call_operand.vmem [shape: f32[1,128], index: 1, kind: output, shape index: {}]
  $region1: #{tile.169} parent=0
    #allocation0 [shape = 'u8[4096]{0}', space=vmem, size = 0x1000, scoped, tag = 'scoped mem for output reshape']
    #allocation1 [shape = 'u8[4096]{0}', space=vmem, size = 0x1000, scoped, tag = 'scoped mem for input reshape']
    %s3 = ssub.s32 4, 1
    %v4 = vld [vmem:[%s0] sm:%s3]
    %5 = vst [vmem:[#allocation1] sm:%s3] %v4
    %v6 = vld [vmem:[#allocation1] sm:$0x1]
    %vm7 = vcmask 523264
    %8 = vst.msk [vmem:[#allocation0] sm:$0x1] %vm7, %v6
    %s9 = scalar_lea.vmem [#allocation1], 1
    %v10 = vld [vmem:[%s9] sm:$0x1]
    %11 = vrot.lane.b32.xlu0 %v10, 64
    %v12 = vpop.permute.xlu0 %11
    %vm13 = vcmask 1048064
    %14 = vst.msk [vmem:[#allocation0] sm:$0x1] %vm13, %v12
    %s16 = ssub.s32 2, 1
    %v17 = vld [vmem:[#allocation0] sm:%s16]
    %s19 = ssub.s32 2, 1
    %20 = vst [vmem:[%s1] sm:%s19] %v17

// kernel: conv5_extractor.17
$region0: #{conv5_extractor.17}
  #allocation0 [shape = 'u32[]', space=smem, size = 0x4, offset = 0x4, fixed_abs, tag = 'smem constant byte address 0x4 - core index']
  #allocation1 [shape = 'u32[72,128]{1,0:T(1,128)}', space=vmem, size = 0x9000, scoped, tag = 'internal scratch']
  #allocation2 [shape = 'f32[4,128]{1,0:T(4,128)}', space=vmem, size = 0x800, scoped, tag = 'scratch operand']
  %s0 = inlined_call_operand.vmem [shape: bf16[2,2,576], index: 0, kind: input, shape index: {}]
  %s1 = inlined_call_operand.vmem [shape: bf16[576,128], index: 1, kind: input, shape index: {}]
  %s2 = inlined_call_operand.vmem [shape: f32[1,128], index: 2, kind: input, shape index: {}]
  %s3 = inlined_call_operand.vmem [shape: bf16[384,128], index: 3, kind: input, shape index: {}]
  %s4 = inlined_call_operand.vmem [shape: f32[1,128], index: 4, kind: input, shape index: {}]
  %s5 = inlined_call_operand.vmem [shape: bf16[576,128], index: 5, kind: input, shape index: {}]
  %s6 = inlined_call_operand.vmem [shape: f32[1,128], index: 6, kind: input, shape index: {}]
  %s7 = inlined_call_operand.vmem [shape: bf16[2,2,128], index: 7, kind: output, shape index: {}]
  %s8 = sld [smem:[#allocation0]]
  $region61: #{conv5_extractor.17} parent=0
    _
  %s10 = ssub.s32 1, %s8
  %s11 = scalar_select 0, %s10, %s8
  loop: start=0, step=1, limit=4
  $region2: #{conv5_extractor.17} parent=0 // loop_pre_header
    _
  $region3: #{conv5_extractor.17} parent=0 // loop_header
    %s13 = sphi 0, %s17
    %p14 = scmp.ge.s32.totalorder %s13, 4
    %s23 = sphi 0, %s25
    %s26 = sphi 0, %s23
    %s27 = sphi 0, %s26
    %s43 = sphi 0, %s27
    %s47 = sphi 0, %s47
    %s49 = sphi 0, %s47
    %s50 = sphi 0, %s49
    %s64 = sphi 0, %s50
    %s68 = sphi 0, %s68
    %s70 = sphi 0, %s68
    %s71 = sphi 0, %s70
    %s85 = sphi 0, %s71
    %s89 = sphi 0, %s89
    %s91 = sphi 0, %s89
    %s92 = sphi 0, %s91
    %s106 = sphi 0, %s92
    %s110 = sphi 0, %s110
    %s112 = sphi 0, %s110
    %s113 = sphi 0, %s112
    %s127 = sphi 0, %s113
    %s131 = sphi 0, %s131
    %s133 = sphi 0, %s131
    %s134 = sphi 0, %s133
    %s148 = sphi 0, %s134
    %s152 = sphi 0, %s152
    %s154 = sphi 0, %s152
    %s155 = sphi 0, %s154
    %s169 = sphi 0, %s155
    %s175 = sphi 0, %s177
    %s178 = sphi 0, %s175
    %s179 = sphi 0, %s178
    %s195 = sphi 0, %s179
  $region4: #{conv5_extractor.17} parent=0 // loop_header_branch
    %16 = sbr.rel (%p14) target = $region8
  $region5: #{conv5_extractor.17} parent=0 // loop_body
    %s18 = ssub.s32 %s13, 1
    %s19 = ssub.s32 %s13, 2
    %s20 = sadd.s32 %s13, 1
    %s21 = ssub.s32 %s13, %s20
    %p22 = scmp.eq.s32.totalorder %s21, 0
    %s24 = sadd.s32 %s23, 1
    %s25 = scalar_select %p22, %s23, %s24
    %p28 = pneg %p22
    %p29 = scmp.eq.s32.totalorder %s13, 1
    %p30 = por %p28, %p29
    %p31 = scmp.ne.s32.totalorder %s23, %s26
    %p32 = scmp.eq.s32.totalorder %s13, 0
    %p33 = por %p31, %p32
    %p34 = scmp.ne.s32.totalorder %s23, %s26
    %p35 = scmp.eq.s32.totalorder %s18, 1
    %p36 = por %p34, %p35
    %p37 = scmp.ne.s32.totalorder %s26, %s27
    %p38 = scmp.eq.s32.totalorder %s18, 0
    %p39 = por %p37, %p38
    %p40 = scmp.ne.s32.totalorder %s26, %s27
    %p41 = scmp.eq.s32.totalorder %s19, 1
    %p42 = por %p40, %p41
    %p44 = scmp.ne.s32.totalorder %s27, %s43
    %p45 = scmp.eq.s32.totalorder %s19, 0
    %p46 = por %p44, %p45
    %s48 = sadd.s32 %s47, 1
    %p51 = scmp.eq.s32.totalorder %s13, 1
    %p52 = scmp.ne.s32.totalorder %s47, %s49
    %p53 = scmp.eq.s32.totalorder %s13, 0
    %p54 = por %p52, %p53
    %p55 = scmp.ne.s32.totalorder %s47, %s49
    %p56 = scmp.eq.s32.totalorder %s18, 1
    %p57 = por %p55, %p56
    %p58 = scmp.ne.s32.totalorder %s49, %s50
    %p59 = scmp.eq.s32.totalorder %s18, 0
    %p60 = por %p58, %p59
    %p61 = scmp.ne.s32.totalorder %s49, %s50
    %p62 = scmp.eq.s32.totalorder %s19, 1
    %p63 = por %p61, %p62
    %p65 = scmp.ne.s32.totalorder %s50, %s64
    %p66 = scmp.eq.s32.totalorder %s19, 0
    %p67 = por %p65, %p66
    %s69 = sadd.s32 %s68, 1
    %p72 = scmp.eq.s32.totalorder %s13, 1
    %p73 = scmp.ne.s32.totalorder %s68, %s70
    %p74 = scmp.eq.s32.totalorder %s13, 0
    %p75 = por %p73, %p74
    %p76 = scmp.ne.s32.totalorder %s68, %s70
    %p77 = scmp.eq.s32.totalorder %s18, 1
    %p78 = por %p76, %p77
    %p79 = scmp.ne.s32.totalorder %s70, %s71
    %p80 = scmp.eq.s32.totalorder %s18, 0
    %p81 = por %p79, %p80
    %p82 = scmp.ne.s32.totalorder %s70, %s71
    %p83 = scmp.eq.s32.totalorder %s19, 1
    %p84 = por %p82, %p83
    %p86 = scmp.ne.s32.totalorder %s71, %s85
    %p87 = scmp.eq.s32.totalorder %s19, 0
    %p88 = por %p86, %p87
    %s90 = sadd.s32 %s89, 1
    %p93 = scmp.eq.s32.totalorder %s13, 1
    %p94 = scmp.ne.s32.totalorder %s89, %s91
    %p95 = scmp.eq.s32.totalorder %s13, 0
    %p96 = por %p94, %p95
    %p97 = scmp.ne.s32.totalorder %s89, %s91
    %p98 = scmp.eq.s32.totalorder %s18, 1
    %p99 = por %p97, %p98
    %p100 = scmp.ne.s32.totalorder %s91, %s92
    %p101 = scmp.eq.s32.totalorder %s18, 0
    %p102 = por %p100, %p101
    %p103 = scmp.ne.s32.totalorder %s91, %s92
    %p104 = scmp.eq.s32.totalorder %s19, 1
    %p105 = por %p103, %p104
    %p107 = scmp.ne.s32.totalorder %s92, %s106
    %p108 = scmp.eq.s32.totalorder %s19, 0
    %p109 = por %p107, %p108
    %s111 = sadd.s32 %s110, 1
    %p114 = scmp.eq.s32.totalorder %s13, 1
    %p115 = scmp.ne.s32.totalorder %s110, %s112
    %p116 = scmp.eq.s32.totalorder %s13, 0
    %p117 = por %p115, %p116
    %p118 = scmp.ne.s32.totalorder %s110, %s112
    %p119 = scmp.eq.s32.totalorder %s18, 1
    %p120 = por %p118, %p119
    %p121 = scmp.ne.s32.totalorder %s112, %s113
    %p122 = scmp.eq.s32.totalorder %s18, 0
    %p123 = por %p121, %p122
    %p124 = scmp.ne.s32.totalorder %s112, %s113
    %p125 = scmp.eq.s32.totalorder %s19, 1
    %p126 = por %p124, %p125
    %p128 = scmp.ne.s32.totalorder %s113, %s127
    %p129 = scmp.eq.s32.totalorder %s19, 0
    %p130 = por %p128, %p129
    %s132 = sadd.s32 %s131, 1
    %p135 = scmp.eq.s32.totalorder %s13, 1
    %p136 = scmp.ne.s32.totalorder %s131, %s133
    %p137 = scmp.eq.s32.totalorder %s13, 0
    %p138 = por %p136, %p137
    %p139 = scmp.ne.s32.totalorder %s131, %s133
    %p140 = scmp.eq.s32.totalorder %s18, 1
    %p141 = por %p139, %p140
    %p142 = scmp.ne.s32.totalorder %s133, %s134
    %p143 = scmp.eq.s32.totalorder %s18, 0
    %p144 = por %p142, %p143
    %p145 = scmp.ne.s32.totalorder %s133, %s134
    %p146 = scmp.eq.s32.totalorder %s19, 1
    %p147 = por %p145, %p146
    %p149 = scmp.ne.s32.totalorder %s134, %s148
    %p150 = scmp.eq.s32.totalorder %s19, 0
    %p151 = por %p149, %p150
    %s153 = sadd.s32 %s152, 1
    %p156 = scmp.eq.s32.totalorder %s13, 1
    %p157 = scmp.ne.s32.totalorder %s152, %s154
    %p158 = scmp.eq.s32.totalorder %s13, 0
    %p159 = por %p157, %p158
    %p160 = scmp.ne.s32.totalorder %s152, %s154
    %p161 = scmp.eq.s32.totalorder %s18, 1
    %p162 = por %p160, %p161
    %p163 = scmp.ne.s32.totalorder %s154, %s155
    %p164 = scmp.eq.s32.totalorder %s18, 0
    %p165 = por %p163, %p164
    %p166 = scmp.ne.s32.totalorder %s154, %s155
    %p167 = scmp.eq.s32.totalorder %s19, 1
    %p168 = por %p166, %p167
    %p170 = scmp.ne.s32.totalorder %s155, %s169
    %p171 = scmp.eq.s32.totalorder %s19, 0
    %p172 = por %p170, %p171
    %s173 = ssub.s32 %s13, %s20
    %p174 = scmp.eq.s32.totalorder %s173, 0
    %s176 = sadd.s32 %s175, 1
    %s177 = scalar_select %p174, %s175, %s176
    %p180 = pneg %p174
    %p181 = scmp.eq.s32.totalorder %s13, 1
    %p182 = por %p180, %p181
    %p183 = scmp.ne.s32.totalorder %s175, %s178
    %p184 = scmp.eq.s32.totalorder %s13, 0
    %p185 = por %p183, %p184
    %p186 = scmp.ne.s32.totalorder %s175, %s178
    %p187 = scmp.eq.s32.totalorder %s18, 1
    %p188 = por %p186, %p187
    %p189 = scmp.ne.s32.totalorder %s178, %s179
    %p190 = scmp.eq.s32.totalorder %s18, 0
    %p191 = por %p189, %p190
    %p192 = scmp.ne.s32.totalorder %s178, %s179
    %p193 = scmp.eq.s32.totalorder %s19, 1
    %p194 = por %p192, %p193
    %p196 = scmp.ne.s32.totalorder %s179, %s195
    %p197 = scmp.eq.s32.totalorder %s19, 0
    %p198 = por %p196, %p197
    %p199 = scmp.le.s32.totalorder 1, %s13
    %p200 = scmp.lt.s32.totalorder %s13, 3
    %p201 = pnand %p199, %p200
    %p202 = pneg %p201
    // Predicated region
    $region9: #{conv5_extractor.17} parent=5 // pred_check
      _
    $region10: #{conv5_extractor.17} parent=5 // pred_check_branch
      %204 = sbr.rel (%p201) target = $region12
    $region11: #{conv5_extractor.17} parent=5 // pred_region
      %s205 = ssub.s32 %s13, 1
      // Predicated region
      $region13: #{conv5_extractor.17} parent=11 // pred_check
        %p206 = pneg %p60
      $region14: #{conv5_extractor.17} parent=11 // pred_check_branch
        %208 = sbr.rel (%p206) target = $region16
      $region15: #{conv5_extractor.17} parent=11 // pred_region
        _
      $region16: #{conv5_extractor.17} parent=11 // pred_fallthru
        _
      // Predicated region
      $region17: #{conv5_extractor.17} parent=11 // pred_check
        %p209 = pneg %p81
      $region18: #{conv5_extractor.17} parent=11 // pred_check_branch
        %211 = sbr.rel (%p209) target = $region20
      $region19: #{conv5_extractor.17} parent=11 // pred_region
        _
      $region20: #{conv5_extractor.17} parent=11 // pred_fallthru
        _
      // Predicated region
      $region21: #{conv5_extractor.17} parent=11 // pred_check
        %p212 = pneg %p102
      $region22: #{conv5_extractor.17} parent=11 // pred_check_branch
        %214 = sbr.rel (%p212) target = $region24
      $region23: #{conv5_extractor.17} parent=11 // pred_region
        _
      $region24: #{conv5_extractor.17} parent=11 // pred_fallthru
        _
      // Predicated region
      $region25: #{conv5_extractor.17} parent=11 // pred_check
        %p215 = pneg %p123
      $region26: #{conv5_extractor.17} parent=11 // pred_check_branch
        %217 = sbr.rel (%p215) target = $region28
      $region27: #{conv5_extractor.17} parent=11 // pred_region
        _
      $region28: #{conv5_extractor.17} parent=11 // pred_fallthru
        _
      // Predicated region
      $region29: #{conv5_extractor.17} parent=11 // pred_check
        %p218 = pneg %p144
      $region30: #{conv5_extractor.17} parent=11 // pred_check_branch
        %220 = sbr.rel (%p218) target = $region32
      $region31: #{conv5_extractor.17} parent=11 // pred_region
        _
      $region32: #{conv5_extractor.17} parent=11 // pred_fallthru
        _
      // Predicated region
      $region33: #{conv5_extractor.17} parent=11 // pred_check
        %p221 = pneg %p165
      $region34: #{conv5_extractor.17} parent=11 // pred_check_branch
        %223 = sbr.rel (%p221) target = $region36
      $region35: #{conv5_extractor.17} parent=11 // pred_region
        _
      $region36: #{conv5_extractor.17} parent=11 // pred_fallthru
        _
    $region12: #{conv5_extractor.17} parent=5 // pred_fallthru
      _
    %p224 = scmp.lt.s32.totalorder %s13, 2
    // Predicated region
    $region37: #{conv5_extractor.17} parent=5 // pred_check
      %p225 = pneg %p224
    $region38: #{conv5_extractor.17} parent=5 // pred_check_branch
      %227 = sbr.rel (%p225) target = $region40
    $region39: #{conv5_extractor.17} parent=5 // pred_region
      // Predicated region
      $region41: #{conv5_extractor.17} parent=39 // pred_check
        %p228 = pneg %p33
      $region42: #{conv5_extractor.17} parent=39 // pred_check_branch
        %230 = sbr.rel (%p228) target = $region44
      $region43: #{conv5_extractor.17} parent=39 // pred_region
        %p231 = scmp.lt.s32.totalorder %s13, 1
        %s232 = scalar_select %p231, %s13, 1
        %s233 = smul.addr %s232, 5
        %s234 = scalar_lea.vmem %s0, %s233
      $region44: #{conv5_extractor.17} parent=39 // pred_fallthru
        _
    $region40: #{conv5_extractor.17} parent=5 // pred_fallthru
      _
    %p235 = scmp.le.s32.totalorder 1, %s13
    %p236 = scmp.lt.s32.totalorder %s13, 3
    %p237 = pnand %p235, %p236
    %p238 = pneg %p237
    // Predicated region
    $region45: #{conv5_extractor.17} parent=5 // pred_check
      _
    $region46: #{conv5_extractor.17} parent=5 // pred_check_branch
      %240 = sbr.rel (%p237) target = $region48
    $region47: #{conv5_extractor.17} parent=5 // pred_region
      %s241 = ssub.s32 %s13, 1
      %p242 = scmp.lt.s32.totalorder %s18, 1
      %s243 = scalar_select %p242, %s18, 1
      %s244 = smul.addr %s243, 5
      %s245 = scalar_lea.vmem %s0, %s244
      %p246 = pneg %p39
      %p247 = pneg %p36
      %p248 = pneg %p60
      %p249 = pneg %p57
      %p250 = pneg %p81
      %p251 = pneg %p78
      %p252 = pneg %p102
      %p253 = pneg %p99
      %p254 = pneg %p123
      %p255 = pneg %p120
      %p256 = pneg %p144
      %p257 = pneg %p141
      %p258 = pneg %p165
      %p259 = pneg %p162
      %p260 = pneg %p191
      %p261 = pneg %p188
      %p262 = scmp.lt.s32.totalorder %s18, 1
      %s263 = scalar_select %p262, %s18, 1
      %s264 = scalar_lea.vmem %s7, %s263
      %p265 = scmp.lt.s32.totalorder %s18, 1
      %s266 = scalar_select %p265, %s18, 1
      %s267 = smul.addr %s266, 5
      %s268 = scalar_lea.vmem %s0, %s267
      %p269 = scmp.lt.s32.totalorder %s18, 1
      %s270 = scalar_select %p269, %s18, 1
      %s271 = scalar_lea.vmem %s7, %s270
      %v273 = vld [vmem:[%s268] sm:$0x1f]
      %v274 = vld [vmem:[%s1] sm:$0xf]
      %v275 = vld [vmem:[%s1 + $0x4] sm:$0xf]
      %v276 = vld [vmem:[%s1 + $0x8] sm:$0xf]
      %v277 = vld [vmem:[%s1 + $0xc] sm:$0xf]
      %v278 = vld [vmem:[%s1 + $0x10] sm:$0xf]
      %v279 = vld [vmem:[%s1 + $0x14] sm:$0xf]
      %v280 = vld [vmem:[%s1 + $0x18] sm:$0xf]
      %v281 = vld [vmem:[%s1 + $0x1c] sm:$0xf]
      %v282 = vld [vmem:[%s1 + $0x20] sm:$0xf]
      %v283 = vld [vmem:[%s1 + $0x24] sm:$0xf]
      %v284 = vld [vmem:[%s1 + $0x28] sm:$0xf]
      %v285 = vld [vmem:[%s1 + $0x2c] sm:$0xf]
      %v286 = vld [vmem:[%s1 + $0x30] sm:$0xf]
      %v287 = vld [vmem:[%s1 + $0x34] sm:$0xf]
      %v288 = vld [vmem:[%s1 + $0x38] sm:$0xf]
      %v289 = vld [vmem:[%s1 + $0x3c] sm:$0xf]
      %v290 = vld [vmem:[%s1 + $0x40] sm:$0xf]
      %v291 = vld [vmem:[%s1 + $0x44] sm:$0xf]
      %v292 = vld [vmem:[%s1 + $0x48] sm:$0xf]
      %v293 = vld [vmem:[%s1 + $0x4c] sm:$0xf]
      %v294 = vld [vmem:[%s1 + $0x50] sm:$0xf]
      %v295 = vld [vmem:[%s1 + $0x54] sm:$0xf]
      %v296 = vld [vmem:[%s1 + $0x58] sm:$0xf]
      %v297 = vld [vmem:[%s1 + $0x5c] sm:$0xf]
      %v298 = vld [vmem:[%s1 + $0x60] sm:$0xf]
      %v299 = vld [vmem:[%s1 + $0x64] sm:$0xf]
      %v300 = vld [vmem:[%s1 + $0x68] sm:$0xf]
      %v301 = vld [vmem:[%s1 + $0x6c] sm:$0xf]
      %v302 = vld [vmem:[%s1 + $0x70] sm:$0xf]
      %v303 = vld [vmem:[%s1 + $0x74] sm:$0xf]
      %v304 = vld [vmem:[%s1 + $0x78] sm:$0xf]
      %v305 = vld [vmem:[%s1 + $0x7c] sm:$0xf]
      %v306 = vld [vmem:[%s1 + $0x80] sm:$0xf]
      %v307 = vld [vmem:[%s1 + $0x84] sm:$0xf]
      %v308 = vld [vmem:[%s1 + $0x88] sm:$0xf]
      %v309 = vld [vmem:[%s1 + $0x8c] sm:$0xf]
      %v310 = vld [vmem:[%s1 + $0x90] sm:$0xf]
      %v311 = vld [vmem:[%s1 + $0x94] sm:$0xf]
      %v312 = vld [vmem:[%s1 + $0x98] sm:$0xf]
      %v313 = vld [vmem:[%s1 + $0x9c] sm:$0xf]
      %v314 = vld [vmem:[%s1 + $0xa0] sm:$0xf]
      %v315 = vld [vmem:[%s1 + $0xa4] sm:$0xf]
      %v316 = vld [vmem:[%s1 + $0xa8] sm:$0xf]
      %v317 = vld [vmem:[%s1 + $0xac] sm:$0xf]
      %v318 = vld [vmem:[%s1 + $0xb0] sm:$0xf]
      %v319 = vld [vmem:[%s1 + $0xb4] sm:$0xf]
      %v320 = vld [vmem:[%s1 + $0xb8] sm:$0xf]
      %v321 = vld [vmem:[%s1 + $0xbc] sm:$0xf]
      %v322 = vld [vmem:[%s1 + $0xc0] sm:$0xf]
      %v323 = vld [vmem:[%s1 + $0xc4] sm:$0xf]
      %v324 = vld [vmem:[%s1 + $0xc8] sm:$0xf]
      %v325 = vld [vmem:[%s1 + $0xcc] sm:$0xf]
      %v326 = vld [vmem:[%s1 + $0xd0] sm:$0xf]
      %v327 = vld [vmem:[%s1 + $0xd4] sm:$0xf]
      %v328 = vld [vmem:[%s1 + $0xd8] sm:$0xf]
      %v329 = vld [vmem:[%s1 + $0xdc] sm:$0xf]
      %v330 = vld [vmem:[%s1 + $0xe0] sm:$0xf]
      %v331 = vld [vmem:[%s1 + $0xe4] sm:$0xf]
      %v332 = vld [vmem:[%s1 + $0xe8] sm:$0xf]
      %v333 = vld [vmem:[%s1 + $0xec] sm:$0xf]
      %v334 = vld [vmem:[%s1 + $0xf0] sm:$0xf]
      %v335 = vld [vmem:[%s1 + $0xf4] sm:$0xf]
      %v336 = vld [vmem:[%s1 + $0xf8] sm:$0xf]
      %v337 = vld [vmem:[%s1 + $0xfc] sm:$0xf]
      %v338 = vld [vmem:[%s1 + $0x100] sm:$0xf]
      %v339 = vld [vmem:[%s1 + $0x104] sm:$0xf]
      %v340 = vld [vmem:[%s1 + $0x108] sm:$0xf]
      %v341 = vld [vmem:[%s1 + $0x10c] sm:$0xf]
      %v342 = vld [vmem:[%s1 + $0x110] sm:$0xf]
      %v343 = vld [vmem:[%s1 + $0x114] sm:$0xf]
      %v344 = vld [vmem:[%s1 + $0x118] sm:$0xf]
      %v345 = vld [vmem:[%s1 + $0x11c] sm:$0xf]
      %v346 = vld [vmem:[%s2] sm:$0x1]
      %v348 = vperm.slane %v346, 0
      %351 = vst [vmem:[#allocation1] ss:$9 sm:$0xff] %v273
      %v352 = vld [vmem:[#allocation1] sm:$0xff]
      %v353 = vld [vmem:[#allocation1 + $0x9] sm:$0xff]
      %v354 = vld [vmem:[#allocation1 + $0x12] sm:$0xff]
      %v355 = vld [vmem:[#allocation1 + $0x1b] sm:$0xff]
      %v356 = vld [vmem:[#allocation1 + $0x24] sm:$0xff]
      %v433 = vunpack.c.l.b16 %v274
      %v434 = vunpack.c.l.b16 %v275
      %v435 = vunpack.c.l.b16 %v276
      %v436 = vunpack.c.l.b16 %v277
      %v437 = vunpack.c.l.b16 %v278
      %v438 = vunpack.c.l.b16 %v279
      %v439 = vunpack.c.l.b16 %v280
      %v440 = vunpack.c.l.b16 %v281
      %v441 = vunpack.c.l.b16 %v282
      %v442 = vunpack.c.l.b16 %v283
      %v443 = vunpack.c.l.b16 %v284
      %v444 = vunpack.c.l.b16 %v285
      %v445 = vunpack.c.l.b16 %v286
      %v446 = vunpack.c.l.b16 %v287
      %v447 = vunpack.c.l.b16 %v288
      %v448 = vunpack.c.l.b16 %v289
      %v449 = vunpack.c.l.b16 %v290
      %v450 = vunpack.c.l.b16 %v291
      %v451 = vunpack.c.l.b16 %v292
      %v452 = vunpack.c.l.b16 %v293
      %v453 = vunpack.c.l.b16 %v294
      %v454 = vunpack.c.l.b16 %v295
      %v455 = vunpack.c.l.b16 %v296
      %v456 = vunpack.c.l.b16 %v297
      %v457 = vunpack.c.l.b16 %v298
      %v458 = vunpack.c.l.b16 %v299
      %v459 = vunpack.c.l.b16 %v300
      %v460 = vunpack.c.l.b16 %v301
      %v461 = vunpack.c.l.b16 %v302
      %v462 = vunpack.c.l.b16 %v303
      %v463 = vunpack.c.l.b16 %v304
      %v464 = vunpack.c.l.b16 %v305
      %v465 = vunpack.c.l.b16 %v306
      %v466 = vunpack.c.l.b16 %v307
      %v467 = vunpack.c.l.b16 %v308
      %v468 = vunpack.c.l.b16 %v309
      %v469 = vunpack.c.l.b16 %v310
      %v470 = vunpack.c.l.b16 %v311
      %v471 = vunpack.c.l.b16 %v312
      %v472 = vunpack.c.l.b16 %v313
      %v473 = vunpack.c.l.b16 %v314
      %v474 = vunpack.c.l.b16 %v315
      %v475 = vunpack.c.l.b16 %v316
      %v476 = vunpack.c.l.b16 %v317
      %v477 = vunpack.c.l.b16 %v318
      %v478 = vunpack.c.l.b16 %v319
      %v479 = vunpack.c.l.b16 %v320
      %v480 = vunpack.c.l.b16 %v321
      %v481 = vunpack.c.l.b16 %v322
      %v482 = vunpack.c.l.b16 %v323
      %v483 = vunpack.c.l.b16 %v324
      %v484 = vunpack.c.l.b16 %v325
      %v485 = vunpack.c.l.b16 %v326
      %v486 = vunpack.c.l.b16 %v327
      %v487 = vunpack.c.l.b16 %v328
      %v488 = vunpack.c.l.b16 %v329
      %v489 = vunpack.c.l.b16 %v330
      %v490 = vunpack.c.l.b16 %v331
      %v491 = vunpack.c.l.b16 %v332
      %v492 = vunpack.c.l.b16 %v333
      %v493 = vunpack.c.l.b16 %v334
      %v494 = vunpack.c.l.b16 %v335
      %v495 = vunpack.c.l.b16 %v336
      %v496 = vunpack.c.l.b16 %v337
      %v497 = vunpack.c.l.b16 %v338
      %v498 = vunpack.c.l.b16 %v339
      %v499 = vunpack.c.l.b16 %v340
      %v500 = vunpack.c.l.b16 %v341
      %v501 = vunpack.c.l.b16 %v342
      %v502 = vunpack.c.l.b16 %v343
      %v503 = vunpack.c.l.b16 %v344
      %v504 = vunpack.c.l.b16 %v345
      %v505 = vpack.c.b16 %v434, %v433
      %v506 = vpack.c.b16 %v436, %v435
      %v507 = vpack.c.b16 %v438, %v437
      %v508 = vpack.c.b16 %v440, %v439
      %v509 = vpack.c.b16 %v442, %v441
      %v510 = vpack.c.b16 %v444, %v443
      %v511 = vpack.c.b16 %v446, %v445
      %v512 = vpack.c.b16 %v448, %v447
      %v513 = vpack.c.b16 %v450, %v449
      %v514 = vpack.c.b16 %v452, %v451
      %v515 = vpack.c.b16 %v454, %v453
      %v516 = vpack.c.b16 %v456, %v455
      %v517 = vpack.c.b16 %v458, %v457
      %v518 = vpack.c.b16 %v460, %v459
      %v519 = vpack.c.b16 %v462, %v461
      %v520 = vpack.c.b16 %v464, %v463
      %v521 = vpack.c.b16 %v466, %v465
      %v522 = vpack.c.b16 %v468, %v467
      %v523 = vpack.c.b16 %v470, %v469
      %v524 = vpack.c.b16 %v472, %v471
      %v525 = vpack.c.b16 %v474, %v473
      %v526 = vpack.c.b16 %v476, %v475
      %v527 = vpack.c.b16 %v478, %v477
      %v528 = vpack.c.b16 %v480, %v479
      %v529 = vpack.c.b16 %v482, %v481
      %v530 = vpack.c.b16 %v484, %v483
      %v531 = vpack.c.b16 %v486, %v485
      %v532 = vpack.c.b16 %v488, %v487
      %v533 = vpack.c.b16 %v490, %v489
      %v534 = vpack.c.b16 %v492, %v491
      %v535 = vpack.c.b16 %v494, %v493
      %v536 = vpack.c.b16 %v496, %v495
      %v537 = vpack.c.b16 %v498, %v497
      %v538 = vpack.c.b16 %v500, %v499
      %v539 = vpack.c.b16 %v502, %v501
      %v540 = vpack.c.b16 %v504, %v503
      %vm577 = vcmask 523264
      %v578 = vsel %vm577, %v356, 0
      %580 = vmatpush.bf16.msra.mxu0 %v512
      %581 = vmatpush.bf16.msra.mxu0 %v511
      %582 = vmatpush.bf16.msra.mxu0 %v510
      %583 = vmatpush.bf16.msra.mxu0 %v509
      %584 = vmatpush.bf16.msra.mxu0 %v508
      %585 = vmatpush.bf16.msra.mxu0 %v507
      %586 = vmatpush.bf16.msra.mxu0 %v506
      %587 = vmatpush.bf16.msra.mxu0 %v505
      %588 = vmatmul.bf16.gmra.mxu0 %v352
      %v589 = vpop.f32.mrf.mxu0
      %v590 = vadd.f32 %v348, %v589
      %v591 = vpop.f32.mrf.mxu0
      %592 = vdwg.mxu0
      %593 = vmatpush.bf16.msra.mxu0 %v520
      %594 = vmatpush.bf16.msra.mxu0 %v519
      %595 = vmatpush.bf16.msra.mxu0 %v518
      %596 = vmatpush.bf16.msra.mxu0 %v517
      %597 = vmatpush.bf16.msra.mxu0 %v516
      %598 = vmatpush.bf16.msra.mxu0 %v515
      %599 = vmatpush.bf16.msra.mxu0 %v514
      %600 = vmatpush.bf16.msra.mxu0 %v513
      %601 = vmatmul.bf16.gmra.mxu0 %v353
      %v602 = vpop.f32.mrf.mxu0
      %v603 = vadd.f32 %v590, %v602
      %v604 = vpop.f32.mrf.mxu0
      %605 = vdwg.mxu0
      %606 = vmatpush.bf16.msra.mxu0 %v528
      %607 = vmatpush.bf16.msra.mxu0 %v527
      %608 = vmatpush.bf16.msra.mxu0 %v526
      %609 = vmatpush.bf16.msra.mxu0 %v525
      %610 = vmatpush.bf16.msra.mxu0 %v524
      %611 = vmatpush.bf16.msra.mxu0 %v523
      %612 = vmatpush.bf16.msra.mxu0 %v522
      %613 = vmatpush.bf16.msra.mxu0 %v521
      %614 = vmatmul.bf16.gmra.mxu0 %v354
      %v615 = vpop.f32.mrf.mxu0
      %v616 = vadd.f32 %v603, %v615
      %v617 = vpop.f32.mrf.mxu0
      %618 = vdwg.mxu0
      %619 = vmatpush.bf16.msra.mxu0 %v536
      %620 = vmatpush.bf16.msra.mxu0 %v535
      %621 = vmatpush.bf16.msra.mxu0 %v534
      %622 = vmatpush.bf16.msra.mxu0 %v533
      %623 = vmatpush.bf16.msra.mxu0 %v532
      %624 = vmatpush.bf16.msra.mxu0 %v531
      %625 = vmatpush.bf16.msra.mxu0 %v530
      %626 = vmatpush.bf16.msra.mxu0 %v529
      %627 = vmatmul.bf16.gmra.mxu0 %v355
      %v628 = vpop.f32.mrf.mxu0
      %v629 = vadd.f32 %v616, %v628
      %v630 = vpop.f32.mrf.mxu0
      %631 = vdwg.mxu0
      %632 = vmatpush.bf16.msra.mxu0 0
      %633 = vmatpush.bf16.msra.mxu0 0
      %634 = vmatpush.bf16.msra.mxu0 0
      %635 = vmatpush.bf16.msra.mxu0 0
      %636 = vmatpush.bf16.msra.mxu0 %v540
      %637 = vmatpush.bf16.msra.mxu0 %v539
      %638 = vmatpush.bf16.msra.mxu0 %v538
      %639 = vmatpush.bf16.msra.mxu0 %v537
      %640 = vmatmul.bf16.gmra.mxu0 %v578
      %v641 = vpop.f32.mrf.mxu0
      %v642 = vadd.f32 %v629, %v641
      %v643 = vpop.f32.mrf.mxu0
      %644 = vdwg.mxu0
      %v645 = vmax.f32 %v642, 0.0
      %v646 = vld [vmem:[%s5] sm:$0xf]
      %v647 = vld [vmem:[%s5 + $0x4] sm:$0xf]
      %v648 = vld [vmem:[%s5 + $0x8] sm:$0xf]
      %v649 = vld [vmem:[%s5 + $0xc] sm:$0xf]
      %v650 = vld [vmem:[%s5 + $0x10] sm:$0xf]
      %v651 = vld [vmem:[%s5 + $0x14] sm:$0xf]
      %v652 = vld [vmem:[%s5 + $0x18] sm:$0xf]
      %v653 = vld [vmem:[%s5 + $0x1c] sm:$0xf]
      %v654 = vld [vmem:[%s5 + $0x20] sm:$0xf]
      %v655 = vld [vmem:[%s5 + $0x24] sm:$0xf]
      %v656 = vld [vmem:[%s5 + $0x28] sm:$0xf]
      %v657 = vld [vmem:[%s5 + $0x2c] sm:$0xf]
      %v658 = vld [vmem:[%s5 + $0x30] sm:$0xf]
      %v659 = vld [vmem:[%s5 + $0x34] sm:$0xf]
      %v660 = vld [vmem:[%s5 + $0x38] sm:$0xf]
      %v661 = vld [vmem:[%s5 + $0x3c] sm:$0xf]
      %v662 = vld [vmem:[%s5 + $0x40] sm:$0xf]
      %v663 = vld [vmem:[%s5 + $0x44] sm:$0xf]
      %v664 = vld [vmem:[%s5 + $0x48] sm:$0xf]
      %v665 = vld [vmem:[%s5 + $0x4c] sm:$0xf]
      %v666 = vld [vmem:[%s5 + $0x50] sm:$0xf]
      %v667 = vld [vmem:[%s5 + $0x54] sm:$0xf]
      %v668 = vld [vmem:[%s5 + $0x58] sm:$0xf]
      %v669 = vld [vmem:[%s5 + $0x5c] sm:$0xf]
      %v670 = vld [vmem:[%s5 + $0x60] sm:$0xf]
      %v671 = vld [vmem:[%s5 + $0x64] sm:$0xf]
      %v672 = vld [vmem:[%s5 + $0x68] sm:$0xf]
      %v673 = vld [vmem:[%s5 + $0x6c] sm:$0xf]
      %v674 = vld [vmem:[%s5 + $0x70] sm:$0xf]
      %v675 = vld [vmem:[%s5 + $0x74] sm:$0xf]
      %v676 = vld [vmem:[%s5 + $0x78] sm:$0xf]
      %v677 = vld [vmem:[%s5 + $0x7c] sm:$0xf]
      %v678 = vld [vmem:[%s5 + $0x80] sm:$0xf]
      %v679 = vld [vmem:[%s5 + $0x84] sm:$0xf]
      %v680 = vld [vmem:[%s5 + $0x88] sm:$0xf]
      %v681 = vld [vmem:[%s5 + $0x8c] sm:$0xf]
      %v682 = vld [vmem:[%s5 + $0x90] sm:$0xf]
      %v683 = vld [vmem:[%s5 + $0x94] sm:$0xf]
      %v684 = vld [vmem:[%s5 + $0x98] sm:$0xf]
      %v685 = vld [vmem:[%s5 + $0x9c] sm:$0xf]
      %v686 = vld [vmem:[%s5 + $0xa0] sm:$0xf]
      %v687 = vld [vmem:[%s5 + $0xa4] sm:$0xf]
      %v688 = vld [vmem:[%s5 + $0xa8] sm:$0xf]
      %v689 = vld [vmem:[%s5 + $0xac] sm:$0xf]
      %v690 = vld [vmem:[%s5 + $0xb0] sm:$0xf]
      %v691 = vld [vmem:[%s5 + $0xb4] sm:$0xf]
      %v692 = vld [vmem:[%s5 + $0xb8] sm:$0xf]
      %v693 = vld [vmem:[%s5 + $0xbc] sm:$0xf]
      %v694 = vld [vmem:[%s5 + $0xc0] sm:$0xf]
      %v695 = vld [vmem:[%s5 + $0xc4] sm:$0xf]
      %v696 = vld [vmem:[%s5 + $0xc8] sm:$0xf]
      %v697 = vld [vmem:[%s5 + $0xcc] sm:$0xf]
      %v698 = vld [vmem:[%s5 + $0xd0] sm:$0xf]
      %v699 = vld [vmem:[%s5 + $0xd4] sm:$0xf]
      %v700 = vld [vmem:[%s5 + $0xd8] sm:$0xf]
      %v701 = vld [vmem:[%s5 + $0xdc] sm:$0xf]
      %v702 = vld [vmem:[%s5 + $0xe0] sm:$0xf]
      %v703 = vld [vmem:[%s5 + $0xe4] sm:$0xf]
      %v704 = vld [vmem:[%s5 + $0xe8] sm:$0xf]
      %v705 = vld [vmem:[%s5 + $0xec] sm:$0xf]
      %v706 = vld [vmem:[%s5 + $0xf0] sm:$0xf]
      %v707 = vld [vmem:[%s5 + $0xf4] sm:$0xf]
      %v708 = vld [vmem:[%s5 + $0xf8] sm:$0xf]
      %v709 = vld [vmem:[%s5 + $0xfc] sm:$0xf]
      %v710 = vld [vmem:[%s5 + $0x100] sm:$0xf]
      %v711 = vld [vmem:[%s5 + $0x104] sm:$0xf]
      %v712 = vld [vmem:[%s5 + $0x108] sm:$0xf]
      %v713 = vld [vmem:[%s5 + $0x10c] sm:$0xf]
      %v714 = vld [vmem:[%s5 + $0x110] sm:$0xf]
      %v715 = vld [vmem:[%s5 + $0x114] sm:$0xf]
      %v716 = vld [vmem:[%s5 + $0x118] sm:$0xf]
      %v717 = vld [vmem:[%s5 + $0x11c] sm:$0xf]
      %v718 = vld [vmem:[%s6] sm:$0x1]
      %v720 = vperm.slane %v718, 0
      %722 = vst [vmem:[#allocation1] ss:$9 sm:$0xff] %v273
      %v723 = vld [vmem:[#allocation1] sm:$0xff]
      %v724 = vld [vmem:[#allocation1 + $0x9] sm:$0xff]
      %v725 = vld [vmem:[#allocation1 + $0x12] sm:$0xff]
      %v726 = vld [vmem:[#allocation1 + $0x1b] sm:$0xff]
      %v727 = vld [vmem:[#allocation1 + $0x24] sm:$0xff]
      %v804 = vunpack.c.l.b16 %v646
      %v805 = vunpack.c.l.b16 %v647
      %v806 = vunpack.c.l.b16 %v648
      %v807 = vunpack.c.l.b16 %v649
      %v808 = vunpack.c.l.b16 %v650
      %v809 = vunpack.c.l.b16 %v651
      %v810 = vunpack.c.l.b16 %v652
      %v811 = vunpack.c.l.b16 %v653
      %v812 = vunpack.c.l.b16 %v654
      %v813 = vunpack.c.l.b16 %v655
      %v814 = vunpack.c.l.b16 %v656
      %v815 = vunpack.c.l.b16 %v657
      %v816 = vunpack.c.l.b16 %v658
      %v817 = vunpack.c.l.b16 %v659
      %v818 = vunpack.c.l.b16 %v660
      %v819 = vunpack.c.l.b16 %v661
      %v820 = vunpack.c.l.b16 %v662
      %v821 = vunpack.c.l.b16 %v663
      %v822 = vunpack.c.l.b16 %v664
      %v823 = vunpack.c.l.b16 %v665
      %v824 = vunpack.c.l.b16 %v666
      %v825 = vunpack.c.l.b16 %v667
      %v826 = vunpack.c.l.b16 %v668
      %v827 = vunpack.c.l.b16 %v669
      %v828 = vunpack.c.l.b16 %v670
      %v829 = vunpack.c.l.b16 %v671
      %v830 = vunpack.c.l.b16 %v672
      %v831 = vunpack.c.l.b16 %v673
      %v832 = vunpack.c.l.b16 %v674
      %v833 = vunpack.c.l.b16 %v675
      %v834 = vunpack.c.l.b16 %v676
      %v835 = vunpack.c.l.b16 %v677
      %v836 = vunpack.c.l.b16 %v678
      %v837 = vunpack.c.l.b16 %v679
      %v838 = vunpack.c.l.b16 %v680
      %v839 = vunpack.c.l.b16 %v681
      %v840 = vunpack.c.l.b16 %v682
      %v841 = vunpack.c.l.b16 %v683
      %v842 = vunpack.c.l.b16 %v684
      %v843 = vunpack.c.l.b16 %v685
      %v844 = vunpack.c.l.b16 %v686
      %v845 = vunpack.c.l.b16 %v687
      %v846 = vunpack.c.l.b16 %v688
      %v847 = vunpack.c.l.b16 %v689
      %v848 = vunpack.c.l.b16 %v690
      %v849 = vunpack.c.l.b16 %v691
      %v850 = vunpack.c.l.b16 %v692
      %v851 = vunpack.c.l.b16 %v693
      %v852 = vunpack.c.l.b16 %v694
      %v853 = vunpack.c.l.b16 %v695
      %v854 = vunpack.c.l.b16 %v696
      %v855 = vunpack.c.l.b16 %v697
      %v856 = vunpack.c.l.b16 %v698
      %v857 = vunpack.c.l.b16 %v699
      %v858 = vunpack.c.l.b16 %v700
      %v859 = vunpack.c.l.b16 %v701
      %v860 = vunpack.c.l.b16 %v702
      %v861 = vunpack.c.l.b16 %v703
      %v862 = vunpack.c.l.b16 %v704
      %v863 = vunpack.c.l.b16 %v705
      %v864 = vunpack.c.l.b16 %v706
      %v865 = vunpack.c.l.b16 %v707
      %v866 = vunpack.c.l.b16 %v708
      %v867 = vunpack.c.l.b16 %v709
      %v868 = vunpack.c.l.b16 %v710
      %v869 = vunpack.c.l.b16 %v711
      %v870 = vunpack.c.l.b16 %v712
      %v871 = vunpack.c.l.b16 %v713
      %v872 = vunpack.c.l.b16 %v714
      %v873 = vunpack.c.l.b16 %v715
      %v874 = vunpack.c.l.b16 %v716
      %v875 = vunpack.c.l.b16 %v717
      %v876 = vpack.c.b16 %v805, %v804
      %v877 = vpack.c.b16 %v807, %v806
      %v878 = vpack.c.b16 %v809, %v808
      %v879 = vpack.c.b16 %v811, %v810
      %v880 = vpack.c.b16 %v813, %v812
      %v881 = vpack.c.b16 %v815, %v814
      %v882 = vpack.c.b16 %v817, %v816
      %v883 = vpack.c.b16 %v819, %v818
      %v884 = vpack.c.b16 %v821, %v820
      %v885 = vpack.c.b16 %v823, %v822
      %v886 = vpack.c.b16 %v825, %v824
      %v887 = vpack.c.b16 %v827, %v826
      %v888 = vpack.c.b16 %v829, %v828
      %v889 = vpack.c.b16 %v831, %v830
      %v890 = vpack.c.b16 %v833, %v832
      %v891 = vpack.c.b16 %v835, %v834
      %v892 = vpack.c.b16 %v837, %v836
      %v893 = vpack.c.b16 %v839, %v838
      %v894 = vpack.c.b16 %v841, %v840
      %v895 = vpack.c.b16 %v843, %v842
      %v896 = vpack.c.b16 %v845, %v844
      %v897 = vpack.c.b16 %v847, %v846
      %v898 = vpack.c.b16 %v849, %v848
      %v899 = vpack.c.b16 %v851, %v850
      %v900 = vpack.c.b16 %v853, %v852
      %v901 = vpack.c.b16 %v855, %v854
      %v902 = vpack.c.b16 %v857, %v856
      %v903 = vpack.c.b16 %v859, %v858
      %v904 = vpack.c.b16 %v861, %v860
      %v905 = vpack.c.b16 %v863, %v862
      %v906 = vpack.c.b16 %v865, %v864
      %v907 = vpack.c.b16 %v867, %v866
      %v908 = vpack.c.b16 %v869, %v868
      %v909 = vpack.c.b16 %v871, %v870
      %v910 = vpack.c.b16 %v873, %v872
      %v911 = vpack.c.b16 %v875, %v874
      %v948 = vsel %vm577, %v727, 0
      %950 = vmatpush.bf16.msra.mxu0 %v883
      %951 = vmatpush.bf16.msra.mxu0 %v882
      %952 = vmatpush.bf16.msra.mxu0 %v881
      %953 = vmatpush.bf16.msra.mxu0 %v880
      %954 = vmatpush.bf16.msra.mxu0 %v879
      %955 = vmatpush.bf16.msra.mxu0 %v878
      %956 = vmatpush.bf16.msra.mxu0 %v877
      %957 = vmatpush.bf16.msra.mxu0 %v876
      %958 = vmatmul.bf16.gmra.mxu0 %v723
      %v959 = vpop.f32.mrf.mxu0
      %v960 = vadd.f32 %v720, %v959
      %v961 = vpop.f32.mrf.mxu0
      %962 = vdwg.mxu0
      %963 = vmatpush.bf16.msra.mxu0 %v891
      %964 = vmatpush.bf16.msra.mxu0 %v890
      %965 = vmatpush.bf16.msra.mxu0 %v889
      %966 = vmatpush.bf16.msra.mxu0 %v888
      %967 = vmatpush.bf16.msra.mxu0 %v887
      %968 = vmatpush.bf16.msra.mxu0 %v886
      %969 = vmatpush.bf16.msra.mxu0 %v885
      %970 = vmatpush.bf16.msra.mxu0 %v884
      %971 = vmatmul.bf16.gmra.mxu0 %v724
      %v972 = vpop.f32.mrf.mxu0
      %v973 = vadd.f32 %v960, %v972
      %v974 = vpop.f32.mrf.mxu0
      %975 = vdwg.mxu0
      %976 = vmatpush.bf16.msra.mxu0 %v899
      %977 = vmatpush.bf16.msra.mxu0 %v898
      %978 = vmatpush.bf16.msra.mxu0 %v897
      %979 = vmatpush.bf16.msra.mxu0 %v896
      %980 = vmatpush.bf16.msra.mxu0 %v895
      %981 = vmatpush.bf16.msra.mxu0 %v894
      %982 = vmatpush.bf16.msra.mxu0 %v893
      %983 = vmatpush.bf16.msra.mxu0 %v892
      %984 = vmatmul.bf16.gmra.mxu0 %v725
      %v985 = vpop.f32.mrf.mxu0
      %v986 = vadd.f32 %v973, %v985
      %v987 = vpop.f32.mrf.mxu0
      %988 = vdwg.mxu0
      %989 = vmatpush.bf16.msra.mxu0 %v907
      %990 = vmatpush.bf16.msra.mxu0 %v906
      %991 = vmatpush.bf16.msra.mxu0 %v905
      %992 = vmatpush.bf16.msra.mxu0 %v904
      %993 = vmatpush.bf16.msra.mxu0 %v903
      %994 = vmatpush.bf16.msra.mxu0 %v902
      %995 = vmatpush.bf16.msra.mxu0 %v901
      %996 = vmatpush.bf16.msra.mxu0 %v900
      %997 = vmatmul.bf16.gmra.mxu0 %v726
      %v998 = vpop.f32.mrf.mxu0
      %v999 = vadd.f32 %v986, %v998
      %v1000 = vpop.f32.mrf.mxu0
      %1001 = vdwg.mxu0
      %1002 = vmatpush.bf16.msra.mxu0 0
      %1003 = vmatpush.bf16.msra.mxu0 0
      %1004 = vmatpush.bf16.msra.mxu0 0
      %1005 = vmatpush.bf16.msra.mxu0 0
      %1006 = vmatpush.bf16.msra.mxu0 %v911
      %1007 = vmatpush.bf16.msra.mxu0 %v910
      %1008 = vmatpush.bf16.msra.mxu0 %v909
      %1009 = vmatpush.bf16.msra.mxu0 %v908
      %1010 = vmatmul.bf16.gmra.mxu0 %v948
      %v1011 = vpop.f32.mrf.mxu0
      %v1012 = vadd.f32 %v999, %v1011
      %v1013 = vpop.f32.mrf.mxu0
      %1014 = vdwg.mxu0
      %1015 = vst [vmem:[#allocation2] sm:$0xf] 0.0
      %1016 = vst [vmem:[#allocation2 + $0x1] sm:$0x3] %v645
      %v1017 = vld [vmem:[%s4] sm:$0x1]
      %v1019 = vperm.slane %v1017, 0
      %v1021 = vadd.f32 %v1012, %v1019
      %v1022 = vld [vmem:[#allocation2] sm:$0x3]
      %v1023 = vpack.c.bf16 %v1022, %v1022
      %v1024 = vld [vmem:[%s3] sm:$0xf]
      %v1025 = vld [vmem:[%s3 + $0x4] sm:$0xf]
      %v1026 = vld [vmem:[%s3 + $0x8] sm:$0xf]
      %v1027 = vld [vmem:[%s3 + $0xc] sm:$0xf]
      %v1028 = vld [vmem:[%s3 + $0x10] sm:$0xf]
      %v1029 = vld [vmem:[%s3 + $0x14] sm:$0xf]
      %v1030 = vld [vmem:[%s3 + $0x18] sm:$0xf]
      %v1031 = vld [vmem:[%s3 + $0x1c] sm:$0xf]
      %v1032 = vld [vmem:[%s3 + $0x20] sm:$0xf]
      %v1033 = vld [vmem:[%s3 + $0x24] sm:$0xf]
      %v1034 = vld [vmem:[%s3 + $0x28] sm:$0xf]
      %v1035 = vld [vmem:[%s3 + $0x2c] sm:$0xf]
      %v1036 = vld [vmem:[%s3 + $0x30] sm:$0xf]
      %v1037 = vld [vmem:[%s3 + $0x34] sm:$0xf]
      %v1038 = vld [vmem:[%s3 + $0x38] sm:$0xf]
      %v1039 = vld [vmem:[%s3 + $0x3c] sm:$0xf]
      %v1056 = vunpack.c.l.b16 %v1024
      %v1057 = vunpack.c.l.b16 %v1025
      %v1058 = vunpack.c.l.b16 %v1026
      %v1059 = vunpack.c.l.b16 %v1027
      %v1060 = vunpack.c.l.b16 %v1028
      %v1061 = vunpack.c.l.b16 %v1029
      %v1062 = vunpack.c.l.b16 %v1030
      %v1063 = vunpack.c.l.b16 %v1031
      %v1064 = vunpack.c.l.b16 %v1032
      %v1065 = vunpack.c.l.b16 %v1033
      %v1066 = vunpack.c.l.b16 %v1034
      %v1067 = vunpack.c.l.b16 %v1035
      %v1068 = vunpack.c.l.b16 %v1036
      %v1069 = vunpack.c.l.b16 %v1037
      %v1070 = vunpack.c.l.b16 %v1038
      %v1071 = vunpack.c.l.b16 %v1039
      %v1072 = vpack.c.b16 %v1057, %v1056
      %v1073 = vpack.c.b16 %v1059, %v1058
      %v1074 = vpack.c.b16 %v1061, %v1060
      %v1075 = vpack.c.b16 %v1063, %v1062
      %v1076 = vpack.c.b16 %v1065, %v1064
      %v1077 = vpack.c.b16 %v1067, %v1066
      %v1078 = vpack.c.b16 %v1069, %v1068
      %v1079 = vpack.c.b16 %v1071, %v1070
      %1088 = vmatpush.bf16.msra.mxu0 %v1079
      %1089 = vmatpush.bf16.msra.mxu0 %v1078
      %1090 = vmatpush.bf16.msra.mxu0 %v1077
      %1091 = vmatpush.bf16.msra.mxu0 %v1076
      %1092 = vmatpush.bf16.msra.mxu0 %v1075
      %1093 = vmatpush.bf16.msra.mxu0 %v1074
      %1094 = vmatpush.bf16.msra.mxu0 %v1073
      %1095 = vmatpush.bf16.msra.mxu0 %v1072
      %1096 = vmatmul.bf16.gmra.mxu0 %v1023
      %v1097 = vpop.f32.mrf.mxu0
      %v1098 = vadd.f32 0.0, %v1097
      %v1099 = vpop.f32.mrf.mxu0
      %1100 = vdwg.mxu0
      %v1101 = vadd.f32 %v1021, %v1098
      %v1102 = vld [vmem:[#allocation2 + $0x1] sm:$0x3]
      %v1103 = vpack.c.bf16 %v1102, %v1102
      %v1104 = vld [vmem:[%s3 + $0x40] sm:$0xf]
      %v1105 = vld [vmem:[%s3 + $0x44] sm:$0xf]
      %v1106 = vld [vmem:[%s3 + $0x48] sm:$0xf]
      %v1107 = vld [vmem:[%s3 + $0x4c] sm:$0xf]
      %v1108 = vld [vmem:[%s3 + $0x50] sm:$0xf]
      %v1109 = vld [vmem:[%s3 + $0x54] sm:$0xf]
      %v1110 = vld [vmem:[%s3 + $0x58] sm:$0xf]
      %v1111 = vld [vmem:[%s3 + $0x5c] sm:$0xf]
      %v1112 = vld [vmem:[%s3 + $0x60] sm:$0xf]
      %v1113 = vld [vmem:[%s3 + $0x64] sm:$0xf]
      %v1114 = vld [vmem:[%s3 + $0x68] sm:$0xf]
      %v1115 = vld [vmem:[%s3 + $0x6c] sm:$0xf]
      %v1116 = vld [vmem:[%s3 + $0x70] sm:$0xf]
      %v1117 = vld [vmem:[%s3 + $0x74] sm:$0xf]
      %v1118 = vld [vmem:[%s3 + $0x78] sm:$0xf]
      %v1119 = vld [vmem:[%s3 + $0x7c] sm:$0xf]
      %v1136 = vunpack.c.l.b16 %v1104
      %v1137 = vunpack.c.l.b16 %v1105
      %v1138 = vunpack.c.l.b16 %v1106
      %v1139 = vunpack.c.l.b16 %v1107
      %v1140 = vunpack.c.l.b16 %v1108
      %v1141 = vunpack.c.l.b16 %v1109
      %v1142 = vunpack.c.l.b16 %v1110
      %v1143 = vunpack.c.l.b16 %v1111
      %v1144 = vunpack.c.l.b16 %v1112
      %v1145 = vunpack.c.l.b16 %v1113
      %v1146 = vunpack.c.l.b16 %v1114
      %v1147 = vunpack.c.l.b16 %v1115
      %v1148 = vunpack.c.l.b16 %v1116
      %v1149 = vunpack.c.l.b16 %v1117
      %v1150 = vunpack.c.l.b16 %v1118
      %v1151 = vunpack.c.l.b16 %v1119
      %v1152 = vpack.c.b16 %v1137, %v1136
      %v1153 = vpack.c.b16 %v1139, %v1138
      %v1154 = vpack.c.b16 %v1141, %v1140
      %v1155 = vpack.c.b16 %v1143, %v1142
      %v1156 = vpack.c.b16 %v1145, %v1144
      %v1157 = vpack.c.b16 %v1147, %v1146
      %v1158 = vpack.c.b16 %v1149, %v1148
      %v1159 = vpack.c.b16 %v1151, %v1150
      %1168 = vmatpush.bf16.msra.mxu0 %v1159
      %1169 = vmatpush.bf16.msra.mxu0 %v1158
      %1170 = vmatpush.bf16.msra.mxu0 %v1157
      %1171 = vmatpush.bf16.msra.mxu0 %v1156
      %1172 = vmatpush.bf16.msra.mxu0 %v1155
      %1173 = vmatpush.bf16.msra.mxu0 %v1154
      %1174 = vmatpush.bf16.msra.mxu0 %v1153
      %1175 = vmatpush.bf16.msra.mxu0 %v1152
      %1176 = vmatmul.bf16.gmra.mxu0 %v1103
      %v1177 = vpop.f32.mrf.mxu0
      %v1178 = vadd.f32 0.0, %v1177
      %v1179 = vpop.f32.mrf.mxu0
      %1180 = vdwg.mxu0
      %v1181 = vadd.f32 %v1101, %v1178
      %v1182 = vld [vmem:[#allocation2 + $0x2] sm:$0x3]
      %v1183 = vpack.c.bf16 %v1182, %v1182
      %v1184 = vld [vmem:[%s3 + $0x80] sm:$0xf]
      %v1185 = vld [vmem:[%s3 + $0x84] sm:$0xf]
      %v1186 = vld [vmem:[%s3 + $0x88] sm:$0xf]
      %v1187 = vld [vmem:[%s3 + $0x8c] sm:$0xf]
      %v1188 = vld [vmem:[%s3 + $0x90] sm:$0xf]
      %v1189 = vld [vmem:[%s3 + $0x94] sm:$0xf]
      %v1190 = vld [vmem:[%s3 + $0x98] sm:$0xf]
      %v1191 = vld [vmem:[%s3 + $0x9c] sm:$0xf]
      %v1192 = vld [vmem:[%s3 + $0xa0] sm:$0xf]
      %v1193 = vld [vmem:[%s3 + $0xa4] sm:$0xf]
      %v1194 = vld [vmem:[%s3 + $0xa8] sm:$0xf]
      %v1195 = vld [vmem:[%s3 + $0xac] sm:$0xf]
      %v1196 = vld [vmem:[%s3 + $0xb0] sm:$0xf]
      %v1197 = vld [vmem:[%s3 + $0xb4] sm:$0xf]
      %v1198 = vld [vmem:[%s3 + $0xb8] sm:$0xf]
      %v1199 = vld [vmem:[%s3 + $0xbc] sm:$0xf]
      %v1216 = vunpack.c.l.b16 %v1184
      %v1217 = vunpack.c.l.b16 %v1185
      %v1218 = vunpack.c.l.b16 %v1186
      %v1219 = vunpack.c.l.b16 %v1187
      %v1220 = vunpack.c.l.b16 %v1188
      %v1221 = vunpack.c.l.b16 %v1189
      %v1222 = vunpack.c.l.b16 %v1190
      %v1223 = vunpack.c.l.b16 %v1191
      %v1224 = vunpack.c.l.b16 %v1192
      %v1225 = vunpack.c.l.b16 %v1193
      %v1226 = vunpack.c.l.b16 %v1194
      %v1227 = vunpack.c.l.b16 %v1195
      %v1228 = vunpack.c.l.b16 %v1196
      %v1229 = vunpack.c.l.b16 %v1197
      %v1230 = vunpack.c.l.b16 %v1198
      %v1231 = vunpack.c.l.b16 %v1199
      %v1232 = vpack.c.b16 %v1217, %v1216
      %v1233 = vpack.c.b16 %v1219, %v1218
      %v1234 = vpack.c.b16 %v1221, %v1220
      %v1235 = vpack.c.b16 %v1223, %v1222
      %v1236 = vpack.c.b16 %v1225, %v1224
      %v1237 = vpack.c.b16 %v1227, %v1226
      %v1238 = vpack.c.b16 %v1229, %v1228
      %v1239 = vpack.c.b16 %v1231, %v1230
      %1248 = vmatpush.bf16.msra.mxu0 %v1239
      %1249 = vmatpush.bf16.msra.mxu0 %v1238
      %1250 = vmatpush.bf16.msra.mxu0 %v1237
      %1251 = vmatpush.bf16.msra.mxu0 %v1236
      %1252 = vmatpush.bf16.msra.mxu0 %v1235
      %1253 = vmatpush.bf16.msra.mxu0 %v1234
      %1254 = vmatpush.bf16.msra.mxu0 %v1233
      %1255 = vmatpush.bf16.msra.mxu0 %v1232
      %1256 = vmatmul.bf16.gmra.mxu0 %v1183
      %v1257 = vpop.f32.mrf.mxu0
      %v1258 = vadd.f32 0.0, %v1257
      %v1259 = vpop.f32.mrf.mxu0
      %1260 = vdwg.mxu0
      %v1261 = vadd.f32 %v1181, %v1258
      %v1262 = vmax.f32 %v1261, 0.0
      %v1263 = vpack.c.bf16 %v1262, %v1262
      %1264 = vst [vmem:[%s271] sm:$0x1] %v1263
      %p1265 = scmp.lt.s32.totalorder %s18, 1
      %s1266 = scalar_select %p1265, %s18, 1
      %s1267 = scalar_lea.vmem %s7, %s1266
      // Predicated region
      $region49: #{conv5_extractor.17} parent=47 // pred_check
        %p1268 = pneg %p188
      $region50: #{conv5_extractor.17} parent=47 // pred_check_branch
        %1270 = sbr.rel (%p1268) target = $region52
      $region51: #{conv5_extractor.17} parent=47 // pred_region
        _
      $region52: #{conv5_extractor.17} parent=47 // pred_fallthru
        _
    $region48: #{conv5_extractor.17} parent=5 // pred_fallthru
      _
    %p1271 = scmp.le.s32.totalorder 2, %s13
    // Predicated region
    $region53: #{conv5_extractor.17} parent=5 // pred_check
      %p1272 = pneg %p1271
    $region54: #{conv5_extractor.17} parent=5 // pred_check_branch
      %1274 = sbr.rel (%p1272) target = $region56
    $region55: #{conv5_extractor.17} parent=5 // pred_region
      %s1275 = ssub.s32 %s13, 2
      // Predicated region
      $region57: #{conv5_extractor.17} parent=55 // pred_check
        %p1276 = pneg %p194
      $region58: #{conv5_extractor.17} parent=55 // pred_check_branch
        %1278 = sbr.rel (%p1276) target = $region60
      $region59: #{conv5_extractor.17} parent=55 // pred_region
        %p1279 = scmp.lt.s32.totalorder %s19, 1
        %s1280 = scalar_select %p1279, %s19, 1
        %s1281 = scalar_lea.vmem %s7, %s1280
      $region60: #{conv5_extractor.17} parent=55 // pred_fallthru
        _
    $region56: #{conv5_extractor.17} parent=5 // pred_fallthru
      _
  $region6: #{conv5_extractor.17} parent=0 // loop_footer
    %s17 = sadd.s32 1, %s13
  $region7: #{conv5_extractor.17} parent=0 // loop_footer_branch
    %12 = sbr.rel target = $region3
  $region8: #{conv5_extractor.17} parent=0 // loop_exit
    _

</llo_original>
